<compile_context>
chip_gen: v7x
topology: tpu7x:2x2x1
jax: 0.10.0
libtpu: 0.0.40
codegen_flags: <defaults>
</compile_context>

<pallas_src>
import functools

import jax
import jax.numpy as jnp
from jax.experimental import pallas as pl
from jax.experimental.pallas import tpu as pltpu

LANE = 128          # channel padding target: lane-dense MXU operands & stores
ROW_TILE_MAX = 256  # one full-M row block up to this many rows, else 256-row tiles


def _round_up(x, m):
    return -(-x // m) * m


def _lane_pad(c):
    return _round_up(c, LANE)


def _row_block(m):
    """Return (padded_M, row_block): single full-M block for small M, else tiles."""
    mp = _round_up(m, 8)
    if mp <= ROW_TILE_MAX:
        return mp, mp
    mp = _round_up(m, ROW_TILE_MAX)
    return mp, ROW_TILE_MAX


def _pad_rows(a, mp):
    m = a.shape[0]
    if mp != m:
        a = jnp.pad(a, ((0, mp - m),) + ((0, 0),) * (a.ndim - 1))
    return a


_PARALLEL = pltpu.CompilerParams(dimension_semantics=("parallel",))


# ----------------------------- Pallas kernels ------------------------------ #

def _matmul_bias_kernel(p_ref, w_ref, b_ref, o_ref, *, relu):
    # bf16 patches @ bf16 (BN-scale-folded) weights on the MXU, f32 accumulate,
    # f32 bias (+ReLU) epilogue, lane-dense (>=128-wide) store.
    y = jnp.dot(p_ref[...], w_ref[...], preferred_element_type=jnp.float32)
    y = y + b_ref[...]
    if relu:
        y = jnp.maximum(y, 0.0)
    o_ref[...] = y.astype(o_ref.dtype)


def _matmul_bias_res_kernel(p_ref, w_ref, b_ref, r_ref, o_ref, *, relu):
    # Same, with the BasicBlock residual fused in (f32) before the ReLU.
    y = jnp.dot(p_ref[...], w_ref[...], preferred_element_type=jnp.float32)
    y = y + b_ref[...] + r_ref[...]
    if relu:
        y = jnp.maximum(y, 0.0)
    o_ref[...] = y.astype(o_ref.dtype)


def _fused_down_kernel(p_ref, w1_ref, b1_ref, wd_ref, bd_ref, o1_ref, id_ref,
                       *, cin_p):
    # One launch for a down-block: conv1 (3x3 +BN+ReLU) and its 1x1 downsample
    # conv (+BN).  The 1x1 conv input is exactly the center column block of the
    # 3x3 patches (same stride, same output locations), so both matmuls share
    # one patch tile already resident in VMEM.
    p = p_ref[...]
    y1 = jnp.dot(p, w1_ref[...], preferred_element_type=jnp.float32)
    o1_ref[...] = jnp.maximum(y1 + b1_ref[...], 0.0).astype(o1_ref.dtype)
    center = p[:, 4 * cin_p:5 * cin_p]          # lane-aligned static slice
    yd = jnp.dot(center, wd_ref[...], preferred_element_type=jnp.float32)
    id_ref[...] = (yd + bd_ref[...]).astype(id_ref.dtype)


def _maxpool_kernel(p_ref, o_ref):
    # (bm, 9, C) window patches -> max over the 3x3 window axis.
    o_ref[...] = jnp.max(p_ref[...], axis=1)


# ------------------------------- glue (JAX) -------------------------------- #

# TODO(synk): assemble patches in-kernel from an NHWC VMEM tile (small kh*kw
# loop over pl.ds slices) to avoid the 9x/49x im2col HBM amplification at real
# resolutions; at these toy shapes the bf16 patch tensor is negligible.
def _extract_patches(x, kh, kw, stride, pad, pad_value=0.0):
    """x: NHWC -> patches (N*Ho*Wo, kh*kw, C), plus Ho, Wo."""
    n, h, w, c = x.shape
    xp = jnp.pad(x, ((0, 0), (pad, pad), (pad, pad), (0, 0)),
                 constant_values=pad_value)
    ho = (h + 2 * pad - kh) // stride + 1
    wo = (w + 2 * pad - kw) // stride + 1
    cols = []
    for i in range(kh):
        for j in range(kw):
            cols.append(xp[:, i:i + stride * ho:stride,
                           j:j + stride * wo:stride, :])
    p = jnp.stack(cols, axis=3)                      # (N, Ho, Wo, kh*kw, C)
    return p.reshape(n * ho * wo, kh * kw, c), ho, wo


def conv_bn(x, wp, *, stride, pad, relu, residual=None):
    """Conv2d (no bias) + folded BN (+ residual) (+ ReLU).  x: NHWC, lane-padded C."""
    kk = wp['k']
    n, _, _, cin_p = x.shape
    cout_p = wp['w'].shape[1]
    patches, ho, wo = _extract_patches(x, kk, kk, stride, pad)
    m = n * ho * wo
    k_dim = kk * kk * cin_p
    p2 = patches.reshape(m, k_dim).astype(jnp.bfloat16)
    mp, bm = _row_block(m)
    p2 = _pad_rows(p2, mp)

    in_specs = [
        pl.BlockSpec((bm, k_dim), lambda i: (i, 0)),
        pl.BlockSpec((k_dim, cout_p), lambda i: (0, 0)),
        pl.BlockSpec((1, cout_p), lambda i: (0, 0)),
    ]
    out_spec = pl.BlockSpec((bm, cout_p), lambda i: (i, 0))
    out_shape = jax.ShapeDtypeStruct((mp, cout_p), jnp.float32)

    if residual is None:
        y = pl.pallas_call(
            functools.partial(_matmul_bias_kernel, relu=relu),
            grid=(mp // bm,), in_specs=in_specs, out_specs=out_spec,
            out_shape=out_shape, compiler_params=_PARALLEL,
        )(p2, wp['w'], wp['b'])
    else:
        r2 = _pad_rows(residual.reshape(m, cout_p), mp)
        y = pl.pallas_call(
            functools.partial(_matmul_bias_res_kernel, relu=relu),
            grid=(mp // bm,),
            in_specs=in_specs + [pl.BlockSpec((bm, cout_p), lambda i: (i, 0))],
            out_specs=out_spec, out_shape=out_shape, compiler_params=_PARALLEL,
        )(p2, wp['w'], wp['b'], r2)

    if mp != m:
        y = y[:m]
    return y.reshape(n, ho, wo, cout_p)


def conv_bn_with_downsample(x, wp1, wpd, *, stride):
    """Fused BasicBlock down-path: conv1 (3x3, pad=1, +BN+ReLU) and the 1x1
    downsample conv (pad=0, +BN) in a single pallas_call sharing one patch tile."""
    n, _, _, cin_p = x.shape
    cout_p = wp1['w'].shape[1]
    patches, ho, wo = _extract_patches(x, 3, 3, stride, 1)
    m = n * ho * wo
    k_dim = 9 * cin_p
    p2 = patches.reshape(m, k_dim).astype(jnp.bfloat16)
    mp, bm = _row_block(m)
    p2 = _pad_rows(p2, mp)

    out_sds = jax.ShapeDtypeStruct((mp, cout_p), jnp.float32)
    y1, idn = pl.pallas_call(
        functools.partial(_fused_down_kernel, cin_p=cin_p),
        grid=(mp // bm,),
        in_specs=[pl.BlockSpec((bm, k_dim), lambda i: (i, 0)),
                  pl.BlockSpec((k_dim, cout_p), lambda i: (0, 0)),
                  pl.BlockSpec((1, cout_p), lambda i: (0, 0)),
                  pl.BlockSpec((cin_p, cout_p), lambda i: (0, 0)),
                  pl.BlockSpec((1, cout_p), lambda i: (0, 0))],
        out_specs=(pl.BlockSpec((bm, cout_p), lambda i: (i, 0)),
                   pl.BlockSpec((bm, cout_p), lambda i: (i, 0))),
        out_shape=(out_sds, out_sds),
        compiler_params=_PARALLEL,
    )(p2, wp1['w'], wp1['b'], wpd['w'], wpd['b'])

    if mp != m:
        y1, idn = y1[:m], idn[:m]
    return y1.reshape(n, ho, wo, cout_p), idn.reshape(n, ho, wo, cout_p)


def maxpool_3x3_s2(x):
    """nn.MaxPool2d(kernel_size=3, stride=2, padding=1).  x: NHWC, lane-padded C."""
    n, _, _, c = x.shape
    patches, ho, wo = _extract_patches(x, 3, 3, 2, 1, pad_value=-jnp.inf)
    m = n * ho * wo
    mp, bm = _row_block(m)
    patches = _pad_rows(patches, mp)
    y = pl.pallas_call(
        _maxpool_kernel,
        grid=(mp // bm,),
        in_specs=[pl.BlockSpec((bm, 9, c), lambda i: (i, 0, 0))],
        out_specs=pl.BlockSpec((bm, c), lambda i: (i, 0)),
        out_shape=jax.ShapeDtypeStruct((mp, c), x.dtype),
        compiler_params=_PARALLEL,
    )(patches)
    if mp != m:
        y = y[:m]
    return y.reshape(n, ho, wo, c)


# ------------------------- parameters (deterministic) ---------------------- #

def _conv_bn_params(key, cin, cout, k):
    kw_, kb, km, kv, kg = jax.random.split(key, 5)
    fan_in = k * k * cin
    w = jax.random.normal(kw_, (k, k, cin, cout), jnp.float32) * (2.0 / fan_in) ** 0.5
    gamma = 1.0 + 0.1 * jax.random.normal(kg, (cout,), jnp.float32)
    beta = 0.1 * jax.random.normal(kb, (cout,), jnp.float32)
    mean = 0.1 * jax.random.normal(km, (cout,), jnp.float32)
    var = 1.0 + 0.1 * jax.random.uniform(kv, (cout,), jnp.float32)
    scale = gamma / jnp.sqrt(var + 1e-5)          # BN folded (inference mode)
    bias = beta - mean * scale
    cin_p, cout_p = _lane_pad(cin), _lane_pad(cout)
    # Fold the BN scale into the conv weight once, pad both channel dims to the
    # 128-lane width (zero rows/cols -> identical math, lane-dense MXU tiles),
    # pre-reshape to the im2col (K, Cout) matrix and pre-cast to bf16.
    wf = w * scale[None, None, None, :]
    wf = jnp.pad(wf, ((0, 0), (0, 0), (0, cin_p - cin), (0, cout_p - cout)))
    w_mat = wf.reshape(k * k * cin_p, cout_p).astype(jnp.bfloat16)
    b = jnp.pad(bias, (0, cout_p - cout)).reshape(1, cout_p)   # bias stays f32
    return {'w': w_mat, 'b': b, 'k': k, 'cout': cout}


def _basic_block_params(key, cin, cout, stride):
    k1, k2, k3 = jax.random.split(key, 3)
    p = {'conv1': _conv_bn_params(k1, cin, cout, 3),
         'conv2': _conv_bn_params(k2, cout, cout, 3),
         'stride': stride}
    if stride != 1 or cin != cout:
        p['downsample'] = _conv_bn_params(k3, cin, cout, 1)
    return p


def make_resnet_encoder_params(key, in_ch=4, base=8, blocks=(2, 2, 2, 2)):
    widths = (base, base * 2, base * 4, base * 8)
    keys = jax.random.split(key, 5)
    params = {'conv1': _conv_bn_params(keys[0], in_ch, base, 7)}
    cin = base
    for li, (width, nb) in enumerate(zip(widths, blocks)):
        bkeys = jax.random.split(keys[li + 1], nb)
        layer = []
        for bi in range(nb):
            stride = 1 if (li == 0 or bi > 0) else 2
            layer.append(_basic_block_params(bkeys[bi], cin, width, stride))
            cin = width
        params[f'layer{li + 1}'] = layer
    # filters (conv2.out_channels of each stage's last block) == widths
    params['filters'] = list(widths)
    return params


# --------------------------------- forward --------------------------------- #

def basic_block_forward(x, p):
    if 'downsample' in p:
        out, identity = conv_bn_with_downsample(x, p['conv1'], p['downsample'],
                                                stride=p['stride'])
    else:
        identity = x
        out = conv_bn(x, p['conv1'], stride=p['stride'], pad=1, relu=True)
    out = conv_bn(out, p['conv2'], stride=1, pad=1, relu=True, residual=identity)
    return out


def resnet_encoder_forward(x_nchw, params):
    # layout: input NCHW -> internal NHWC with channels zero-padded to 128
    # (carried end-to-end); crop + transpose back to NCHW only at the four
    # stage outputs (PyTorch convention).
    n, cin, _, _ = x_nchw.shape
    x = jnp.transpose(x_nchw, (0, 2, 3, 1))
    x = jnp.pad(x, ((0, 0), (0, 0), (0, 0), (0, _lane_pad(cin) - cin)))
    x = conv_bn(x, params['conv1'], stride=2, pad=3, relu=True)
    x = maxpool_3x3_s2(x)
    acts = []
    for li in range(1, 5):
        for blk in params[f'layer{li}']:
            x = basic_block_forward(x, blk)
        cout = params['filters'][li - 1]
        acts.append(jnp.transpose(x[..., :cout], (0, 3, 1, 2)))
    return acts


if __name__ == "__main__":
    key = jax.random.PRNGKey(0)
    kx, kp = jax.random.split(key)
    x = jax.random.normal(kx, (2, 4, 16, 16), jnp.float32)          # NCHW
    params = make_resnet_encoder_params(kp, in_ch=4, base=8)

    fwd = jax.jit(lambda inp: resnet_encoder_forward(inp, params))
    acts = fwd(x)
    for a in acts:
        jax.block_until_ready(a)

    # Expected stage shapes (NCHW): (2,8,4,4) (2,16,2,2) (2,32,1,1) (2,64,1,1)
    assert [tuple(a.shape) for a in acts] == [(2, 8, 4, 4), (2, 16, 2, 2),
                                              (2, 32, 1, 1), (2, 64, 1, 1)]
    print("KERNEL_OK")
</pallas_src>

<mosaic_0001>
module attributes {stable_mosaic.version = 11 : i64} {
  func.func @_matmul_bias_kernel(%arg0: i32, %arg1: memref<128x6272xbf16, #tpu.memory_space<vmem>>, %arg2: memref<6272x128xbf16, #tpu.memory_space<vmem>>, %arg3: memref<1x128xf32, #tpu.memory_space<vmem>>, %arg4: memref<128x128xf32, #tpu.memory_space<vmem>>) attributes {dimension_semantics = [#tpu.dimension_semantics<parallel>], iteration_bounds = array<i64: 1>, scalar_prefetch = 0 : i64, scratch_operands = 0 : i64, tpu.core_type = #tpu.core_type<tc>, window_params = [{transform_indices = @transform_0, window_bounds = array<i64: 128, 6272>}, {pipeline_mode = #tpu.pipeline_mode<synchronous>, transform_indices = @transform_1, window_bounds = array<i64: 6272, 128>}, {pipeline_mode = #tpu.pipeline_mode<synchronous>, transform_indices = @transform_2, window_bounds = array<i64: 1, 128>}, {transform_indices = @transform_3, window_bounds = array<i64: 128, 128>}]} {
    %c0 = arith.constant 0 : index
    %c0_0 = arith.constant 0 : index
    %0 = vector.load %arg1[%c0, %c0_0] : memref<128x6272xbf16, #tpu.memory_space<vmem>>, vector<128x6272xbf16>
    %c0_1 = arith.constant 0 : index
    %c0_2 = arith.constant 0 : index
    %1 = vector.load %arg2[%c0_1, %c0_2] : memref<6272x128xbf16, #tpu.memory_space<vmem>>, vector<6272x128xbf16>
    %cst = arith.constant dense<0.000000e+00> : vector<128x128xf32>
    %2 = tpu.matmul %0, %1, %cst {dimension_numbers = #tpu.dot_dimension_numbers<[1], [0], [0], [1], [0, 0, 1, 1], [], []>} : vector<128x6272xbf16>, vector<6272x128xbf16>, vector<128x128xf32> -> vector<128x128xf32>
    %c0_3 = arith.constant 0 : index
    %c0_4 = arith.constant 0 : index
    %3 = vector.load %arg3[%c0_3, %c0_4] : memref<1x128xf32, #tpu.memory_space<vmem>>, vector<1x128xf32>
    %4 = vector.broadcast %3 : vector<1x128xf32> to vector<128x128xf32>
    %5 = arith.addf %2, %4 : vector<128x128xf32>
    %cst_5 = arith.constant 0.000000e+00 : f32
    %6 = vector.broadcast %cst_5 : f32 to vector<128x128xf32>
    %7 = arith.maximumf %5, %6 : vector<128x128xf32>
    %c0_6 = arith.constant 0 : index
    %c0_7 = arith.constant 0 : index
    %8 = vector.load %arg4[%c0_6, %c0_7] : memref<128x128xf32, #tpu.memory_space<vmem>>, vector<128x128xf32>
    tpu.vector_store %arg4[%c0_6, %c0_7], %7 {strides = array<i32>} : memref<128x128xf32, #tpu.memory_space<vmem>>, vector<128x128xf32>,
    return
  }
  func.func @transform_0(%arg0: i32) -> (i32, i32) {
    %c0_i32 = arith.constant 0 : i32
    %c0_i32_0 = arith.constant 0 : i32
    return %arg0, %c0_i32 : i32, i32
  }
  func.func @transform_1(%arg0: i32) -> (i32, i32) {
    %c0_i32 = arith.constant 0 : i32
    %c0_i32_0 = arith.constant 0 : i32
    %c0_i32_1 = arith.constant 0 : i32
    return %c0_i32, %c0_i32_0 : i32, i32
  }
  func.func @transform_2(%arg0: i32) -> (i32, i32) {
    %c0_i32 = arith.constant 0 : i32
    %c0_i32_0 = arith.constant 0 : i32
    %c0_i32_1 = arith.constant 0 : i32
    return %c0_i32, %c0_i32_0 : i32, i32
  }
  func.func @transform_3(%arg0: i32) -> (i32, i32) {
    %c0_i32 = arith.constant 0 : i32
    %c0_i32_0 = arith.constant 0 : i32
    return %arg0, %c0_i32 : i32, i32
  }
}

module attributes {stable_mosaic.version = 11 : i64} {
  func.func @_maxpool_kernel(%arg0: i32, %arg1: memref<32x9x128xf32, #tpu.memory_space<vmem>>, %arg2: memref<32x128xf32, #tpu.memory_space<vmem>>) attributes {dimension_semantics = [#tpu.dimension_semantics<parallel>], iteration_bounds = array<i64: 1>, scalar_prefetch = 0 : i64, scratch_operands = 0 : i64, tpu.core_type = #tpu.core_type<tc>, window_params = [{transform_indices = @transform_0, window_bounds = array<i64: 32, 9, 128>}, {transform_indices = @transform_1, window_bounds = array<i64: 32, 128>}]} {
    %c0 = arith.constant 0 : index
    %c0_0 = arith.constant 0 : index
    %c0_1 = arith.constant 0 : index
    %0 = vector.load %arg1[%c0, %c0_0, %c0_1] : memref<32x9x128xf32, #tpu.memory_space<vmem>>, vector<32x9x128xf32>
    %cst = arith.constant dense<0xFF800000> : vector<32x128xf32>
    %1 = vector.multi_reduction <maximumf>, %0, %cst [1] : vector<32x9x128xf32> to vector<32x128xf32>
    %c0_2 = arith.constant 0 : index
    %c0_3 = arith.constant 0 : index
    %2 = vector.load %arg2[%c0_2, %c0_3] : memref<32x128xf32, #tpu.memory_space<vmem>>, vector<32x128xf32>
    tpu.vector_store %arg2[%c0_2, %c0_3], %1 {strides = array<i32>} : memref<32x128xf32, #tpu.memory_space<vmem>>, vector<32x128xf32>,
    return
  }
  func.func @transform_0(%arg0: i32) -> (i32, i32, i32) {
    %c0_i32 = arith.constant 0 : i32
    %c0_i32_0 = arith.constant 0 : i32
    %c0_i32_1 = arith.constant 0 : i32
    return %arg0, %c0_i32, %c0_i32_0 : i32, i32, i32
  }
  func.func @transform_1(%arg0: i32) -> (i32, i32) {
    %c0_i32 = arith.constant 0 : i32
    %c0_i32_0 = arith.constant 0 : i32
    return %arg0, %c0_i32 : i32, i32
  }
}

module attributes {stable_mosaic.version = 11 : i64} {
  func.func @_matmul_bias_kernel(%arg0: i32, %arg1: memref<32x1152xbf16, #tpu.memory_space<vmem>>, %arg2: memref<1152x128xbf16, #tpu.memory_space<vmem>>, %arg3: memref<1x128xf32, #tpu.memory_space<vmem>>, %arg4: memref<32x128xf32, #tpu.memory_space<vmem>>) attributes {dimension_semantics = [#tpu.dimension_semantics<parallel>], iteration_bounds = array<i64: 1>, scalar_prefetch = 0 : i64, scratch_operands = 0 : i64, tpu.core_type = #tpu.core_type<tc>, window_params = [{transform_indices = @transform_0, window_bounds = array<i64: 32, 1152>}, {pipeline_mode = #tpu.pipeline_mode<synchronous>, transform_indices = @transform_1, window_bounds = array<i64: 1152, 128>}, {pipeline_mode = #tpu.pipeline_mode<synchronous>, transform_indices = @transform_2, window_bounds = array<i64: 1, 128>}, {transform_indices = @transform_3, window_bounds = array<i64: 32, 128>}]} {
    %c0 = arith.constant 0 : index
    %c0_0 = arith.constant 0 : index
    %0 = vector.load %arg1[%c0, %c0_0] : memref<32x1152xbf16, #tpu.memory_space<vmem>>, vector<32x1152xbf16>
    %c0_1 = arith.constant 0 : index
    %c0_2 = arith.constant 0 : index
    %1 = vector.load %arg2[%c0_1, %c0_2] : memref<1152x128xbf16, #tpu.memory_space<vmem>>, vector<1152x128xbf16>
    %cst = arith.constant dense<0.000000e+00> : vector<32x128xf32>
    %2 = tpu.matmul %0, %1, %cst {dimension_numbers = #tpu.dot_dimension_numbers<[1], [0], [0], [1], [0, 0, 1, 1], [], []>} : vector<32x1152xbf16>, vector<1152x128xbf16>, vector<32x128xf32> -> vector<32x128xf32>
    %c0_3 = arith.constant 0 : index
    %c0_4 = arith.constant 0 : index
    %3 = vector.load %arg3[%c0_3, %c0_4] : memref<1x128xf32, #tpu.memory_space<vmem>>, vector<1x128xf32>
    %4 = vector.broadcast %3 : vector<1x128xf32> to vector<32x128xf32>
    %5 = arith.addf %2, %4 : vector<32x128xf32>
    %cst_5 = arith.constant 0.000000e+00 : f32
    %6 = vector.broadcast %cst_5 : f32 to vector<32x128xf32>
    %7 = arith.maximumf %5, %6 : vector<32x128xf32>
    %c0_6 = arith.constant 0 : index
    %c0_7 = arith.constant 0 : index
    %8 = vector.load %arg4[%c0_6, %c0_7] : memref<32x128xf32, #tpu.memory_space<vmem>>, vector<32x128xf32>
    tpu.vector_store %arg4[%c0_6, %c0_7], %7 {strides = array<i32>} : memref<32x128xf32, #tpu.memory_space<vmem>>, vector<32x128xf32>,
    return
  }
  func.func @transform_0(%arg0: i32) -> (i32, i32) {
    %c0_i32 = arith.constant 0 : i32
    %c0_i32_0 = arith.constant 0 : i32
    return %arg0, %c0_i32 : i32, i32
  }
  func.func @transform_1(%arg0: i32) -> (i32, i32) {
    %c0_i32 = arith.constant 0 : i32
    %c0_i32_0 = arith.constant 0 : i32
    %c0_i32_1 = arith.constant 0 : i32
    return %c0_i32, %c0_i32_0 : i32, i32
  }
  func.func @transform_2(%arg0: i32) -> (i32, i32) {
    %c0_i32 = arith.constant 0 : i32
    %c0_i32_0 = arith.constant 0 : i32
    %c0_i32_1 = arith.constant 0 : i32
    return %c0_i32, %c0_i32_0 : i32, i32
  }
  func.func @transform_3(%arg0: i32) -> (i32, i32) {
    %c0_i32 = arith.constant 0 : i32
    %c0_i32_0 = arith.constant 0 : i32
    return %arg0, %c0_i32 : i32, i32
  }
}

module attributes {stable_mosaic.version = 11 : i64} {
  func.func @_matmul_bias_res_kernel(%arg0: i32, %arg1: memref<32x1152xbf16, #tpu.memory_space<vmem>>, %arg2: memref<1152x128xbf16, #tpu.memory_space<vmem>>, %arg3: memref<1x128xf32, #tpu.memory_space<vmem>>, %arg4: memref<32x128xf32, #tpu.memory_space<vmem>>, %arg5: memref<32x128xf32, #tpu.memory_space<vmem>>) attributes {dimension_semantics = [#tpu.dimension_semantics<parallel>], iteration_bounds = array<i64: 1>, scalar_prefetch = 0 : i64, scratch_operands = 0 : i64, tpu.core_type = #tpu.core_type<tc>, window_params = [{transform_indices = @transform_0, window_bounds = array<i64: 32, 1152>}, {pipeline_mode = #tpu.pipeline_mode<synchronous>, transform_indices = @transform_1, window_bounds = array<i64: 1152, 128>}, {pipeline_mode = #tpu.pipeline_mode<synchronous>, transform_indices = @transform_2, window_bounds = array<i64: 1, 128>}, {transform_indices = @transform_3, window_bounds = array<i64: 32, 128>}, {transform_indices = @transform_4, window_bounds = array<i64: 32, 128>}]} {
    %c0 = arith.constant 0 : index
    %c0_0 = arith.constant 0 : index
    %0 = vector.load %arg1[%c0, %c0_0] : memref<32x1152xbf16, #tpu.memory_space<vmem>>, vector<32x1152xbf16>
    %c0_1 = arith.constant 0 : index
    %c0_2 = arith.constant 0 : index
    %1 = vector.load %arg2[%c0_1, %c0_2] : memref<1152x128xbf16, #tpu.memory_space<vmem>>, vector<1152x128xbf16>
    %cst = arith.constant dense<0.000000e+00> : vector<32x128xf32>
    %2 = tpu.matmul %0, %1, %cst {dimension_numbers = #tpu.dot_dimension_numbers<[1], [0], [0], [1], [0, 0, 1, 1], [], []>} : vector<32x1152xbf16>, vector<1152x128xbf16>, vector<32x128xf32> -> vector<32x128xf32>
    %c0_3 = arith.constant 0 : index
    %c0_4 = arith.constant 0 : index
    %3 = vector.load %arg3[%c0_3, %c0_4] : memref<1x128xf32, #tpu.memory_space<vmem>>, vector<1x128xf32>
    %4 = vector.broadcast %3 : vector<1x128xf32> to vector<32x128xf32>
    %5 = arith.addf %2, %4 : vector<32x128xf32>
    %c0_5 = arith.constant 0 : index
    %c0_6 = arith.constant 0 : index
    %6 = vector.load %arg4[%c0_5, %c0_6] : memref<32x128xf32, #tpu.memory_space<vmem>>, vector<32x128xf32>
    %7 = arith.addf %5, %6 : vector<32x128xf32>
    %cst_7 = arith.constant 0.000000e+00 : f32
    %8 = vector.broadcast %cst_7 : f32 to vector<32x128xf32>
    %9 = arith.maximumf %7, %8 : vector<32x128xf32>
    %c0_8 = arith.constant 0 : index
    %c0_9 = arith.constant 0 : index
    %10 = vector.load %arg5[%c0_8, %c0_9] : memref<32x128xf32, #tpu.memory_space<vmem>>, vector<32x128xf32>
    tpu.vector_store %arg5[%c0_8, %c0_9], %9 {strides = array<i32>} : memref<32x128xf32, #tpu.memory_space<vmem>>, vector<32x128xf32>,
    return
  }
  func.func @transform_0(%arg0: i32) -> (i32, i32) {
    %c0_i32 = arith.constant 0 : i32
    %c0_i32_0 = arith.constant 0 : i32
    return %arg0, %c0_i32 : i32, i32
  }
  func.func @transform_1(%arg0: i32) -> (i32, i32) {
    %c0_i32 = arith.constant 0 : i32
    %c0_i32_0 = arith.constant 0 : i32
    %c0_i32_1 = arith.constant 0 : i32
    return %c0_i32, %c0_i32_0 : i32, i32
  }
  func.func @transform_2(%arg0: i32) -> (i32, i32) {
    %c0_i32 = arith.constant 0 : i32
    %c0_i32_0 = arith.constant 0 : i32
    %c0_i32_1 = arith.constant 0 : i32
    return %c0_i32, %c0_i32_0 : i32, i32
  }
  func.func @transform_3(%arg0: i32) -> (i32, i32) {
    %c0_i32 = arith.constant 0 : i32
    %c0_i32_0 = arith.constant 0 : i32
    return %arg0, %c0_i32 : i32, i32
  }
  func.func @transform_4(%arg0: i32) -> (i32, i32) {
    %c0_i32 = arith.constant 0 : i32
    %c0_i32_0 = arith.constant 0 : i32
    return %arg0, %c0_i32 : i32, i32
  }
}

module attributes {stable_mosaic.version = 11 : i64} {
  func.func @_fused_down_kernel(%arg0: i32, %arg1: memref<8x1152xbf16, #tpu.memory_space<vmem>>, %arg2: memref<1152x128xbf16, #tpu.memory_space<vmem>>, %arg3: memref<1x128xf32, #tpu.memory_space<vmem>>, %arg4: memref<128x128xbf16, #tpu.memory_space<vmem>>, %arg5: memref<1x128xf32, #tpu.memory_space<vmem>>, %arg6: memref<8x128xf32, #tpu.memory_space<vmem>>, %arg7: memref<8x128xf32, #tpu.memory_space<vmem>>) attributes {dimension_semantics = [#tpu.dimension_semantics<parallel>], iteration_bounds = array<i64: 1>, scalar_prefetch = 0 : i64, scratch_operands = 0 : i64, tpu.core_type = #tpu.core_type<tc>, window_params = [{transform_indices = @transform_0, window_bounds = array<i64: 8, 1152>}, {pipeline_mode = #tpu.pipeline_mode<synchronous>, transform_indices = @transform_1, window_bounds = array<i64: 1152, 128>}, {pipeline_mode = #tpu.pipeline_mode<synchronous>, transform_indices = @transform_2, window_bounds = array<i64: 1, 128>}, {pipeline_mode = #tpu.pipeline_mode<synchronous>, transform_indices = @transform_3, window_bounds = array<i64: 128, 128>}, {pipeline_mode = #tpu.pipeline_mode<synchronous>, transform_indices = @transform_4, window_bounds = array<i64: 1, 128>}, {transform_indices = @transform_5, window_bounds = array<i64: 8, 128>}, {transform_indices = @transform_6, window_bounds = array<i64: 8, 128>}]} {
    %c0 = arith.constant 0 : index
    %c0_0 = arith.constant 0 : index
    %0 = vector.load %arg1[%c0, %c0_0] : memref<8x1152xbf16, #tpu.memory_space<vmem>>, vector<8x1152xbf16>
    %c0_1 = arith.constant 0 : index
    %c0_2 = arith.constant 0 : index
    %1 = vector.load %arg2[%c0_1, %c0_2] : memref<1152x128xbf16, #tpu.memory_space<vmem>>, vector<1152x128xbf16>
    %cst = arith.constant dense<0.000000e+00> : vector<8x128xf32>
    %2 = tpu.matmul %0, %1, %cst {dimension_numbers = #tpu.dot_dimension_numbers<[1], [0], [0], [1], [0, 0, 1, 1], [], []>} : vector<8x1152xbf16>, vector<1152x128xbf16>, vector<8x128xf32> -> vector<8x128xf32>
    %c0_3 = arith.constant 0 : index
    %c0_4 = arith.constant 0 : index
    %3 = vector.load %arg3[%c0_3, %c0_4] : memref<1x128xf32, #tpu.memory_space<vmem>>, vector<1x128xf32>
    %4 = vector.broadcast %3 : vector<1x128xf32> to vector<8x128xf32>
    %5 = arith.addf %2, %4 : vector<8x128xf32>
    %cst_5 = arith.constant 0.000000e+00 : f32
    %6 = vector.broadcast %cst_5 : f32 to vector<8x128xf32>
    %7 = arith.maximumf %5, %6 : vector<8x128xf32>
    %c0_6 = arith.constant 0 : index
    %c0_7 = arith.constant 0 : index
    %8 = vector.load %arg6[%c0_6, %c0_7] : memref<8x128xf32, #tpu.memory_space<vmem>>, vector<8x128xf32>
    tpu.vector_store %arg6[%c0_6, %c0_7], %7 {strides = array<i32>} : memref<8x128xf32, #tpu.memory_space<vmem>>, vector<8x128xf32>,
    %9 = vector.extract_strided_slice %0 {offsets = [0, 512], sizes = [8, 128], strides = [1, 1]} : vector<8x1152xbf16> to vector<8x128xbf16>
    %c0_8 = arith.constant 0 : index
    %c0_9 = arith.constant 0 : index
    %10 = vector.load %arg4[%c0_8, %c0_9] : memref<128x128xbf16, #tpu.memory_space<vmem>>, vector<128x128xbf16>
    %cst_10 = arith.constant dense<0.000000e+00> : vector<8x128xf32>
    %11 = tpu.matmul %9, %10, %cst_10 {dimension_numbers = #tpu.dot_dimension_numbers<[1], [0], [0], [1], [0, 0, 1, 1], [], []>} : vector<8x128xbf16>, vector<128x128xbf16>, vector<8x128xf32> -> vector<8x128xf32>
    %c0_11 = arith.constant 0 : index
    %c0_12 = arith.constant 0 : index
    %12 = vector.load %arg5[%c0_11, %c0_12] : memref<1x128xf32, #tpu.memory_space<vmem>>, vector<1x128xf32>
    %13 = vector.broadcast %12 : vector<1x128xf32> to vector<8x128xf32>
    %14 = arith.addf %11, %13 : vector<8x128xf32>
    %c0_13 = arith.constant 0 : index
    %c0_14 = arith.constant 0 : index
    %15 = vector.load %arg7[%c0_13, %c0_14] : memref<8x128xf32, #tpu.memory_space<vmem>>, vector<8x128xf32>
    tpu.vector_store %arg7[%c0_13, %c0_14], %14 {strides = array<i32>} : memref<8x128xf32, #tpu.memory_space<vmem>>, vector<8x128xf32>,
    return
  }
  func.func @transform_0(%arg0: i32) -> (i32, i32) {
    %c0_i32 = arith.constant 0 : i32
    %c0_i32_0 = arith.constant 0 : i32
    return %arg0, %c0_i32 : i32, i32
  }
  func.func @transform_1(%arg0: i32) -> (i32, i32) {
    %c0_i32 = arith.constant 0 : i32
    %c0_i32_0 = arith.constant 0 : i32
    %c0_i32_1 = arith.constant 0 : i32
    return %c0_i32, %c0_i32_0 : i32, i32
  }
  func.func @transform_2(%arg0: i32) -> (i32, i32) {
    %c0_i32 = arith.constant 0 : i32
    %c0_i32_0 = arith.constant 0 : i32
    %c0_i32_1 = arith.constant 0 : i32
    return %c0_i32, %c0_i32_0 : i32, i32
  }
  func.func @transform_3(%arg0: i32) -> (i32, i32) {
    %c0_i32 = arith.constant 0 : i32
    %c0_i32_0 = arith.constant 0 : i32
    %c0_i32_1 = arith.constant 0 : i32
    return %c0_i32, %c0_i32_0 : i32, i32
  }
  func.func @transform_4(%arg0: i32) -> (i32, i32) {
    %c0_i32 = arith.constant 0 : i32
    %c0_i32_0 = arith.constant 0 : i32
    %c0_i32_1 = arith.constant 0 : i32
    return %c0_i32, %c0_i32_0 : i32, i32
  }
  func.func @transform_5(%arg0: i32) -> (i32, i32) {
    %c0_i32 = arith.constant 0 : i32
    %c0_i32_0 = arith.constant 0 : i32
    return %arg0, %c0_i32 : i32, i32
  }
  func.func @transform_6(%arg0: i32) -> (i32, i32) {
    %c0_i32 = arith.constant 0 : i32
    %c0_i32_0 = arith.constant 0 : i32
    return %arg0, %c0_i32 : i32, i32
  }
}

module attributes {stable_mosaic.version = 11 : i64} {
  func.func @_matmul_bias_kernel(%arg0: i32, %arg1: memref<8x1152xbf16, #tpu.memory_space<vmem>>, %arg2: memref<1152x128xbf16, #tpu.memory_space<vmem>>, %arg3: memref<1x128xf32, #tpu.memory_space<vmem>>, %arg4: memref<8x128xf32, #tpu.memory_space<vmem>>) attributes {dimension_semantics = [#tpu.dimension_semantics<parallel>], iteration_bounds = array<i64: 1>, scalar_prefetch = 0 : i64, scratch_operands = 0 : i64, tpu.core_type = #tpu.core_type<tc>, window_params = [{transform_indices = @transform_0, window_bounds = array<i64: 8, 1152>}, {pipeline_mode = #tpu.pipeline_mode<synchronous>, transform_indices = @transform_1, window_bounds = array<i64: 1152, 128>}, {pipeline_mode = #tpu.pipeline_mode<synchronous>, transform_indices = @transform_2, window_bounds = array<i64: 1, 128>}, {transform_indices = @transform_3, window_bounds = array<i64: 8, 128>}]} {
    %c0 = arith.constant 0 : index
    %c0_0 = arith.constant 0 : index
    %0 = vector.load %arg1[%c0, %c0_0] : memref<8x1152xbf16, #tpu.memory_space<vmem>>, vector<8x1152xbf16>
    %c0_1 = arith.constant 0 : index
    %c0_2 = arith.constant 0 : index
    %1 = vector.load %arg2[%c0_1, %c0_2] : memref<1152x128xbf16, #tpu.memory_space<vmem>>, vector<1152x128xbf16>
    %cst = arith.constant dense<0.000000e+00> : vector<8x128xf32>
    %2 = tpu.matmul %0, %1, %cst {dimension_numbers = #tpu.dot_dimension_numbers<[1], [0], [0], [1], [0, 0, 1, 1], [], []>} : vector<8x1152xbf16>, vector<1152x128xbf16>, vector<8x128xf32> -> vector<8x128xf32>
    %c0_3 = arith.constant 0 : index
    %c0_4 = arith.constant 0 : index
    %3 = vector.load %arg3[%c0_3, %c0_4] : memref<1x128xf32, #tpu.memory_space<vmem>>, vector<1x128xf32>
    %4 = vector.broadcast %3 : vector<1x128xf32> to vector<8x128xf32>
    %5 = arith.addf %2, %4 : vector<8x128xf32>
    %cst_5 = arith.constant 0.000000e+00 : f32
    %6 = vector.broadcast %cst_5 : f32 to vector<8x128xf32>
    %7 = arith.maximumf %5, %6 : vector<8x128xf32>
    %c0_6 = arith.constant 0 : index
    %c0_7 = arith.constant 0 : index
    %8 = vector.load %arg4[%c0_6, %c0_7] : memref<8x128xf32, #tpu.memory_space<vmem>>, vector<8x128xf32>
    tpu.vector_store %arg4[%c0_6, %c0_7], %7 {strides = array<i32>} : memref<8x128xf32, #tpu.memory_space<vmem>>, vector<8x128xf32>,
    return
  }
  func.func @transform_0(%arg0: i32) -> (i32, i32) {
    %c0_i32 = arith.constant 0 : i32
    %c0_i32_0 = arith.constant 0 : i32
    return %arg0, %c0_i32 : i32, i32
  }
  func.func @transform_1(%arg0: i32) -> (i32, i32) {
    %c0_i32 = arith.constant 0 : i32
    %c0_i32_0 = arith.constant 0 : i32
    %c0_i32_1 = arith.constant 0 : i32
    return %c0_i32, %c0_i32_0 : i32, i32
  }
  func.func @transform_2(%arg0: i32) -> (i32, i32) {
    %c0_i32 = arith.constant 0 : i32
    %c0_i32_0 = arith.constant 0 : i32
    %c0_i32_1 = arith.constant 0 : i32
    return %c0_i32, %c0_i32_0 : i32, i32
  }
  func.func @transform_3(%arg0: i32) -> (i32, i32) {
    %c0_i32 = arith.constant 0 : i32
    %c0_i32_0 = arith.constant 0 : i32
    return %arg0, %c0_i32 : i32, i32
  }
}

module attributes {stable_mosaic.version = 11 : i64} {
  func.func @_matmul_bias_res_kernel(%arg0: i32, %arg1: memref<8x1152xbf16, #tpu.memory_space<vmem>>, %arg2: memref<1152x128xbf16, #tpu.memory_space<vmem>>, %arg3: memref<1x128xf32, #tpu.memory_space<vmem>>, %arg4: memref<8x128xf32, #tpu.memory_space<vmem>>, %arg5: memref<8x128xf32, #tpu.memory_space<vmem>>) attributes {dimension_semantics = [#tpu.dimension_semantics<parallel>], iteration_bounds = array<i64: 1>, scalar_prefetch = 0 : i64, scratch_operands = 0 : i64, tpu.core_type = #tpu.core_type<tc>, window_params = [{transform_indices = @transform_0, window_bounds = array<i64: 8, 1152>}, {pipeline_mode = #tpu.pipeline_mode<synchronous>, transform_indices = @transform_1, window_bounds = array<i64: 1152, 128>}, {pipeline_mode = #tpu.pipeline_mode<synchronous>, transform_indices = @transform_2, window_bounds = array<i64: 1, 128>}, {transform_indices = @transform_3, window_bounds = array<i64: 8, 128>}, {transform_indices = @transform_4, window_bounds = array<i64: 8, 128>}]} {
    %c0 = arith.constant 0 : index
    %c0_0 = arith.constant 0 : index
    %0 = vector.load %arg1[%c0, %c0_0] : memref<8x1152xbf16, #tpu.memory_space<vmem>>, vector<8x1152xbf16>
    %c0_1 = arith.constant 0 : index
    %c0_2 = arith.constant 0 : index
    %1 = vector.load %arg2[%c0_1, %c0_2] : memref<1152x128xbf16, #tpu.memory_space<vmem>>, vector<1152x128xbf16>
    %cst = arith.constant dense<0.000000e+00> : vector<8x128xf32>
    %2 = tpu.matmul %0, %1, %cst {dimension_numbers = #tpu.dot_dimension_numbers<[1], [0], [0], [1], [0, 0, 1, 1], [], []>} : vector<8x1152xbf16>, vector<1152x128xbf16>, vector<8x128xf32> -> vector<8x128xf32>
    %c0_3 = arith.constant 0 : index
    %c0_4 = arith.constant 0 : index
    %3 = vector.load %arg3[%c0_3, %c0_4] : memref<1x128xf32, #tpu.memory_space<vmem>>, vector<1x128xf32>
    %4 = vector.broadcast %3 : vector<1x128xf32> to vector<8x128xf32>
    %5 = arith.addf %2, %4 : vector<8x128xf32>
    %c0_5 = arith.constant 0 : index
    %c0_6 = arith.constant 0 : index
    %6 = vector.load %arg4[%c0_5, %c0_6] : memref<8x128xf32, #tpu.memory_space<vmem>>, vector<8x128xf32>
    %7 = arith.addf %5, %6 : vector<8x128xf32>
    %cst_7 = arith.constant 0.000000e+00 : f32
    %8 = vector.broadcast %cst_7 : f32 to vector<8x128xf32>
    %9 = arith.maximumf %7, %8 : vector<8x128xf32>
    %c0_8 = arith.constant 0 : index
    %c0_9 = arith.constant 0 : index
    %10 = vector.load %arg5[%c0_8, %c0_9] : memref<8x128xf32, #tpu.memory_space<vmem>>, vector<8x128xf32>
    tpu.vector_store %arg5[%c0_8, %c0_9], %9 {strides = array<i32>} : memref<8x128xf32, #tpu.memory_space<vmem>>, vector<8x128xf32>,
    return
  }
  func.func @transform_0(%arg0: i32) -> (i32, i32) {
    %c0_i32 = arith.constant 0 : i32
    %c0_i32_0 = arith.constant 0 : i32
    return %arg0, %c0_i32 : i32, i32
  }
  func.func @transform_1(%arg0: i32) -> (i32, i32) {
    %c0_i32 = arith.constant 0 : i32
    %c0_i32_0 = arith.constant 0 : i32
    %c0_i32_1 = arith.constant 0 : i32
    return %c0_i32, %c0_i32_0 : i32, i32
  }
  func.func @transform_2(%arg0: i32) -> (i32, i32) {
    %c0_i32 = arith.constant 0 : i32
    %c0_i32_0 = arith.constant 0 : i32
    %c0_i32_1 = arith.constant 0 : i32
    return %c0_i32, %c0_i32_0 : i32, i32
  }
  func.func @transform_3(%arg0: i32) -> (i32, i32) {
    %c0_i32 = arith.constant 0 : i32
    %c0_i32_0 = arith.constant 0 : i32
    return %arg0, %c0_i32 : i32, i32
  }
  func.func @transform_4(%arg0: i32) -> (i32, i32) {
    %c0_i32 = arith.constant 0 : i32
    %c0_i32_0 = arith.constant 0 : i32
    return %arg0, %c0_i32 : i32, i32
  }
}

</mosaic_0001>

<llo_original>
// kernel: _lambda_.19
$region0: #{_lambda_.19}
  #allocation0 [shape = 'u32[]', space=smem, size = 0x4, offset = 0x4, fixed_abs, tag = 'smem constant byte address 0x4 - core index']
  #allocation1 [shape = 'u32[144,128]{1,0:T(1,128)}', space=vmem, size = 0x12000, scoped, tag = 'internal scratch']
  %s0 = inlined_call_operand.vmem [shape: f32[32,9,128], index: 0, kind: input, shape index: {}]
  %s1 = inlined_call_operand.vmem [shape: f32[32,128], index: 1, kind: output, shape index: {}]
  %s2 = sld [smem:[#allocation0]]
  $region14: #{_lambda_.19} parent=0
    _
  %s4 = ssub.s32 1, %s2
  %s5 = scalar_select 0, %s4, %s2
  // Predicated region
  $region2: #{_lambda_.19} parent=0 // pred_check
    _
  $region3: #{_lambda_.19} parent=0 // pred_check_branch
    %7 = sbr.rel (0) target = $region5
  $region4: #{_lambda_.19} parent=0 // pred_region
    _
  $region5: #{_lambda_.19} parent=0 // pred_fallthru
    _
  %v8 = vld [vmem:[%s0] sm:$0xff]
  %v9 = vld [vmem:[%s0 + $0x8] sm:$0x1]
  %v10 = vld [vmem:[%s0 + $0x10] sm:$0xff]
  %v11 = vld [vmem:[%s0 + $0x18] sm:$0x1]
  %v12 = vld [vmem:[%s0 + $0x20] sm:$0xff]
  %v13 = vld [vmem:[%s0 + $0x28] sm:$0x1]
  %v14 = vld [vmem:[%s0 + $0x30] sm:$0xff]
  %v15 = vld [vmem:[%s0 + $0x38] sm:$0x1]
  %v16 = vld [vmem:[%s0 + $0x40] sm:$0xff]
  %v17 = vld [vmem:[%s0 + $0x48] sm:$0x1]
  %v18 = vld [vmem:[%s0 + $0x50] sm:$0xff]
  %v19 = vld [vmem:[%s0 + $0x58] sm:$0x1]
  %v20 = vld [vmem:[%s0 + $0x60] sm:$0xff]
  %v21 = vld [vmem:[%s0 + $0x68] sm:$0x1]
  %v22 = vld [vmem:[%s0 + $0x70] sm:$0xff]
  %v23 = vld [vmem:[%s0 + $0x78] sm:$0x1]
  %v24 = vld [vmem:[%s0 + $0x80] sm:$0xff]
  %v25 = vld [vmem:[%s0 + $0x88] sm:$0x1]
  %v26 = vld [vmem:[%s0 + $0x90] sm:$0xff]
  %v27 = vld [vmem:[%s0 + $0x98] sm:$0x1]
  %v28 = vld [vmem:[%s0 + $0xa0] sm:$0xff]
  %v29 = vld [vmem:[%s0 + $0xa8] sm:$0x1]
  %v30 = vld [vmem:[%s0 + $0xb0] sm:$0xff]
  %v31 = vld [vmem:[%s0 + $0xb8] sm:$0x1]
  %v32 = vld [vmem:[%s0 + $0xc0] sm:$0xff]
  %v33 = vld [vmem:[%s0 + $0xc8] sm:$0x1]
  %v34 = vld [vmem:[%s0 + $0xd0] sm:$0xff]
  %v35 = vld [vmem:[%s0 + $0xd8] sm:$0x1]
  %v36 = vld [vmem:[%s0 + $0xe0] sm:$0xff]
  %v37 = vld [vmem:[%s0 + $0xe8] sm:$0x1]
  %v38 = vld [vmem:[%s0 + $0xf0] sm:$0xff]
  %v39 = vld [vmem:[%s0 + $0xf8] sm:$0x1]
  %v40 = vld [vmem:[%s0 + $0x100] sm:$0xff]
  %v41 = vld [vmem:[%s0 + $0x108] sm:$0x1]
  %v42 = vld [vmem:[%s0 + $0x110] sm:$0xff]
  %v43 = vld [vmem:[%s0 + $0x118] sm:$0x1]
  %v44 = vld [vmem:[%s0 + $0x120] sm:$0xff]
  %v45 = vld [vmem:[%s0 + $0x128] sm:$0x1]
  %v46 = vld [vmem:[%s0 + $0x130] sm:$0xff]
  %v47 = vld [vmem:[%s0 + $0x138] sm:$0x1]
  %v48 = vld [vmem:[%s0 + $0x140] sm:$0xff]
  %v49 = vld [vmem:[%s0 + $0x148] sm:$0x1]
  %v50 = vld [vmem:[%s0 + $0x150] sm:$0xff]
  %v51 = vld [vmem:[%s0 + $0x158] sm:$0x1]
  %v52 = vld [vmem:[%s0 + $0x160] sm:$0xff]
  %v53 = vld [vmem:[%s0 + $0x168] sm:$0x1]
  %v54 = vld [vmem:[%s0 + $0x170] sm:$0xff]
  %v55 = vld [vmem:[%s0 + $0x178] sm:$0x1]
  %v56 = vld [vmem:[%s0 + $0x180] sm:$0xff]
  %v57 = vld [vmem:[%s0 + $0x188] sm:$0x1]
  %v58 = vld [vmem:[%s0 + $0x190] sm:$0xff]
  %v59 = vld [vmem:[%s0 + $0x198] sm:$0x1]
  %v60 = vld [vmem:[%s0 + $0x1a0] sm:$0xff]
  %v61 = vld [vmem:[%s0 + $0x1a8] sm:$0x1]
  %v62 = vld [vmem:[%s0 + $0x1b0] sm:$0xff]
  %v63 = vld [vmem:[%s0 + $0x1b8] sm:$0x1]
  %v64 = vld [vmem:[%s0 + $0x1c0] sm:$0xff]
  %v65 = vld [vmem:[%s0 + $0x1c8] sm:$0x1]
  %v66 = vld [vmem:[%s0 + $0x1d0] sm:$0xff]
  %v67 = vld [vmem:[%s0 + $0x1d8] sm:$0x1]
  %v68 = vld [vmem:[%s0 + $0x1e0] sm:$0xff]
  %v69 = vld [vmem:[%s0 + $0x1e8] sm:$0x1]
  %v70 = vld [vmem:[%s0 + $0x1f0] sm:$0xff]
  %v71 = vld [vmem:[%s0 + $0x1f8] sm:$0x1]
  %vm72 = vcmask 1040384
  %v73 = vsel %vm72, %v9, -inf
  %v74 = vmax.f32 %v8, %v73
  %v75 = vrot.slane %v74, 4
  %v76 = vmax.f32 %v74, %v75
  %v77 = vrot.slane %v76, 2
  %v78 = vmax.f32 %v76, %v77
  %v79 = vrot.slane %v78, 1
  %v80 = vmax.f32 %v78, %v79
  %v81 = vsel %vm72, %v11, -inf
  %v82 = vmax.f32 %v10, %v81
  %v83 = vrot.slane %v82, 4
  %v84 = vmax.f32 %v82, %v83
  %v85 = vrot.slane %v84, 2
  %v86 = vmax.f32 %v84, %v85
  %v87 = vrot.slane %v86, 1
  %v88 = vmax.f32 %v86, %v87
  %v89 = vsel %vm72, %v13, -inf
  %v90 = vmax.f32 %v12, %v89
  %v91 = vrot.slane %v90, 4
  %v92 = vmax.f32 %v90, %v91
  %v93 = vrot.slane %v92, 2
  %v94 = vmax.f32 %v92, %v93
  %v95 = vrot.slane %v94, 1
  %v96 = vmax.f32 %v94, %v95
  %v97 = vsel %vm72, %v15, -inf
  %v98 = vmax.f32 %v14, %v97
  %v99 = vrot.slane %v98, 4
  %v100 = vmax.f32 %v98, %v99
  %v101 = vrot.slane %v100, 2
  %v102 = vmax.f32 %v100, %v101
  %v103 = vrot.slane %v102, 1
  %v104 = vmax.f32 %v102, %v103
  %v105 = vsel %vm72, %v17, -inf
  %v106 = vmax.f32 %v16, %v105
  %v107 = vrot.slane %v106, 4
  %v108 = vmax.f32 %v106, %v107
  %v109 = vrot.slane %v108, 2
  %v110 = vmax.f32 %v108, %v109
  %v111 = vrot.slane %v110, 1
  %v112 = vmax.f32 %v110, %v111
  %v113 = vsel %vm72, %v19, -inf
  %v114 = vmax.f32 %v18, %v113
  %v115 = vrot.slane %v114, 4
  %v116 = vmax.f32 %v114, %v115
  %v117 = vrot.slane %v116, 2
  %v118 = vmax.f32 %v116, %v117
  %v119 = vrot.slane %v118, 1
  %v120 = vmax.f32 %v118, %v119
  %v121 = vsel %vm72, %v21, -inf
  %v122 = vmax.f32 %v20, %v121
  %v123 = vrot.slane %v122, 4
  %v124 = vmax.f32 %v122, %v123
  %v125 = vrot.slane %v124, 2
  %v126 = vmax.f32 %v124, %v125
  %v127 = vrot.slane %v126, 1
  %v128 = vmax.f32 %v126, %v127
  %v129 = vsel %vm72, %v23, -inf
  %v130 = vmax.f32 %v22, %v129
  %v131 = vrot.slane %v130, 4
  %v132 = vmax.f32 %v130, %v131
  %v133 = vrot.slane %v132, 2
  %v134 = vmax.f32 %v132, %v133
  %v135 = vrot.slane %v134, 1
  %v136 = vmax.f32 %v134, %v135
  %v137 = vsel %vm72, %v25, -inf
  %v138 = vmax.f32 %v24, %v137
  %v139 = vrot.slane %v138, 4
  %v140 = vmax.f32 %v138, %v139
  %v141 = vrot.slane %v140, 2
  %v142 = vmax.f32 %v140, %v141
  %v143 = vrot.slane %v142, 1
  %v144 = vmax.f32 %v142, %v143
  %v145 = vsel %vm72, %v27, -inf
  %v146 = vmax.f32 %v26, %v145
  %v147 = vrot.slane %v146, 4
  %v148 = vmax.f32 %v146, %v147
  %v149 = vrot.slane %v148, 2
  %v150 = vmax.f32 %v148, %v149
  %v151 = vrot.slane %v150, 1
  %v152 = vmax.f32 %v150, %v151
  %v153 = vsel %vm72, %v29, -inf
  %v154 = vmax.f32 %v28, %v153
  %v155 = vrot.slane %v154, 4
  %v156 = vmax.f32 %v154, %v155
  %v157 = vrot.slane %v156, 2
  %v158 = vmax.f32 %v156, %v157
  %v159 = vrot.slane %v158, 1
  %v160 = vmax.f32 %v158, %v159
  %v161 = vsel %vm72, %v31, -inf
  %v162 = vmax.f32 %v30, %v161
  %v163 = vrot.slane %v162, 4
  %v164 = vmax.f32 %v162, %v163
  %v165 = vrot.slane %v164, 2
  %v166 = vmax.f32 %v164, %v165
  %v167 = vrot.slane %v166, 1
  %v168 = vmax.f32 %v166, %v167
  %v169 = vsel %vm72, %v33, -inf
  %v170 = vmax.f32 %v32, %v169
  %v171 = vrot.slane %v170, 4
  %v172 = vmax.f32 %v170, %v171
  %v173 = vrot.slane %v172, 2
  %v174 = vmax.f32 %v172, %v173
  %v175 = vrot.slane %v174, 1
  %v176 = vmax.f32 %v174, %v175
  %v177 = vsel %vm72, %v35, -inf
  %v178 = vmax.f32 %v34, %v177
  %v179 = vrot.slane %v178, 4
  %v180 = vmax.f32 %v178, %v179
  %v181 = vrot.slane %v180, 2
  %v182 = vmax.f32 %v180, %v181
  %v183 = vrot.slane %v182, 1
  %v184 = vmax.f32 %v182, %v183
  %v185 = vsel %vm72, %v37, -inf
  %v186 = vmax.f32 %v36, %v185
  %v187 = vrot.slane %v186, 4
  %v188 = vmax.f32 %v186, %v187
  %v189 = vrot.slane %v188, 2
  %v190 = vmax.f32 %v188, %v189
  %v191 = vrot.slane %v190, 1
  %v192 = vmax.f32 %v190, %v191
  %v193 = vsel %vm72, %v39, -inf
  %v194 = vmax.f32 %v38, %v193
  %v195 = vrot.slane %v194, 4
  %v196 = vmax.f32 %v194, %v195
  %v197 = vrot.slane %v196, 2
  %v198 = vmax.f32 %v196, %v197
  %v199 = vrot.slane %v198, 1
  %v200 = vmax.f32 %v198, %v199
  %v201 = vsel %vm72, %v41, -inf
  %v202 = vmax.f32 %v40, %v201
  %v203 = vrot.slane %v202, 4
  %v204 = vmax.f32 %v202, %v203
  %v205 = vrot.slane %v204, 2
  %v206 = vmax.f32 %v204, %v205
  %v207 = vrot.slane %v206, 1
  %v208 = vmax.f32 %v206, %v207
  %v209 = vsel %vm72, %v43, -inf
  %v210 = vmax.f32 %v42, %v209
  %v211 = vrot.slane %v210, 4
  %v212 = vmax.f32 %v210, %v211
  %v213 = vrot.slane %v212, 2
  %v214 = vmax.f32 %v212, %v213
  %v215 = vrot.slane %v214, 1
  %v216 = vmax.f32 %v214, %v215
  %v217 = vsel %vm72, %v45, -inf
  %v218 = vmax.f32 %v44, %v217
  %v219 = vrot.slane %v218, 4
  %v220 = vmax.f32 %v218, %v219
  %v221 = vrot.slane %v220, 2
  %v222 = vmax.f32 %v220, %v221
  %v223 = vrot.slane %v222, 1
  %v224 = vmax.f32 %v222, %v223
  %v225 = vsel %vm72, %v47, -inf
  %v226 = vmax.f32 %v46, %v225
  %v227 = vrot.slane %v226, 4
  %v228 = vmax.f32 %v226, %v227
  %v229 = vrot.slane %v228, 2
  %v230 = vmax.f32 %v228, %v229
  %v231 = vrot.slane %v230, 1
  %v232 = vmax.f32 %v230, %v231
  %v233 = vsel %vm72, %v49, -inf
  %v234 = vmax.f32 %v48, %v233
  %v235 = vrot.slane %v234, 4
  %v236 = vmax.f32 %v234, %v235
  %v237 = vrot.slane %v236, 2
  %v238 = vmax.f32 %v236, %v237
  %v239 = vrot.slane %v238, 1
  %v240 = vmax.f32 %v238, %v239
  %v241 = vsel %vm72, %v51, -inf
  %v242 = vmax.f32 %v50, %v241
  %v243 = vrot.slane %v242, 4
  %v244 = vmax.f32 %v242, %v243
  %v245 = vrot.slane %v244, 2
  %v246 = vmax.f32 %v244, %v245
  %v247 = vrot.slane %v246, 1
  %v248 = vmax.f32 %v246, %v247
  %v249 = vsel %vm72, %v53, -inf
  %v250 = vmax.f32 %v52, %v249
  %v251 = vrot.slane %v250, 4
  %v252 = vmax.f32 %v250, %v251
  %v253 = vrot.slane %v252, 2
  %v254 = vmax.f32 %v252, %v253
  %v255 = vrot.slane %v254, 1
  %v256 = vmax.f32 %v254, %v255
  %v257 = vsel %vm72, %v55, -inf
  %v258 = vmax.f32 %v54, %v257
  %v259 = vrot.slane %v258, 4
  %v260 = vmax.f32 %v258, %v259
  %v261 = vrot.slane %v260, 2
  %v262 = vmax.f32 %v260, %v261
  %v263 = vrot.slane %v262, 1
  %v264 = vmax.f32 %v262, %v263
  %v265 = vsel %vm72, %v57, -inf
  %v266 = vmax.f32 %v56, %v265
  %v267 = vrot.slane %v266, 4
  %v268 = vmax.f32 %v266, %v267
  %v269 = vrot.slane %v268, 2
  %v270 = vmax.f32 %v268, %v269
  %v271 = vrot.slane %v270, 1
  %v272 = vmax.f32 %v270, %v271
  %v273 = vsel %vm72, %v59, -inf
  %v274 = vmax.f32 %v58, %v273
  %v275 = vrot.slane %v274, 4
  %v276 = vmax.f32 %v274, %v275
  %v277 = vrot.slane %v276, 2
  %v278 = vmax.f32 %v276, %v277
  %v279 = vrot.slane %v278, 1
  %v280 = vmax.f32 %v278, %v279
  %v281 = vsel %vm72, %v61, -inf
  %v282 = vmax.f32 %v60, %v281
  %v283 = vrot.slane %v282, 4
  %v284 = vmax.f32 %v282, %v283
  %v285 = vrot.slane %v284, 2
  %v286 = vmax.f32 %v284, %v285
  %v287 = vrot.slane %v286, 1
  %v288 = vmax.f32 %v286, %v287
  %v289 = vsel %vm72, %v63, -inf
  %v290 = vmax.f32 %v62, %v289
  %v291 = vrot.slane %v290, 4
  %v292 = vmax.f32 %v290, %v291
  %v293 = vrot.slane %v292, 2
  %v294 = vmax.f32 %v292, %v293
  %v295 = vrot.slane %v294, 1
  %v296 = vmax.f32 %v294, %v295
  %v297 = vsel %vm72, %v65, -inf
  %v298 = vmax.f32 %v64, %v297
  %v299 = vrot.slane %v298, 4
  %v300 = vmax.f32 %v298, %v299
  %v301 = vrot.slane %v300, 2
  %v302 = vmax.f32 %v300, %v301
  %v303 = vrot.slane %v302, 1
  %v304 = vmax.f32 %v302, %v303
  %v305 = vsel %vm72, %v67, -inf
  %v306 = vmax.f32 %v66, %v305
  %v307 = vrot.slane %v306, 4
  %v308 = vmax.f32 %v306, %v307
  %v309 = vrot.slane %v308, 2
  %v310 = vmax.f32 %v308, %v309
  %v311 = vrot.slane %v310, 1
  %v312 = vmax.f32 %v310, %v311
  %v313 = vsel %vm72, %v69, -inf
  %v314 = vmax.f32 %v68, %v313
  %v315 = vrot.slane %v314, 4
  %v316 = vmax.f32 %v314, %v315
  %v317 = vrot.slane %v316, 2
  %v318 = vmax.f32 %v316, %v317
  %v319 = vrot.slane %v318, 1
  %v320 = vmax.f32 %v318, %v319
  %v321 = vsel %vm72, %v71, -inf
  %v322 = vmax.f32 %v70, %v321
  %v323 = vrot.slane %v322, 4
  %v324 = vmax.f32 %v322, %v323
  %v325 = vrot.slane %v324, 2
  %v326 = vmax.f32 %v324, %v325
  %v327 = vrot.slane %v326, 1
  %v328 = vmax.f32 %v326, %v327
  %vm361 = vcmask 1041409
  %v362 = vsel %vm361, %v88, %v80
  %vm363 = vcmask 1042434
  %v364 = vsel %vm363, %v96, %v362
  %vm365 = vcmask 1043459
  %v366 = vsel %vm365, %v104, %v364
  %vm367 = vcmask 1044484
  %v368 = vsel %vm367, %v112, %v366
  %vm369 = vcmask 1045509
  %v370 = vsel %vm369, %v120, %v368
  %vm371 = vcmask 1046534
  %v372 = vsel %vm371, %v128, %v370
  %vm373 = vcmask 1047559
  %v374 = vsel %vm373, %v136, %v372
  %v375 = vsel %vm361, %v152, %v144
  %v376 = vsel %vm363, %v160, %v375
  %v377 = vsel %vm365, %v168, %v376
  %v378 = vsel %vm367, %v176, %v377
  %v379 = vsel %vm369, %v184, %v378
  %v380 = vsel %vm371, %v192, %v379
  %v381 = vsel %vm373, %v200, %v380
  %v382 = vsel %vm361, %v216, %v208
  %v383 = vsel %vm363, %v224, %v382
  %v384 = vsel %vm365, %v232, %v383
  %v385 = vsel %vm367, %v240, %v384
  %v386 = vsel %vm369, %v248, %v385
  %v387 = vsel %vm371, %v256, %v386
  %v388 = vsel %vm373, %v264, %v387
  %v389 = vsel %vm361, %v280, %v272
  %v390 = vsel %vm363, %v288, %v389
  %v391 = vsel %vm365, %v296, %v390
  %v392 = vsel %vm367, %v304, %v391
  %v393 = vsel %vm369, %v312, %v392
  %v394 = vsel %vm371, %v320, %v393
  %v395 = vsel %vm373, %v328, %v394
  %400 = vst [vmem:[%s1] sm:$0xff] %v374
  %401 = vst [vmem:[%s1 + $0x8] sm:$0xff] %v381
  %402 = vst [vmem:[%s1 + $0x10] sm:$0xff] %v388
  %403 = vst [vmem:[%s1 + $0x18] sm:$0xff] %v395
  // Predicated region
  $region6: #{_lambda_.19} parent=0 // pred_check
    _
  $region7: #{_lambda_.19} parent=0 // pred_check_branch
    %405 = sbr.rel (0) target = $region9
  $region8: #{_lambda_.19} parent=0 // pred_region
    _
  $region9: #{_lambda_.19} parent=0 // pred_fallthru
    _
  // Predicated region
  $region10: #{_lambda_.19} parent=0 // pred_check
    _
  $region11: #{_lambda_.19} parent=0 // pred_check_branch
    %407 = sbr.rel (0) target = $region13
  $region12: #{_lambda_.19} parent=0 // pred_region
    _
  $region13: #{_lambda_.19} parent=0 // pred_fallthru
    _

// kernel: _lambda_.20
$region0: #{_lambda_.20}
  #allocation0 [shape = 'u32[]', space=smem, size = 0x4, offset = 0x4, fixed_abs, tag = 'smem constant byte address 0x4 - core index']
  #allocation1 [shape = 'u32[144,128]{1,0:T(1,128)}', space=vmem, size = 0x12000, scoped, tag = 'internal scratch']
  %s0 = inlined_call_operand.vmem [shape: bf16[32,1152], index: 0, kind: input, shape index: {}]
  %s1 = inlined_call_operand.vmem [shape: bf16[1152,128], index: 1, kind: input, shape index: {}]
  %s2 = inlined_call_operand.vmem [shape: f32[1,128], index: 2, kind: input, shape index: {}]
  %s3 = inlined_call_operand.vmem [shape: f32[32,128], index: 3, kind: output, shape index: {}]
  %s4 = sld [smem:[#allocation0]]
  $region22: #{_lambda_.20} parent=0
    _
  %s6 = ssub.s32 1, %s4
  %s7 = scalar_select 0, %s6, %s4
  // Predicated region
  $region2: #{_lambda_.20} parent=0 // pred_check
    _
  $region3: #{_lambda_.20} parent=0 // pred_check_branch
    %9 = sbr.rel (0) target = $region5
  $region4: #{_lambda_.20} parent=0 // pred_region
    _
  $region5: #{_lambda_.20} parent=0 // pred_fallthru
    _
  // Predicated region
  $region6: #{_lambda_.20} parent=0 // pred_check
    _
  $region7: #{_lambda_.20} parent=0 // pred_check_branch
    %11 = sbr.rel (0) target = $region9
  $region8: #{_lambda_.20} parent=0 // pred_region
    _
  $region9: #{_lambda_.20} parent=0 // pred_fallthru
    _
  // Predicated region
  $region10: #{_lambda_.20} parent=0 // pred_check
    _
  $region11: #{_lambda_.20} parent=0 // pred_check_branch
    %13 = sbr.rel (0) target = $region13
  $region12: #{_lambda_.20} parent=0 // pred_region
    _
  $region13: #{_lambda_.20} parent=0 // pred_fallthru
    _
  %v15 = vld [vmem:[%s0] sm:$0xff]
  %v16 = vld [vmem:[%s0 + $0x8] sm:$0xff]
  %v17 = vld [vmem:[%s0 + $0x10] sm:$0xff]
  %v18 = vld [vmem:[%s0 + $0x18] sm:$0xff]
  %v19 = vld [vmem:[%s0 + $0x20] sm:$0xf]
  %v20 = vld [vmem:[%s0 + $0x24] sm:$0xff]
  %v21 = vld [vmem:[%s0 + $0x2c] sm:$0xff]
  %v22 = vld [vmem:[%s0 + $0x34] sm:$0xff]
  %v23 = vld [vmem:[%s0 + $0x3c] sm:$0xff]
  %v24 = vld [vmem:[%s0 + $0x44] sm:$0xf]
  %v25 = vld [vmem:[%s0 + $0x48] sm:$0xff]
  %v26 = vld [vmem:[%s0 + $0x50] sm:$0xff]
  %v27 = vld [vmem:[%s0 + $0x58] sm:$0xff]
  %v28 = vld [vmem:[%s0 + $0x60] sm:$0xff]
  %v29 = vld [vmem:[%s0 + $0x68] sm:$0xf]
  %v30 = vld [vmem:[%s0 + $0x6c] sm:$0xff]
  %v31 = vld [vmem:[%s0 + $0x74] sm:$0xff]
  %v32 = vld [vmem:[%s0 + $0x7c] sm:$0xff]
  %v33 = vld [vmem:[%s0 + $0x84] sm:$0xff]
  %v34 = vld [vmem:[%s0 + $0x8c] sm:$0xf]
  %v35 = vld [vmem:[%s1] sm:$0xf]
  %v36 = vld [vmem:[%s1 + $0x4] sm:$0xf]
  %v37 = vld [vmem:[%s1 + $0x8] sm:$0xf]
  %v38 = vld [vmem:[%s1 + $0xc] sm:$0xf]
  %v39 = vld [vmem:[%s1 + $0x10] sm:$0xf]
  %v40 = vld [vmem:[%s1 + $0x14] sm:$0xf]
  %v41 = vld [vmem:[%s1 + $0x18] sm:$0xf]
  %v42 = vld [vmem:[%s1 + $0x1c] sm:$0xf]
  %v43 = vld [vmem:[%s1 + $0x20] sm:$0xf]
  %v44 = vld [vmem:[%s1 + $0x24] sm:$0xf]
  %v45 = vld [vmem:[%s1 + $0x28] sm:$0xf]
  %v46 = vld [vmem:[%s1 + $0x2c] sm:$0xf]
  %v47 = vld [vmem:[%s1 + $0x30] sm:$0xf]
  %v48 = vld [vmem:[%s1 + $0x34] sm:$0xf]
  %v49 = vld [vmem:[%s1 + $0x38] sm:$0xf]
  %v50 = vld [vmem:[%s1 + $0x3c] sm:$0xf]
  %v51 = vld [vmem:[%s1 + $0x40] sm:$0xf]
  %v52 = vld [vmem:[%s1 + $0x44] sm:$0xf]
  %v53 = vld [vmem:[%s1 + $0x48] sm:$0xf]
  %v54 = vld [vmem:[%s1 + $0x4c] sm:$0xf]
  %v55 = vld [vmem:[%s1 + $0x50] sm:$0xf]
  %v56 = vld [vmem:[%s1 + $0x54] sm:$0xf]
  %v57 = vld [vmem:[%s1 + $0x58] sm:$0xf]
  %v58 = vld [vmem:[%s1 + $0x5c] sm:$0xf]
  %v59 = vld [vmem:[%s1 + $0x60] sm:$0xf]
  %v60 = vld [vmem:[%s1 + $0x64] sm:$0xf]
  %v61 = vld [vmem:[%s1 + $0x68] sm:$0xf]
  %v62 = vld [vmem:[%s1 + $0x6c] sm:$0xf]
  %v63 = vld [vmem:[%s1 + $0x70] sm:$0xf]
  %v64 = vld [vmem:[%s1 + $0x74] sm:$0xf]
  %v65 = vld [vmem:[%s1 + $0x78] sm:$0xf]
  %v66 = vld [vmem:[%s1 + $0x7c] sm:$0xf]
  %v67 = vld [vmem:[%s1 + $0x80] sm:$0xf]
  %v68 = vld [vmem:[%s1 + $0x84] sm:$0xf]
  %v69 = vld [vmem:[%s1 + $0x88] sm:$0xf]
  %v70 = vld [vmem:[%s1 + $0x8c] sm:$0xf]
  %v71 = vld [vmem:[%s1 + $0x90] sm:$0xf]
  %v72 = vld [vmem:[%s1 + $0x94] sm:$0xf]
  %v73 = vld [vmem:[%s1 + $0x98] sm:$0xf]
  %v74 = vld [vmem:[%s1 + $0x9c] sm:$0xf]
  %v75 = vld [vmem:[%s1 + $0xa0] sm:$0xf]
  %v76 = vld [vmem:[%s1 + $0xa4] sm:$0xf]
  %v77 = vld [vmem:[%s1 + $0xa8] sm:$0xf]
  %v78 = vld [vmem:[%s1 + $0xac] sm:$0xf]
  %v79 = vld [vmem:[%s1 + $0xb0] sm:$0xf]
  %v80 = vld [vmem:[%s1 + $0xb4] sm:$0xf]
  %v81 = vld [vmem:[%s1 + $0xb8] sm:$0xf]
  %v82 = vld [vmem:[%s1 + $0xbc] sm:$0xf]
  %v83 = vld [vmem:[%s1 + $0xc0] sm:$0xf]
  %v84 = vld [vmem:[%s1 + $0xc4] sm:$0xf]
  %v85 = vld [vmem:[%s1 + $0xc8] sm:$0xf]
  %v86 = vld [vmem:[%s1 + $0xcc] sm:$0xf]
  %v87 = vld [vmem:[%s1 + $0xd0] sm:$0xf]
  %v88 = vld [vmem:[%s1 + $0xd4] sm:$0xf]
  %v89 = vld [vmem:[%s1 + $0xd8] sm:$0xf]
  %v90 = vld [vmem:[%s1 + $0xdc] sm:$0xf]
  %v91 = vld [vmem:[%s1 + $0xe0] sm:$0xf]
  %v92 = vld [vmem:[%s1 + $0xe4] sm:$0xf]
  %v93 = vld [vmem:[%s1 + $0xe8] sm:$0xf]
  %v94 = vld [vmem:[%s1 + $0xec] sm:$0xf]
  %v95 = vld [vmem:[%s1 + $0xf0] sm:$0xf]
  %v96 = vld [vmem:[%s1 + $0xf4] sm:$0xf]
  %v97 = vld [vmem:[%s1 + $0xf8] sm:$0xf]
  %v98 = vld [vmem:[%s1 + $0xfc] sm:$0xf]
  %v99 = vld [vmem:[%s1 + $0x100] sm:$0xf]
  %v100 = vld [vmem:[%s1 + $0x104] sm:$0xf]
  %v101 = vld [vmem:[%s1 + $0x108] sm:$0xf]
  %v102 = vld [vmem:[%s1 + $0x10c] sm:$0xf]
  %v103 = vld [vmem:[%s1 + $0x110] sm:$0xf]
  %v104 = vld [vmem:[%s1 + $0x114] sm:$0xf]
  %v105 = vld [vmem:[%s1 + $0x118] sm:$0xf]
  %v106 = vld [vmem:[%s1 + $0x11c] sm:$0xf]
  %v107 = vld [vmem:[%s1 + $0x120] sm:$0xf]
  %v108 = vld [vmem:[%s1 + $0x124] sm:$0xf]
  %v109 = vld [vmem:[%s1 + $0x128] sm:$0xf]
  %v110 = vld [vmem:[%s1 + $0x12c] sm:$0xf]
  %v111 = vld [vmem:[%s1 + $0x130] sm:$0xf]
  %v112 = vld [vmem:[%s1 + $0x134] sm:$0xf]
  %v113 = vld [vmem:[%s1 + $0x138] sm:$0xf]
  %v114 = vld [vmem:[%s1 + $0x13c] sm:$0xf]
  %v115 = vld [vmem:[%s1 + $0x140] sm:$0xf]
  %v116 = vld [vmem:[%s1 + $0x144] sm:$0xf]
  %v117 = vld [vmem:[%s1 + $0x148] sm:$0xf]
  %v118 = vld [vmem:[%s1 + $0x14c] sm:$0xf]
  %v119 = vld [vmem:[%s1 + $0x150] sm:$0xf]
  %v120 = vld [vmem:[%s1 + $0x154] sm:$0xf]
  %v121 = vld [vmem:[%s1 + $0x158] sm:$0xf]
  %v122 = vld [vmem:[%s1 + $0x15c] sm:$0xf]
  %v123 = vld [vmem:[%s1 + $0x160] sm:$0xf]
  %v124 = vld [vmem:[%s1 + $0x164] sm:$0xf]
  %v125 = vld [vmem:[%s1 + $0x168] sm:$0xf]
  %v126 = vld [vmem:[%s1 + $0x16c] sm:$0xf]
  %v127 = vld [vmem:[%s1 + $0x170] sm:$0xf]
  %v128 = vld [vmem:[%s1 + $0x174] sm:$0xf]
  %v129 = vld [vmem:[%s1 + $0x178] sm:$0xf]
  %v130 = vld [vmem:[%s1 + $0x17c] sm:$0xf]
  %v131 = vld [vmem:[%s1 + $0x180] sm:$0xf]
  %v132 = vld [vmem:[%s1 + $0x184] sm:$0xf]
  %v133 = vld [vmem:[%s1 + $0x188] sm:$0xf]
  %v134 = vld [vmem:[%s1 + $0x18c] sm:$0xf]
  %v135 = vld [vmem:[%s1 + $0x190] sm:$0xf]
  %v136 = vld [vmem:[%s1 + $0x194] sm:$0xf]
  %v137 = vld [vmem:[%s1 + $0x198] sm:$0xf]
  %v138 = vld [vmem:[%s1 + $0x19c] sm:$0xf]
  %v139 = vld [vmem:[%s1 + $0x1a0] sm:$0xf]
  %v140 = vld [vmem:[%s1 + $0x1a4] sm:$0xf]
  %v141 = vld [vmem:[%s1 + $0x1a8] sm:$0xf]
  %v142 = vld [vmem:[%s1 + $0x1ac] sm:$0xf]
  %v143 = vld [vmem:[%s1 + $0x1b0] sm:$0xf]
  %v144 = vld [vmem:[%s1 + $0x1b4] sm:$0xf]
  %v145 = vld [vmem:[%s1 + $0x1b8] sm:$0xf]
  %v146 = vld [vmem:[%s1 + $0x1bc] sm:$0xf]
  %v147 = vld [vmem:[%s1 + $0x1c0] sm:$0xf]
  %v148 = vld [vmem:[%s1 + $0x1c4] sm:$0xf]
  %v149 = vld [vmem:[%s1 + $0x1c8] sm:$0xf]
  %v150 = vld [vmem:[%s1 + $0x1cc] sm:$0xf]
  %v151 = vld [vmem:[%s1 + $0x1d0] sm:$0xf]
  %v152 = vld [vmem:[%s1 + $0x1d4] sm:$0xf]
  %v153 = vld [vmem:[%s1 + $0x1d8] sm:$0xf]
  %v154 = vld [vmem:[%s1 + $0x1dc] sm:$0xf]
  %v155 = vld [vmem:[%s1 + $0x1e0] sm:$0xf]
  %v156 = vld [vmem:[%s1 + $0x1e4] sm:$0xf]
  %v157 = vld [vmem:[%s1 + $0x1e8] sm:$0xf]
  %v158 = vld [vmem:[%s1 + $0x1ec] sm:$0xf]
  %v159 = vld [vmem:[%s1 + $0x1f0] sm:$0xf]
  %v160 = vld [vmem:[%s1 + $0x1f4] sm:$0xf]
  %v161 = vld [vmem:[%s1 + $0x1f8] sm:$0xf]
  %v162 = vld [vmem:[%s1 + $0x1fc] sm:$0xf]
  %v163 = vld [vmem:[%s1 + $0x200] sm:$0xf]
  %v164 = vld [vmem:[%s1 + $0x204] sm:$0xf]
  %v165 = vld [vmem:[%s1 + $0x208] sm:$0xf]
  %v166 = vld [vmem:[%s1 + $0x20c] sm:$0xf]
  %v167 = vld [vmem:[%s1 + $0x210] sm:$0xf]
  %v168 = vld [vmem:[%s1 + $0x214] sm:$0xf]
  %v169 = vld [vmem:[%s1 + $0x218] sm:$0xf]
  %v170 = vld [vmem:[%s1 + $0x21c] sm:$0xf]
  %v171 = vld [vmem:[%s1 + $0x220] sm:$0xf]
  %v172 = vld [vmem:[%s1 + $0x224] sm:$0xf]
  %v173 = vld [vmem:[%s1 + $0x228] sm:$0xf]
  %v174 = vld [vmem:[%s1 + $0x22c] sm:$0xf]
  %v175 = vld [vmem:[%s1 + $0x230] sm:$0xf]
  %v176 = vld [vmem:[%s1 + $0x234] sm:$0xf]
  %v177 = vld [vmem:[%s1 + $0x238] sm:$0xf]
  %v178 = vld [vmem:[%s1 + $0x23c] sm:$0xf]
  %v179 = vld [vmem:[%s2] sm:$0x1]
  %v181 = vlaneseq
  %v182 = vshrl.u32 %v181, 7
  %v183 = vsub.s32 0, %v182
  %v184 = vrot.slane %v179, %v183
  %v206 = vunpack.c.l.b16 %v15
  %v207 = vunpack.c.h.b16 %v15
  %v208 = vunpack.c.l.b16 %v16
  %v209 = vunpack.c.h.b16 %v16
  %v210 = vunpack.c.l.b16 %v17
  %v211 = vunpack.c.h.b16 %v17
  %v212 = vunpack.c.l.b16 %v18
  %v213 = vunpack.c.h.b16 %v18
  %v214 = vunpack.c.l.b16 %v19
  %v215 = vunpack.c.l.b16 %v20
  %v216 = vunpack.c.h.b16 %v20
  %v217 = vunpack.c.l.b16 %v21
  %v218 = vunpack.c.h.b16 %v21
  %v219 = vunpack.c.l.b16 %v22
  %v220 = vunpack.c.h.b16 %v22
  %v221 = vunpack.c.l.b16 %v23
  %v222 = vunpack.c.h.b16 %v23
  %v223 = vunpack.c.l.b16 %v24
  %v224 = vunpack.c.l.b16 %v25
  %v225 = vunpack.c.h.b16 %v25
  %v226 = vunpack.c.l.b16 %v26
  %v227 = vunpack.c.h.b16 %v26
  %v228 = vunpack.c.l.b16 %v27
  %v229 = vunpack.c.h.b16 %v27
  %v230 = vunpack.c.l.b16 %v28
  %v231 = vunpack.c.h.b16 %v28
  %v232 = vunpack.c.l.b16 %v29
  %v233 = vunpack.c.l.b16 %v30
  %v234 = vunpack.c.h.b16 %v30
  %v235 = vunpack.c.l.b16 %v31
  %v236 = vunpack.c.h.b16 %v31
  %v237 = vunpack.c.l.b16 %v32
  %v238 = vunpack.c.h.b16 %v32
  %v239 = vunpack.c.l.b16 %v33
  %v240 = vunpack.c.h.b16 %v33
  %v241 = vunpack.c.l.b16 %v34
  %v242 = vpack.c.b16 %v215, %v206
  %v243 = vpack.c.b16 %v216, %v207
  %v244 = vpack.c.b16 %v217, %v208
  %v245 = vpack.c.b16 %v218, %v209
  %v246 = vpack.c.b16 %v219, %v210
  %v247 = vpack.c.b16 %v220, %v211
  %v248 = vpack.c.b16 %v221, %v212
  %v249 = vpack.c.b16 %v222, %v213
  %v250 = vpack.c.b16 %v223, %v214
  %v251 = vpack.c.b16 %v233, %v224
  %v252 = vpack.c.b16 %v234, %v225
  %v253 = vpack.c.b16 %v235, %v226
  %v254 = vpack.c.b16 %v236, %v227
  %v255 = vpack.c.b16 %v237, %v228
  %v256 = vpack.c.b16 %v238, %v229
  %v257 = vpack.c.b16 %v239, %v230
  %v258 = vpack.c.b16 %v240, %v231
  %v259 = vpack.c.b16 %v241, %v232
  %v422 = vunpack.c.l.b16 %v35
  %v423 = vunpack.c.l.b16 %v36
  %v424 = vunpack.c.l.b16 %v37
  %v425 = vunpack.c.l.b16 %v38
  %v426 = vunpack.c.l.b16 %v39
  %v427 = vunpack.c.l.b16 %v40
  %v428 = vunpack.c.l.b16 %v41
  %v429 = vunpack.c.l.b16 %v42
  %v430 = vunpack.c.l.b16 %v43
  %v431 = vunpack.c.l.b16 %v44
  %v432 = vunpack.c.l.b16 %v45
  %v433 = vunpack.c.l.b16 %v46
  %v434 = vunpack.c.l.b16 %v47
  %v435 = vunpack.c.l.b16 %v48
  %v436 = vunpack.c.l.b16 %v49
  %v437 = vunpack.c.l.b16 %v50
  %v438 = vunpack.c.l.b16 %v51
  %v439 = vunpack.c.l.b16 %v52
  %v440 = vunpack.c.l.b16 %v53
  %v441 = vunpack.c.l.b16 %v54
  %v442 = vunpack.c.l.b16 %v55
  %v443 = vunpack.c.l.b16 %v56
  %v444 = vunpack.c.l.b16 %v57
  %v445 = vunpack.c.l.b16 %v58
  %v446 = vunpack.c.l.b16 %v59
  %v447 = vunpack.c.l.b16 %v60
  %v448 = vunpack.c.l.b16 %v61
  %v449 = vunpack.c.l.b16 %v62
  %v450 = vunpack.c.l.b16 %v63
  %v451 = vunpack.c.l.b16 %v64
  %v452 = vunpack.c.l.b16 %v65
  %v453 = vunpack.c.l.b16 %v66
  %v454 = vunpack.c.l.b16 %v67
  %v455 = vunpack.c.l.b16 %v68
  %v456 = vunpack.c.l.b16 %v69
  %v457 = vunpack.c.l.b16 %v70
  %v458 = vunpack.c.l.b16 %v71
  %v459 = vunpack.c.l.b16 %v72
  %v460 = vunpack.c.l.b16 %v73
  %v461 = vunpack.c.l.b16 %v74
  %v462 = vunpack.c.l.b16 %v75
  %v463 = vunpack.c.l.b16 %v76
  %v464 = vunpack.c.l.b16 %v77
  %v465 = vunpack.c.l.b16 %v78
  %v466 = vunpack.c.l.b16 %v79
  %v467 = vunpack.c.l.b16 %v80
  %v468 = vunpack.c.l.b16 %v81
  %v469 = vunpack.c.l.b16 %v82
  %v470 = vunpack.c.l.b16 %v83
  %v471 = vunpack.c.l.b16 %v84
  %v472 = vunpack.c.l.b16 %v85
  %v473 = vunpack.c.l.b16 %v86
  %v474 = vunpack.c.l.b16 %v87
  %v475 = vunpack.c.l.b16 %v88
  %v476 = vunpack.c.l.b16 %v89
  %v477 = vunpack.c.l.b16 %v90
  %v478 = vunpack.c.l.b16 %v91
  %v479 = vunpack.c.l.b16 %v92
  %v480 = vunpack.c.l.b16 %v93
  %v481 = vunpack.c.l.b16 %v94
  %v482 = vunpack.c.l.b16 %v95
  %v483 = vunpack.c.l.b16 %v96
  %v484 = vunpack.c.l.b16 %v97
  %v485 = vunpack.c.l.b16 %v98
  %v486 = vunpack.c.l.b16 %v99
  %v487 = vunpack.c.l.b16 %v100
  %v488 = vunpack.c.l.b16 %v101
  %v489 = vunpack.c.l.b16 %v102
  %v490 = vunpack.c.l.b16 %v103
  %v491 = vunpack.c.l.b16 %v104
  %v492 = vunpack.c.l.b16 %v105
  %v493 = vunpack.c.l.b16 %v106
  %v494 = vunpack.c.l.b16 %v107
  %v495 = vunpack.c.l.b16 %v108
  %v496 = vunpack.c.l.b16 %v109
  %v497 = vunpack.c.l.b16 %v110
  %v498 = vunpack.c.l.b16 %v111
  %v499 = vunpack.c.l.b16 %v112
  %v500 = vunpack.c.l.b16 %v113
  %v501 = vunpack.c.l.b16 %v114
  %v502 = vunpack.c.l.b16 %v115
  %v503 = vunpack.c.l.b16 %v116
  %v504 = vunpack.c.l.b16 %v117
  %v505 = vunpack.c.l.b16 %v118
  %v506 = vunpack.c.l.b16 %v119
  %v507 = vunpack.c.l.b16 %v120
  %v508 = vunpack.c.l.b16 %v121
  %v509 = vunpack.c.l.b16 %v122
  %v510 = vunpack.c.l.b16 %v123
  %v511 = vunpack.c.l.b16 %v124
  %v512 = vunpack.c.l.b16 %v125
  %v513 = vunpack.c.l.b16 %v126
  %v514 = vunpack.c.l.b16 %v127
  %v515 = vunpack.c.l.b16 %v128
  %v516 = vunpack.c.l.b16 %v129
  %v517 = vunpack.c.l.b16 %v130
  %v518 = vunpack.c.l.b16 %v131
  %v519 = vunpack.c.l.b16 %v132
  %v520 = vunpack.c.l.b16 %v133
  %v521 = vunpack.c.l.b16 %v134
  %v522 = vunpack.c.l.b16 %v135
  %v523 = vunpack.c.l.b16 %v136
  %v524 = vunpack.c.l.b16 %v137
  %v525 = vunpack.c.l.b16 %v138
  %v526 = vunpack.c.l.b16 %v139
  %v527 = vunpack.c.l.b16 %v140
  %v528 = vunpack.c.l.b16 %v141
  %v529 = vunpack.c.l.b16 %v142
  %v530 = vunpack.c.l.b16 %v143
  %v531 = vunpack.c.l.b16 %v144
  %v532 = vunpack.c.l.b16 %v145
  %v533 = vunpack.c.l.b16 %v146
  %v534 = vunpack.c.l.b16 %v147
  %v535 = vunpack.c.l.b16 %v148
  %v536 = vunpack.c.l.b16 %v149
  %v537 = vunpack.c.l.b16 %v150
  %v538 = vunpack.c.l.b16 %v151
  %v539 = vunpack.c.l.b16 %v152
  %v540 = vunpack.c.l.b16 %v153
  %v541 = vunpack.c.l.b16 %v154
  %v542 = vunpack.c.l.b16 %v155
  %v543 = vunpack.c.l.b16 %v156
  %v544 = vunpack.c.l.b16 %v157
  %v545 = vunpack.c.l.b16 %v158
  %v546 = vunpack.c.l.b16 %v159
  %v547 = vunpack.c.l.b16 %v160
  %v548 = vunpack.c.l.b16 %v161
  %v549 = vunpack.c.l.b16 %v162
  %v550 = vunpack.c.l.b16 %v163
  %v551 = vunpack.c.l.b16 %v164
  %v552 = vunpack.c.l.b16 %v165
  %v553 = vunpack.c.l.b16 %v166
  %v554 = vunpack.c.l.b16 %v167
  %v555 = vunpack.c.l.b16 %v168
  %v556 = vunpack.c.l.b16 %v169
  %v557 = vunpack.c.l.b16 %v170
  %v558 = vunpack.c.l.b16 %v171
  %v559 = vunpack.c.l.b16 %v172
  %v560 = vunpack.c.l.b16 %v173
  %v561 = vunpack.c.l.b16 %v174
  %v562 = vunpack.c.l.b16 %v175
  %v563 = vunpack.c.l.b16 %v176
  %v564 = vunpack.c.l.b16 %v177
  %v565 = vunpack.c.l.b16 %v178
  %v566 = vpack.c.b16 %v423, %v422
  %v567 = vpack.c.b16 %v425, %v424
  %v568 = vpack.c.b16 %v427, %v426
  %v569 = vpack.c.b16 %v429, %v428
  %v570 = vpack.c.b16 %v431, %v430
  %v571 = vpack.c.b16 %v433, %v432
  %v572 = vpack.c.b16 %v435, %v434
  %v573 = vpack.c.b16 %v437, %v436
  %v574 = vpack.c.b16 %v439, %v438
  %v575 = vpack.c.b16 %v441, %v440
  %v576 = vpack.c.b16 %v443, %v442
  %v577 = vpack.c.b16 %v445, %v444
  %v578 = vpack.c.b16 %v447, %v446
  %v579 = vpack.c.b16 %v449, %v448
  %v580 = vpack.c.b16 %v451, %v450
  %v581 = vpack.c.b16 %v453, %v452
  %v582 = vpack.c.b16 %v455, %v454
  %v583 = vpack.c.b16 %v457, %v456
  %v584 = vpack.c.b16 %v459, %v458
  %v585 = vpack.c.b16 %v461, %v460
  %v586 = vpack.c.b16 %v463, %v462
  %v587 = vpack.c.b16 %v465, %v464
  %v588 = vpack.c.b16 %v467, %v466
  %v589 = vpack.c.b16 %v469, %v468
  %v590 = vpack.c.b16 %v471, %v470
  %v591 = vpack.c.b16 %v473, %v472
  %v592 = vpack.c.b16 %v475, %v474
  %v593 = vpack.c.b16 %v477, %v476
  %v594 = vpack.c.b16 %v479, %v478
  %v595 = vpack.c.b16 %v481, %v480
  %v596 = vpack.c.b16 %v483, %v482
  %v597 = vpack.c.b16 %v485, %v484
  %v598 = vpack.c.b16 %v487, %v486
  %v599 = vpack.c.b16 %v489, %v488
  %v600 = vpack.c.b16 %v491, %v490
  %v601 = vpack.c.b16 %v493, %v492
  %v602 = vpack.c.b16 %v495, %v494
  %v603 = vpack.c.b16 %v497, %v496
  %v604 = vpack.c.b16 %v499, %v498
  %v605 = vpack.c.b16 %v501, %v500
  %v606 = vpack.c.b16 %v503, %v502
  %v607 = vpack.c.b16 %v505, %v504
  %v608 = vpack.c.b16 %v507, %v506
  %v609 = vpack.c.b16 %v509, %v508
  %v610 = vpack.c.b16 %v511, %v510
  %v611 = vpack.c.b16 %v513, %v512
  %v612 = vpack.c.b16 %v515, %v514
  %v613 = vpack.c.b16 %v517, %v516
  %v614 = vpack.c.b16 %v519, %v518
  %v615 = vpack.c.b16 %v521, %v520
  %v616 = vpack.c.b16 %v523, %v522
  %v617 = vpack.c.b16 %v525, %v524
  %v618 = vpack.c.b16 %v527, %v526
  %v619 = vpack.c.b16 %v529, %v528
  %v620 = vpack.c.b16 %v531, %v530
  %v621 = vpack.c.b16 %v533, %v532
  %v622 = vpack.c.b16 %v535, %v534
  %v623 = vpack.c.b16 %v537, %v536
  %v624 = vpack.c.b16 %v539, %v538
  %v625 = vpack.c.b16 %v541, %v540
  %v626 = vpack.c.b16 %v543, %v542
  %v627 = vpack.c.b16 %v545, %v544
  %v628 = vpack.c.b16 %v547, %v546
  %v629 = vpack.c.b16 %v549, %v548
  %v630 = vpack.c.b16 %v551, %v550
  %v631 = vpack.c.b16 %v553, %v552
  %v632 = vpack.c.b16 %v555, %v554
  %v633 = vpack.c.b16 %v557, %v556
  %v634 = vpack.c.b16 %v559, %v558
  %v635 = vpack.c.b16 %v561, %v560
  %v636 = vpack.c.b16 %v563, %v562
  %v637 = vpack.c.b16 %v565, %v564
  %710 = vmatprep.subr.bf16.mxu0 0
  %711 = vmatpush1.bf16.msra.mxu0 %v566
  %712 = vmatprep.subr.bf16.mxu0 0
  %713 = vmatpush1.bf16.msra.mxu0 %v567
  %714 = vmatprep.subr.bf16.mxu0 0
  %715 = vmatpush1.bf16.msra.mxu0 %v568
  %716 = vmatprep.subr.bf16.mxu0 0
  %717 = vmatpush1.bf16.msra.mxu0 %v569
  %718 = vmatprep.subr.bf16.mxu0 0
  %719 = vmatpush1.bf16.msra.mxu0 %v570
  %720 = vmatprep.subr.bf16.mxu0 0
  %721 = vmatpush1.bf16.msra.mxu0 %v571
  %722 = vmatprep.subr.bf16.mxu0 0
  %723 = vmatpush1.bf16.msra.mxu0 %v572
  %724 = vmatprep.subr.bf16.mxu0 0
  %725 = vmatpush1.bf16.msra.mxu0 %v573
  %726 = vmatprep.subr.bf16.mxu0 0
  %727 = vmatpush1.bf16.msra.mxu0 %v574
  %728 = vmatprep.subr.bf16.mxu0 0
  %729 = vmatpush1.bf16.msra.mxu0 %v575
  %730 = vmatprep.subr.bf16.mxu0 0
  %731 = vmatpush1.bf16.msra.mxu0 %v576
  %732 = vmatprep.subr.bf16.mxu0 0
  %733 = vmatpush1.bf16.msra.mxu0 %v577
  %734 = vmatprep.subr.bf16.mxu0 0
  %735 = vmatpush1.bf16.msra.mxu0 %v578
  %736 = vmatprep.subr.bf16.mxu0 0
  %737 = vmatpush1.bf16.msra.mxu0 %v579
  %738 = vmatprep.subr.bf16.mxu0 0
  %739 = vmatpush1.bf16.msra.mxu0 %v580
  %740 = vmatprep.subr.bf16.mxu0 0
  %741 = vmatpush1.bf16.msra.mxu0 %v581
  %742 = vmatprep.mubr.bf16.mxu0 %v243
  %743 = vmatmul.mubr.bf16.gmra.mrb[0].mxu0 %v242
  %v744 = vpop.f32.mrb[0].mxu0
  %v745 = vadd.f32 %v184, %v744
  %v746 = vpop.f32.mrb[0].mxu0
  %v747 = vpop.f32.mrb[0].mxu0
  %v748 = vadd.f32 %v184, %v747
  %v749 = vpop.f32.mrb[0].mxu0
  %750 = vmatprep.mubr.bf16.mxu0 %v252
  %751 = vmatmul.mubr.bf16.gmra.mrb[0].mxu0 %v251
  %v752 = vpop.f32.mrb[0].mxu0
  %v753 = vadd.f32 %v184, %v752
  %v754 = vpop.f32.mrb[0].mxu0
  %v755 = vpop.f32.mrb[0].mxu0
  %v756 = vadd.f32 %v184, %v755
  %v757 = vpop.f32.mrb[0].mxu0
  %758 = vdwg.mxu0
  %759 = vmatprep.subr.bf16.mxu0 0
  %760 = vmatpush1.bf16.msra.mxu0 %v582
  %761 = vmatprep.subr.bf16.mxu0 0
  %762 = vmatpush1.bf16.msra.mxu0 %v583
  %763 = vmatprep.subr.bf16.mxu0 0
  %764 = vmatpush1.bf16.msra.mxu0 %v584
  %765 = vmatprep.subr.bf16.mxu0 0
  %766 = vmatpush1.bf16.msra.mxu0 %v585
  %767 = vmatprep.subr.bf16.mxu0 0
  %768 = vmatpush1.bf16.msra.mxu0 %v586
  %769 = vmatprep.subr.bf16.mxu0 0
  %770 = vmatpush1.bf16.msra.mxu0 %v587
  %771 = vmatprep.subr.bf16.mxu0 0
  %772 = vmatpush1.bf16.msra.mxu0 %v588
  %773 = vmatprep.subr.bf16.mxu0 0
  %774 = vmatpush1.bf16.msra.mxu0 %v589
  %775 = vmatprep.subr.bf16.mxu0 0
  %776 = vmatpush1.bf16.msra.mxu0 %v590
  %777 = vmatprep.subr.bf16.mxu0 0
  %778 = vmatpush1.bf16.msra.mxu0 %v591
  %779 = vmatprep.subr.bf16.mxu0 0
  %780 = vmatpush1.bf16.msra.mxu0 %v592
  %781 = vmatprep.subr.bf16.mxu0 0
  %782 = vmatpush1.bf16.msra.mxu0 %v593
  %783 = vmatprep.subr.bf16.mxu0 0
  %784 = vmatpush1.bf16.msra.mxu0 %v594
  %785 = vmatprep.subr.bf16.mxu0 0
  %786 = vmatpush1.bf16.msra.mxu0 %v595
  %787 = vmatprep.subr.bf16.mxu0 0
  %788 = vmatpush1.bf16.msra.mxu0 %v596
  %789 = vmatprep.subr.bf16.mxu0 0
  %790 = vmatpush1.bf16.msra.mxu0 %v597
  %791 = vmatprep.mubr.bf16.mxu0 %v245
  %792 = vmatmul.mubr.bf16.gmra.mrb[0].mxu0 %v244
  %v793 = vpop.f32.mrb[0].mxu0
  %v794 = vadd.f32 %v745, %v793
  %v795 = vpop.f32.mrb[0].mxu0
  %v796 = vpop.f32.mrb[0].mxu0
  %v797 = vadd.f32 %v748, %v796
  %v798 = vpop.f32.mrb[0].mxu0
  %799 = vmatprep.mubr.bf16.mxu0 %v254
  %800 = vmatmul.mubr.bf16.gmra.mrb[0].mxu0 %v253
  %v801 = vpop.f32.mrb[0].mxu0
  %v802 = vadd.f32 %v753, %v801
  %v803 = vpop.f32.mrb[0].mxu0
  %v804 = vpop.f32.mrb[0].mxu0
  %v805 = vadd.f32 %v756, %v804
  %v806 = vpop.f32.mrb[0].mxu0
  %807 = vdwg.mxu0
  %808 = vmatprep.subr.bf16.mxu0 0
  %809 = vmatpush1.bf16.msra.mxu0 %v598
  %810 = vmatprep.subr.bf16.mxu0 0
  %811 = vmatpush1.bf16.msra.mxu0 %v599
  %812 = vmatprep.subr.bf16.mxu0 0
  %813 = vmatpush1.bf16.msra.mxu0 %v600
  %814 = vmatprep.subr.bf16.mxu0 0
  %815 = vmatpush1.bf16.msra.mxu0 %v601
  %816 = vmatprep.subr.bf16.mxu0 0
  %817 = vmatpush1.bf16.msra.mxu0 %v602
  %818 = vmatprep.subr.bf16.mxu0 0
  %819 = vmatpush1.bf16.msra.mxu0 %v603
  %820 = vmatprep.subr.bf16.mxu0 0
  %821 = vmatpush1.bf16.msra.mxu0 %v604
  %822 = vmatprep.subr.bf16.mxu0 0
  %823 = vmatpush1.bf16.msra.mxu0 %v605
  %824 = vmatprep.subr.bf16.mxu0 0
  %825 = vmatpush1.bf16.msra.mxu0 %v606
  %826 = vmatprep.subr.bf16.mxu0 0
  %827 = vmatpush1.bf16.msra.mxu0 %v607
  %828 = vmatprep.subr.bf16.mxu0 0
  %829 = vmatpush1.bf16.msra.mxu0 %v608
  %830 = vmatprep.subr.bf16.mxu0 0
  %831 = vmatpush1.bf16.msra.mxu0 %v609
  %832 = vmatprep.subr.bf16.mxu0 0
  %833 = vmatpush1.bf16.msra.mxu0 %v610
  %834 = vmatprep.subr.bf16.mxu0 0
  %835 = vmatpush1.bf16.msra.mxu0 %v611
  %836 = vmatprep.subr.bf16.mxu0 0
  %837 = vmatpush1.bf16.msra.mxu0 %v612
  %838 = vmatprep.subr.bf16.mxu0 0
  %839 = vmatpush1.bf16.msra.mxu0 %v613
  %840 = vmatprep.mubr.bf16.mxu0 %v247
  %841 = vmatmul.mubr.bf16.gmra.mrb[0].mxu0 %v246
  %v842 = vpop.f32.mrb[0].mxu0
  %v843 = vadd.f32 %v794, %v842
  %v844 = vpop.f32.mrb[0].mxu0
  %v845 = vpop.f32.mrb[0].mxu0
  %v846 = vadd.f32 %v797, %v845
  %v847 = vpop.f32.mrb[0].mxu0
  %848 = vmatprep.mubr.bf16.mxu0 %v256
  %849 = vmatmul.mubr.bf16.gmra.mrb[0].mxu0 %v255
  %v850 = vpop.f32.mrb[0].mxu0
  %v851 = vadd.f32 %v802, %v850
  %v852 = vpop.f32.mrb[0].mxu0
  %v853 = vpop.f32.mrb[0].mxu0
  %v854 = vadd.f32 %v805, %v853
  %v855 = vpop.f32.mrb[0].mxu0
  %856 = vdwg.mxu0
  %857 = vmatprep.subr.bf16.mxu0 0
  %858 = vmatpush1.bf16.msra.mxu0 %v614
  %859 = vmatprep.subr.bf16.mxu0 0
  %860 = vmatpush1.bf16.msra.mxu0 %v615
  %861 = vmatprep.subr.bf16.mxu0 0
  %862 = vmatpush1.bf16.msra.mxu0 %v616
  %863 = vmatprep.subr.bf16.mxu0 0
  %864 = vmatpush1.bf16.msra.mxu0 %v617
  %865 = vmatprep.subr.bf16.mxu0 0
  %866 = vmatpush1.bf16.msra.mxu0 %v618
  %867 = vmatprep.subr.bf16.mxu0 0
  %868 = vmatpush1.bf16.msra.mxu0 %v619
  %869 = vmatprep.subr.bf16.mxu0 0
  %870 = vmatpush1.bf16.msra.mxu0 %v620
  %871 = vmatprep.subr.bf16.mxu0 0
  %872 = vmatpush1.bf16.msra.mxu0 %v621
  %873 = vmatprep.subr.bf16.mxu0 0
  %874 = vmatpush1.bf16.msra.mxu0 %v622
  %875 = vmatprep.subr.bf16.mxu0 0
  %876 = vmatpush1.bf16.msra.mxu0 %v623
  %877 = vmatprep.subr.bf16.mxu0 0
  %878 = vmatpush1.bf16.msra.mxu0 %v624
  %879 = vmatprep.subr.bf16.mxu0 0
  %880 = vmatpush1.bf16.msra.mxu0 %v625
  %881 = vmatprep.subr.bf16.mxu0 0
  %882 = vmatpush1.bf16.msra.mxu0 %v626
  %883 = vmatprep.subr.bf16.mxu0 0
  %884 = vmatpush1.bf16.msra.mxu0 %v627
  %885 = vmatprep.subr.bf16.mxu0 0
  %886 = vmatpush1.bf16.msra.mxu0 %v628
  %887 = vmatprep.subr.bf16.mxu0 0
  %888 = vmatpush1.bf16.msra.mxu0 %v629
  %889 = vmatprep.mubr.bf16.mxu0 %v249
  %890 = vmatmul.mubr.bf16.gmra.mrb[0].mxu0 %v248
  %v891 = vpop.f32.mrb[0].mxu0
  %v892 = vadd.f32 %v843, %v891
  %v893 = vpop.f32.mrb[0].mxu0
  %v894 = vpop.f32.mrb[0].mxu0
  %v895 = vadd.f32 %v846, %v894
  %v896 = vpop.f32.mrb[0].mxu0
  %897 = vmatprep.mubr.bf16.mxu0 %v258
  %898 = vmatmul.mubr.bf16.gmra.mrb[0].mxu0 %v257
  %v899 = vpop.f32.mrb[0].mxu0
  %v900 = vadd.f32 %v851, %v899
  %v901 = vpop.f32.mrb[0].mxu0
  %v902 = vpop.f32.mrb[0].mxu0
  %v903 = vadd.f32 %v854, %v902
  %v904 = vpop.f32.mrb[0].mxu0
  %905 = vdwg.mxu0
  %906 = vmatprep.subr.bf16.mxu0 0
  %907 = vmatpush1.bf16.msra.mxu0 %v630
  %908 = vmatprep.subr.bf16.mxu0 0
  %909 = vmatpush1.bf16.msra.mxu0 %v631
  %910 = vmatprep.subr.bf16.mxu0 0
  %911 = vmatpush1.bf16.msra.mxu0 %v632
  %912 = vmatprep.subr.bf16.mxu0 0
  %913 = vmatpush1.bf16.msra.mxu0 %v633
  %914 = vmatprep.subr.bf16.mxu0 0
  %915 = vmatpush1.bf16.msra.mxu0 %v634
  %916 = vmatprep.subr.bf16.mxu0 0
  %917 = vmatpush1.bf16.msra.mxu0 %v635
  %918 = vmatprep.subr.bf16.mxu0 0
  %919 = vmatpush1.bf16.msra.mxu0 %v636
  %920 = vmatprep.subr.bf16.mxu0 0
  %921 = vmatpush1.bf16.msra.mxu0 %v637
  %922 = vmatprep.subr.bf16.mxu0 0
  %923 = vmatpush1.bf16.msra.mxu0 0
  %924 = vmatprep.subr.bf16.mxu0 0
  %925 = vmatpush1.bf16.msra.mxu0 0
  %926 = vmatprep.subr.bf16.mxu0 0
  %927 = vmatpush1.bf16.msra.mxu0 0
  %928 = vmatprep.subr.bf16.mxu0 0
  %929 = vmatpush1.bf16.msra.mxu0 0
  %930 = vmatprep.subr.bf16.mxu0 0
  %931 = vmatpush1.bf16.msra.mxu0 0
  %932 = vmatprep.subr.bf16.mxu0 0
  %933 = vmatpush1.bf16.msra.mxu0 0
  %934 = vmatprep.subr.bf16.mxu0 0
  %935 = vmatpush1.bf16.msra.mxu0 0
  %936 = vmatprep.subr.bf16.mxu0 0
  %937 = vmatpush1.bf16.msra.mxu0 0
  %938 = vmatprep.mubr.bf16.mxu0 0
  %939 = vmatmul.mubr.bf16.gmra.mrb[0].mxu0 %v250
  %v940 = vpop.f32.mrb[0].mxu0
  %v941 = vadd.f32 %v892, %v940
  %v942 = vpop.f32.mrb[0].mxu0
  %v943 = vpop.f32.mrb[0].mxu0
  %v944 = vadd.f32 %v895, %v943
  %v945 = vpop.f32.mrb[0].mxu0
  %946 = vmatprep.mubr.bf16.mxu0 0
  %947 = vmatmul.mubr.bf16.gmra.mrb[0].mxu0 %v259
  %v948 = vpop.f32.mrb[0].mxu0
  %v949 = vadd.f32 %v900, %v948
  %v950 = vpop.f32.mrb[0].mxu0
  %v951 = vpop.f32.mrb[0].mxu0
  %v952 = vadd.f32 %v903, %v951
  %v953 = vpop.f32.mrb[0].mxu0
  %954 = vdwg.mxu0
  %v955 = vmax.f32 %v941, 0.0
  %v956 = vmax.f32 %v944, 0.0
  %v957 = vmax.f32 %v949, 0.0
  %v958 = vmax.f32 %v952, 0.0
  %959 = vst [vmem:[%s3] sm:$0xff] %v955
  %960 = vst [vmem:[%s3 + $0x8] sm:$0xff] %v956
  %961 = vst [vmem:[%s3 + $0x10] sm:$0xff] %v957
  %962 = vst [vmem:[%s3 + $0x18] sm:$0xff] %v958
  // Predicated region
  $region14: #{_lambda_.20} parent=0 // pred_check
    _
  $region15: #{_lambda_.20} parent=0 // pred_check_branch
    %964 = sbr.rel (0) target = $region17
  $region16: #{_lambda_.20} parent=0 // pred_region
    _
  $region17: #{_lambda_.20} parent=0 // pred_fallthru
    _
  // Predicated region
  $region18: #{_lambda_.20} parent=0 // pred_check
    _
  $region19: #{_lambda_.20} parent=0 // pred_check_branch
    %966 = sbr.rel (0) target = $region21
  $region20: #{_lambda_.20} parent=0 // pred_region
    _
  $region21: #{_lambda_.20} parent=0 // pred_fallthru
    _

// kernel: _lambda_.21
$region0: #{_lambda_.21}
  #allocation0 [shape = 'u32[]', space=smem, size = 0x4, offset = 0x4, fixed_abs, tag = 'smem constant byte address 0x4 - core index']
  #allocation1 [shape = 'u32[144,128]{1,0:T(1,128)}', space=vmem, size = 0x12000, scoped, tag = 'internal scratch']
  %s0 = inlined_call_operand.vmem [shape: bf16[32,1152], index: 0, kind: input, shape index: {}]
  %s1 = inlined_call_operand.vmem [shape: bf16[1152,128], index: 1, kind: input, shape index: {}]
  %s2 = inlined_call_operand.vmem [shape: f32[1,128], index: 2, kind: input, shape index: {}]
  %s3 = inlined_call_operand.vmem [shape: f32[32,128], index: 3, kind: input, shape index: {}]
  %s4 = inlined_call_operand.vmem [shape: f32[32,128], index: 4, kind: output, shape index: {}]
  %s5 = sld [smem:[#allocation0]]
  $region26: #{_lambda_.21} parent=0
    _
  %s7 = ssub.s32 1, %s5
  %s8 = scalar_select 0, %s7, %s5
  // Predicated region
  $region2: #{_lambda_.21} parent=0 // pred_check
    _
  $region3: #{_lambda_.21} parent=0 // pred_check_branch
    %10 = sbr.rel (0) target = $region5
  $region4: #{_lambda_.21} parent=0 // pred_region
    _
  $region5: #{_lambda_.21} parent=0 // pred_fallthru
    _
  // Predicated region
  $region6: #{_lambda_.21} parent=0 // pred_check
    _
  $region7: #{_lambda_.21} parent=0 // pred_check_branch
    %12 = sbr.rel (0) target = $region9
  $region8: #{_lambda_.21} parent=0 // pred_region
    _
  $region9: #{_lambda_.21} parent=0 // pred_fallthru
    _
  // Predicated region
  $region10: #{_lambda_.21} parent=0 // pred_check
    _
  $region11: #{_lambda_.21} parent=0 // pred_check_branch
    %14 = sbr.rel (0) target = $region13
  $region12: #{_lambda_.21} parent=0 // pred_region
    _
  $region13: #{_lambda_.21} parent=0 // pred_fallthru
    _
  // Predicated region
  $region14: #{_lambda_.21} parent=0 // pred_check
    _
  $region15: #{_lambda_.21} parent=0 // pred_check_branch
    %16 = sbr.rel (0) target = $region17
  $region16: #{_lambda_.21} parent=0 // pred_region
    _
  $region17: #{_lambda_.21} parent=0 // pred_fallthru
    _
  %v18 = vld [vmem:[%s0] sm:$0xff]
  %v19 = vld [vmem:[%s0 + $0x8] sm:$0xff]
  %v20 = vld [vmem:[%s0 + $0x10] sm:$0xff]
  %v21 = vld [vmem:[%s0 + $0x18] sm:$0xff]
  %v22 = vld [vmem:[%s0 + $0x20] sm:$0xf]
  %v23 = vld [vmem:[%s0 + $0x24] sm:$0xff]
  %v24 = vld [vmem:[%s0 + $0x2c] sm:$0xff]
  %v25 = vld [vmem:[%s0 + $0x34] sm:$0xff]
  %v26 = vld [vmem:[%s0 + $0x3c] sm:$0xff]
  %v27 = vld [vmem:[%s0 + $0x44] sm:$0xf]
  %v28 = vld [vmem:[%s0 + $0x48] sm:$0xff]
  %v29 = vld [vmem:[%s0 + $0x50] sm:$0xff]
  %v30 = vld [vmem:[%s0 + $0x58] sm:$0xff]
  %v31 = vld [vmem:[%s0 + $0x60] sm:$0xff]
  %v32 = vld [vmem:[%s0 + $0x68] sm:$0xf]
  %v33 = vld [vmem:[%s0 + $0x6c] sm:$0xff]
  %v34 = vld [vmem:[%s0 + $0x74] sm:$0xff]
  %v35 = vld [vmem:[%s0 + $0x7c] sm:$0xff]
  %v36 = vld [vmem:[%s0 + $0x84] sm:$0xff]
  %v37 = vld [vmem:[%s0 + $0x8c] sm:$0xf]
  %v38 = vld [vmem:[%s1] sm:$0xf]
  %v39 = vld [vmem:[%s1 + $0x4] sm:$0xf]
  %v40 = vld [vmem:[%s1 + $0x8] sm:$0xf]
  %v41 = vld [vmem:[%s1 + $0xc] sm:$0xf]
  %v42 = vld [vmem:[%s1 + $0x10] sm:$0xf]
  %v43 = vld [vmem:[%s1 + $0x14] sm:$0xf]
  %v44 = vld [vmem:[%s1 + $0x18] sm:$0xf]
  %v45 = vld [vmem:[%s1 + $0x1c] sm:$0xf]
  %v46 = vld [vmem:[%s1 + $0x20] sm:$0xf]
  %v47 = vld [vmem:[%s1 + $0x24] sm:$0xf]
  %v48 = vld [vmem:[%s1 + $0x28] sm:$0xf]
  %v49 = vld [vmem:[%s1 + $0x2c] sm:$0xf]
  %v50 = vld [vmem:[%s1 + $0x30] sm:$0xf]
  %v51 = vld [vmem:[%s1 + $0x34] sm:$0xf]
  %v52 = vld [vmem:[%s1 + $0x38] sm:$0xf]
  %v53 = vld [vmem:[%s1 + $0x3c] sm:$0xf]
  %v54 = vld [vmem:[%s1 + $0x40] sm:$0xf]
  %v55 = vld [vmem:[%s1 + $0x44] sm:$0xf]
  %v56 = vld [vmem:[%s1 + $0x48] sm:$0xf]
  %v57 = vld [vmem:[%s1 + $0x4c] sm:$0xf]
  %v58 = vld [vmem:[%s1 + $0x50] sm:$0xf]
  %v59 = vld [vmem:[%s1 + $0x54] sm:$0xf]
  %v60 = vld [vmem:[%s1 + $0x58] sm:$0xf]
  %v61 = vld [vmem:[%s1 + $0x5c] sm:$0xf]
  %v62 = vld [vmem:[%s1 + $0x60] sm:$0xf]
  %v63 = vld [vmem:[%s1 + $0x64] sm:$0xf]
  %v64 = vld [vmem:[%s1 + $0x68] sm:$0xf]
  %v65 = vld [vmem:[%s1 + $0x6c] sm:$0xf]
  %v66 = vld [vmem:[%s1 + $0x70] sm:$0xf]
  %v67 = vld [vmem:[%s1 + $0x74] sm:$0xf]
  %v68 = vld [vmem:[%s1 + $0x78] sm:$0xf]
  %v69 = vld [vmem:[%s1 + $0x7c] sm:$0xf]
  %v70 = vld [vmem:[%s1 + $0x80] sm:$0xf]
  %v71 = vld [vmem:[%s1 + $0x84] sm:$0xf]
  %v72 = vld [vmem:[%s1 + $0x88] sm:$0xf]
  %v73 = vld [vmem:[%s1 + $0x8c] sm:$0xf]
  %v74 = vld [vmem:[%s1 + $0x90] sm:$0xf]
  %v75 = vld [vmem:[%s1 + $0x94] sm:$0xf]
  %v76 = vld [vmem:[%s1 + $0x98] sm:$0xf]
  %v77 = vld [vmem:[%s1 + $0x9c] sm:$0xf]
  %v78 = vld [vmem:[%s1 + $0xa0] sm:$0xf]
  %v79 = vld [vmem:[%s1 + $0xa4] sm:$0xf]
  %v80 = vld [vmem:[%s1 + $0xa8] sm:$0xf]
  %v81 = vld [vmem:[%s1 + $0xac] sm:$0xf]
  %v82 = vld [vmem:[%s1 + $0xb0] sm:$0xf]
  %v83 = vld [vmem:[%s1 + $0xb4] sm:$0xf]
  %v84 = vld [vmem:[%s1 + $0xb8] sm:$0xf]
  %v85 = vld [vmem:[%s1 + $0xbc] sm:$0xf]
  %v86 = vld [vmem:[%s1 + $0xc0] sm:$0xf]
  %v87 = vld [vmem:[%s1 + $0xc4] sm:$0xf]
  %v88 = vld [vmem:[%s1 + $0xc8] sm:$0xf]
  %v89 = vld [vmem:[%s1 + $0xcc] sm:$0xf]
  %v90 = vld [vmem:[%s1 + $0xd0] sm:$0xf]
  %v91 = vld [vmem:[%s1 + $0xd4] sm:$0xf]
  %v92 = vld [vmem:[%s1 + $0xd8] sm:$0xf]
  %v93 = vld [vmem:[%s1 + $0xdc] sm:$0xf]
  %v94 = vld [vmem:[%s1 + $0xe0] sm:$0xf]
  %v95 = vld [vmem:[%s1 + $0xe4] sm:$0xf]
  %v96 = vld [vmem:[%s1 + $0xe8] sm:$0xf]
  %v97 = vld [vmem:[%s1 + $0xec] sm:$0xf]
  %v98 = vld [vmem:[%s1 + $0xf0] sm:$0xf]
  %v99 = vld [vmem:[%s1 + $0xf4] sm:$0xf]
  %v100 = vld [vmem:[%s1 + $0xf8] sm:$0xf]
  %v101 = vld [vmem:[%s1 + $0xfc] sm:$0xf]
  %v102 = vld [vmem:[%s1 + $0x100] sm:$0xf]
  %v103 = vld [vmem:[%s1 + $0x104] sm:$0xf]
  %v104 = vld [vmem:[%s1 + $0x108] sm:$0xf]
  %v105 = vld [vmem:[%s1 + $0x10c] sm:$0xf]
  %v106 = vld [vmem:[%s1 + $0x110] sm:$0xf]
  %v107 = vld [vmem:[%s1 + $0x114] sm:$0xf]
  %v108 = vld [vmem:[%s1 + $0x118] sm:$0xf]
  %v109 = vld [vmem:[%s1 + $0x11c] sm:$0xf]
  %v110 = vld [vmem:[%s1 + $0x120] sm:$0xf]
  %v111 = vld [vmem:[%s1 + $0x124] sm:$0xf]
  %v112 = vld [vmem:[%s1 + $0x128] sm:$0xf]
  %v113 = vld [vmem:[%s1 + $0x12c] sm:$0xf]
  %v114 = vld [vmem:[%s1 + $0x130] sm:$0xf]
  %v115 = vld [vmem:[%s1 + $0x134] sm:$0xf]
  %v116 = vld [vmem:[%s1 + $0x138] sm:$0xf]
  %v117 = vld [vmem:[%s1 + $0x13c] sm:$0xf]
  %v118 = vld [vmem:[%s1 + $0x140] sm:$0xf]
  %v119 = vld [vmem:[%s1 + $0x144] sm:$0xf]
  %v120 = vld [vmem:[%s1 + $0x148] sm:$0xf]
  %v121 = vld [vmem:[%s1 + $0x14c] sm:$0xf]
  %v122 = vld [vmem:[%s1 + $0x150] sm:$0xf]
  %v123 = vld [vmem:[%s1 + $0x154] sm:$0xf]
  %v124 = vld [vmem:[%s1 + $0x158] sm:$0xf]
  %v125 = vld [vmem:[%s1 + $0x15c] sm:$0xf]
  %v126 = vld [vmem:[%s1 + $0x160] sm:$0xf]
  %v127 = vld [vmem:[%s1 + $0x164] sm:$0xf]
  %v128 = vld [vmem:[%s1 + $0x168] sm:$0xf]
  %v129 = vld [vmem:[%s1 + $0x16c] sm:$0xf]
  %v130 = vld [vmem:[%s1 + $0x170] sm:$0xf]
  %v131 = vld [vmem:[%s1 + $0x174] sm:$0xf]
  %v132 = vld [vmem:[%s1 + $0x178] sm:$0xf]
  %v133 = vld [vmem:[%s1 + $0x17c] sm:$0xf]
  %v134 = vld [vmem:[%s1 + $0x180] sm:$0xf]
  %v135 = vld [vmem:[%s1 + $0x184] sm:$0xf]
  %v136 = vld [vmem:[%s1 + $0x188] sm:$0xf]
  %v137 = vld [vmem:[%s1 + $0x18c] sm:$0xf]
  %v138 = vld [vmem:[%s1 + $0x190] sm:$0xf]
  %v139 = vld [vmem:[%s1 + $0x194] sm:$0xf]
  %v140 = vld [vmem:[%s1 + $0x198] sm:$0xf]
  %v141 = vld [vmem:[%s1 + $0x19c] sm:$0xf]
  %v142 = vld [vmem:[%s1 + $0x1a0] sm:$0xf]
  %v143 = vld [vmem:[%s1 + $0x1a4] sm:$0xf]
  %v144 = vld [vmem:[%s1 + $0x1a8] sm:$0xf]
  %v145 = vld [vmem:[%s1 + $0x1ac] sm:$0xf]
  %v146 = vld [vmem:[%s1 + $0x1b0] sm:$0xf]
  %v147 = vld [vmem:[%s1 + $0x1b4] sm:$0xf]
  %v148 = vld [vmem:[%s1 + $0x1b8] sm:$0xf]
  %v149 = vld [vmem:[%s1 + $0x1bc] sm:$0xf]
  %v150 = vld [vmem:[%s1 + $0x1c0] sm:$0xf]
  %v151 = vld [vmem:[%s1 + $0x1c4] sm:$0xf]
  %v152 = vld [vmem:[%s1 + $0x1c8] sm:$0xf]
  %v153 = vld [vmem:[%s1 + $0x1cc] sm:$0xf]
  %v154 = vld [vmem:[%s1 + $0x1d0] sm:$0xf]
  %v155 = vld [vmem:[%s1 + $0x1d4] sm:$0xf]
  %v156 = vld [vmem:[%s1 + $0x1d8] sm:$0xf]
  %v157 = vld [vmem:[%s1 + $0x1dc] sm:$0xf]
  %v158 = vld [vmem:[%s1 + $0x1e0] sm:$0xf]
  %v159 = vld [vmem:[%s1 + $0x1e4] sm:$0xf]
  %v160 = vld [vmem:[%s1 + $0x1e8] sm:$0xf]
  %v161 = vld [vmem:[%s1 + $0x1ec] sm:$0xf]
  %v162 = vld [vmem:[%s1 + $0x1f0] sm:$0xf]
  %v163 = vld [vmem:[%s1 + $0x1f4] sm:$0xf]
  %v164 = vld [vmem:[%s1 + $0x1f8] sm:$0xf]
  %v165 = vld [vmem:[%s1 + $0x1fc] sm:$0xf]
  %v166 = vld [vmem:[%s1 + $0x200] sm:$0xf]
  %v167 = vld [vmem:[%s1 + $0x204] sm:$0xf]
  %v168 = vld [vmem:[%s1 + $0x208] sm:$0xf]
  %v169 = vld [vmem:[%s1 + $0x20c] sm:$0xf]
  %v170 = vld [vmem:[%s1 + $0x210] sm:$0xf]
  %v171 = vld [vmem:[%s1 + $0x214] sm:$0xf]
  %v172 = vld [vmem:[%s1 + $0x218] sm:$0xf]
  %v173 = vld [vmem:[%s1 + $0x21c] sm:$0xf]
  %v174 = vld [vmem:[%s1 + $0x220] sm:$0xf]
  %v175 = vld [vmem:[%s1 + $0x224] sm:$0xf]
  %v176 = vld [vmem:[%s1 + $0x228] sm:$0xf]
  %v177 = vld [vmem:[%s1 + $0x22c] sm:$0xf]
  %v178 = vld [vmem:[%s1 + $0x230] sm:$0xf]
  %v179 = vld [vmem:[%s1 + $0x234] sm:$0xf]
  %v180 = vld [vmem:[%s1 + $0x238] sm:$0xf]
  %v181 = vld [vmem:[%s1 + $0x23c] sm:$0xf]
  %v182 = vld [vmem:[%s2] sm:$0x1]
  %v184 = vlaneseq
  %v185 = vshrl.u32 %v184, 7
  %v186 = vsub.s32 0, %v185
  %v187 = vrot.slane %v182, %v186
  %v209 = vunpack.c.l.b16 %v18
  %v210 = vunpack.c.h.b16 %v18
  %v211 = vunpack.c.l.b16 %v19
  %v212 = vunpack.c.h.b16 %v19
  %v213 = vunpack.c.l.b16 %v20
  %v214 = vunpack.c.h.b16 %v20
  %v215 = vunpack.c.l.b16 %v21
  %v216 = vunpack.c.h.b16 %v21
  %v217 = vunpack.c.l.b16 %v22
  %v218 = vunpack.c.l.b16 %v23
  %v219 = vunpack.c.h.b16 %v23
  %v220 = vunpack.c.l.b16 %v24
  %v221 = vunpack.c.h.b16 %v24
  %v222 = vunpack.c.l.b16 %v25
  %v223 = vunpack.c.h.b16 %v25
  %v224 = vunpack.c.l.b16 %v26
  %v225 = vunpack.c.h.b16 %v26
  %v226 = vunpack.c.l.b16 %v27
  %v227 = vunpack.c.l.b16 %v28
  %v228 = vunpack.c.h.b16 %v28
  %v229 = vunpack.c.l.b16 %v29
  %v230 = vunpack.c.h.b16 %v29
  %v231 = vunpack.c.l.b16 %v30
  %v232 = vunpack.c.h.b16 %v30
  %v233 = vunpack.c.l.b16 %v31
  %v234 = vunpack.c.h.b16 %v31
  %v235 = vunpack.c.l.b16 %v32
  %v236 = vunpack.c.l.b16 %v33
  %v237 = vunpack.c.h.b16 %v33
  %v238 = vunpack.c.l.b16 %v34
  %v239 = vunpack.c.h.b16 %v34
  %v240 = vunpack.c.l.b16 %v35
  %v241 = vunpack.c.h.b16 %v35
  %v242 = vunpack.c.l.b16 %v36
  %v243 = vunpack.c.h.b16 %v36
  %v244 = vunpack.c.l.b16 %v37
  %v245 = vpack.c.b16 %v218, %v209
  %v246 = vpack.c.b16 %v219, %v210
  %v247 = vpack.c.b16 %v220, %v211
  %v248 = vpack.c.b16 %v221, %v212
  %v249 = vpack.c.b16 %v222, %v213
  %v250 = vpack.c.b16 %v223, %v214
  %v251 = vpack.c.b16 %v224, %v215
  %v252 = vpack.c.b16 %v225, %v216
  %v253 = vpack.c.b16 %v226, %v217
  %v254 = vpack.c.b16 %v236, %v227
  %v255 = vpack.c.b16 %v237, %v228
  %v256 = vpack.c.b16 %v238, %v229
  %v257 = vpack.c.b16 %v239, %v230
  %v258 = vpack.c.b16 %v240, %v231
  %v259 = vpack.c.b16 %v241, %v232
  %v260 = vpack.c.b16 %v242, %v233
  %v261 = vpack.c.b16 %v243, %v234
  %v262 = vpack.c.b16 %v244, %v235
  %v425 = vunpack.c.l.b16 %v38
  %v426 = vunpack.c.l.b16 %v39
  %v427 = vunpack.c.l.b16 %v40
  %v428 = vunpack.c.l.b16 %v41
  %v429 = vunpack.c.l.b16 %v42
  %v430 = vunpack.c.l.b16 %v43
  %v431 = vunpack.c.l.b16 %v44
  %v432 = vunpack.c.l.b16 %v45
  %v433 = vunpack.c.l.b16 %v46
  %v434 = vunpack.c.l.b16 %v47
  %v435 = vunpack.c.l.b16 %v48
  %v436 = vunpack.c.l.b16 %v49
  %v437 = vunpack.c.l.b16 %v50
  %v438 = vunpack.c.l.b16 %v51
  %v439 = vunpack.c.l.b16 %v52
  %v440 = vunpack.c.l.b16 %v53
  %v441 = vunpack.c.l.b16 %v54
  %v442 = vunpack.c.l.b16 %v55
  %v443 = vunpack.c.l.b16 %v56
  %v444 = vunpack.c.l.b16 %v57
  %v445 = vunpack.c.l.b16 %v58
  %v446 = vunpack.c.l.b16 %v59
  %v447 = vunpack.c.l.b16 %v60
  %v448 = vunpack.c.l.b16 %v61
  %v449 = vunpack.c.l.b16 %v62
  %v450 = vunpack.c.l.b16 %v63
  %v451 = vunpack.c.l.b16 %v64
  %v452 = vunpack.c.l.b16 %v65
  %v453 = vunpack.c.l.b16 %v66
  %v454 = vunpack.c.l.b16 %v67
  %v455 = vunpack.c.l.b16 %v68
  %v456 = vunpack.c.l.b16 %v69
  %v457 = vunpack.c.l.b16 %v70
  %v458 = vunpack.c.l.b16 %v71
  %v459 = vunpack.c.l.b16 %v72
  %v460 = vunpack.c.l.b16 %v73
  %v461 = vunpack.c.l.b16 %v74
  %v462 = vunpack.c.l.b16 %v75
  %v463 = vunpack.c.l.b16 %v76
  %v464 = vunpack.c.l.b16 %v77
  %v465 = vunpack.c.l.b16 %v78
  %v466 = vunpack.c.l.b16 %v79
  %v467 = vunpack.c.l.b16 %v80
  %v468 = vunpack.c.l.b16 %v81
  %v469 = vunpack.c.l.b16 %v82
  %v470 = vunpack.c.l.b16 %v83
  %v471 = vunpack.c.l.b16 %v84
  %v472 = vunpack.c.l.b16 %v85
  %v473 = vunpack.c.l.b16 %v86
  %v474 = vunpack.c.l.b16 %v87
  %v475 = vunpack.c.l.b16 %v88
  %v476 = vunpack.c.l.b16 %v89
  %v477 = vunpack.c.l.b16 %v90
  %v478 = vunpack.c.l.b16 %v91
  %v479 = vunpack.c.l.b16 %v92
  %v480 = vunpack.c.l.b16 %v93
  %v481 = vunpack.c.l.b16 %v94
  %v482 = vunpack.c.l.b16 %v95
  %v483 = vunpack.c.l.b16 %v96
  %v484 = vunpack.c.l.b16 %v97
  %v485 = vunpack.c.l.b16 %v98
  %v486 = vunpack.c.l.b16 %v99
  %v487 = vunpack.c.l.b16 %v100
  %v488 = vunpack.c.l.b16 %v101
  %v489 = vunpack.c.l.b16 %v102
  %v490 = vunpack.c.l.b16 %v103
  %v491 = vunpack.c.l.b16 %v104
  %v492 = vunpack.c.l.b16 %v105
  %v493 = vunpack.c.l.b16 %v106
  %v494 = vunpack.c.l.b16 %v107
  %v495 = vunpack.c.l.b16 %v108
  %v496 = vunpack.c.l.b16 %v109
  %v497 = vunpack.c.l.b16 %v110
  %v498 = vunpack.c.l.b16 %v111
  %v499 = vunpack.c.l.b16 %v112
  %v500 = vunpack.c.l.b16 %v113
  %v501 = vunpack.c.l.b16 %v114
  %v502 = vunpack.c.l.b16 %v115
  %v503 = vunpack.c.l.b16 %v116
  %v504 = vunpack.c.l.b16 %v117
  %v505 = vunpack.c.l.b16 %v118
  %v506 = vunpack.c.l.b16 %v119
  %v507 = vunpack.c.l.b16 %v120
  %v508 = vunpack.c.l.b16 %v121
  %v509 = vunpack.c.l.b16 %v122
  %v510 = vunpack.c.l.b16 %v123
  %v511 = vunpack.c.l.b16 %v124
  %v512 = vunpack.c.l.b16 %v125
  %v513 = vunpack.c.l.b16 %v126
  %v514 = vunpack.c.l.b16 %v127
  %v515 = vunpack.c.l.b16 %v128
  %v516 = vunpack.c.l.b16 %v129
  %v517 = vunpack.c.l.b16 %v130
  %v518 = vunpack.c.l.b16 %v131
  %v519 = vunpack.c.l.b16 %v132
  %v520 = vunpack.c.l.b16 %v133
  %v521 = vunpack.c.l.b16 %v134
  %v522 = vunpack.c.l.b16 %v135
  %v523 = vunpack.c.l.b16 %v136
  %v524 = vunpack.c.l.b16 %v137
  %v525 = vunpack.c.l.b16 %v138
  %v526 = vunpack.c.l.b16 %v139
  %v527 = vunpack.c.l.b16 %v140
  %v528 = vunpack.c.l.b16 %v141
  %v529 = vunpack.c.l.b16 %v142
  %v530 = vunpack.c.l.b16 %v143
  %v531 = vunpack.c.l.b16 %v144
  %v532 = vunpack.c.l.b16 %v145
  %v533 = vunpack.c.l.b16 %v146
  %v534 = vunpack.c.l.b16 %v147
  %v535 = vunpack.c.l.b16 %v148
  %v536 = vunpack.c.l.b16 %v149
  %v537 = vunpack.c.l.b16 %v150
  %v538 = vunpack.c.l.b16 %v151
  %v539 = vunpack.c.l.b16 %v152
  %v540 = vunpack.c.l.b16 %v153
  %v541 = vunpack.c.l.b16 %v154
  %v542 = vunpack.c.l.b16 %v155
  %v543 = vunpack.c.l.b16 %v156
  %v544 = vunpack.c.l.b16 %v157
  %v545 = vunpack.c.l.b16 %v158
  %v546 = vunpack.c.l.b16 %v159
  %v547 = vunpack.c.l.b16 %v160
  %v548 = vunpack.c.l.b16 %v161
  %v549 = vunpack.c.l.b16 %v162
  %v550 = vunpack.c.l.b16 %v163
  %v551 = vunpack.c.l.b16 %v164
  %v552 = vunpack.c.l.b16 %v165
  %v553 = vunpack.c.l.b16 %v166
  %v554 = vunpack.c.l.b16 %v167
  %v555 = vunpack.c.l.b16 %v168
  %v556 = vunpack.c.l.b16 %v169
  %v557 = vunpack.c.l.b16 %v170
  %v558 = vunpack.c.l.b16 %v171
  %v559 = vunpack.c.l.b16 %v172
  %v560 = vunpack.c.l.b16 %v173
  %v561 = vunpack.c.l.b16 %v174
  %v562 = vunpack.c.l.b16 %v175
  %v563 = vunpack.c.l.b16 %v176
  %v564 = vunpack.c.l.b16 %v177
  %v565 = vunpack.c.l.b16 %v178
  %v566 = vunpack.c.l.b16 %v179
  %v567 = vunpack.c.l.b16 %v180
  %v568 = vunpack.c.l.b16 %v181
  %v569 = vpack.c.b16 %v426, %v425
  %v570 = vpack.c.b16 %v428, %v427
  %v571 = vpack.c.b16 %v430, %v429
  %v572 = vpack.c.b16 %v432, %v431
  %v573 = vpack.c.b16 %v434, %v433
  %v574 = vpack.c.b16 %v436, %v435
  %v575 = vpack.c.b16 %v438, %v437
  %v576 = vpack.c.b16 %v440, %v439
  %v577 = vpack.c.b16 %v442, %v441
  %v578 = vpack.c.b16 %v444, %v443
  %v579 = vpack.c.b16 %v446, %v445
  %v580 = vpack.c.b16 %v448, %v447
  %v581 = vpack.c.b16 %v450, %v449
  %v582 = vpack.c.b16 %v452, %v451
  %v583 = vpack.c.b16 %v454, %v453
  %v584 = vpack.c.b16 %v456, %v455
  %v585 = vpack.c.b16 %v458, %v457
  %v586 = vpack.c.b16 %v460, %v459
  %v587 = vpack.c.b16 %v462, %v461
  %v588 = vpack.c.b16 %v464, %v463
  %v589 = vpack.c.b16 %v466, %v465
  %v590 = vpack.c.b16 %v468, %v467
  %v591 = vpack.c.b16 %v470, %v469
  %v592 = vpack.c.b16 %v472, %v471
  %v593 = vpack.c.b16 %v474, %v473
  %v594 = vpack.c.b16 %v476, %v475
  %v595 = vpack.c.b16 %v478, %v477
  %v596 = vpack.c.b16 %v480, %v479
  %v597 = vpack.c.b16 %v482, %v481
  %v598 = vpack.c.b16 %v484, %v483
  %v599 = vpack.c.b16 %v486, %v485
  %v600 = vpack.c.b16 %v488, %v487
  %v601 = vpack.c.b16 %v490, %v489
  %v602 = vpack.c.b16 %v492, %v491
  %v603 = vpack.c.b16 %v494, %v493
  %v604 = vpack.c.b16 %v496, %v495
  %v605 = vpack.c.b16 %v498, %v497
  %v606 = vpack.c.b16 %v500, %v499
  %v607 = vpack.c.b16 %v502, %v501
  %v608 = vpack.c.b16 %v504, %v503
  %v609 = vpack.c.b16 %v506, %v505
  %v610 = vpack.c.b16 %v508, %v507
  %v611 = vpack.c.b16 %v510, %v509
  %v612 = vpack.c.b16 %v512, %v511
  %v613 = vpack.c.b16 %v514, %v513
  %v614 = vpack.c.b16 %v516, %v515
  %v615 = vpack.c.b16 %v518, %v517
  %v616 = vpack.c.b16 %v520, %v519
  %v617 = vpack.c.b16 %v522, %v521
  %v618 = vpack.c.b16 %v524, %v523
  %v619 = vpack.c.b16 %v526, %v525
  %v620 = vpack.c.b16 %v528, %v527
  %v621 = vpack.c.b16 %v530, %v529
  %v622 = vpack.c.b16 %v532, %v531
  %v623 = vpack.c.b16 %v534, %v533
  %v624 = vpack.c.b16 %v536, %v535
  %v625 = vpack.c.b16 %v538, %v537
  %v626 = vpack.c.b16 %v540, %v539
  %v627 = vpack.c.b16 %v542, %v541
  %v628 = vpack.c.b16 %v544, %v543
  %v629 = vpack.c.b16 %v546, %v545
  %v630 = vpack.c.b16 %v548, %v547
  %v631 = vpack.c.b16 %v550, %v549
  %v632 = vpack.c.b16 %v552, %v551
  %v633 = vpack.c.b16 %v554, %v553
  %v634 = vpack.c.b16 %v556, %v555
  %v635 = vpack.c.b16 %v558, %v557
  %v636 = vpack.c.b16 %v560, %v559
  %v637 = vpack.c.b16 %v562, %v561
  %v638 = vpack.c.b16 %v564, %v563
  %v639 = vpack.c.b16 %v566, %v565
  %v640 = vpack.c.b16 %v568, %v567
  %713 = vmatprep.subr.bf16.mxu0 0
  %714 = vmatpush1.bf16.msra.mxu0 %v569
  %715 = vmatprep.subr.bf16.mxu0 0
  %716 = vmatpush1.bf16.msra.mxu0 %v570
  %717 = vmatprep.subr.bf16.mxu0 0
  %718 = vmatpush1.bf16.msra.mxu0 %v571
  %719 = vmatprep.subr.bf16.mxu0 0
  %720 = vmatpush1.bf16.msra.mxu0 %v572
  %721 = vmatprep.subr.bf16.mxu0 0
  %722 = vmatpush1.bf16.msra.mxu0 %v573
  %723 = vmatprep.subr.bf16.mxu0 0
  %724 = vmatpush1.bf16.msra.mxu0 %v574
  %725 = vmatprep.subr.bf16.mxu0 0
  %726 = vmatpush1.bf16.msra.mxu0 %v575
  %727 = vmatprep.subr.bf16.mxu0 0
  %728 = vmatpush1.bf16.msra.mxu0 %v576
  %729 = vmatprep.subr.bf16.mxu0 0
  %730 = vmatpush1.bf16.msra.mxu0 %v577
  %731 = vmatprep.subr.bf16.mxu0 0
  %732 = vmatpush1.bf16.msra.mxu0 %v578
  %733 = vmatprep.subr.bf16.mxu0 0
  %734 = vmatpush1.bf16.msra.mxu0 %v579
  %735 = vmatprep.subr.bf16.mxu0 0
  %736 = vmatpush1.bf16.msra.mxu0 %v580
  %737 = vmatprep.subr.bf16.mxu0 0
  %738 = vmatpush1.bf16.msra.mxu0 %v581
  %739 = vmatprep.subr.bf16.mxu0 0
  %740 = vmatpush1.bf16.msra.mxu0 %v582
  %741 = vmatprep.subr.bf16.mxu0 0
  %742 = vmatpush1.bf16.msra.mxu0 %v583
  %743 = vmatprep.subr.bf16.mxu0 0
  %744 = vmatpush1.bf16.msra.mxu0 %v584
  %745 = vmatprep.mubr.bf16.mxu0 %v246
  %746 = vmatmul.mubr.bf16.gmra.mrb[0].mxu0 %v245
  %v747 = vpop.f32.mrb[0].mxu0
  %v748 = vadd.f32 %v187, %v747
  %v749 = vpop.f32.mrb[0].mxu0
  %v750 = vpop.f32.mrb[0].mxu0
  %v751 = vadd.f32 %v187, %v750
  %v752 = vpop.f32.mrb[0].mxu0
  %753 = vmatprep.mubr.bf16.mxu0 %v255
  %754 = vmatmul.mubr.bf16.gmra.mrb[0].mxu0 %v254
  %v755 = vpop.f32.mrb[0].mxu0
  %v756 = vadd.f32 %v187, %v755
  %v757 = vpop.f32.mrb[0].mxu0
  %v758 = vpop.f32.mrb[0].mxu0
  %v759 = vadd.f32 %v187, %v758
  %v760 = vpop.f32.mrb[0].mxu0
  %761 = vdwg.mxu0
  %762 = vmatprep.subr.bf16.mxu0 0
  %763 = vmatpush1.bf16.msra.mxu0 %v585
  %764 = vmatprep.subr.bf16.mxu0 0
  %765 = vmatpush1.bf16.msra.mxu0 %v586
  %766 = vmatprep.subr.bf16.mxu0 0
  %767 = vmatpush1.bf16.msra.mxu0 %v587
  %768 = vmatprep.subr.bf16.mxu0 0
  %769 = vmatpush1.bf16.msra.mxu0 %v588
  %770 = vmatprep.subr.bf16.mxu0 0
  %771 = vmatpush1.bf16.msra.mxu0 %v589
  %772 = vmatprep.subr.bf16.mxu0 0
  %773 = vmatpush1.bf16.msra.mxu0 %v590
  %774 = vmatprep.subr.bf16.mxu0 0
  %775 = vmatpush1.bf16.msra.mxu0 %v591
  %776 = vmatprep.subr.bf16.mxu0 0
  %777 = vmatpush1.bf16.msra.mxu0 %v592
  %778 = vmatprep.subr.bf16.mxu0 0
  %779 = vmatpush1.bf16.msra.mxu0 %v593
  %780 = vmatprep.subr.bf16.mxu0 0
  %781 = vmatpush1.bf16.msra.mxu0 %v594
  %782 = vmatprep.subr.bf16.mxu0 0
  %783 = vmatpush1.bf16.msra.mxu0 %v595
  %784 = vmatprep.subr.bf16.mxu0 0
  %785 = vmatpush1.bf16.msra.mxu0 %v596
  %786 = vmatprep.subr.bf16.mxu0 0
  %787 = vmatpush1.bf16.msra.mxu0 %v597
  %788 = vmatprep.subr.bf16.mxu0 0
  %789 = vmatpush1.bf16.msra.mxu0 %v598
  %790 = vmatprep.subr.bf16.mxu0 0
  %791 = vmatpush1.bf16.msra.mxu0 %v599
  %792 = vmatprep.subr.bf16.mxu0 0
  %793 = vmatpush1.bf16.msra.mxu0 %v600
  %794 = vmatprep.mubr.bf16.mxu0 %v248
  %795 = vmatmul.mubr.bf16.gmra.mrb[0].mxu0 %v247
  %v796 = vpop.f32.mrb[0].mxu0
  %v797 = vadd.f32 %v748, %v796
  %v798 = vpop.f32.mrb[0].mxu0
  %v799 = vpop.f32.mrb[0].mxu0
  %v800 = vadd.f32 %v751, %v799
  %v801 = vpop.f32.mrb[0].mxu0
  %802 = vmatprep.mubr.bf16.mxu0 %v257
  %803 = vmatmul.mubr.bf16.gmra.mrb[0].mxu0 %v256
  %v804 = vpop.f32.mrb[0].mxu0
  %v805 = vadd.f32 %v756, %v804
  %v806 = vpop.f32.mrb[0].mxu0
  %v807 = vpop.f32.mrb[0].mxu0
  %v808 = vadd.f32 %v759, %v807
  %v809 = vpop.f32.mrb[0].mxu0
  %810 = vdwg.mxu0
  %811 = vmatprep.subr.bf16.mxu0 0
  %812 = vmatpush1.bf16.msra.mxu0 %v601
  %813 = vmatprep.subr.bf16.mxu0 0
  %814 = vmatpush1.bf16.msra.mxu0 %v602
  %815 = vmatprep.subr.bf16.mxu0 0
  %816 = vmatpush1.bf16.msra.mxu0 %v603
  %817 = vmatprep.subr.bf16.mxu0 0
  %818 = vmatpush1.bf16.msra.mxu0 %v604
  %819 = vmatprep.subr.bf16.mxu0 0
  %820 = vmatpush1.bf16.msra.mxu0 %v605
  %821 = vmatprep.subr.bf16.mxu0 0
  %822 = vmatpush1.bf16.msra.mxu0 %v606
  %823 = vmatprep.subr.bf16.mxu0 0
  %824 = vmatpush1.bf16.msra.mxu0 %v607
  %825 = vmatprep.subr.bf16.mxu0 0
  %826 = vmatpush1.bf16.msra.mxu0 %v608
  %827 = vmatprep.subr.bf16.mxu0 0
  %828 = vmatpush1.bf16.msra.mxu0 %v609
  %829 = vmatprep.subr.bf16.mxu0 0
  %830 = vmatpush1.bf16.msra.mxu0 %v610
  %831 = vmatprep.subr.bf16.mxu0 0
  %832 = vmatpush1.bf16.msra.mxu0 %v611
  %833 = vmatprep.subr.bf16.mxu0 0
  %834 = vmatpush1.bf16.msra.mxu0 %v612
  %835 = vmatprep.subr.bf16.mxu0 0
  %836 = vmatpush1.bf16.msra.mxu0 %v613
  %837 = vmatprep.subr.bf16.mxu0 0
  %838 = vmatpush1.bf16.msra.mxu0 %v614
  %839 = vmatprep.subr.bf16.mxu0 0
  %840 = vmatpush1.bf16.msra.mxu0 %v615
  %841 = vmatprep.subr.bf16.mxu0 0
  %842 = vmatpush1.bf16.msra.mxu0 %v616
  %843 = vmatprep.mubr.bf16.mxu0 %v250
  %844 = vmatmul.mubr.bf16.gmra.mrb[0].mxu0 %v249
  %v845 = vpop.f32.mrb[0].mxu0
  %v846 = vadd.f32 %v797, %v845
  %v847 = vpop.f32.mrb[0].mxu0
  %v848 = vpop.f32.mrb[0].mxu0
  %v849 = vadd.f32 %v800, %v848
  %v850 = vpop.f32.mrb[0].mxu0
  %851 = vmatprep.mubr.bf16.mxu0 %v259
  %852 = vmatmul.mubr.bf16.gmra.mrb[0].mxu0 %v258
  %v853 = vpop.f32.mrb[0].mxu0
  %v854 = vadd.f32 %v805, %v853
  %v855 = vpop.f32.mrb[0].mxu0
  %v856 = vpop.f32.mrb[0].mxu0
  %v857 = vadd.f32 %v808, %v856
  %v858 = vpop.f32.mrb[0].mxu0
  %859 = vdwg.mxu0
  %860 = vmatprep.subr.bf16.mxu0 0
  %861 = vmatpush1.bf16.msra.mxu0 %v617
  %862 = vmatprep.subr.bf16.mxu0 0
  %863 = vmatpush1.bf16.msra.mxu0 %v618
  %864 = vmatprep.subr.bf16.mxu0 0
  %865 = vmatpush1.bf16.msra.mxu0 %v619
  %866 = vmatprep.subr.bf16.mxu0 0
  %867 = vmatpush1.bf16.msra.mxu0 %v620
  %868 = vmatprep.subr.bf16.mxu0 0
  %869 = vmatpush1.bf16.msra.mxu0 %v621
  %870 = vmatprep.subr.bf16.mxu0 0
  %871 = vmatpush1.bf16.msra.mxu0 %v622
  %872 = vmatprep.subr.bf16.mxu0 0
  %873 = vmatpush1.bf16.msra.mxu0 %v623
  %874 = vmatprep.subr.bf16.mxu0 0
  %875 = vmatpush1.bf16.msra.mxu0 %v624
  %876 = vmatprep.subr.bf16.mxu0 0
  %877 = vmatpush1.bf16.msra.mxu0 %v625
  %878 = vmatprep.subr.bf16.mxu0 0
  %879 = vmatpush1.bf16.msra.mxu0 %v626
  %880 = vmatprep.subr.bf16.mxu0 0
  %881 = vmatpush1.bf16.msra.mxu0 %v627
  %882 = vmatprep.subr.bf16.mxu0 0
  %883 = vmatpush1.bf16.msra.mxu0 %v628
  %884 = vmatprep.subr.bf16.mxu0 0
  %885 = vmatpush1.bf16.msra.mxu0 %v629
  %886 = vmatprep.subr.bf16.mxu0 0
  %887 = vmatpush1.bf16.msra.mxu0 %v630
  %888 = vmatprep.subr.bf16.mxu0 0
  %889 = vmatpush1.bf16.msra.mxu0 %v631
  %890 = vmatprep.subr.bf16.mxu0 0
  %891 = vmatpush1.bf16.msra.mxu0 %v632
  %892 = vmatprep.mubr.bf16.mxu0 %v252
  %893 = vmatmul.mubr.bf16.gmra.mrb[0].mxu0 %v251
  %v894 = vpop.f32.mrb[0].mxu0
  %v895 = vadd.f32 %v846, %v894
  %v896 = vpop.f32.mrb[0].mxu0
  %v897 = vpop.f32.mrb[0].mxu0
  %v898 = vadd.f32 %v849, %v897
  %v899 = vpop.f32.mrb[0].mxu0
  %900 = vmatprep.mubr.bf16.mxu0 %v261
  %901 = vmatmul.mubr.bf16.gmra.mrb[0].mxu0 %v260
  %v902 = vpop.f32.mrb[0].mxu0
  %v903 = vadd.f32 %v854, %v902
  %v904 = vpop.f32.mrb[0].mxu0
  %v905 = vpop.f32.mrb[0].mxu0
  %v906 = vadd.f32 %v857, %v905
  %v907 = vpop.f32.mrb[0].mxu0
  %908 = vdwg.mxu0
  %909 = vmatprep.subr.bf16.mxu0 0
  %910 = vmatpush1.bf16.msra.mxu0 %v633
  %911 = vmatprep.subr.bf16.mxu0 0
  %912 = vmatpush1.bf16.msra.mxu0 %v634
  %913 = vmatprep.subr.bf16.mxu0 0
  %914 = vmatpush1.bf16.msra.mxu0 %v635
  %915 = vmatprep.subr.bf16.mxu0 0
  %916 = vmatpush1.bf16.msra.mxu0 %v636
  %917 = vmatprep.subr.bf16.mxu0 0
  %918 = vmatpush1.bf16.msra.mxu0 %v637
  %919 = vmatprep.subr.bf16.mxu0 0
  %920 = vmatpush1.bf16.msra.mxu0 %v638
  %921 = vmatprep.subr.bf16.mxu0 0
  %922 = vmatpush1.bf16.msra.mxu0 %v639
  %923 = vmatprep.subr.bf16.mxu0 0
  %924 = vmatpush1.bf16.msra.mxu0 %v640
  %925 = vmatprep.subr.bf16.mxu0 0
  %926 = vmatpush1.bf16.msra.mxu0 0
  %927 = vmatprep.subr.bf16.mxu0 0
  %928 = vmatpush1.bf16.msra.mxu0 0
  %929 = vmatprep.subr.bf16.mxu0 0
  %930 = vmatpush1.bf16.msra.mxu0 0
  %931 = vmatprep.subr.bf16.mxu0 0
  %932 = vmatpush1.bf16.msra.mxu0 0
  %933 = vmatprep.subr.bf16.mxu0 0
  %934 = vmatpush1.bf16.msra.mxu0 0
  %935 = vmatprep.subr.bf16.mxu0 0
  %936 = vmatpush1.bf16.msra.mxu0 0
  %937 = vmatprep.subr.bf16.mxu0 0
  %938 = vmatpush1.bf16.msra.mxu0 0
  %939 = vmatprep.subr.bf16.mxu0 0
  %940 = vmatpush1.bf16.msra.mxu0 0
  %941 = vmatprep.mubr.bf16.mxu0 0
  %942 = vmatmul.mubr.bf16.gmra.mrb[0].mxu0 %v253
  %v943 = vpop.f32.mrb[0].mxu0
  %v944 = vadd.f32 %v895, %v943
  %v945 = vpop.f32.mrb[0].mxu0
  %v946 = vpop.f32.mrb[0].mxu0
  %v947 = vadd.f32 %v898, %v946
  %v948 = vpop.f32.mrb[0].mxu0
  %949 = vmatprep.mubr.bf16.mxu0 0
  %950 = vmatmul.mubr.bf16.gmra.mrb[0].mxu0 %v262
  %v951 = vpop.f32.mrb[0].mxu0
  %v952 = vadd.f32 %v903, %v951
  %v953 = vpop.f32.mrb[0].mxu0
  %v954 = vpop.f32.mrb[0].mxu0
  %v955 = vadd.f32 %v906, %v954
  %v956 = vpop.f32.mrb[0].mxu0
  %957 = vdwg.mxu0
  %v958 = vld [vmem:[%s3] sm:$0xff]
  %v959 = vld [vmem:[%s3 + $0x8] sm:$0xff]
  %v960 = vld [vmem:[%s3 + $0x10] sm:$0xff]
  %v961 = vld [vmem:[%s3 + $0x18] sm:$0xff]
  %v962 = vadd.f32 %v944, %v958
  %v963 = vadd.f32 %v947, %v959
  %v964 = vadd.f32 %v952, %v960
  %v965 = vadd.f32 %v955, %v961
  %v966 = vmax.f32 %v962, 0.0
  %v967 = vmax.f32 %v963, 0.0
  %v968 = vmax.f32 %v964, 0.0
  %v969 = vmax.f32 %v965, 0.0
  %970 = vst [vmem:[%s4] sm:$0xff] %v966
  %971 = vst [vmem:[%s4 + $0x8] sm:$0xff] %v967
  %972 = vst [vmem:[%s4 + $0x10] sm:$0xff] %v968
  %973 = vst [vmem:[%s4 + $0x18] sm:$0xff] %v969
  // Predicated region
  $region18: #{_lambda_.21} parent=0 // pred_check
    _
  $region19: #{_lambda_.21} parent=0 // pred_check_branch
    %975 = sbr.rel (0) target = $region21
  $region20: #{_lambda_.21} parent=0 // pred_region
    _
  $region21: #{_lambda_.21} parent=0 // pred_fallthru
    _
  // Predicated region
  $region22: #{_lambda_.21} parent=0 // pred_check
    _
  $region23: #{_lambda_.21} parent=0 // pred_check_branch
    %977 = sbr.rel (0) target = $region25
  $region24: #{_lambda_.21} parent=0 // pred_region
    _
  $region25: #{_lambda_.21} parent=0 // pred_fallthru
    _

// kernel: _lambda_.24
$region0: #{_lambda_.24}
  #allocation0 [shape = 'u32[]', space=smem, size = 0x4, offset = 0x4, fixed_abs, tag = 'smem constant byte address 0x4 - core index']
  #allocation1 [shape = 'u32[144,128]{1,0:T(1,128)}', space=vmem, size = 0x12000, scoped, tag = 'internal scratch']
  %s0 = inlined_call_operand.vmem [shape: bf16[8,1152], index: 0, kind: input, shape index: {}]
  %s1 = inlined_call_operand.vmem [shape: bf16[1152,128], index: 1, kind: input, shape index: {}]
  %s2 = inlined_call_operand.vmem [shape: f32[1,128], index: 2, kind: input, shape index: {}]
  %s3 = inlined_call_operand.vmem [shape: bf16[128,128], index: 3, kind: input, shape index: {}]
  %s4 = inlined_call_operand.vmem [shape: f32[1,128], index: 4, kind: input, shape index: {}]
  %s5 = inlined_call_operand.vmem [shape: f32[8,128], index: 5, kind: output, shape index: {0}]
  %s6 = inlined_call_operand.vmem [shape: f32[8,128], index: 6, kind: output, shape index: {1}]
  %7 = xla_tuple %s5, %s6
  %s8 = sld [smem:[#allocation0]]
  $region38: #{_lambda_.24} parent=0
    _
  %s10 = ssub.s32 1, %s8
  %s11 = scalar_select 0, %s10, %s8
  // Predicated region
  $region2: #{_lambda_.24} parent=0 // pred_check
    _
  $region3: #{_lambda_.24} parent=0 // pred_check_branch
    %13 = sbr.rel (0) target = $region5
  $region4: #{_lambda_.24} parent=0 // pred_region
    _
  $region5: #{_lambda_.24} parent=0 // pred_fallthru
    _
  // Predicated region
  $region6: #{_lambda_.24} parent=0 // pred_check
    _
  $region7: #{_lambda_.24} parent=0 // pred_check_branch
    %15 = sbr.rel (0) target = $region9
  $region8: #{_lambda_.24} parent=0 // pred_region
    _
  $region9: #{_lambda_.24} parent=0 // pred_fallthru
    _
  // Predicated region
  $region10: #{_lambda_.24} parent=0 // pred_check
    _
  $region11: #{_lambda_.24} parent=0 // pred_check_branch
    %17 = sbr.rel (0) target = $region13
  $region12: #{_lambda_.24} parent=0 // pred_region
    _
  $region13: #{_lambda_.24} parent=0 // pred_fallthru
    _
  // Predicated region
  $region14: #{_lambda_.24} parent=0 // pred_check
    _
  $region15: #{_lambda_.24} parent=0 // pred_check_branch
    %19 = sbr.rel (0) target = $region17
  $region16: #{_lambda_.24} parent=0 // pred_region
    _
  $region17: #{_lambda_.24} parent=0 // pred_fallthru
    _
  // Predicated region
  $region18: #{_lambda_.24} parent=0 // pred_check
    _
  $region19: #{_lambda_.24} parent=0 // pred_check_branch
    %21 = sbr.rel (0) target = $region21
  $region20: #{_lambda_.24} parent=0 // pred_region
    _
  $region21: #{_lambda_.24} parent=0 // pred_fallthru
    _
  %v23 = vld [vmem:[%s0] sm:$0xff]
  %v24 = vld [vmem:[%s0 + $0x8] sm:$0xff]
  %v25 = vld [vmem:[%s0 + $0x10] sm:$0xff]
  %v26 = vld [vmem:[%s0 + $0x18] sm:$0xff]
  %v27 = vld [vmem:[%s0 + $0x20] sm:$0xf]
  %v28 = vld [vmem:[%s1] sm:$0xf]
  %v29 = vld [vmem:[%s1 + $0x4] sm:$0xf]
  %v30 = vld [vmem:[%s1 + $0x8] sm:$0xf]
  %v31 = vld [vmem:[%s1 + $0xc] sm:$0xf]
  %v32 = vld [vmem:[%s1 + $0x10] sm:$0xf]
  %v33 = vld [vmem:[%s1 + $0x14] sm:$0xf]
  %v34 = vld [vmem:[%s1 + $0x18] sm:$0xf]
  %v35 = vld [vmem:[%s1 + $0x1c] sm:$0xf]
  %v36 = vld [vmem:[%s1 + $0x20] sm:$0xf]
  %v37 = vld [vmem:[%s1 + $0x24] sm:$0xf]
  %v38 = vld [vmem:[%s1 + $0x28] sm:$0xf]
  %v39 = vld [vmem:[%s1 + $0x2c] sm:$0xf]
  %v40 = vld [vmem:[%s1 + $0x30] sm:$0xf]
  %v41 = vld [vmem:[%s1 + $0x34] sm:$0xf]
  %v42 = vld [vmem:[%s1 + $0x38] sm:$0xf]
  %v43 = vld [vmem:[%s1 + $0x3c] sm:$0xf]
  %v44 = vld [vmem:[%s1 + $0x40] sm:$0xf]
  %v45 = vld [vmem:[%s1 + $0x44] sm:$0xf]
  %v46 = vld [vmem:[%s1 + $0x48] sm:$0xf]
  %v47 = vld [vmem:[%s1 + $0x4c] sm:$0xf]
  %v48 = vld [vmem:[%s1 + $0x50] sm:$0xf]
  %v49 = vld [vmem:[%s1 + $0x54] sm:$0xf]
  %v50 = vld [vmem:[%s1 + $0x58] sm:$0xf]
  %v51 = vld [vmem:[%s1 + $0x5c] sm:$0xf]
  %v52 = vld [vmem:[%s1 + $0x60] sm:$0xf]
  %v53 = vld [vmem:[%s1 + $0x64] sm:$0xf]
  %v54 = vld [vmem:[%s1 + $0x68] sm:$0xf]
  %v55 = vld [vmem:[%s1 + $0x6c] sm:$0xf]
  %v56 = vld [vmem:[%s1 + $0x70] sm:$0xf]
  %v57 = vld [vmem:[%s1 + $0x74] sm:$0xf]
  %v58 = vld [vmem:[%s1 + $0x78] sm:$0xf]
  %v59 = vld [vmem:[%s1 + $0x7c] sm:$0xf]
  %v60 = vld [vmem:[%s1 + $0x80] sm:$0xf]
  %v61 = vld [vmem:[%s1 + $0x84] sm:$0xf]
  %v62 = vld [vmem:[%s1 + $0x88] sm:$0xf]
  %v63 = vld [vmem:[%s1 + $0x8c] sm:$0xf]
  %v64 = vld [vmem:[%s1 + $0x90] sm:$0xf]
  %v65 = vld [vmem:[%s1 + $0x94] sm:$0xf]
  %v66 = vld [vmem:[%s1 + $0x98] sm:$0xf]
  %v67 = vld [vmem:[%s1 + $0x9c] sm:$0xf]
  %v68 = vld [vmem:[%s1 + $0xa0] sm:$0xf]
  %v69 = vld [vmem:[%s1 + $0xa4] sm:$0xf]
  %v70 = vld [vmem:[%s1 + $0xa8] sm:$0xf]
  %v71 = vld [vmem:[%s1 + $0xac] sm:$0xf]
  %v72 = vld [vmem:[%s1 + $0xb0] sm:$0xf]
  %v73 = vld [vmem:[%s1 + $0xb4] sm:$0xf]
  %v74 = vld [vmem:[%s1 + $0xb8] sm:$0xf]
  %v75 = vld [vmem:[%s1 + $0xbc] sm:$0xf]
  %v76 = vld [vmem:[%s1 + $0xc0] sm:$0xf]
  %v77 = vld [vmem:[%s1 + $0xc4] sm:$0xf]
  %v78 = vld [vmem:[%s1 + $0xc8] sm:$0xf]
  %v79 = vld [vmem:[%s1 + $0xcc] sm:$0xf]
  %v80 = vld [vmem:[%s1 + $0xd0] sm:$0xf]
  %v81 = vld [vmem:[%s1 + $0xd4] sm:$0xf]
  %v82 = vld [vmem:[%s1 + $0xd8] sm:$0xf]
  %v83 = vld [vmem:[%s1 + $0xdc] sm:$0xf]
  %v84 = vld [vmem:[%s1 + $0xe0] sm:$0xf]
  %v85 = vld [vmem:[%s1 + $0xe4] sm:$0xf]
  %v86 = vld [vmem:[%s1 + $0xe8] sm:$0xf]
  %v87 = vld [vmem:[%s1 + $0xec] sm:$0xf]
  %v88 = vld [vmem:[%s1 + $0xf0] sm:$0xf]
  %v89 = vld [vmem:[%s1 + $0xf4] sm:$0xf]
  %v90 = vld [vmem:[%s1 + $0xf8] sm:$0xf]
  %v91 = vld [vmem:[%s1 + $0xfc] sm:$0xf]
  %v92 = vld [vmem:[%s1 + $0x100] sm:$0xf]
  %v93 = vld [vmem:[%s1 + $0x104] sm:$0xf]
  %v94 = vld [vmem:[%s1 + $0x108] sm:$0xf]
  %v95 = vld [vmem:[%s1 + $0x10c] sm:$0xf]
  %v96 = vld [vmem:[%s1 + $0x110] sm:$0xf]
  %v97 = vld [vmem:[%s1 + $0x114] sm:$0xf]
  %v98 = vld [vmem:[%s1 + $0x118] sm:$0xf]
  %v99 = vld [vmem:[%s1 + $0x11c] sm:$0xf]
  %v100 = vld [vmem:[%s1 + $0x120] sm:$0xf]
  %v101 = vld [vmem:[%s1 + $0x124] sm:$0xf]
  %v102 = vld [vmem:[%s1 + $0x128] sm:$0xf]
  %v103 = vld [vmem:[%s1 + $0x12c] sm:$0xf]
  %v104 = vld [vmem:[%s1 + $0x130] sm:$0xf]
  %v105 = vld [vmem:[%s1 + $0x134] sm:$0xf]
  %v106 = vld [vmem:[%s1 + $0x138] sm:$0xf]
  %v107 = vld [vmem:[%s1 + $0x13c] sm:$0xf]
  %v108 = vld [vmem:[%s1 + $0x140] sm:$0xf]
  %v109 = vld [vmem:[%s1 + $0x144] sm:$0xf]
  %v110 = vld [vmem:[%s1 + $0x148] sm:$0xf]
  %v111 = vld [vmem:[%s1 + $0x14c] sm:$0xf]
  %v112 = vld [vmem:[%s1 + $0x150] sm:$0xf]
  %v113 = vld [vmem:[%s1 + $0x154] sm:$0xf]
  %v114 = vld [vmem:[%s1 + $0x158] sm:$0xf]
  %v115 = vld [vmem:[%s1 + $0x15c] sm:$0xf]
  %v116 = vld [vmem:[%s1 + $0x160] sm:$0xf]
  %v117 = vld [vmem:[%s1 + $0x164] sm:$0xf]
  %v118 = vld [vmem:[%s1 + $0x168] sm:$0xf]
  %v119 = vld [vmem:[%s1 + $0x16c] sm:$0xf]
  %v120 = vld [vmem:[%s1 + $0x170] sm:$0xf]
  %v121 = vld [vmem:[%s1 + $0x174] sm:$0xf]
  %v122 = vld [vmem:[%s1 + $0x178] sm:$0xf]
  %v123 = vld [vmem:[%s1 + $0x17c] sm:$0xf]
  %v124 = vld [vmem:[%s1 + $0x180] sm:$0xf]
  %v125 = vld [vmem:[%s1 + $0x184] sm:$0xf]
  %v126 = vld [vmem:[%s1 + $0x188] sm:$0xf]
  %v127 = vld [vmem:[%s1 + $0x18c] sm:$0xf]
  %v128 = vld [vmem:[%s1 + $0x190] sm:$0xf]
  %v129 = vld [vmem:[%s1 + $0x194] sm:$0xf]
  %v130 = vld [vmem:[%s1 + $0x198] sm:$0xf]
  %v131 = vld [vmem:[%s1 + $0x19c] sm:$0xf]
  %v132 = vld [vmem:[%s1 + $0x1a0] sm:$0xf]
  %v133 = vld [vmem:[%s1 + $0x1a4] sm:$0xf]
  %v134 = vld [vmem:[%s1 + $0x1a8] sm:$0xf]
  %v135 = vld [vmem:[%s1 + $0x1ac] sm:$0xf]
  %v136 = vld [vmem:[%s1 + $0x1b0] sm:$0xf]
  %v137 = vld [vmem:[%s1 + $0x1b4] sm:$0xf]
  %v138 = vld [vmem:[%s1 + $0x1b8] sm:$0xf]
  %v139 = vld [vmem:[%s1 + $0x1bc] sm:$0xf]
  %v140 = vld [vmem:[%s1 + $0x1c0] sm:$0xf]
  %v141 = vld [vmem:[%s1 + $0x1c4] sm:$0xf]
  %v142 = vld [vmem:[%s1 + $0x1c8] sm:$0xf]
  %v143 = vld [vmem:[%s1 + $0x1cc] sm:$0xf]
  %v144 = vld [vmem:[%s1 + $0x1d0] sm:$0xf]
  %v145 = vld [vmem:[%s1 + $0x1d4] sm:$0xf]
  %v146 = vld [vmem:[%s1 + $0x1d8] sm:$0xf]
  %v147 = vld [vmem:[%s1 + $0x1dc] sm:$0xf]
  %v148 = vld [vmem:[%s1 + $0x1e0] sm:$0xf]
  %v149 = vld [vmem:[%s1 + $0x1e4] sm:$0xf]
  %v150 = vld [vmem:[%s1 + $0x1e8] sm:$0xf]
  %v151 = vld [vmem:[%s1 + $0x1ec] sm:$0xf]
  %v152 = vld [vmem:[%s1 + $0x1f0] sm:$0xf]
  %v153 = vld [vmem:[%s1 + $0x1f4] sm:$0xf]
  %v154 = vld [vmem:[%s1 + $0x1f8] sm:$0xf]
  %v155 = vld [vmem:[%s1 + $0x1fc] sm:$0xf]
  %v156 = vld [vmem:[%s1 + $0x200] sm:$0xf]
  %v157 = vld [vmem:[%s1 + $0x204] sm:$0xf]
  %v158 = vld [vmem:[%s1 + $0x208] sm:$0xf]
  %v159 = vld [vmem:[%s1 + $0x20c] sm:$0xf]
  %v160 = vld [vmem:[%s1 + $0x210] sm:$0xf]
  %v161 = vld [vmem:[%s1 + $0x214] sm:$0xf]
  %v162 = vld [vmem:[%s1 + $0x218] sm:$0xf]
  %v163 = vld [vmem:[%s1 + $0x21c] sm:$0xf]
  %v164 = vld [vmem:[%s1 + $0x220] sm:$0xf]
  %v165 = vld [vmem:[%s1 + $0x224] sm:$0xf]
  %v166 = vld [vmem:[%s1 + $0x228] sm:$0xf]
  %v167 = vld [vmem:[%s1 + $0x22c] sm:$0xf]
  %v168 = vld [vmem:[%s1 + $0x230] sm:$0xf]
  %v169 = vld [vmem:[%s1 + $0x234] sm:$0xf]
  %v170 = vld [vmem:[%s1 + $0x238] sm:$0xf]
  %v171 = vld [vmem:[%s1 + $0x23c] sm:$0xf]
  %v172 = vld [vmem:[%s2] sm:$0x1]
  %v174 = vlaneseq
  %v175 = vshrl.u32 %v174, 7
  %v176 = vsub.s32 0, %v175
  %v177 = vrot.slane %v172, %v176
  %v184 = vunpack.c.l.b16 %v23
  %v185 = vunpack.c.h.b16 %v23
  %v186 = vunpack.c.l.b16 %v24
  %v187 = vunpack.c.h.b16 %v24
  %v188 = vunpack.c.l.b16 %v25
  %v189 = vunpack.c.h.b16 %v25
  %v190 = vunpack.c.l.b16 %v26
  %v191 = vunpack.c.h.b16 %v26
  %v192 = vunpack.c.l.b16 %v27
  %v193 = vpack.c.b16 %v184, %v184
  %v194 = vpack.c.b16 %v185, %v185
  %v195 = vpack.c.b16 %v186, %v186
  %v196 = vpack.c.b16 %v187, %v187
  %v197 = vpack.c.b16 %v188, %v188
  %v198 = vpack.c.b16 %v189, %v189
  %v199 = vpack.c.b16 %v190, %v190
  %v200 = vpack.c.b16 %v191, %v191
  %v201 = vpack.c.b16 %v192, %v192
  %v355 = vunpack.c.l.b16 %v28
  %v356 = vunpack.c.l.b16 %v29
  %v357 = vunpack.c.l.b16 %v30
  %v358 = vunpack.c.l.b16 %v31
  %v359 = vunpack.c.l.b16 %v32
  %v360 = vunpack.c.l.b16 %v33
  %v361 = vunpack.c.l.b16 %v34
  %v362 = vunpack.c.l.b16 %v35
  %v363 = vunpack.c.l.b16 %v36
  %v364 = vunpack.c.l.b16 %v37
  %v365 = vunpack.c.l.b16 %v38
  %v366 = vunpack.c.l.b16 %v39
  %v367 = vunpack.c.l.b16 %v40
  %v368 = vunpack.c.l.b16 %v41
  %v369 = vunpack.c.l.b16 %v42
  %v370 = vunpack.c.l.b16 %v43
  %v371 = vunpack.c.l.b16 %v44
  %v372 = vunpack.c.l.b16 %v45
  %v373 = vunpack.c.l.b16 %v46
  %v374 = vunpack.c.l.b16 %v47
  %v375 = vunpack.c.l.b16 %v48
  %v376 = vunpack.c.l.b16 %v49
  %v377 = vunpack.c.l.b16 %v50
  %v378 = vunpack.c.l.b16 %v51
  %v379 = vunpack.c.l.b16 %v52
  %v380 = vunpack.c.l.b16 %v53
  %v381 = vunpack.c.l.b16 %v54
  %v382 = vunpack.c.l.b16 %v55
  %v383 = vunpack.c.l.b16 %v56
  %v384 = vunpack.c.l.b16 %v57
  %v385 = vunpack.c.l.b16 %v58
  %v386 = vunpack.c.l.b16 %v59
  %v387 = vunpack.c.l.b16 %v60
  %v388 = vunpack.c.l.b16 %v61
  %v389 = vunpack.c.l.b16 %v62
  %v390 = vunpack.c.l.b16 %v63
  %v391 = vunpack.c.l.b16 %v64
  %v392 = vunpack.c.l.b16 %v65
  %v393 = vunpack.c.l.b16 %v66
  %v394 = vunpack.c.l.b16 %v67
  %v395 = vunpack.c.l.b16 %v68
  %v396 = vunpack.c.l.b16 %v69
  %v397 = vunpack.c.l.b16 %v70
  %v398 = vunpack.c.l.b16 %v71
  %v399 = vunpack.c.l.b16 %v72
  %v400 = vunpack.c.l.b16 %v73
  %v401 = vunpack.c.l.b16 %v74
  %v402 = vunpack.c.l.b16 %v75
  %v403 = vunpack.c.l.b16 %v76
  %v404 = vunpack.c.l.b16 %v77
  %v405 = vunpack.c.l.b16 %v78
  %v406 = vunpack.c.l.b16 %v79
  %v407 = vunpack.c.l.b16 %v80
  %v408 = vunpack.c.l.b16 %v81
  %v409 = vunpack.c.l.b16 %v82
  %v410 = vunpack.c.l.b16 %v83
  %v411 = vunpack.c.l.b16 %v84
  %v412 = vunpack.c.l.b16 %v85
  %v413 = vunpack.c.l.b16 %v86
  %v414 = vunpack.c.l.b16 %v87
  %v415 = vunpack.c.l.b16 %v88
  %v416 = vunpack.c.l.b16 %v89
  %v417 = vunpack.c.l.b16 %v90
  %v418 = vunpack.c.l.b16 %v91
  %v419 = vunpack.c.l.b16 %v92
  %v420 = vunpack.c.l.b16 %v93
  %v421 = vunpack.c.l.b16 %v94
  %v422 = vunpack.c.l.b16 %v95
  %v423 = vunpack.c.l.b16 %v96
  %v424 = vunpack.c.l.b16 %v97
  %v425 = vunpack.c.l.b16 %v98
  %v426 = vunpack.c.l.b16 %v99
  %v427 = vunpack.c.l.b16 %v100
  %v428 = vunpack.c.l.b16 %v101
  %v429 = vunpack.c.l.b16 %v102
  %v430 = vunpack.c.l.b16 %v103
  %v431 = vunpack.c.l.b16 %v104
  %v432 = vunpack.c.l.b16 %v105
  %v433 = vunpack.c.l.b16 %v106
  %v434 = vunpack.c.l.b16 %v107
  %v435 = vunpack.c.l.b16 %v108
  %v436 = vunpack.c.l.b16 %v109
  %v437 = vunpack.c.l.b16 %v110
  %v438 = vunpack.c.l.b16 %v111
  %v439 = vunpack.c.l.b16 %v112
  %v440 = vunpack.c.l.b16 %v113
  %v441 = vunpack.c.l.b16 %v114
  %v442 = vunpack.c.l.b16 %v115
  %v443 = vunpack.c.l.b16 %v116
  %v444 = vunpack.c.l.b16 %v117
  %v445 = vunpack.c.l.b16 %v118
  %v446 = vunpack.c.l.b16 %v119
  %v447 = vunpack.c.l.b16 %v120
  %v448 = vunpack.c.l.b16 %v121
  %v449 = vunpack.c.l.b16 %v122
  %v450 = vunpack.c.l.b16 %v123
  %v451 = vunpack.c.l.b16 %v124
  %v452 = vunpack.c.l.b16 %v125
  %v453 = vunpack.c.l.b16 %v126
  %v454 = vunpack.c.l.b16 %v127
  %v455 = vunpack.c.l.b16 %v128
  %v456 = vunpack.c.l.b16 %v129
  %v457 = vunpack.c.l.b16 %v130
  %v458 = vunpack.c.l.b16 %v131
  %v459 = vunpack.c.l.b16 %v132
  %v460 = vunpack.c.l.b16 %v133
  %v461 = vunpack.c.l.b16 %v134
  %v462 = vunpack.c.l.b16 %v135
  %v463 = vunpack.c.l.b16 %v136
  %v464 = vunpack.c.l.b16 %v137
  %v465 = vunpack.c.l.b16 %v138
  %v466 = vunpack.c.l.b16 %v139
  %v467 = vunpack.c.l.b16 %v140
  %v468 = vunpack.c.l.b16 %v141
  %v469 = vunpack.c.l.b16 %v142
  %v470 = vunpack.c.l.b16 %v143
  %v471 = vunpack.c.l.b16 %v144
  %v472 = vunpack.c.l.b16 %v145
  %v473 = vunpack.c.l.b16 %v146
  %v474 = vunpack.c.l.b16 %v147
  %v475 = vunpack.c.l.b16 %v148
  %v476 = vunpack.c.l.b16 %v149
  %v477 = vunpack.c.l.b16 %v150
  %v478 = vunpack.c.l.b16 %v151
  %v479 = vunpack.c.l.b16 %v152
  %v480 = vunpack.c.l.b16 %v153
  %v481 = vunpack.c.l.b16 %v154
  %v482 = vunpack.c.l.b16 %v155
  %v483 = vunpack.c.l.b16 %v156
  %v484 = vunpack.c.l.b16 %v157
  %v485 = vunpack.c.l.b16 %v158
  %v486 = vunpack.c.l.b16 %v159
  %v487 = vunpack.c.l.b16 %v160
  %v488 = vunpack.c.l.b16 %v161
  %v489 = vunpack.c.l.b16 %v162
  %v490 = vunpack.c.l.b16 %v163
  %v491 = vunpack.c.l.b16 %v164
  %v492 = vunpack.c.l.b16 %v165
  %v493 = vunpack.c.l.b16 %v166
  %v494 = vunpack.c.l.b16 %v167
  %v495 = vunpack.c.l.b16 %v168
  %v496 = vunpack.c.l.b16 %v169
  %v497 = vunpack.c.l.b16 %v170
  %v498 = vunpack.c.l.b16 %v171
  %v499 = vpack.c.b16 %v356, %v355
  %v500 = vpack.c.b16 %v358, %v357
  %v501 = vpack.c.b16 %v360, %v359
  %v502 = vpack.c.b16 %v362, %v361
  %v503 = vpack.c.b16 %v364, %v363
  %v504 = vpack.c.b16 %v366, %v365
  %v505 = vpack.c.b16 %v368, %v367
  %v506 = vpack.c.b16 %v370, %v369
  %v507 = vpack.c.b16 %v372, %v371
  %v508 = vpack.c.b16 %v374, %v373
  %v509 = vpack.c.b16 %v376, %v375
  %v510 = vpack.c.b16 %v378, %v377
  %v511 = vpack.c.b16 %v380, %v379
  %v512 = vpack.c.b16 %v382, %v381
  %v513 = vpack.c.b16 %v384, %v383
  %v514 = vpack.c.b16 %v386, %v385
  %v515 = vpack.c.b16 %v388, %v387
  %v516 = vpack.c.b16 %v390, %v389
  %v517 = vpack.c.b16 %v392, %v391
  %v518 = vpack.c.b16 %v394, %v393
  %v519 = vpack.c.b16 %v396, %v395
  %v520 = vpack.c.b16 %v398, %v397
  %v521 = vpack.c.b16 %v400, %v399
  %v522 = vpack.c.b16 %v402, %v401
  %v523 = vpack.c.b16 %v404, %v403
  %v524 = vpack.c.b16 %v406, %v405
  %v525 = vpack.c.b16 %v408, %v407
  %v526 = vpack.c.b16 %v410, %v409
  %v527 = vpack.c.b16 %v412, %v411
  %v528 = vpack.c.b16 %v414, %v413
  %v529 = vpack.c.b16 %v416, %v415
  %v530 = vpack.c.b16 %v418, %v417
  %v531 = vpack.c.b16 %v420, %v419
  %v532 = vpack.c.b16 %v422, %v421
  %v533 = vpack.c.b16 %v424, %v423
  %v534 = vpack.c.b16 %v426, %v425
  %v535 = vpack.c.b16 %v428, %v427
  %v536 = vpack.c.b16 %v430, %v429
  %v537 = vpack.c.b16 %v432, %v431
  %v538 = vpack.c.b16 %v434, %v433
  %v539 = vpack.c.b16 %v436, %v435
  %v540 = vpack.c.b16 %v438, %v437
  %v541 = vpack.c.b16 %v440, %v439
  %v542 = vpack.c.b16 %v442, %v441
  %v543 = vpack.c.b16 %v444, %v443
  %v544 = vpack.c.b16 %v446, %v445
  %v545 = vpack.c.b16 %v448, %v447
  %v546 = vpack.c.b16 %v450, %v449
  %v547 = vpack.c.b16 %v452, %v451
  %v548 = vpack.c.b16 %v454, %v453
  %v549 = vpack.c.b16 %v456, %v455
  %v550 = vpack.c.b16 %v458, %v457
  %v551 = vpack.c.b16 %v460, %v459
  %v552 = vpack.c.b16 %v462, %v461
  %v553 = vpack.c.b16 %v464, %v463
  %v554 = vpack.c.b16 %v466, %v465
  %v555 = vpack.c.b16 %v468, %v467
  %v556 = vpack.c.b16 %v470, %v469
  %v557 = vpack.c.b16 %v472, %v471
  %v558 = vpack.c.b16 %v474, %v473
  %v559 = vpack.c.b16 %v476, %v475
  %v560 = vpack.c.b16 %v478, %v477
  %v561 = vpack.c.b16 %v480, %v479
  %v562 = vpack.c.b16 %v482, %v481
  %v563 = vpack.c.b16 %v484, %v483
  %v564 = vpack.c.b16 %v486, %v485
  %v565 = vpack.c.b16 %v488, %v487
  %v566 = vpack.c.b16 %v490, %v489
  %v567 = vpack.c.b16 %v492, %v491
  %v568 = vpack.c.b16 %v494, %v493
  %v569 = vpack.c.b16 %v496, %v495
  %v570 = vpack.c.b16 %v498, %v497
  %643 = vmatprep.subr.bf16.mxu0 0
  %644 = vmatpush1.bf16.msra.mxu0 %v499
  %645 = vmatprep.subr.bf16.mxu0 0
  %646 = vmatpush1.bf16.msra.mxu0 %v500
  %647 = vmatprep.subr.bf16.mxu0 0
  %648 = vmatpush1.bf16.msra.mxu0 %v501
  %649 = vmatprep.subr.bf16.mxu0 0
  %650 = vmatpush1.bf16.msra.mxu0 %v502
  %651 = vmatprep.subr.bf16.mxu0 0
  %652 = vmatpush1.bf16.msra.mxu0 %v503
  %653 = vmatprep.subr.bf16.mxu0 0
  %654 = vmatpush1.bf16.msra.mxu0 %v504
  %655 = vmatprep.subr.bf16.mxu0 0
  %656 = vmatpush1.bf16.msra.mxu0 %v505
  %657 = vmatprep.subr.bf16.mxu0 0
  %658 = vmatpush1.bf16.msra.mxu0 %v506
  %659 = vmatprep.subr.bf16.mxu0 0
  %660 = vmatpush1.bf16.msra.mxu0 %v507
  %661 = vmatprep.subr.bf16.mxu0 0
  %662 = vmatpush1.bf16.msra.mxu0 %v508
  %663 = vmatprep.subr.bf16.mxu0 0
  %664 = vmatpush1.bf16.msra.mxu0 %v509
  %665 = vmatprep.subr.bf16.mxu0 0
  %666 = vmatpush1.bf16.msra.mxu0 %v510
  %667 = vmatprep.subr.bf16.mxu0 0
  %668 = vmatpush1.bf16.msra.mxu0 %v511
  %669 = vmatprep.subr.bf16.mxu0 0
  %670 = vmatpush1.bf16.msra.mxu0 %v512
  %671 = vmatprep.subr.bf16.mxu0 0
  %672 = vmatpush1.bf16.msra.mxu0 %v513
  %673 = vmatprep.subr.bf16.mxu0 0
  %674 = vmatpush1.bf16.msra.mxu0 %v514
  %675 = vmatprep.mubr.bf16.mxu0 %v194
  %676 = vmatmul.mubr.bf16.gmra.mrb[0].mxu0 %v193
  %v677 = vpop.f32.mrb[0].mxu0
  %v678 = vadd.f32 %v177, %v677
  %v679 = vpop.f32.mrb[0].mxu0
  %v680 = vpop.f32.mrb[0].mxu0
  %v681 = vpop.f32.mrb[0].mxu0
  %682 = vdwg.mxu0
  %683 = vmatprep.subr.bf16.mxu0 0
  %684 = vmatpush1.bf16.msra.mxu0 %v515
  %685 = vmatprep.subr.bf16.mxu0 0
  %686 = vmatpush1.bf16.msra.mxu0 %v516
  %687 = vmatprep.subr.bf16.mxu0 0
  %688 = vmatpush1.bf16.msra.mxu0 %v517
  %689 = vmatprep.subr.bf16.mxu0 0
  %690 = vmatpush1.bf16.msra.mxu0 %v518
  %691 = vmatprep.subr.bf16.mxu0 0
  %692 = vmatpush1.bf16.msra.mxu0 %v519
  %693 = vmatprep.subr.bf16.mxu0 0
  %694 = vmatpush1.bf16.msra.mxu0 %v520
  %695 = vmatprep.subr.bf16.mxu0 0
  %696 = vmatpush1.bf16.msra.mxu0 %v521
  %697 = vmatprep.subr.bf16.mxu0 0
  %698 = vmatpush1.bf16.msra.mxu0 %v522
  %699 = vmatprep.subr.bf16.mxu0 0
  %700 = vmatpush1.bf16.msra.mxu0 %v523
  %701 = vmatprep.subr.bf16.mxu0 0
  %702 = vmatpush1.bf16.msra.mxu0 %v524
  %703 = vmatprep.subr.bf16.mxu0 0
  %704 = vmatpush1.bf16.msra.mxu0 %v525
  %705 = vmatprep.subr.bf16.mxu0 0
  %706 = vmatpush1.bf16.msra.mxu0 %v526
  %707 = vmatprep.subr.bf16.mxu0 0
  %708 = vmatpush1.bf16.msra.mxu0 %v527
  %709 = vmatprep.subr.bf16.mxu0 0
  %710 = vmatpush1.bf16.msra.mxu0 %v528
  %711 = vmatprep.subr.bf16.mxu0 0
  %712 = vmatpush1.bf16.msra.mxu0 %v529
  %713 = vmatprep.subr.bf16.mxu0 0
  %714 = vmatpush1.bf16.msra.mxu0 %v530
  %715 = vmatprep.mubr.bf16.mxu0 %v196
  %716 = vmatmul.mubr.bf16.gmra.mrb[0].mxu0 %v195
  %v717 = vpop.f32.mrb[0].mxu0
  %v718 = vadd.f32 %v678, %v717
  %v719 = vpop.f32.mrb[0].mxu0
  %v720 = vpop.f32.mrb[0].mxu0
  %v721 = vpop.f32.mrb[0].mxu0
  %722 = vdwg.mxu0
  %723 = vmatprep.subr.bf16.mxu0 0
  %724 = vmatpush1.bf16.msra.mxu0 %v531
  %725 = vmatprep.subr.bf16.mxu0 0
  %726 = vmatpush1.bf16.msra.mxu0 %v532
  %727 = vmatprep.subr.bf16.mxu0 0
  %728 = vmatpush1.bf16.msra.mxu0 %v533
  %729 = vmatprep.subr.bf16.mxu0 0
  %730 = vmatpush1.bf16.msra.mxu0 %v534
  %731 = vmatprep.subr.bf16.mxu0 0
  %732 = vmatpush1.bf16.msra.mxu0 %v535
  %733 = vmatprep.subr.bf16.mxu0 0
  %734 = vmatpush1.bf16.msra.mxu0 %v536
  %735 = vmatprep.subr.bf16.mxu0 0
  %736 = vmatpush1.bf16.msra.mxu0 %v537
  %737 = vmatprep.subr.bf16.mxu0 0
  %738 = vmatpush1.bf16.msra.mxu0 %v538
  %739 = vmatprep.subr.bf16.mxu0 0
  %740 = vmatpush1.bf16.msra.mxu0 %v539
  %741 = vmatprep.subr.bf16.mxu0 0
  %742 = vmatpush1.bf16.msra.mxu0 %v540
  %743 = vmatprep.subr.bf16.mxu0 0
  %744 = vmatpush1.bf16.msra.mxu0 %v541
  %745 = vmatprep.subr.bf16.mxu0 0
  %746 = vmatpush1.bf16.msra.mxu0 %v542
  %747 = vmatprep.subr.bf16.mxu0 0
  %748 = vmatpush1.bf16.msra.mxu0 %v543
  %749 = vmatprep.subr.bf16.mxu0 0
  %750 = vmatpush1.bf16.msra.mxu0 %v544
  %751 = vmatprep.subr.bf16.mxu0 0
  %752 = vmatpush1.bf16.msra.mxu0 %v545
  %753 = vmatprep.subr.bf16.mxu0 0
  %754 = vmatpush1.bf16.msra.mxu0 %v546
  %755 = vmatprep.mubr.bf16.mxu0 %v198
  %756 = vmatmul.mubr.bf16.gmra.mrb[0].mxu0 %v197
  %v757 = vpop.f32.mrb[0].mxu0
  %v758 = vadd.f32 %v718, %v757
  %v759 = vpop.f32.mrb[0].mxu0
  %v760 = vpop.f32.mrb[0].mxu0
  %v761 = vpop.f32.mrb[0].mxu0
  %762 = vdwg.mxu0
  %763 = vmatprep.subr.bf16.mxu0 0
  %764 = vmatpush1.bf16.msra.mxu0 %v547
  %765 = vmatprep.subr.bf16.mxu0 0
  %766 = vmatpush1.bf16.msra.mxu0 %v548
  %767 = vmatprep.subr.bf16.mxu0 0
  %768 = vmatpush1.bf16.msra.mxu0 %v549
  %769 = vmatprep.subr.bf16.mxu0 0
  %770 = vmatpush1.bf16.msra.mxu0 %v550
  %771 = vmatprep.subr.bf16.mxu0 0
  %772 = vmatpush1.bf16.msra.mxu0 %v551
  %773 = vmatprep.subr.bf16.mxu0 0
  %774 = vmatpush1.bf16.msra.mxu0 %v552
  %775 = vmatprep.subr.bf16.mxu0 0
  %776 = vmatpush1.bf16.msra.mxu0 %v553
  %777 = vmatprep.subr.bf16.mxu0 0
  %778 = vmatpush1.bf16.msra.mxu0 %v554
  %779 = vmatprep.subr.bf16.mxu0 0
  %780 = vmatpush1.bf16.msra.mxu0 %v555
  %781 = vmatprep.subr.bf16.mxu0 0
  %782 = vmatpush1.bf16.msra.mxu0 %v556
  %783 = vmatprep.subr.bf16.mxu0 0
  %784 = vmatpush1.bf16.msra.mxu0 %v557
  %785 = vmatprep.subr.bf16.mxu0 0
  %786 = vmatpush1.bf16.msra.mxu0 %v558
  %787 = vmatprep.subr.bf16.mxu0 0
  %788 = vmatpush1.bf16.msra.mxu0 %v559
  %789 = vmatprep.subr.bf16.mxu0 0
  %790 = vmatpush1.bf16.msra.mxu0 %v560
  %791 = vmatprep.subr.bf16.mxu0 0
  %792 = vmatpush1.bf16.msra.mxu0 %v561
  %793 = vmatprep.subr.bf16.mxu0 0
  %794 = vmatpush1.bf16.msra.mxu0 %v562
  %795 = vmatprep.mubr.bf16.mxu0 %v200
  %796 = vmatmul.mubr.bf16.gmra.mrb[0].mxu0 %v199
  %v797 = vpop.f32.mrb[0].mxu0
  %v798 = vadd.f32 %v758, %v797
  %v799 = vpop.f32.mrb[0].mxu0
  %v800 = vpop.f32.mrb[0].mxu0
  %v801 = vpop.f32.mrb[0].mxu0
  %802 = vdwg.mxu0
  %803 = vmatprep.subr.bf16.mxu0 0
  %804 = vmatpush1.bf16.msra.mxu0 %v563
  %805 = vmatprep.subr.bf16.mxu0 0
  %806 = vmatpush1.bf16.msra.mxu0 %v564
  %807 = vmatprep.subr.bf16.mxu0 0
  %808 = vmatpush1.bf16.msra.mxu0 %v565
  %809 = vmatprep.subr.bf16.mxu0 0
  %810 = vmatpush1.bf16.msra.mxu0 %v566
  %811 = vmatprep.subr.bf16.mxu0 0
  %812 = vmatpush1.bf16.msra.mxu0 %v567
  %813 = vmatprep.subr.bf16.mxu0 0
  %814 = vmatpush1.bf16.msra.mxu0 %v568
  %815 = vmatprep.subr.bf16.mxu0 0
  %816 = vmatpush1.bf16.msra.mxu0 %v569
  %817 = vmatprep.subr.bf16.mxu0 0
  %818 = vmatpush1.bf16.msra.mxu0 %v570
  %819 = vmatprep.subr.bf16.mxu0 0
  %820 = vmatpush1.bf16.msra.mxu0 0
  %821 = vmatprep.subr.bf16.mxu0 0
  %822 = vmatpush1.bf16.msra.mxu0 0
  %823 = vmatprep.subr.bf16.mxu0 0
  %824 = vmatpush1.bf16.msra.mxu0 0
  %825 = vmatprep.subr.bf16.mxu0 0
  %826 = vmatpush1.bf16.msra.mxu0 0
  %827 = vmatprep.subr.bf16.mxu0 0
  %828 = vmatpush1.bf16.msra.mxu0 0
  %829 = vmatprep.subr.bf16.mxu0 0
  %830 = vmatpush1.bf16.msra.mxu0 0
  %831 = vmatprep.subr.bf16.mxu0 0
  %832 = vmatpush1.bf16.msra.mxu0 0
  %833 = vmatprep.subr.bf16.mxu0 0
  %834 = vmatpush1.bf16.msra.mxu0 0
  %835 = vmatprep.mubr.bf16.mxu0 0
  %836 = vmatmul.mubr.bf16.gmra.mrb[0].mxu0 %v201
  %v837 = vpop.f32.mrb[0].mxu0
  %v838 = vadd.f32 %v798, %v837
  %v839 = vpop.f32.mrb[0].mxu0
  %v840 = vpop.f32.mrb[0].mxu0
  %v841 = vpop.f32.mrb[0].mxu0
  %842 = vdwg.mxu0
  %v843 = vmax.f32 %v838, 0.0
  %844 = vst [vmem:[%s5] sm:$0xff] %v843
  %v845 = vld [vmem:[%s3] sm:$0xf]
  %v846 = vld [vmem:[%s3 + $0x4] sm:$0xf]
  %v847 = vld [vmem:[%s3 + $0x8] sm:$0xf]
  %v848 = vld [vmem:[%s3 + $0xc] sm:$0xf]
  %v849 = vld [vmem:[%s3 + $0x10] sm:$0xf]
  %v850 = vld [vmem:[%s3 + $0x14] sm:$0xf]
  %v851 = vld [vmem:[%s3 + $0x18] sm:$0xf]
  %v852 = vld [vmem:[%s3 + $0x1c] sm:$0xf]
  %v853 = vld [vmem:[%s3 + $0x20] sm:$0xf]
  %v854 = vld [vmem:[%s3 + $0x24] sm:$0xf]
  %v855 = vld [vmem:[%s3 + $0x28] sm:$0xf]
  %v856 = vld [vmem:[%s3 + $0x2c] sm:$0xf]
  %v857 = vld [vmem:[%s3 + $0x30] sm:$0xf]
  %v858 = vld [vmem:[%s3 + $0x34] sm:$0xf]
  %v859 = vld [vmem:[%s3 + $0x38] sm:$0xf]
  %v860 = vld [vmem:[%s3 + $0x3c] sm:$0xf]
  %v861 = vld [vmem:[%s4] sm:$0x1]
  %v863 = vlaneseq
  %v864 = vshrl.u32 %v863, 7
  %v865 = vsub.s32 0, %v864
  %v866 = vrot.slane %v861, %v865
  %v884 = vunpack.c.l.b16 %v845
  %v885 = vunpack.c.l.b16 %v846
  %v886 = vunpack.c.l.b16 %v847
  %v887 = vunpack.c.l.b16 %v848
  %v888 = vunpack.c.l.b16 %v849
  %v889 = vunpack.c.l.b16 %v850
  %v890 = vunpack.c.l.b16 %v851
  %v891 = vunpack.c.l.b16 %v852
  %v892 = vunpack.c.l.b16 %v853
  %v893 = vunpack.c.l.b16 %v854
  %v894 = vunpack.c.l.b16 %v855
  %v895 = vunpack.c.l.b16 %v856
  %v896 = vunpack.c.l.b16 %v857
  %v897 = vunpack.c.l.b16 %v858
  %v898 = vunpack.c.l.b16 %v859
  %v899 = vunpack.c.l.b16 %v860
  %v900 = vpack.c.b16 %v885, %v884
  %v901 = vpack.c.b16 %v887, %v886
  %v902 = vpack.c.b16 %v889, %v888
  %v903 = vpack.c.b16 %v891, %v890
  %v904 = vpack.c.b16 %v893, %v892
  %v905 = vpack.c.b16 %v895, %v894
  %v906 = vpack.c.b16 %v897, %v896
  %v907 = vpack.c.b16 %v899, %v898
  %916 = vmatprep.subr.bf16.mxu0 0
  %917 = vmatpush1.bf16.msra.mxu0 %v900
  %918 = vmatprep.subr.bf16.mxu0 0
  %919 = vmatpush1.bf16.msra.mxu0 %v901
  %920 = vmatprep.subr.bf16.mxu0 0
  %921 = vmatpush1.bf16.msra.mxu0 %v902
  %922 = vmatprep.subr.bf16.mxu0 0
  %923 = vmatpush1.bf16.msra.mxu0 %v903
  %924 = vmatprep.subr.bf16.mxu0 0
  %925 = vmatpush1.bf16.msra.mxu0 %v904
  %926 = vmatprep.subr.bf16.mxu0 0
  %927 = vmatpush1.bf16.msra.mxu0 %v905
  %928 = vmatprep.subr.bf16.mxu0 0
  %929 = vmatpush1.bf16.msra.mxu0 %v906
  %930 = vmatprep.subr.bf16.mxu0 0
  %931 = vmatpush1.bf16.msra.mxu0 %v907
  %932 = vmatprep.subr.bf16.mxu0 0
  %933 = vmatpush1.bf16.msra.mxu0 0
  %934 = vmatprep.subr.bf16.mxu0 0
  %935 = vmatpush1.bf16.msra.mxu0 0
  %936 = vmatprep.subr.bf16.mxu0 0
  %937 = vmatpush1.bf16.msra.mxu0 0
  %938 = vmatprep.subr.bf16.mxu0 0
  %939 = vmatpush1.bf16.msra.mxu0 0
  %940 = vmatprep.subr.bf16.mxu0 0
  %941 = vmatpush1.bf16.msra.mxu0 0
  %942 = vmatprep.subr.bf16.mxu0 0
  %943 = vmatpush1.bf16.msra.mxu0 0
  %944 = vmatprep.subr.bf16.mxu0 0
  %945 = vmatpush1.bf16.msra.mxu0 0
  %946 = vmatprep.subr.bf16.mxu0 0
  %947 = vmatpush1.bf16.msra.mxu0 0
  %948 = vmatprep.mubr.bf16.mxu0 0
  %949 = vmatmul.mubr.bf16.gmra.mrb[0].mxu0 %v25
  %v950 = vpop.f32.mrb[0].mxu0
  %v951 = vadd.f32 %v866, %v950
  %v952 = vpop.f32.mrb[0].mxu0
  %v953 = vpop.f32.mrb[0].mxu0
  %v954 = vpop.f32.mrb[0].mxu0
  %955 = vdwg.mxu0
  %956 = vst [vmem:[%s6] sm:$0xff] %v951
  // Predicated region
  $region22: #{_lambda_.24} parent=0 // pred_check
    _
  $region23: #{_lambda_.24} parent=0 // pred_check_branch
    %958 = sbr.rel (0) target = $region25
  $region24: #{_lambda_.24} parent=0 // pred_region
    _
  $region25: #{_lambda_.24} parent=0 // pred_fallthru
    _
  // Predicated region
  $region26: #{_lambda_.24} parent=0 // pred_check
    _
  $region27: #{_lambda_.24} parent=0 // pred_check_branch
    %960 = sbr.rel (0) target = $region29
  $region28: #{_lambda_.24} parent=0 // pred_region
    _
  $region29: #{_lambda_.24} parent=0 // pred_fallthru
    _
  // Predicated region
  $region30: #{_lambda_.24} parent=0 // pred_check
    _
  $region31: #{_lambda_.24} parent=0 // pred_check_branch
    %962 = sbr.rel (0) target = $region33
  $region32: #{_lambda_.24} parent=0 // pred_region
    _
  $region33: #{_lambda_.24} parent=0 // pred_fallthru
    _
  // Predicated region
  $region34: #{_lambda_.24} parent=0 // pred_check
    _
  $region35: #{_lambda_.24} parent=0 // pred_check_branch
    %964 = sbr.rel (0) target = $region37
  $region36: #{_lambda_.24} parent=0 // pred_region
    _
  $region37: #{_lambda_.24} parent=0 // pred_fallthru
    _

// kernel: _lambda_.25
$region0: #{_lambda_.25}
  #allocation0 [shape = 'u32[]', space=smem, size = 0x4, offset = 0x4, fixed_abs, tag = 'smem constant byte address 0x4 - core index']
  #allocation1 [shape = 'u32[144,128]{1,0:T(1,128)}', space=vmem, size = 0x12000, scoped, tag = 'internal scratch']
  %s0 = inlined_call_operand.vmem [shape: bf16[8,1152], index: 0, kind: input, shape index: {}]
  %s1 = inlined_call_operand.vmem [shape: bf16[1152,128], index: 1, kind: input, shape index: {}]
  %s2 = inlined_call_operand.vmem [shape: f32[1,128], index: 2, kind: input, shape index: {}]
  %s3 = inlined_call_operand.vmem [shape: f32[8,128], index: 3, kind: input, shape index: {}]
  %s4 = inlined_call_operand.vmem [shape: f32[8,128], index: 4, kind: output, shape index: {}]
  %s5 = sld [smem:[#allocation0]]
  $region26: #{_lambda_.25} parent=0
    _
  %s7 = ssub.s32 1, %s5
  %s8 = scalar_select 0, %s7, %s5
  // Predicated region
  $region2: #{_lambda_.25} parent=0 // pred_check
    _
  $region3: #{_lambda_.25} parent=0 // pred_check_branch
    %10 = sbr.rel (0) target = $region5
  $region4: #{_lambda_.25} parent=0 // pred_region
    _
  $region5: #{_lambda_.25} parent=0 // pred_fallthru
    _
  // Predicated region
  $region6: #{_lambda_.25} parent=0 // pred_check
    _
  $region7: #{_lambda_.25} parent=0 // pred_check_branch
    %12 = sbr.rel (0) target = $region9
  $region8: #{_lambda_.25} parent=0 // pred_region
    _
  $region9: #{_lambda_.25} parent=0 // pred_fallthru
    _
  // Predicated region
  $region10: #{_lambda_.25} parent=0 // pred_check
    _
  $region11: #{_lambda_.25} parent=0 // pred_check_branch
    %14 = sbr.rel (0) target = $region13
  $region12: #{_lambda_.25} parent=0 // pred_region
    _
  $region13: #{_lambda_.25} parent=0 // pred_fallthru
    _
  // Predicated region
  $region14: #{_lambda_.25} parent=0 // pred_check
    _
  $region15: #{_lambda_.25} parent=0 // pred_check_branch
    %16 = sbr.rel (0) target = $region17
  $region16: #{_lambda_.25} parent=0 // pred_region
    _
  $region17: #{_lambda_.25} parent=0 // pred_fallthru
    _
  %v18 = vld [vmem:[%s0] sm:$0xff]
  %v19 = vld [vmem:[%s0 + $0x8] sm:$0xff]
  %v20 = vld [vmem:[%s0 + $0x10] sm:$0xff]
  %v21 = vld [vmem:[%s0 + $0x18] sm:$0xff]
  %v22 = vld [vmem:[%s0 + $0x20] sm:$0xf]
  %v23 = vld [vmem:[%s1] sm:$0xf]
  %v24 = vld [vmem:[%s1 + $0x4] sm:$0xf]
  %v25 = vld [vmem:[%s1 + $0x8] sm:$0xf]
  %v26 = vld [vmem:[%s1 + $0xc] sm:$0xf]
  %v27 = vld [vmem:[%s1 + $0x10] sm:$0xf]
  %v28 = vld [vmem:[%s1 + $0x14] sm:$0xf]
  %v29 = vld [vmem:[%s1 + $0x18] sm:$0xf]
  %v30 = vld [vmem:[%s1 + $0x1c] sm:$0xf]
  %v31 = vld [vmem:[%s1 + $0x20] sm:$0xf]
  %v32 = vld [vmem:[%s1 + $0x24] sm:$0xf]
  %v33 = vld [vmem:[%s1 + $0x28] sm:$0xf]
  %v34 = vld [vmem:[%s1 + $0x2c] sm:$0xf]
  %v35 = vld [vmem:[%s1 + $0x30] sm:$0xf]
  %v36 = vld [vmem:[%s1 + $0x34] sm:$0xf]
  %v37 = vld [vmem:[%s1 + $0x38] sm:$0xf]
  %v38 = vld [vmem:[%s1 + $0x3c] sm:$0xf]
  %v39 = vld [vmem:[%s1 + $0x40] sm:$0xf]
  %v40 = vld [vmem:[%s1 + $0x44] sm:$0xf]
  %v41 = vld [vmem:[%s1 + $0x48] sm:$0xf]
  %v42 = vld [vmem:[%s1 + $0x4c] sm:$0xf]
  %v43 = vld [vmem:[%s1 + $0x50] sm:$0xf]
  %v44 = vld [vmem:[%s1 + $0x54] sm:$0xf]
  %v45 = vld [vmem:[%s1 + $0x58] sm:$0xf]
  %v46 = vld [vmem:[%s1 + $0x5c] sm:$0xf]
  %v47 = vld [vmem:[%s1 + $0x60] sm:$0xf]
  %v48 = vld [vmem:[%s1 + $0x64] sm:$0xf]
  %v49 = vld [vmem:[%s1 + $0x68] sm:$0xf]
  %v50 = vld [vmem:[%s1 + $0x6c] sm:$0xf]
  %v51 = vld [vmem:[%s1 + $0x70] sm:$0xf]
  %v52 = vld [vmem:[%s1 + $0x74] sm:$0xf]
  %v53 = vld [vmem:[%s1 + $0x78] sm:$0xf]
  %v54 = vld [vmem:[%s1 + $0x7c] sm:$0xf]
  %v55 = vld [vmem:[%s1 + $0x80] sm:$0xf]
  %v56 = vld [vmem:[%s1 + $0x84] sm:$0xf]
  %v57 = vld [vmem:[%s1 + $0x88] sm:$0xf]
  %v58 = vld [vmem:[%s1 + $0x8c] sm:$0xf]
  %v59 = vld [vmem:[%s1 + $0x90] sm:$0xf]
  %v60 = vld [vmem:[%s1 + $0x94] sm:$0xf]
  %v61 = vld [vmem:[%s1 + $0x98] sm:$0xf]
  %v62 = vld [vmem:[%s1 + $0x9c] sm:$0xf]
  %v63 = vld [vmem:[%s1 + $0xa0] sm:$0xf]
  %v64 = vld [vmem:[%s1 + $0xa4] sm:$0xf]
  %v65 = vld [vmem:[%s1 + $0xa8] sm:$0xf]
  %v66 = vld [vmem:[%s1 + $0xac] sm:$0xf]
  %v67 = vld [vmem:[%s1 + $0xb0] sm:$0xf]
  %v68 = vld [vmem:[%s1 + $0xb4] sm:$0xf]
  %v69 = vld [vmem:[%s1 + $0xb8] sm:$0xf]
  %v70 = vld [vmem:[%s1 + $0xbc] sm:$0xf]
  %v71 = vld [vmem:[%s1 + $0xc0] sm:$0xf]
  %v72 = vld [vmem:[%s1 + $0xc4] sm:$0xf]
  %v73 = vld [vmem:[%s1 + $0xc8] sm:$0xf]
  %v74 = vld [vmem:[%s1 + $0xcc] sm:$0xf]
  %v75 = vld [vmem:[%s1 + $0xd0] sm:$0xf]
  %v76 = vld [vmem:[%s1 + $0xd4] sm:$0xf]
  %v77 = vld [vmem:[%s1 + $0xd8] sm:$0xf]
  %v78 = vld [vmem:[%s1 + $0xdc] sm:$0xf]
  %v79 = vld [vmem:[%s1 + $0xe0] sm:$0xf]
  %v80 = vld [vmem:[%s1 + $0xe4] sm:$0xf]
  %v81 = vld [vmem:[%s1 + $0xe8] sm:$0xf]
  %v82 = vld [vmem:[%s1 + $0xec] sm:$0xf]
  %v83 = vld [vmem:[%s1 + $0xf0] sm:$0xf]
  %v84 = vld [vmem:[%s1 + $0xf4] sm:$0xf]
  %v85 = vld [vmem:[%s1 + $0xf8] sm:$0xf]
  %v86 = vld [vmem:[%s1 + $0xfc] sm:$0xf]
  %v87 = vld [vmem:[%s1 + $0x100] sm:$0xf]
  %v88 = vld [vmem:[%s1 + $0x104] sm:$0xf]
  %v89 = vld [vmem:[%s1 + $0x108] sm:$0xf]
  %v90 = vld [vmem:[%s1 + $0x10c] sm:$0xf]
  %v91 = vld [vmem:[%s1 + $0x110] sm:$0xf]
  %v92 = vld [vmem:[%s1 + $0x114] sm:$0xf]
  %v93 = vld [vmem:[%s1 + $0x118] sm:$0xf]
  %v94 = vld [vmem:[%s1 + $0x11c] sm:$0xf]
  %v95 = vld [vmem:[%s1 + $0x120] sm:$0xf]
  %v96 = vld [vmem:[%s1 + $0x124] sm:$0xf]
  %v97 = vld [vmem:[%s1 + $0x128] sm:$0xf]
  %v98 = vld [vmem:[%s1 + $0x12c] sm:$0xf]
  %v99 = vld [vmem:[%s1 + $0x130] sm:$0xf]
  %v100 = vld [vmem:[%s1 + $0x134] sm:$0xf]
  %v101 = vld [vmem:[%s1 + $0x138] sm:$0xf]
  %v102 = vld [vmem:[%s1 + $0x13c] sm:$0xf]
  %v103 = vld [vmem:[%s1 + $0x140] sm:$0xf]
  %v104 = vld [vmem:[%s1 + $0x144] sm:$0xf]
  %v105 = vld [vmem:[%s1 + $0x148] sm:$0xf]
  %v106 = vld [vmem:[%s1 + $0x14c] sm:$0xf]
  %v107 = vld [vmem:[%s1 + $0x150] sm:$0xf]
  %v108 = vld [vmem:[%s1 + $0x154] sm:$0xf]
  %v109 = vld [vmem:[%s1 + $0x158] sm:$0xf]
  %v110 = vld [vmem:[%s1 + $0x15c] sm:$0xf]
  %v111 = vld [vmem:[%s1 + $0x160] sm:$0xf]
  %v112 = vld [vmem:[%s1 + $0x164] sm:$0xf]
  %v113 = vld [vmem:[%s1 + $0x168] sm:$0xf]
  %v114 = vld [vmem:[%s1 + $0x16c] sm:$0xf]
  %v115 = vld [vmem:[%s1 + $0x170] sm:$0xf]
  %v116 = vld [vmem:[%s1 + $0x174] sm:$0xf]
  %v117 = vld [vmem:[%s1 + $0x178] sm:$0xf]
  %v118 = vld [vmem:[%s1 + $0x17c] sm:$0xf]
  %v119 = vld [vmem:[%s1 + $0x180] sm:$0xf]
  %v120 = vld [vmem:[%s1 + $0x184] sm:$0xf]
  %v121 = vld [vmem:[%s1 + $0x188] sm:$0xf]
  %v122 = vld [vmem:[%s1 + $0x18c] sm:$0xf]
  %v123 = vld [vmem:[%s1 + $0x190] sm:$0xf]
  %v124 = vld [vmem:[%s1 + $0x194] sm:$0xf]
  %v125 = vld [vmem:[%s1 + $0x198] sm:$0xf]
  %v126 = vld [vmem:[%s1 + $0x19c] sm:$0xf]
  %v127 = vld [vmem:[%s1 + $0x1a0] sm:$0xf]
  %v128 = vld [vmem:[%s1 + $0x1a4] sm:$0xf]
  %v129 = vld [vmem:[%s1 + $0x1a8] sm:$0xf]
  %v130 = vld [vmem:[%s1 + $0x1ac] sm:$0xf]
  %v131 = vld [vmem:[%s1 + $0x1b0] sm:$0xf]
  %v132 = vld [vmem:[%s1 + $0x1b4] sm:$0xf]
  %v133 = vld [vmem:[%s1 + $0x1b8] sm:$0xf]
  %v134 = vld [vmem:[%s1 + $0x1bc] sm:$0xf]
  %v135 = vld [vmem:[%s1 + $0x1c0] sm:$0xf]
  %v136 = vld [vmem:[%s1 + $0x1c4] sm:$0xf]
  %v137 = vld [vmem:[%s1 + $0x1c8] sm:$0xf]
  %v138 = vld [vmem:[%s1 + $0x1cc] sm:$0xf]
  %v139 = vld [vmem:[%s1 + $0x1d0] sm:$0xf]
  %v140 = vld [vmem:[%s1 + $0x1d4] sm:$0xf]
  %v141 = vld [vmem:[%s1 + $0x1d8] sm:$0xf]
  %v142 = vld [vmem:[%s1 + $0x1dc] sm:$0xf]
  %v143 = vld [vmem:[%s1 + $0x1e0] sm:$0xf]
  %v144 = vld [vmem:[%s1 + $0x1e4] sm:$0xf]
  %v145 = vld [vmem:[%s1 + $0x1e8] sm:$0xf]
  %v146 = vld [vmem:[%s1 + $0x1ec] sm:$0xf]
  %v147 = vld [vmem:[%s1 + $0x1f0] sm:$0xf]
  %v148 = vld [vmem:[%s1 + $0x1f4] sm:$0xf]
  %v149 = vld [vmem:[%s1 + $0x1f8] sm:$0xf]
  %v150 = vld [vmem:[%s1 + $0x1fc] sm:$0xf]
  %v151 = vld [vmem:[%s1 + $0x200] sm:$0xf]
  %v152 = vld [vmem:[%s1 + $0x204] sm:$0xf]
  %v153 = vld [vmem:[%s1 + $0x208] sm:$0xf]
  %v154 = vld [vmem:[%s1 + $0x20c] sm:$0xf]
  %v155 = vld [vmem:[%s1 + $0x210] sm:$0xf]
  %v156 = vld [vmem:[%s1 + $0x214] sm:$0xf]
  %v157 = vld [vmem:[%s1 + $0x218] sm:$0xf]
  %v158 = vld [vmem:[%s1 + $0x21c] sm:$0xf]
  %v159 = vld [vmem:[%s1 + $0x220] sm:$0xf]
  %v160 = vld [vmem:[%s1 + $0x224] sm:$0xf]
  %v161 = vld [vmem:[%s1 + $0x228] sm:$0xf]
  %v162 = vld [vmem:[%s1 + $0x22c] sm:$0xf]
  %v163 = vld [vmem:[%s1 + $0x230] sm:$0xf]
  %v164 = vld [vmem:[%s1 + $0x234] sm:$0xf]
  %v165 = vld [vmem:[%s1 + $0x238] sm:$0xf]
  %v166 = vld [vmem:[%s1 + $0x23c] sm:$0xf]
  %v167 = vld [vmem:[%s2] sm:$0x1]
  %v169 = vlaneseq
  %v170 = vshrl.u32 %v169, 7
  %v171 = vsub.s32 0, %v170
  %v172 = vrot.slane %v167, %v171
  %v179 = vunpack.c.l.b16 %v18
  %v180 = vunpack.c.h.b16 %v18
  %v181 = vunpack.c.l.b16 %v19
  %v182 = vunpack.c.h.b16 %v19
  %v183 = vunpack.c.l.b16 %v20
  %v184 = vunpack.c.h.b16 %v20
  %v185 = vunpack.c.l.b16 %v21
  %v186 = vunpack.c.h.b16 %v21
  %v187 = vunpack.c.l.b16 %v22
  %v188 = vpack.c.b16 %v179, %v179
  %v189 = vpack.c.b16 %v180, %v180
  %v190 = vpack.c.b16 %v181, %v181
  %v191 = vpack.c.b16 %v182, %v182
  %v192 = vpack.c.b16 %v183, %v183
  %v193 = vpack.c.b16 %v184, %v184
  %v194 = vpack.c.b16 %v185, %v185
  %v195 = vpack.c.b16 %v186, %v186
  %v196 = vpack.c.b16 %v187, %v187
  %v350 = vunpack.c.l.b16 %v23
  %v351 = vunpack.c.l.b16 %v24
  %v352 = vunpack.c.l.b16 %v25
  %v353 = vunpack.c.l.b16 %v26
  %v354 = vunpack.c.l.b16 %v27
  %v355 = vunpack.c.l.b16 %v28
  %v356 = vunpack.c.l.b16 %v29
  %v357 = vunpack.c.l.b16 %v30
  %v358 = vunpack.c.l.b16 %v31
  %v359 = vunpack.c.l.b16 %v32
  %v360 = vunpack.c.l.b16 %v33
  %v361 = vunpack.c.l.b16 %v34
  %v362 = vunpack.c.l.b16 %v35
  %v363 = vunpack.c.l.b16 %v36
  %v364 = vunpack.c.l.b16 %v37
  %v365 = vunpack.c.l.b16 %v38
  %v366 = vunpack.c.l.b16 %v39
  %v367 = vunpack.c.l.b16 %v40
  %v368 = vunpack.c.l.b16 %v41
  %v369 = vunpack.c.l.b16 %v42
  %v370 = vunpack.c.l.b16 %v43
  %v371 = vunpack.c.l.b16 %v44
  %v372 = vunpack.c.l.b16 %v45
  %v373 = vunpack.c.l.b16 %v46
  %v374 = vunpack.c.l.b16 %v47
  %v375 = vunpack.c.l.b16 %v48
  %v376 = vunpack.c.l.b16 %v49
  %v377 = vunpack.c.l.b16 %v50
  %v378 = vunpack.c.l.b16 %v51
  %v379 = vunpack.c.l.b16 %v52
  %v380 = vunpack.c.l.b16 %v53
  %v381 = vunpack.c.l.b16 %v54
  %v382 = vunpack.c.l.b16 %v55
  %v383 = vunpack.c.l.b16 %v56
  %v384 = vunpack.c.l.b16 %v57
  %v385 = vunpack.c.l.b16 %v58
  %v386 = vunpack.c.l.b16 %v59
  %v387 = vunpack.c.l.b16 %v60
  %v388 = vunpack.c.l.b16 %v61
  %v389 = vunpack.c.l.b16 %v62
  %v390 = vunpack.c.l.b16 %v63
  %v391 = vunpack.c.l.b16 %v64
  %v392 = vunpack.c.l.b16 %v65
  %v393 = vunpack.c.l.b16 %v66
  %v394 = vunpack.c.l.b16 %v67
  %v395 = vunpack.c.l.b16 %v68
  %v396 = vunpack.c.l.b16 %v69
  %v397 = vunpack.c.l.b16 %v70
  %v398 = vunpack.c.l.b16 %v71
  %v399 = vunpack.c.l.b16 %v72
  %v400 = vunpack.c.l.b16 %v73
  %v401 = vunpack.c.l.b16 %v74
  %v402 = vunpack.c.l.b16 %v75
  %v403 = vunpack.c.l.b16 %v76
  %v404 = vunpack.c.l.b16 %v77
  %v405 = vunpack.c.l.b16 %v78
  %v406 = vunpack.c.l.b16 %v79
  %v407 = vunpack.c.l.b16 %v80
  %v408 = vunpack.c.l.b16 %v81
  %v409 = vunpack.c.l.b16 %v82
  %v410 = vunpack.c.l.b16 %v83
  %v411 = vunpack.c.l.b16 %v84
  %v412 = vunpack.c.l.b16 %v85
  %v413 = vunpack.c.l.b16 %v86
  %v414 = vunpack.c.l.b16 %v87
  %v415 = vunpack.c.l.b16 %v88
  %v416 = vunpack.c.l.b16 %v89
  %v417 = vunpack.c.l.b16 %v90
  %v418 = vunpack.c.l.b16 %v91
  %v419 = vunpack.c.l.b16 %v92
  %v420 = vunpack.c.l.b16 %v93
  %v421 = vunpack.c.l.b16 %v94
  %v422 = vunpack.c.l.b16 %v95
  %v423 = vunpack.c.l.b16 %v96
  %v424 = vunpack.c.l.b16 %v97
  %v425 = vunpack.c.l.b16 %v98
  %v426 = vunpack.c.l.b16 %v99
  %v427 = vunpack.c.l.b16 %v100
  %v428 = vunpack.c.l.b16 %v101
  %v429 = vunpack.c.l.b16 %v102
  %v430 = vunpack.c.l.b16 %v103
  %v431 = vunpack.c.l.b16 %v104
  %v432 = vunpack.c.l.b16 %v105
  %v433 = vunpack.c.l.b16 %v106
  %v434 = vunpack.c.l.b16 %v107
  %v435 = vunpack.c.l.b16 %v108
  %v436 = vunpack.c.l.b16 %v109
  %v437 = vunpack.c.l.b16 %v110
  %v438 = vunpack.c.l.b16 %v111
  %v439 = vunpack.c.l.b16 %v112
  %v440 = vunpack.c.l.b16 %v113
  %v441 = vunpack.c.l.b16 %v114
  %v442 = vunpack.c.l.b16 %v115
  %v443 = vunpack.c.l.b16 %v116
  %v444 = vunpack.c.l.b16 %v117
  %v445 = vunpack.c.l.b16 %v118
  %v446 = vunpack.c.l.b16 %v119
  %v447 = vunpack.c.l.b16 %v120
  %v448 = vunpack.c.l.b16 %v121
  %v449 = vunpack.c.l.b16 %v122
  %v450 = vunpack.c.l.b16 %v123
  %v451 = vunpack.c.l.b16 %v124
  %v452 = vunpack.c.l.b16 %v125
  %v453 = vunpack.c.l.b16 %v126
  %v454 = vunpack.c.l.b16 %v127
  %v455 = vunpack.c.l.b16 %v128
  %v456 = vunpack.c.l.b16 %v129
  %v457 = vunpack.c.l.b16 %v130
  %v458 = vunpack.c.l.b16 %v131
  %v459 = vunpack.c.l.b16 %v132
  %v460 = vunpack.c.l.b16 %v133
  %v461 = vunpack.c.l.b16 %v134
  %v462 = vunpack.c.l.b16 %v135
  %v463 = vunpack.c.l.b16 %v136
  %v464 = vunpack.c.l.b16 %v137
  %v465 = vunpack.c.l.b16 %v138
  %v466 = vunpack.c.l.b16 %v139
  %v467 = vunpack.c.l.b16 %v140
  %v468 = vunpack.c.l.b16 %v141
  %v469 = vunpack.c.l.b16 %v142
  %v470 = vunpack.c.l.b16 %v143
  %v471 = vunpack.c.l.b16 %v144
  %v472 = vunpack.c.l.b16 %v145
  %v473 = vunpack.c.l.b16 %v146
  %v474 = vunpack.c.l.b16 %v147
  %v475 = vunpack.c.l.b16 %v148
  %v476 = vunpack.c.l.b16 %v149
  %v477 = vunpack.c.l.b16 %v150
  %v478 = vunpack.c.l.b16 %v151
  %v479 = vunpack.c.l.b16 %v152
  %v480 = vunpack.c.l.b16 %v153
  %v481 = vunpack.c.l.b16 %v154
  %v482 = vunpack.c.l.b16 %v155
  %v483 = vunpack.c.l.b16 %v156
  %v484 = vunpack.c.l.b16 %v157
  %v485 = vunpack.c.l.b16 %v158
  %v486 = vunpack.c.l.b16 %v159
  %v487 = vunpack.c.l.b16 %v160
  %v488 = vunpack.c.l.b16 %v161
  %v489 = vunpack.c.l.b16 %v162
  %v490 = vunpack.c.l.b16 %v163
  %v491 = vunpack.c.l.b16 %v164
  %v492 = vunpack.c.l.b16 %v165
  %v493 = vunpack.c.l.b16 %v166
  %v494 = vpack.c.b16 %v351, %v350
  %v495 = vpack.c.b16 %v353, %v352
  %v496 = vpack.c.b16 %v355, %v354
  %v497 = vpack.c.b16 %v357, %v356
  %v498 = vpack.c.b16 %v359, %v358
  %v499 = vpack.c.b16 %v361, %v360
  %v500 = vpack.c.b16 %v363, %v362
  %v501 = vpack.c.b16 %v365, %v364
  %v502 = vpack.c.b16 %v367, %v366
  %v503 = vpack.c.b16 %v369, %v368
  %v504 = vpack.c.b16 %v371, %v370
  %v505 = vpack.c.b16 %v373, %v372
  %v506 = vpack.c.b16 %v375, %v374
  %v507 = vpack.c.b16 %v377, %v376
  %v508 = vpack.c.b16 %v379, %v378
  %v509 = vpack.c.b16 %v381, %v380
  %v510 = vpack.c.b16 %v383, %v382
  %v511 = vpack.c.b16 %v385, %v384
  %v512 = vpack.c.b16 %v387, %v386
  %v513 = vpack.c.b16 %v389, %v388
  %v514 = vpack.c.b16 %v391, %v390
  %v515 = vpack.c.b16 %v393, %v392
  %v516 = vpack.c.b16 %v395, %v394
  %v517 = vpack.c.b16 %v397, %v396
  %v518 = vpack.c.b16 %v399, %v398
  %v519 = vpack.c.b16 %v401, %v400
  %v520 = vpack.c.b16 %v403, %v402
  %v521 = vpack.c.b16 %v405, %v404
  %v522 = vpack.c.b16 %v407, %v406
  %v523 = vpack.c.b16 %v409, %v408
  %v524 = vpack.c.b16 %v411, %v410
  %v525 = vpack.c.b16 %v413, %v412
  %v526 = vpack.c.b16 %v415, %v414
  %v527 = vpack.c.b16 %v417, %v416
  %v528 = vpack.c.b16 %v419, %v418
  %v529 = vpack.c.b16 %v421, %v420
  %v530 = vpack.c.b16 %v423, %v422
  %v531 = vpack.c.b16 %v425, %v424
  %v532 = vpack.c.b16 %v427, %v426
  %v533 = vpack.c.b16 %v429, %v428
  %v534 = vpack.c.b16 %v431, %v430
  %v535 = vpack.c.b16 %v433, %v432
  %v536 = vpack.c.b16 %v435, %v434
  %v537 = vpack.c.b16 %v437, %v436
  %v538 = vpack.c.b16 %v439, %v438
  %v539 = vpack.c.b16 %v441, %v440
  %v540 = vpack.c.b16 %v443, %v442
  %v541 = vpack.c.b16 %v445, %v444
  %v542 = vpack.c.b16 %v447, %v446
  %v543 = vpack.c.b16 %v449, %v448
  %v544 = vpack.c.b16 %v451, %v450
  %v545 = vpack.c.b16 %v453, %v452
  %v546 = vpack.c.b16 %v455, %v454
  %v547 = vpack.c.b16 %v457, %v456
  %v548 = vpack.c.b16 %v459, %v458
  %v549 = vpack.c.b16 %v461, %v460
  %v550 = vpack.c.b16 %v463, %v462
  %v551 = vpack.c.b16 %v465, %v464
  %v552 = vpack.c.b16 %v467, %v466
  %v553 = vpack.c.b16 %v469, %v468
  %v554 = vpack.c.b16 %v471, %v470
  %v555 = vpack.c.b16 %v473, %v472
  %v556 = vpack.c.b16 %v475, %v474
  %v557 = vpack.c.b16 %v477, %v476
  %v558 = vpack.c.b16 %v479, %v478
  %v559 = vpack.c.b16 %v481, %v480
  %v560 = vpack.c.b16 %v483, %v482
  %v561 = vpack.c.b16 %v485, %v484
  %v562 = vpack.c.b16 %v487, %v486
  %v563 = vpack.c.b16 %v489, %v488
  %v564 = vpack.c.b16 %v491, %v490
  %v565 = vpack.c.b16 %v493, %v492
  %638 = vmatprep.subr.bf16.mxu0 0
  %639 = vmatpush1.bf16.msra.mxu0 %v494
  %640 = vmatprep.subr.bf16.mxu0 0
  %641 = vmatpush1.bf16.msra.mxu0 %v495
  %642 = vmatprep.subr.bf16.mxu0 0
  %643 = vmatpush1.bf16.msra.mxu0 %v496
  %644 = vmatprep.subr.bf16.mxu0 0
  %645 = vmatpush1.bf16.msra.mxu0 %v497
  %646 = vmatprep.subr.bf16.mxu0 0
  %647 = vmatpush1.bf16.msra.mxu0 %v498
  %648 = vmatprep.subr.bf16.mxu0 0
  %649 = vmatpush1.bf16.msra.mxu0 %v499
  %650 = vmatprep.subr.bf16.mxu0 0
  %651 = vmatpush1.bf16.msra.mxu0 %v500
  %652 = vmatprep.subr.bf16.mxu0 0
  %653 = vmatpush1.bf16.msra.mxu0 %v501
  %654 = vmatprep.subr.bf16.mxu0 0
  %655 = vmatpush1.bf16.msra.mxu0 %v502
  %656 = vmatprep.subr.bf16.mxu0 0
  %657 = vmatpush1.bf16.msra.mxu0 %v503
  %658 = vmatprep.subr.bf16.mxu0 0
  %659 = vmatpush1.bf16.msra.mxu0 %v504
  %660 = vmatprep.subr.bf16.mxu0 0
  %661 = vmatpush1.bf16.msra.mxu0 %v505
  %662 = vmatprep.subr.bf16.mxu0 0
  %663 = vmatpush1.bf16.msra.mxu0 %v506
  %664 = vmatprep.subr.bf16.mxu0 0
  %665 = vmatpush1.bf16.msra.mxu0 %v507
  %666 = vmatprep.subr.bf16.mxu0 0
  %667 = vmatpush1.bf16.msra.mxu0 %v508
  %668 = vmatprep.subr.bf16.mxu0 0
  %669 = vmatpush1.bf16.msra.mxu0 %v509
  %670 = vmatprep.mubr.bf16.mxu0 %v189
  %671 = vmatmul.mubr.bf16.gmra.mrb[0].mxu0 %v188
  %v672 = vpop.f32.mrb[0].mxu0
  %v673 = vadd.f32 %v172, %v672
  %v674 = vpop.f32.mrb[0].mxu0
  %v675 = vpop.f32.mrb[0].mxu0
  %v676 = vpop.f32.mrb[0].mxu0
  %677 = vdwg.mxu0
  %678 = vmatprep.subr.bf16.mxu0 0
  %679 = vmatpush1.bf16.msra.mxu0 %v510
  %680 = vmatprep.subr.bf16.mxu0 0
  %681 = vmatpush1.bf16.msra.mxu0 %v511
  %682 = vmatprep.subr.bf16.mxu0 0
  %683 = vmatpush1.bf16.msra.mxu0 %v512
  %684 = vmatprep.subr.bf16.mxu0 0
  %685 = vmatpush1.bf16.msra.mxu0 %v513
  %686 = vmatprep.subr.bf16.mxu0 0
  %687 = vmatpush1.bf16.msra.mxu0 %v514
  %688 = vmatprep.subr.bf16.mxu0 0
  %689 = vmatpush1.bf16.msra.mxu0 %v515
  %690 = vmatprep.subr.bf16.mxu0 0
  %691 = vmatpush1.bf16.msra.mxu0 %v516
  %692 = vmatprep.subr.bf16.mxu0 0
  %693 = vmatpush1.bf16.msra.mxu0 %v517
  %694 = vmatprep.subr.bf16.mxu0 0
  %695 = vmatpush1.bf16.msra.mxu0 %v518
  %696 = vmatprep.subr.bf16.mxu0 0
  %697 = vmatpush1.bf16.msra.mxu0 %v519
  %698 = vmatprep.subr.bf16.mxu0 0
  %699 = vmatpush1.bf16.msra.mxu0 %v520
  %700 = vmatprep.subr.bf16.mxu0 0
  %701 = vmatpush1.bf16.msra.mxu0 %v521
  %702 = vmatprep.subr.bf16.mxu0 0
  %703 = vmatpush1.bf16.msra.mxu0 %v522
  %704 = vmatprep.subr.bf16.mxu0 0
  %705 = vmatpush1.bf16.msra.mxu0 %v523
  %706 = vmatprep.subr.bf16.mxu0 0
  %707 = vmatpush1.bf16.msra.mxu0 %v524
  %708 = vmatprep.subr.bf16.mxu0 0
  %709 = vmatpush1.bf16.msra.mxu0 %v525
  %710 = vmatprep.mubr.bf16.mxu0 %v191
  %711 = vmatmul.mubr.bf16.gmra.mrb[0].mxu0 %v190
  %v712 = vpop.f32.mrb[0].mxu0
  %v713 = vadd.f32 %v673, %v712
  %v714 = vpop.f32.mrb[0].mxu0
  %v715 = vpop.f32.mrb[0].mxu0
  %v716 = vpop.f32.mrb[0].mxu0
  %717 = vdwg.mxu0
  %718 = vmatprep.subr.bf16.mxu0 0
  %719 = vmatpush1.bf16.msra.mxu0 %v526
  %720 = vmatprep.subr.bf16.mxu0 0
  %721 = vmatpush1.bf16.msra.mxu0 %v527
  %722 = vmatprep.subr.bf16.mxu0 0
  %723 = vmatpush1.bf16.msra.mxu0 %v528
  %724 = vmatprep.subr.bf16.mxu0 0
  %725 = vmatpush1.bf16.msra.mxu0 %v529
  %726 = vmatprep.subr.bf16.mxu0 0
  %727 = vmatpush1.bf16.msra.mxu0 %v530
  %728 = vmatprep.subr.bf16.mxu0 0
  %729 = vmatpush1.bf16.msra.mxu0 %v531
  %730 = vmatprep.subr.bf16.mxu0 0
  %731 = vmatpush1.bf16.msra.mxu0 %v532
  %732 = vmatprep.subr.bf16.mxu0 0
  %733 = vmatpush1.bf16.msra.mxu0 %v533
  %734 = vmatprep.subr.bf16.mxu0 0
  %735 = vmatpush1.bf16.msra.mxu0 %v534
  %736 = vmatprep.subr.bf16.mxu0 0
  %737 = vmatpush1.bf16.msra.mxu0 %v535
  %738 = vmatprep.subr.bf16.mxu0 0
  %739 = vmatpush1.bf16.msra.mxu0 %v536
  %740 = vmatprep.subr.bf16.mxu0 0
  %741 = vmatpush1.bf16.msra.mxu0 %v537
  %742 = vmatprep.subr.bf16.mxu0 0
  %743 = vmatpush1.bf16.msra.mxu0 %v538
  %744 = vmatprep.subr.bf16.mxu0 0
  %745 = vmatpush1.bf16.msra.mxu0 %v539
  %746 = vmatprep.subr.bf16.mxu0 0
  %747 = vmatpush1.bf16.msra.mxu0 %v540
  %748 = vmatprep.subr.bf16.mxu0 0
  %749 = vmatpush1.bf16.msra.mxu0 %v541
  %750 = vmatprep.mubr.bf16.mxu0 %v193
  %751 = vmatmul.mubr.bf16.gmra.mrb[0].mxu0 %v192
  %v752 = vpop.f32.mrb[0].mxu0
  %v753 = vadd.f32 %v713, %v752
  %v754 = vpop.f32.mrb[0].mxu0
  %v755 = vpop.f32.mrb[0].mxu0
  %v756 = vpop.f32.mrb[0].mxu0
  %757 = vdwg.mxu0
  %758 = vmatprep.subr.bf16.mxu0 0
  %759 = vmatpush1.bf16.msra.mxu0 %v542
  %760 = vmatprep.subr.bf16.mxu0 0
  %761 = vmatpush1.bf16.msra.mxu0 %v543
  %762 = vmatprep.subr.bf16.mxu0 0
  %763 = vmatpush1.bf16.msra.mxu0 %v544
  %764 = vmatprep.subr.bf16.mxu0 0
  %765 = vmatpush1.bf16.msra.mxu0 %v545
  %766 = vmatprep.subr.bf16.mxu0 0
  %767 = vmatpush1.bf16.msra.mxu0 %v546
  %768 = vmatprep.subr.bf16.mxu0 0
  %769 = vmatpush1.bf16.msra.mxu0 %v547
  %770 = vmatprep.subr.bf16.mxu0 0
  %771 = vmatpush1.bf16.msra.mxu0 %v548
  %772 = vmatprep.subr.bf16.mxu0 0
  %773 = vmatpush1.bf16.msra.mxu0 %v549
  %774 = vmatprep.subr.bf16.mxu0 0
  %775 = vmatpush1.bf16.msra.mxu0 %v550
  %776 = vmatprep.subr.bf16.mxu0 0
  %777 = vmatpush1.bf16.msra.mxu0 %v551
  %778 = vmatprep.subr.bf16.mxu0 0
  %779 = vmatpush1.bf16.msra.mxu0 %v552
  %780 = vmatprep.subr.bf16.mxu0 0
  %781 = vmatpush1.bf16.msra.mxu0 %v553
  %782 = vmatprep.subr.bf16.mxu0 0
  %783 = vmatpush1.bf16.msra.mxu0 %v554
  %784 = vmatprep.subr.bf16.mxu0 0
  %785 = vmatpush1.bf16.msra.mxu0 %v555
  %786 = vmatprep.subr.bf16.mxu0 0
  %787 = vmatpush1.bf16.msra.mxu0 %v556
  %788 = vmatprep.subr.bf16.mxu0 0
  %789 = vmatpush1.bf16.msra.mxu0 %v557
  %790 = vmatprep.mubr.bf16.mxu0 %v195
  %791 = vmatmul.mubr.bf16.gmra.mrb[0].mxu0 %v194
  %v792 = vpop.f32.mrb[0].mxu0
  %v793 = vadd.f32 %v753, %v792
  %v794 = vpop.f32.mrb[0].mxu0
  %v795 = vpop.f32.mrb[0].mxu0
  %v796 = vpop.f32.mrb[0].mxu0
  %797 = vdwg.mxu0
  %798 = vmatprep.subr.bf16.mxu0 0
  %799 = vmatpush1.bf16.msra.mxu0 %v558
  %800 = vmatprep.subr.bf16.mxu0 0
  %801 = vmatpush1.bf16.msra.mxu0 %v559
  %802 = vmatprep.subr.bf16.mxu0 0
  %803 = vmatpush1.bf16.msra.mxu0 %v560
  %804 = vmatprep.subr.bf16.mxu0 0
  %805 = vmatpush1.bf16.msra.mxu0 %v561
  %806 = vmatprep.subr.bf16.mxu0 0
  %807 = vmatpush1.bf16.msra.mxu0 %v562
  %808 = vmatprep.subr.bf16.mxu0 0
  %809 = vmatpush1.bf16.msra.mxu0 %v563
  %810 = vmatprep.subr.bf16.mxu0 0
  %811 = vmatpush1.bf16.msra.mxu0 %v564
  %812 = vmatprep.subr.bf16.mxu0 0
  %813 = vmatpush1.bf16.msra.mxu0 %v565
  %814 = vmatprep.subr.bf16.mxu0 0
  %815 = vmatpush1.bf16.msra.mxu0 0
  %816 = vmatprep.subr.bf16.mxu0 0
  %817 = vmatpush1.bf16.msra.mxu0 0
  %818 = vmatprep.subr.bf16.mxu0 0
  %819 = vmatpush1.bf16.msra.mxu0 0
  %820 = vmatprep.subr.bf16.mxu0 0
  %821 = vmatpush1.bf16.msra.mxu0 0
  %822 = vmatprep.subr.bf16.mxu0 0
  %823 = vmatpush1.bf16.msra.mxu0 0
  %824 = vmatprep.subr.bf16.mxu0 0
  %825 = vmatpush1.bf16.msra.mxu0 0
  %826 = vmatprep.subr.bf16.mxu0 0
  %827 = vmatpush1.bf16.msra.mxu0 0
  %828 = vmatprep.subr.bf16.mxu0 0
  %829 = vmatpush1.bf16.msra.mxu0 0
  %830 = vmatprep.mubr.bf16.mxu0 0
  %831 = vmatmul.mubr.bf16.gmra.mrb[0].mxu0 %v196
  %v832 = vpop.f32.mrb[0].mxu0
  %v833 = vadd.f32 %v793, %v832
  %v834 = vpop.f32.mrb[0].mxu0
  %v835 = vpop.f32.mrb[0].mxu0
  %v836 = vpop.f32.mrb[0].mxu0
  %837 = vdwg.mxu0
  %v838 = vld [vmem:[%s3] sm:$0xff]
  %v839 = vadd.f32 %v833, %v838
  %v840 = vmax.f32 %v839, 0.0
  %841 = vst [vmem:[%s4] sm:$0xff] %v840
  // Predicated region
  $region18: #{_lambda_.25} parent=0 // pred_check
    _
  $region19: #{_lambda_.25} parent=0 // pred_check_branch
    %843 = sbr.rel (0) target = $region21
  $region20: #{_lambda_.25} parent=0 // pred_region
    _
  $region21: #{_lambda_.25} parent=0 // pred_fallthru
    _
  // Predicated region
  $region22: #{_lambda_.25} parent=0 // pred_check
    _
  $region23: #{_lambda_.25} parent=0 // pred_check_branch
    %845 = sbr.rel (0) target = $region25
  $region24: #{_lambda_.25} parent=0 // pred_region
    _
  $region25: #{_lambda_.25} parent=0 // pred_fallthru
    _

// kernel: _lambda_.26
$region0: #{_lambda_.26}
  #allocation0 [shape = 'u32[]', space=smem, size = 0x4, offset = 0x4, fixed_abs, tag = 'smem constant byte address 0x4 - core index']
  #allocation1 [shape = 'u32[144,128]{1,0:T(1,128)}', space=vmem, size = 0x12000, scoped, tag = 'internal scratch']
  %s0 = inlined_call_operand.vmem [shape: bf16[8,1152], index: 0, kind: input, shape index: {}]
  %s1 = inlined_call_operand.vmem [shape: bf16[1152,128], index: 1, kind: input, shape index: {}]
  %s2 = inlined_call_operand.vmem [shape: f32[1,128], index: 2, kind: input, shape index: {}]
  %s3 = inlined_call_operand.vmem [shape: f32[8,128], index: 3, kind: output, shape index: {}]
  %s4 = sld [smem:[#allocation0]]
  $region22: #{_lambda_.26} parent=0
    _
  %s6 = ssub.s32 1, %s4
  %s7 = scalar_select 0, %s6, %s4
  // Predicated region
  $region2: #{_lambda_.26} parent=0 // pred_check
    _
  $region3: #{_lambda_.26} parent=0 // pred_check_branch
    %9 = sbr.rel (0) target = $region5
  $region4: #{_lambda_.26} parent=0 // pred_region
    _
  $region5: #{_lambda_.26} parent=0 // pred_fallthru
    _
  // Predicated region
  $region6: #{_lambda_.26} parent=0 // pred_check
    _
  $region7: #{_lambda_.26} parent=0 // pred_check_branch
    %11 = sbr.rel (0) target = $region9
  $region8: #{_lambda_.26} parent=0 // pred_region
    _
  $region9: #{_lambda_.26} parent=0 // pred_fallthru
    _
  // Predicated region
  $region10: #{_lambda_.26} parent=0 // pred_check
    _
  $region11: #{_lambda_.26} parent=0 // pred_check_branch
    %13 = sbr.rel (0) target = $region13
  $region12: #{_lambda_.26} parent=0 // pred_region
    _
  $region13: #{_lambda_.26} parent=0 // pred_fallthru
    _
  %v15 = vld [vmem:[%s0] sm:$0xff]
  %v16 = vld [vmem:[%s0 + $0x8] sm:$0xff]
  %v17 = vld [vmem:[%s0 + $0x10] sm:$0xff]
  %v18 = vld [vmem:[%s0 + $0x18] sm:$0xff]
  %v19 = vld [vmem:[%s0 + $0x20] sm:$0xf]
  %v20 = vld [vmem:[%s1] sm:$0xf]
  %v21 = vld [vmem:[%s1 + $0x4] sm:$0xf]
  %v22 = vld [vmem:[%s1 + $0x8] sm:$0xf]
  %v23 = vld [vmem:[%s1 + $0xc] sm:$0xf]
  %v24 = vld [vmem:[%s1 + $0x10] sm:$0xf]
  %v25 = vld [vmem:[%s1 + $0x14] sm:$0xf]
  %v26 = vld [vmem:[%s1 + $0x18] sm:$0xf]
  %v27 = vld [vmem:[%s1 + $0x1c] sm:$0xf]
  %v28 = vld [vmem:[%s1 + $0x20] sm:$0xf]
  %v29 = vld [vmem:[%s1 + $0x24] sm:$0xf]
  %v30 = vld [vmem:[%s1 + $0x28] sm:$0xf]
  %v31 = vld [vmem:[%s1 + $0x2c] sm:$0xf]
  %v32 = vld [vmem:[%s1 + $0x30] sm:$0xf]
  %v33 = vld [vmem:[%s1 + $0x34] sm:$0xf]
  %v34 = vld [vmem:[%s1 + $0x38] sm:$0xf]
  %v35 = vld [vmem:[%s1 + $0x3c] sm:$0xf]
  %v36 = vld [vmem:[%s1 + $0x40] sm:$0xf]
  %v37 = vld [vmem:[%s1 + $0x44] sm:$0xf]
  %v38 = vld [vmem:[%s1 + $0x48] sm:$0xf]
  %v39 = vld [vmem:[%s1 + $0x4c] sm:$0xf]
  %v40 = vld [vmem:[%s1 + $0x50] sm:$0xf]
  %v41 = vld [vmem:[%s1 + $0x54] sm:$0xf]
  %v42 = vld [vmem:[%s1 + $0x58] sm:$0xf]
  %v43 = vld [vmem:[%s1 + $0x5c] sm:$0xf]
  %v44 = vld [vmem:[%s1 + $0x60] sm:$0xf]
  %v45 = vld [vmem:[%s1 + $0x64] sm:$0xf]
  %v46 = vld [vmem:[%s1 + $0x68] sm:$0xf]
  %v47 = vld [vmem:[%s1 + $0x6c] sm:$0xf]
  %v48 = vld [vmem:[%s1 + $0x70] sm:$0xf]
  %v49 = vld [vmem:[%s1 + $0x74] sm:$0xf]
  %v50 = vld [vmem:[%s1 + $0x78] sm:$0xf]
  %v51 = vld [vmem:[%s1 + $0x7c] sm:$0xf]
  %v52 = vld [vmem:[%s1 + $0x80] sm:$0xf]
  %v53 = vld [vmem:[%s1 + $0x84] sm:$0xf]
  %v54 = vld [vmem:[%s1 + $0x88] sm:$0xf]
  %v55 = vld [vmem:[%s1 + $0x8c] sm:$0xf]
  %v56 = vld [vmem:[%s1 + $0x90] sm:$0xf]
  %v57 = vld [vmem:[%s1 + $0x94] sm:$0xf]
  %v58 = vld [vmem:[%s1 + $0x98] sm:$0xf]
  %v59 = vld [vmem:[%s1 + $0x9c] sm:$0xf]
  %v60 = vld [vmem:[%s1 + $0xa0] sm:$0xf]
  %v61 = vld [vmem:[%s1 + $0xa4] sm:$0xf]
  %v62 = vld [vmem:[%s1 + $0xa8] sm:$0xf]
  %v63 = vld [vmem:[%s1 + $0xac] sm:$0xf]
  %v64 = vld [vmem:[%s1 + $0xb0] sm:$0xf]
  %v65 = vld [vmem:[%s1 + $0xb4] sm:$0xf]
  %v66 = vld [vmem:[%s1 + $0xb8] sm:$0xf]
  %v67 = vld [vmem:[%s1 + $0xbc] sm:$0xf]
  %v68 = vld [vmem:[%s1 + $0xc0] sm:$0xf]
  %v69 = vld [vmem:[%s1 + $0xc4] sm:$0xf]
  %v70 = vld [vmem:[%s1 + $0xc8] sm:$0xf]
  %v71 = vld [vmem:[%s1 + $0xcc] sm:$0xf]
  %v72 = vld [vmem:[%s1 + $0xd0] sm:$0xf]
  %v73 = vld [vmem:[%s1 + $0xd4] sm:$0xf]
  %v74 = vld [vmem:[%s1 + $0xd8] sm:$0xf]
  %v75 = vld [vmem:[%s1 + $0xdc] sm:$0xf]
  %v76 = vld [vmem:[%s1 + $0xe0] sm:$0xf]
  %v77 = vld [vmem:[%s1 + $0xe4] sm:$0xf]
  %v78 = vld [vmem:[%s1 + $0xe8] sm:$0xf]
  %v79 = vld [vmem:[%s1 + $0xec] sm:$0xf]
  %v80 = vld [vmem:[%s1 + $0xf0] sm:$0xf]
  %v81 = vld [vmem:[%s1 + $0xf4] sm:$0xf]
  %v82 = vld [vmem:[%s1 + $0xf8] sm:$0xf]
  %v83 = vld [vmem:[%s1 + $0xfc] sm:$0xf]
  %v84 = vld [vmem:[%s1 + $0x100] sm:$0xf]
  %v85 = vld [vmem:[%s1 + $0x104] sm:$0xf]
  %v86 = vld [vmem:[%s1 + $0x108] sm:$0xf]
  %v87 = vld [vmem:[%s1 + $0x10c] sm:$0xf]
  %v88 = vld [vmem:[%s1 + $0x110] sm:$0xf]
  %v89 = vld [vmem:[%s1 + $0x114] sm:$0xf]
  %v90 = vld [vmem:[%s1 + $0x118] sm:$0xf]
  %v91 = vld [vmem:[%s1 + $0x11c] sm:$0xf]
  %v92 = vld [vmem:[%s1 + $0x120] sm:$0xf]
  %v93 = vld [vmem:[%s1 + $0x124] sm:$0xf]
  %v94 = vld [vmem:[%s1 + $0x128] sm:$0xf]
  %v95 = vld [vmem:[%s1 + $0x12c] sm:$0xf]
  %v96 = vld [vmem:[%s1 + $0x130] sm:$0xf]
  %v97 = vld [vmem:[%s1 + $0x134] sm:$0xf]
  %v98 = vld [vmem:[%s1 + $0x138] sm:$0xf]
  %v99 = vld [vmem:[%s1 + $0x13c] sm:$0xf]
  %v100 = vld [vmem:[%s1 + $0x140] sm:$0xf]
  %v101 = vld [vmem:[%s1 + $0x144] sm:$0xf]
  %v102 = vld [vmem:[%s1 + $0x148] sm:$0xf]
  %v103 = vld [vmem:[%s1 + $0x14c] sm:$0xf]
  %v104 = vld [vmem:[%s1 + $0x150] sm:$0xf]
  %v105 = vld [vmem:[%s1 + $0x154] sm:$0xf]
  %v106 = vld [vmem:[%s1 + $0x158] sm:$0xf]
  %v107 = vld [vmem:[%s1 + $0x15c] sm:$0xf]
  %v108 = vld [vmem:[%s1 + $0x160] sm:$0xf]
  %v109 = vld [vmem:[%s1 + $0x164] sm:$0xf]
  %v110 = vld [vmem:[%s1 + $0x168] sm:$0xf]
  %v111 = vld [vmem:[%s1 + $0x16c] sm:$0xf]
  %v112 = vld [vmem:[%s1 + $0x170] sm:$0xf]
  %v113 = vld [vmem:[%s1 + $0x174] sm:$0xf]
  %v114 = vld [vmem:[%s1 + $0x178] sm:$0xf]
  %v115 = vld [vmem:[%s1 + $0x17c] sm:$0xf]
  %v116 = vld [vmem:[%s1 + $0x180] sm:$0xf]
  %v117 = vld [vmem:[%s1 + $0x184] sm:$0xf]
  %v118 = vld [vmem:[%s1 + $0x188] sm:$0xf]
  %v119 = vld [vmem:[%s1 + $0x18c] sm:$0xf]
  %v120 = vld [vmem:[%s1 + $0x190] sm:$0xf]
  %v121 = vld [vmem:[%s1 + $0x194] sm:$0xf]
  %v122 = vld [vmem:[%s1 + $0x198] sm:$0xf]
  %v123 = vld [vmem:[%s1 + $0x19c] sm:$0xf]
  %v124 = vld [vmem:[%s1 + $0x1a0] sm:$0xf]
  %v125 = vld [vmem:[%s1 + $0x1a4] sm:$0xf]
  %v126 = vld [vmem:[%s1 + $0x1a8] sm:$0xf]
  %v127 = vld [vmem:[%s1 + $0x1ac] sm:$0xf]
  %v128 = vld [vmem:[%s1 + $0x1b0] sm:$0xf]
  %v129 = vld [vmem:[%s1 + $0x1b4] sm:$0xf]
  %v130 = vld [vmem:[%s1 + $0x1b8] sm:$0xf]
  %v131 = vld [vmem:[%s1 + $0x1bc] sm:$0xf]
  %v132 = vld [vmem:[%s1 + $0x1c0] sm:$0xf]
  %v133 = vld [vmem:[%s1 + $0x1c4] sm:$0xf]
  %v134 = vld [vmem:[%s1 + $0x1c8] sm:$0xf]
  %v135 = vld [vmem:[%s1 + $0x1cc] sm:$0xf]
  %v136 = vld [vmem:[%s1 + $0x1d0] sm:$0xf]
  %v137 = vld [vmem:[%s1 + $0x1d4] sm:$0xf]
  %v138 = vld [vmem:[%s1 + $0x1d8] sm:$0xf]
  %v139 = vld [vmem:[%s1 + $0x1dc] sm:$0xf]
  %v140 = vld [vmem:[%s1 + $0x1e0] sm:$0xf]
  %v141 = vld [vmem:[%s1 + $0x1e4] sm:$0xf]
  %v142 = vld [vmem:[%s1 + $0x1e8] sm:$0xf]
  %v143 = vld [vmem:[%s1 + $0x1ec] sm:$0xf]
  %v144 = vld [vmem:[%s1 + $0x1f0] sm:$0xf]
  %v145 = vld [vmem:[%s1 + $0x1f4] sm:$0xf]
  %v146 = vld [vmem:[%s1 + $0x1f8] sm:$0xf]
  %v147 = vld [vmem:[%s1 + $0x1fc] sm:$0xf]
  %v148 = vld [vmem:[%s1 + $0x200] sm:$0xf]
  %v149 = vld [vmem:[%s1 + $0x204] sm:$0xf]
  %v150 = vld [vmem:[%s1 + $0x208] sm:$0xf]
  %v151 = vld [vmem:[%s1 + $0x20c] sm:$0xf]
  %v152 = vld [vmem:[%s1 + $0x210] sm:$0xf]
  %v153 = vld [vmem:[%s1 + $0x214] sm:$0xf]
  %v154 = vld [vmem:[%s1 + $0x218] sm:$0xf]
  %v155 = vld [vmem:[%s1 + $0x21c] sm:$0xf]
  %v156 = vld [vmem:[%s1 + $0x220] sm:$0xf]
  %v157 = vld [vmem:[%s1 + $0x224] sm:$0xf]
  %v158 = vld [vmem:[%s1 + $0x228] sm:$0xf]
  %v159 = vld [vmem:[%s1 + $0x22c] sm:$0xf]
  %v160 = vld [vmem:[%s1 + $0x230] sm:$0xf]
  %v161 = vld [vmem:[%s1 + $0x234] sm:$0xf]
  %v162 = vld [vmem:[%s1 + $0x238] sm:$0xf]
  %v163 = vld [vmem:[%s1 + $0x23c] sm:$0xf]
  %v164 = vld [vmem:[%s2] sm:$0x1]
  %v166 = vlaneseq
  %v167 = vshrl.u32 %v166, 7
  %v168 = vsub.s32 0, %v167
  %v169 = vrot.slane %v164, %v168
  %v176 = vunpack.c.l.b16 %v15
  %v177 = vunpack.c.h.b16 %v15
  %v178 = vunpack.c.l.b16 %v16
  %v179 = vunpack.c.h.b16 %v16
  %v180 = vunpack.c.l.b16 %v17
  %v181 = vunpack.c.h.b16 %v17
  %v182 = vunpack.c.l.b16 %v18
  %v183 = vunpack.c.h.b16 %v18
  %v184 = vunpack.c.l.b16 %v19
  %v185 = vpack.c.b16 %v176, %v176
  %v186 = vpack.c.b16 %v177, %v177
  %v187 = vpack.c.b16 %v178, %v178
  %v188 = vpack.c.b16 %v179, %v179
  %v189 = vpack.c.b16 %v180, %v180
  %v190 = vpack.c.b16 %v181, %v181
  %v191 = vpack.c.b16 %v182, %v182
  %v192 = vpack.c.b16 %v183, %v183
  %v193 = vpack.c.b16 %v184, %v184
  %v347 = vunpack.c.l.b16 %v20
  %v348 = vunpack.c.l.b16 %v21
  %v349 = vunpack.c.l.b16 %v22
  %v350 = vunpack.c.l.b16 %v23
  %v351 = vunpack.c.l.b16 %v24
  %v352 = vunpack.c.l.b16 %v25
  %v353 = vunpack.c.l.b16 %v26
  %v354 = vunpack.c.l.b16 %v27
  %v355 = vunpack.c.l.b16 %v28
  %v356 = vunpack.c.l.b16 %v29
  %v357 = vunpack.c.l.b16 %v30
  %v358 = vunpack.c.l.b16 %v31
  %v359 = vunpack.c.l.b16 %v32
  %v360 = vunpack.c.l.b16 %v33
  %v361 = vunpack.c.l.b16 %v34
  %v362 = vunpack.c.l.b16 %v35
  %v363 = vunpack.c.l.b16 %v36
  %v364 = vunpack.c.l.b16 %v37
  %v365 = vunpack.c.l.b16 %v38
  %v366 = vunpack.c.l.b16 %v39
  %v367 = vunpack.c.l.b16 %v40
  %v368 = vunpack.c.l.b16 %v41
  %v369 = vunpack.c.l.b16 %v42
  %v370 = vunpack.c.l.b16 %v43
  %v371 = vunpack.c.l.b16 %v44
  %v372 = vunpack.c.l.b16 %v45
  %v373 = vunpack.c.l.b16 %v46
  %v374 = vunpack.c.l.b16 %v47
  %v375 = vunpack.c.l.b16 %v48
  %v376 = vunpack.c.l.b16 %v49
  %v377 = vunpack.c.l.b16 %v50
  %v378 = vunpack.c.l.b16 %v51
  %v379 = vunpack.c.l.b16 %v52
  %v380 = vunpack.c.l.b16 %v53
  %v381 = vunpack.c.l.b16 %v54
  %v382 = vunpack.c.l.b16 %v55
  %v383 = vunpack.c.l.b16 %v56
  %v384 = vunpack.c.l.b16 %v57
  %v385 = vunpack.c.l.b16 %v58
  %v386 = vunpack.c.l.b16 %v59
  %v387 = vunpack.c.l.b16 %v60
  %v388 = vunpack.c.l.b16 %v61
  %v389 = vunpack.c.l.b16 %v62
  %v390 = vunpack.c.l.b16 %v63
  %v391 = vunpack.c.l.b16 %v64
  %v392 = vunpack.c.l.b16 %v65
  %v393 = vunpack.c.l.b16 %v66
  %v394 = vunpack.c.l.b16 %v67
  %v395 = vunpack.c.l.b16 %v68
  %v396 = vunpack.c.l.b16 %v69
  %v397 = vunpack.c.l.b16 %v70
  %v398 = vunpack.c.l.b16 %v71
  %v399 = vunpack.c.l.b16 %v72
  %v400 = vunpack.c.l.b16 %v73
  %v401 = vunpack.c.l.b16 %v74
  %v402 = vunpack.c.l.b16 %v75
  %v403 = vunpack.c.l.b16 %v76
  %v404 = vunpack.c.l.b16 %v77
  %v405 = vunpack.c.l.b16 %v78
  %v406 = vunpack.c.l.b16 %v79
  %v407 = vunpack.c.l.b16 %v80
  %v408 = vunpack.c.l.b16 %v81
  %v409 = vunpack.c.l.b16 %v82
  %v410 = vunpack.c.l.b16 %v83
  %v411 = vunpack.c.l.b16 %v84
  %v412 = vunpack.c.l.b16 %v85
  %v413 = vunpack.c.l.b16 %v86
  %v414 = vunpack.c.l.b16 %v87
  %v415 = vunpack.c.l.b16 %v88
  %v416 = vunpack.c.l.b16 %v89
  %v417 = vunpack.c.l.b16 %v90
  %v418 = vunpack.c.l.b16 %v91
  %v419 = vunpack.c.l.b16 %v92
  %v420 = vunpack.c.l.b16 %v93
  %v421 = vunpack.c.l.b16 %v94
  %v422 = vunpack.c.l.b16 %v95
  %v423 = vunpack.c.l.b16 %v96
  %v424 = vunpack.c.l.b16 %v97
  %v425 = vunpack.c.l.b16 %v98
  %v426 = vunpack.c.l.b16 %v99
  %v427 = vunpack.c.l.b16 %v100
  %v428 = vunpack.c.l.b16 %v101
  %v429 = vunpack.c.l.b16 %v102
  %v430 = vunpack.c.l.b16 %v103
  %v431 = vunpack.c.l.b16 %v104
  %v432 = vunpack.c.l.b16 %v105
  %v433 = vunpack.c.l.b16 %v106
  %v434 = vunpack.c.l.b16 %v107
  %v435 = vunpack.c.l.b16 %v108
  %v436 = vunpack.c.l.b16 %v109
  %v437 = vunpack.c.l.b16 %v110
  %v438 = vunpack.c.l.b16 %v111
  %v439 = vunpack.c.l.b16 %v112
  %v440 = vunpack.c.l.b16 %v113
  %v441 = vunpack.c.l.b16 %v114
  %v442 = vunpack.c.l.b16 %v115
  %v443 = vunpack.c.l.b16 %v116
  %v444 = vunpack.c.l.b16 %v117
  %v445 = vunpack.c.l.b16 %v118
  %v446 = vunpack.c.l.b16 %v119
  %v447 = vunpack.c.l.b16 %v120
  %v448 = vunpack.c.l.b16 %v121
  %v449 = vunpack.c.l.b16 %v122
  %v450 = vunpack.c.l.b16 %v123
  %v451 = vunpack.c.l.b16 %v124
  %v452 = vunpack.c.l.b16 %v125
  %v453 = vunpack.c.l.b16 %v126
  %v454 = vunpack.c.l.b16 %v127
  %v455 = vunpack.c.l.b16 %v128
  %v456 = vunpack.c.l.b16 %v129
  %v457 = vunpack.c.l.b16 %v130
  %v458 = vunpack.c.l.b16 %v131
  %v459 = vunpack.c.l.b16 %v132
  %v460 = vunpack.c.l.b16 %v133
  %v461 = vunpack.c.l.b16 %v134
  %v462 = vunpack.c.l.b16 %v135
  %v463 = vunpack.c.l.b16 %v136
  %v464 = vunpack.c.l.b16 %v137
  %v465 = vunpack.c.l.b16 %v138
  %v466 = vunpack.c.l.b16 %v139
  %v467 = vunpack.c.l.b16 %v140
  %v468 = vunpack.c.l.b16 %v141
  %v469 = vunpack.c.l.b16 %v142
  %v470 = vunpack.c.l.b16 %v143
  %v471 = vunpack.c.l.b16 %v144
  %v472 = vunpack.c.l.b16 %v145
  %v473 = vunpack.c.l.b16 %v146
  %v474 = vunpack.c.l.b16 %v147
  %v475 = vunpack.c.l.b16 %v148
  %v476 = vunpack.c.l.b16 %v149
  %v477 = vunpack.c.l.b16 %v150
  %v478 = vunpack.c.l.b16 %v151
  %v479 = vunpack.c.l.b16 %v152
  %v480 = vunpack.c.l.b16 %v153
  %v481 = vunpack.c.l.b16 %v154
  %v482 = vunpack.c.l.b16 %v155
  %v483 = vunpack.c.l.b16 %v156
  %v484 = vunpack.c.l.b16 %v157
  %v485 = vunpack.c.l.b16 %v158
  %v486 = vunpack.c.l.b16 %v159
  %v487 = vunpack.c.l.b16 %v160
  %v488 = vunpack.c.l.b16 %v161
  %v489 = vunpack.c.l.b16 %v162
  %v490 = vunpack.c.l.b16 %v163
  %v491 = vpack.c.b16 %v348, %v347
  %v492 = vpack.c.b16 %v350, %v349
  %v493 = vpack.c.b16 %v352, %v351
  %v494 = vpack.c.b16 %v354, %v353
  %v495 = vpack.c.b16 %v356, %v355
  %v496 = vpack.c.b16 %v358, %v357
  %v497 = vpack.c.b16 %v360, %v359
  %v498 = vpack.c.b16 %v362, %v361
  %v499 = vpack.c.b16 %v364, %v363
  %v500 = vpack.c.b16 %v366, %v365
  %v501 = vpack.c.b16 %v368, %v367
  %v502 = vpack.c.b16 %v370, %v369
  %v503 = vpack.c.b16 %v372, %v371
  %v504 = vpack.c.b16 %v374, %v373
  %v505 = vpack.c.b16 %v376, %v375
  %v506 = vpack.c.b16 %v378, %v377
  %v507 = vpack.c.b16 %v380, %v379
  %v508 = vpack.c.b16 %v382, %v381
  %v509 = vpack.c.b16 %v384, %v383
  %v510 = vpack.c.b16 %v386, %v385
  %v511 = vpack.c.b16 %v388, %v387
  %v512 = vpack.c.b16 %v390, %v389
  %v513 = vpack.c.b16 %v392, %v391
  %v514 = vpack.c.b16 %v394, %v393
  %v515 = vpack.c.b16 %v396, %v395
  %v516 = vpack.c.b16 %v398, %v397
  %v517 = vpack.c.b16 %v400, %v399
  %v518 = vpack.c.b16 %v402, %v401
  %v519 = vpack.c.b16 %v404, %v403
  %v520 = vpack.c.b16 %v406, %v405
  %v521 = vpack.c.b16 %v408, %v407
  %v522 = vpack.c.b16 %v410, %v409
  %v523 = vpack.c.b16 %v412, %v411
  %v524 = vpack.c.b16 %v414, %v413
  %v525 = vpack.c.b16 %v416, %v415
  %v526 = vpack.c.b16 %v418, %v417
  %v527 = vpack.c.b16 %v420, %v419
  %v528 = vpack.c.b16 %v422, %v421
  %v529 = vpack.c.b16 %v424, %v423
  %v530 = vpack.c.b16 %v426, %v425
  %v531 = vpack.c.b16 %v428, %v427
  %v532 = vpack.c.b16 %v430, %v429
  %v533 = vpack.c.b16 %v432, %v431
  %v534 = vpack.c.b16 %v434, %v433
  %v535 = vpack.c.b16 %v436, %v435
  %v536 = vpack.c.b16 %v438, %v437
  %v537 = vpack.c.b16 %v440, %v439
  %v538 = vpack.c.b16 %v442, %v441
  %v539 = vpack.c.b16 %v444, %v443
  %v540 = vpack.c.b16 %v446, %v445
  %v541 = vpack.c.b16 %v448, %v447
  %v542 = vpack.c.b16 %v450, %v449
  %v543 = vpack.c.b16 %v452, %v451
  %v544 = vpack.c.b16 %v454, %v453
  %v545 = vpack.c.b16 %v456, %v455
  %v546 = vpack.c.b16 %v458, %v457
  %v547 = vpack.c.b16 %v460, %v459
  %v548 = vpack.c.b16 %v462, %v461
  %v549 = vpack.c.b16 %v464, %v463
  %v550 = vpack.c.b16 %v466, %v465
  %v551 = vpack.c.b16 %v468, %v467
  %v552 = vpack.c.b16 %v470, %v469
  %v553 = vpack.c.b16 %v472, %v471
  %v554 = vpack.c.b16 %v474, %v473
  %v555 = vpack.c.b16 %v476, %v475
  %v556 = vpack.c.b16 %v478, %v477
  %v557 = vpack.c.b16 %v480, %v479
  %v558 = vpack.c.b16 %v482, %v481
  %v559 = vpack.c.b16 %v484, %v483
  %v560 = vpack.c.b16 %v486, %v485
  %v561 = vpack.c.b16 %v488, %v487
  %v562 = vpack.c.b16 %v490, %v489
  %635 = vmatprep.subr.bf16.mxu0 0
  %636 = vmatpush1.bf16.msra.mxu0 %v491
  %637 = vmatprep.subr.bf16.mxu0 0
  %638 = vmatpush1.bf16.msra.mxu0 %v492
  %639 = vmatprep.subr.bf16.mxu0 0
  %640 = vmatpush1.bf16.msra.mxu0 %v493
  %641 = vmatprep.subr.bf16.mxu0 0
  %642 = vmatpush1.bf16.msra.mxu0 %v494
  %643 = vmatprep.subr.bf16.mxu0 0
  %644 = vmatpush1.bf16.msra.mxu0 %v495
  %645 = vmatprep.subr.bf16.mxu0 0
  %646 = vmatpush1.bf16.msra.mxu0 %v496
  %647 = vmatprep.subr.bf16.mxu0 0
  %648 = vmatpush1.bf16.msra.mxu0 %v497
  %649 = vmatprep.subr.bf16.mxu0 0
  %650 = vmatpush1.bf16.msra.mxu0 %v498
  %651 = vmatprep.subr.bf16.mxu0 0
  %652 = vmatpush1.bf16.msra.mxu0 %v499
  %653 = vmatprep.subr.bf16.mxu0 0
  %654 = vmatpush1.bf16.msra.mxu0 %v500
  %655 = vmatprep.subr.bf16.mxu0 0
  %656 = vmatpush1.bf16.msra.mxu0 %v501
  %657 = vmatprep.subr.bf16.mxu0 0
  %658 = vmatpush1.bf16.msra.mxu0 %v502
  %659 = vmatprep.subr.bf16.mxu0 0
  %660 = vmatpush1.bf16.msra.mxu0 %v503
  %661 = vmatprep.subr.bf16.mxu0 0
  %662 = vmatpush1.bf16.msra.mxu0 %v504
  %663 = vmatprep.subr.bf16.mxu0 0
  %664 = vmatpush1.bf16.msra.mxu0 %v505
  %665 = vmatprep.subr.bf16.mxu0 0
  %666 = vmatpush1.bf16.msra.mxu0 %v506
  %667 = vmatprep.mubr.bf16.mxu0 %v186
  %668 = vmatmul.mubr.bf16.gmra.mrb[0].mxu0 %v185
  %v669 = vpop.f32.mrb[0].mxu0
  %v670 = vadd.f32 %v169, %v669
  %v671 = vpop.f32.mrb[0].mxu0
  %v672 = vpop.f32.mrb[0].mxu0
  %v673 = vpop.f32.mrb[0].mxu0
  %674 = vdwg.mxu0
  %675 = vmatprep.subr.bf16.mxu0 0
  %676 = vmatpush1.bf16.msra.mxu0 %v507
  %677 = vmatprep.subr.bf16.mxu0 0
  %678 = vmatpush1.bf16.msra.mxu0 %v508
  %679 = vmatprep.subr.bf16.mxu0 0
  %680 = vmatpush1.bf16.msra.mxu0 %v509
  %681 = vmatprep.subr.bf16.mxu0 0
  %682 = vmatpush1.bf16.msra.mxu0 %v510
  %683 = vmatprep.subr.bf16.mxu0 0
  %684 = vmatpush1.bf16.msra.mxu0 %v511
  %685 = vmatprep.subr.bf16.mxu0 0
  %686 = vmatpush1.bf16.msra.mxu0 %v512
  %687 = vmatprep.subr.bf16.mxu0 0
  %688 = vmatpush1.bf16.msra.mxu0 %v513
  %689 = vmatprep.subr.bf16.mxu0 0
  %690 = vmatpush1.bf16.msra.mxu0 %v514
  %691 = vmatprep.subr.bf16.mxu0 0
  %692 = vmatpush1.bf16.msra.mxu0 %v515
  %693 = vmatprep.subr.bf16.mxu0 0
  %694 = vmatpush1.bf16.msra.mxu0 %v516
  %695 = vmatprep.subr.bf16.mxu0 0
  %696 = vmatpush1.bf16.msra.mxu0 %v517
  %697 = vmatprep.subr.bf16.mxu0 0
  %698 = vmatpush1.bf16.msra.mxu0 %v518
  %699 = vmatprep.subr.bf16.mxu0 0
  %700 = vmatpush1.bf16.msra.mxu0 %v519
  %701 = vmatprep.subr.bf16.mxu0 0
  %702 = vmatpush1.bf16.msra.mxu0 %v520
  %703 = vmatprep.subr.bf16.mxu0 0
  %704 = vmatpush1.bf16.msra.mxu0 %v521
  %705 = vmatprep.subr.bf16.mxu0 0
  %706 = vmatpush1.bf16.msra.mxu0 %v522
  %707 = vmatprep.mubr.bf16.mxu0 %v188
  %708 = vmatmul.mubr.bf16.gmra.mrb[0].mxu0 %v187
  %v709 = vpop.f32.mrb[0].mxu0
  %v710 = vadd.f32 %v670, %v709
  %v711 = vpop.f32.mrb[0].mxu0
  %v712 = vpop.f32.mrb[0].mxu0
  %v713 = vpop.f32.mrb[0].mxu0
  %714 = vdwg.mxu0
  %715 = vmatprep.subr.bf16.mxu0 0
  %716 = vmatpush1.bf16.msra.mxu0 %v523
  %717 = vmatprep.subr.bf16.mxu0 0
  %718 = vmatpush1.bf16.msra.mxu0 %v524
  %719 = vmatprep.subr.bf16.mxu0 0
  %720 = vmatpush1.bf16.msra.mxu0 %v525
  %721 = vmatprep.subr.bf16.mxu0 0
  %722 = vmatpush1.bf16.msra.mxu0 %v526
  %723 = vmatprep.subr.bf16.mxu0 0
  %724 = vmatpush1.bf16.msra.mxu0 %v527
  %725 = vmatprep.subr.bf16.mxu0 0
  %726 = vmatpush1.bf16.msra.mxu0 %v528
  %727 = vmatprep.subr.bf16.mxu0 0
  %728 = vmatpush1.bf16.msra.mxu0 %v529
  %729 = vmatprep.subr.bf16.mxu0 0
  %730 = vmatpush1.bf16.msra.mxu0 %v530
  %731 = vmatprep.subr.bf16.mxu0 0
  %732 = vmatpush1.bf16.msra.mxu0 %v531
  %733 = vmatprep.subr.bf16.mxu0 0
  %734 = vmatpush1.bf16.msra.mxu0 %v532
  %735 = vmatprep.subr.bf16.mxu0 0
  %736 = vmatpush1.bf16.msra.mxu0 %v533
  %737 = vmatprep.subr.bf16.mxu0 0
  %738 = vmatpush1.bf16.msra.mxu0 %v534
  %739 = vmatprep.subr.bf16.mxu0 0
  %740 = vmatpush1.bf16.msra.mxu0 %v535
  %741 = vmatprep.subr.bf16.mxu0 0
  %742 = vmatpush1.bf16.msra.mxu0 %v536
  %743 = vmatprep.subr.bf16.mxu0 0
  %744 = vmatpush1.bf16.msra.mxu0 %v537
  %745 = vmatprep.subr.bf16.mxu0 0
  %746 = vmatpush1.bf16.msra.mxu0 %v538
  %747 = vmatprep.mubr.bf16.mxu0 %v190
  %748 = vmatmul.mubr.bf16.gmra.mrb[0].mxu0 %v189
  %v749 = vpop.f32.mrb[0].mxu0
  %v750 = vadd.f32 %v710, %v749
  %v751 = vpop.f32.mrb[0].mxu0
  %v752 = vpop.f32.mrb[0].mxu0
  %v753 = vpop.f32.mrb[0].mxu0
  %754 = vdwg.mxu0
  %755 = vmatprep.subr.bf16.mxu0 0
  %756 = vmatpush1.bf16.msra.mxu0 %v539
  %757 = vmatprep.subr.bf16.mxu0 0
  %758 = vmatpush1.bf16.msra.mxu0 %v540
  %759 = vmatprep.subr.bf16.mxu0 0
  %760 = vmatpush1.bf16.msra.mxu0 %v541
  %761 = vmatprep.subr.bf16.mxu0 0
  %762 = vmatpush1.bf16.msra.mxu0 %v542
  %763 = vmatprep.subr.bf16.mxu0 0
  %764 = vmatpush1.bf16.msra.mxu0 %v543
  %765 = vmatprep.subr.bf16.mxu0 0
  %766 = vmatpush1.bf16.msra.mxu0 %v544
  %767 = vmatprep.subr.bf16.mxu0 0
  %768 = vmatpush1.bf16.msra.mxu0 %v545
  %769 = vmatprep.subr.bf16.mxu0 0
  %770 = vmatpush1.bf16.msra.mxu0 %v546
  %771 = vmatprep.subr.bf16.mxu0 0
  %772 = vmatpush1.bf16.msra.mxu0 %v547
  %773 = vmatprep.subr.bf16.mxu0 0
  %774 = vmatpush1.bf16.msra.mxu0 %v548
  %775 = vmatprep.subr.bf16.mxu0 0
  %776 = vmatpush1.bf16.msra.mxu0 %v549
  %777 = vmatprep.subr.bf16.mxu0 0
  %778 = vmatpush1.bf16.msra.mxu0 %v550
  %779 = vmatprep.subr.bf16.mxu0 0
  %780 = vmatpush1.bf16.msra.mxu0 %v551
  %781 = vmatprep.subr.bf16.mxu0 0
  %782 = vmatpush1.bf16.msra.mxu0 %v552
  %783 = vmatprep.subr.bf16.mxu0 0
  %784 = vmatpush1.bf16.msra.mxu0 %v553
  %785 = vmatprep.subr.bf16.mxu0 0
  %786 = vmatpush1.bf16.msra.mxu0 %v554
  %787 = vmatprep.mubr.bf16.mxu0 %v192
  %788 = vmatmul.mubr.bf16.gmra.mrb[0].mxu0 %v191
  %v789 = vpop.f32.mrb[0].mxu0
  %v790 = vadd.f32 %v750, %v789
  %v791 = vpop.f32.mrb[0].mxu0
  %v792 = vpop.f32.mrb[0].mxu0
  %v793 = vpop.f32.mrb[0].mxu0
  %794 = vdwg.mxu0
  %795 = vmatprep.subr.bf16.mxu0 0
  %796 = vmatpush1.bf16.msra.mxu0 %v555
  %797 = vmatprep.subr.bf16.mxu0 0
  %798 = vmatpush1.bf16.msra.mxu0 %v556
  %799 = vmatprep.subr.bf16.mxu0 0
  %800 = vmatpush1.bf16.msra.mxu0 %v557
  %801 = vmatprep.subr.bf16.mxu0 0
  %802 = vmatpush1.bf16.msra.mxu0 %v558
  %803 = vmatprep.subr.bf16.mxu0 0
  %804 = vmatpush1.bf16.msra.mxu0 %v559
  %805 = vmatprep.subr.bf16.mxu0 0
  %806 = vmatpush1.bf16.msra.mxu0 %v560
  %807 = vmatprep.subr.bf16.mxu0 0
  %808 = vmatpush1.bf16.msra.mxu0 %v561
  %809 = vmatprep.subr.bf16.mxu0 0
  %810 = vmatpush1.bf16.msra.mxu0 %v562
  %811 = vmatprep.subr.bf16.mxu0 0
  %812 = vmatpush1.bf16.msra.mxu0 0
  %813 = vmatprep.subr.bf16.mxu0 0
  %814 = vmatpush1.bf16.msra.mxu0 0
  %815 = vmatprep.subr.bf16.mxu0 0
  %816 = vmatpush1.bf16.msra.mxu0 0
  %817 = vmatprep.subr.bf16.mxu0 0
  %818 = vmatpush1.bf16.msra.mxu0 0
  %819 = vmatprep.subr.bf16.mxu0 0
  %820 = vmatpush1.bf16.msra.mxu0 0
  %821 = vmatprep.subr.bf16.mxu0 0
  %822 = vmatpush1.bf16.msra.mxu0 0
  %823 = vmatprep.subr.bf16.mxu0 0
  %824 = vmatpush1.bf16.msra.mxu0 0
  %825 = vmatprep.subr.bf16.mxu0 0
  %826 = vmatpush1.bf16.msra.mxu0 0
  %827 = vmatprep.mubr.bf16.mxu0 0
  %828 = vmatmul.mubr.bf16.gmra.mrb[0].mxu0 %v193
  %v829 = vpop.f32.mrb[0].mxu0
  %v830 = vadd.f32 %v790, %v829
  %v831 = vpop.f32.mrb[0].mxu0
  %v832 = vpop.f32.mrb[0].mxu0
  %v833 = vpop.f32.mrb[0].mxu0
  %834 = vdwg.mxu0
  %v835 = vmax.f32 %v830, 0.0
  %836 = vst [vmem:[%s3] sm:$0xff] %v835
  // Predicated region
  $region14: #{_lambda_.26} parent=0 // pred_check
    _
  $region15: #{_lambda_.26} parent=0 // pred_check_branch
    %838 = sbr.rel (0) target = $region17
  $region16: #{_lambda_.26} parent=0 // pred_region
    _
  $region17: #{_lambda_.26} parent=0 // pred_fallthru
    _
  // Predicated region
  $region18: #{_lambda_.26} parent=0 // pred_check
    _
  $region19: #{_lambda_.26} parent=0 // pred_check_branch
    %840 = sbr.rel (0) target = $region21
  $region20: #{_lambda_.26} parent=0 // pred_region
    _
  $region21: #{_lambda_.26} parent=0 // pred_fallthru
    _

// kernel: _lambda_.18
$region0: #{_lambda_.18}
  #allocation0 [shape = 'u32[]', space=smem, size = 0x4, offset = 0x4, fixed_abs, tag = 'smem constant byte address 0x4 - core index']
  #allocation1 [shape = 'u32[144,128]{1,0:T(1,128)}', space=vmem, size = 0x12000, scoped, tag = 'internal scratch']
  %s0 = inlined_call_operand.vmem [shape: bf16[128,6272], index: 0, kind: input, shape index: {}]
  %s1 = inlined_call_operand.vmem [shape: bf16[6272,128], index: 1, kind: input, shape index: {}]
  %s2 = inlined_call_operand.vmem [shape: f32[1,128], index: 2, kind: input, shape index: {}]
  %s3 = inlined_call_operand.vmem [shape: f32[128,128], index: 3, kind: output, shape index: {}]
  %s4 = sld [smem:[#allocation0]]
  $region22: #{_lambda_.18} parent=0
    _
  %s6 = ssub.s32 1, %s4
  %s7 = scalar_select 0, %s6, %s4
  // Predicated region
  $region2: #{_lambda_.18} parent=0 // pred_check
    _
  $region3: #{_lambda_.18} parent=0 // pred_check_branch
    %9 = sbr.rel (0) target = $region5
  $region4: #{_lambda_.18} parent=0 // pred_region
    _
  $region5: #{_lambda_.18} parent=0 // pred_fallthru
    _
  // Predicated region
  $region6: #{_lambda_.18} parent=0 // pred_check
    _
  $region7: #{_lambda_.18} parent=0 // pred_check_branch
    %11 = sbr.rel (0) target = $region9
  $region8: #{_lambda_.18} parent=0 // pred_region
    _
  $region9: #{_lambda_.18} parent=0 // pred_fallthru
    _
  // Predicated region
  $region10: #{_lambda_.18} parent=0 // pred_check
    _
  $region11: #{_lambda_.18} parent=0 // pred_check_branch
    %13 = sbr.rel (0) target = $region13
  $region12: #{_lambda_.18} parent=0 // pred_region
    _
  $region13: #{_lambda_.18} parent=0 // pred_fallthru
    _
  %v15 = vld [vmem:[%s0] sm:$0xff]
  %v16 = vld [vmem:[%s0 + $0x8] sm:$0xff]
  %v17 = vld [vmem:[%s0 + $0x10] sm:$0xff]
  %v18 = vld [vmem:[%s0 + $0x18] sm:$0xff]
  %v19 = vld [vmem:[%s0 + $0x20] sm:$0xff]
  %v20 = vld [vmem:[%s0 + $0x28] sm:$0xff]
  %v21 = vld [vmem:[%s0 + $0x30] sm:$0xff]
  %v22 = vld [vmem:[%s0 + $0x38] sm:$0xff]
  %v23 = vld [vmem:[%s0 + $0x40] sm:$0xff]
  %v24 = vld [vmem:[%s0 + $0x48] sm:$0xff]
  %v25 = vld [vmem:[%s0 + $0x50] sm:$0xff]
  %v26 = vld [vmem:[%s0 + $0x58] sm:$0xff]
  %v27 = vld [vmem:[%s0 + $0x60] sm:$0xff]
  %v28 = vld [vmem:[%s0 + $0x68] sm:$0xff]
  %v29 = vld [vmem:[%s0 + $0x70] sm:$0xff]
  %v30 = vld [vmem:[%s0 + $0x78] sm:$0xff]
  %v31 = vld [vmem:[%s0 + $0x80] sm:$0xff]
  %v32 = vld [vmem:[%s0 + $0x88] sm:$0xff]
  %v33 = vld [vmem:[%s0 + $0x90] sm:$0xff]
  %v34 = vld [vmem:[%s0 + $0x98] sm:$0xff]
  %v35 = vld [vmem:[%s0 + $0xa0] sm:$0xff]
  %v36 = vld [vmem:[%s0 + $0xa8] sm:$0xff]
  %v37 = vld [vmem:[%s0 + $0xb0] sm:$0xff]
  %v38 = vld [vmem:[%s0 + $0xb8] sm:$0xff]
  %v39 = vld [vmem:[%s0 + $0xc0] sm:$0xf]
  %v40 = vld [vmem:[%s0 + $0xc4] sm:$0xff]
  %v41 = vld [vmem:[%s0 + $0xcc] sm:$0xff]
  %v42 = vld [vmem:[%s0 + $0xd4] sm:$0xff]
  %v43 = vld [vmem:[%s0 + $0xdc] sm:$0xff]
  %v44 = vld [vmem:[%s0 + $0xe4] sm:$0xff]
  %v45 = vld [vmem:[%s0 + $0xec] sm:$0xff]
  %v46 = vld [vmem:[%s0 + $0xf4] sm:$0xff]
  %v47 = vld [vmem:[%s0 + $0xfc] sm:$0xff]
  %v48 = vld [vmem:[%s0 + $0x104] sm:$0xff]
  %v49 = vld [vmem:[%s0 + $0x10c] sm:$0xff]
  %v50 = vld [vmem:[%s0 + $0x114] sm:$0xff]
  %v51 = vld [vmem:[%s0 + $0x11c] sm:$0xff]
  %v52 = vld [vmem:[%s0 + $0x124] sm:$0xff]
  %v53 = vld [vmem:[%s0 + $0x12c] sm:$0xff]
  %v54 = vld [vmem:[%s0 + $0x134] sm:$0xff]
  %v55 = vld [vmem:[%s0 + $0x13c] sm:$0xff]
  %v56 = vld [vmem:[%s0 + $0x144] sm:$0xff]
  %v57 = vld [vmem:[%s0 + $0x14c] sm:$0xff]
  %v58 = vld [vmem:[%s0 + $0x154] sm:$0xff]
  %v59 = vld [vmem:[%s0 + $0x15c] sm:$0xff]
  %v60 = vld [vmem:[%s0 + $0x164] sm:$0xff]
  %v61 = vld [vmem:[%s0 + $0x16c] sm:$0xff]
  %v62 = vld [vmem:[%s0 + $0x174] sm:$0xff]
  %v63 = vld [vmem:[%s0 + $0x17c] sm:$0xff]
  %v64 = vld [vmem:[%s0 + $0x184] sm:$0xf]
  %v65 = vld [vmem:[%s0 + $0x188] sm:$0xff]
  %v66 = vld [vmem:[%s0 + $0x190] sm:$0xff]
  %v67 = vld [vmem:[%s0 + $0x198] sm:$0xff]
  %v68 = vld [vmem:[%s0 + $0x1a0] sm:$0xff]
  %v69 = vld [vmem:[%s0 + $0x1a8] sm:$0xff]
  %v70 = vld [vmem:[%s0 + $0x1b0] sm:$0xff]
  %v71 = vld [vmem:[%s0 + $0x1b8] sm:$0xff]
  %v72 = vld [vmem:[%s0 + $0x1c0] sm:$0xff]
  %v73 = vld [vmem:[%s0 + $0x1c8] sm:$0xff]
  %v74 = vld [vmem:[%s0 + $0x1d0] sm:$0xff]
  %v75 = vld [vmem:[%s0 + $0x1d8] sm:$0xff]
  %v76 = vld [vmem:[%s0 + $0x1e0] sm:$0xff]
  %v77 = vld [vmem:[%s0 + $0x1e8] sm:$0xff]
  %v78 = vld [vmem:[%s0 + $0x1f0] sm:$0xff]
  %v79 = vld [vmem:[%s0 + $0x1f8] sm:$0xff]
  %v80 = vld [vmem:[%s0 + $0x200] sm:$0xff]
  %v81 = vld [vmem:[%s0 + $0x208] sm:$0xff]
  %v82 = vld [vmem:[%s0 + $0x210] sm:$0xff]
  %v83 = vld [vmem:[%s0 + $0x218] sm:$0xff]
  %v84 = vld [vmem:[%s0 + $0x220] sm:$0xff]
  %v85 = vld [vmem:[%s0 + $0x228] sm:$0xff]
  %v86 = vld [vmem:[%s0 + $0x230] sm:$0xff]
  %v87 = vld [vmem:[%s0 + $0x238] sm:$0xff]
  %v88 = vld [vmem:[%s0 + $0x240] sm:$0xff]
  %v89 = vld [vmem:[%s0 + $0x248] sm:$0xf]
  %v90 = vld [vmem:[%s0 + $0x24c] sm:$0xff]
  %v91 = vld [vmem:[%s0 + $0x254] sm:$0xff]
  %v92 = vld [vmem:[%s0 + $0x25c] sm:$0xff]
  %v93 = vld [vmem:[%s0 + $0x264] sm:$0xff]
  %v94 = vld [vmem:[%s0 + $0x26c] sm:$0xff]
  %v95 = vld [vmem:[%s0 + $0x274] sm:$0xff]
  %v96 = vld [vmem:[%s0 + $0x27c] sm:$0xff]
  %v97 = vld [vmem:[%s0 + $0x284] sm:$0xff]
  %v98 = vld [vmem:[%s0 + $0x28c] sm:$0xff]
  %v99 = vld [vmem:[%s0 + $0x294] sm:$0xff]
  %v100 = vld [vmem:[%s0 + $0x29c] sm:$0xff]
  %v101 = vld [vmem:[%s0 + $0x2a4] sm:$0xff]
  %v102 = vld [vmem:[%s0 + $0x2ac] sm:$0xff]
  %v103 = vld [vmem:[%s0 + $0x2b4] sm:$0xff]
  %v104 = vld [vmem:[%s0 + $0x2bc] sm:$0xff]
  %v105 = vld [vmem:[%s0 + $0x2c4] sm:$0xff]
  %v106 = vld [vmem:[%s0 + $0x2cc] sm:$0xff]
  %v107 = vld [vmem:[%s0 + $0x2d4] sm:$0xff]
  %v108 = vld [vmem:[%s0 + $0x2dc] sm:$0xff]
  %v109 = vld [vmem:[%s0 + $0x2e4] sm:$0xff]
  %v110 = vld [vmem:[%s0 + $0x2ec] sm:$0xff]
  %v111 = vld [vmem:[%s0 + $0x2f4] sm:$0xff]
  %v112 = vld [vmem:[%s0 + $0x2fc] sm:$0xff]
  %v113 = vld [vmem:[%s0 + $0x304] sm:$0xff]
  %v114 = vld [vmem:[%s0 + $0x30c] sm:$0xf]
  %v115 = vld [vmem:[%s0 + $0x310] sm:$0xff]
  %v116 = vld [vmem:[%s0 + $0x318] sm:$0xff]
  %v117 = vld [vmem:[%s0 + $0x320] sm:$0xff]
  %v118 = vld [vmem:[%s0 + $0x328] sm:$0xff]
  %v119 = vld [vmem:[%s0 + $0x330] sm:$0xff]
  %v120 = vld [vmem:[%s0 + $0x338] sm:$0xff]
  %v121 = vld [vmem:[%s0 + $0x340] sm:$0xff]
  %v122 = vld [vmem:[%s0 + $0x348] sm:$0xff]
  %v123 = vld [vmem:[%s0 + $0x350] sm:$0xff]
  %v124 = vld [vmem:[%s0 + $0x358] sm:$0xff]
  %v125 = vld [vmem:[%s0 + $0x360] sm:$0xff]
  %v126 = vld [vmem:[%s0 + $0x368] sm:$0xff]
  %v127 = vld [vmem:[%s0 + $0x370] sm:$0xff]
  %v128 = vld [vmem:[%s0 + $0x378] sm:$0xff]
  %v129 = vld [vmem:[%s0 + $0x380] sm:$0xff]
  %v130 = vld [vmem:[%s0 + $0x388] sm:$0xff]
  %v131 = vld [vmem:[%s0 + $0x390] sm:$0xff]
  %v132 = vld [vmem:[%s0 + $0x398] sm:$0xff]
  %v133 = vld [vmem:[%s0 + $0x3a0] sm:$0xff]
  %v134 = vld [vmem:[%s0 + $0x3a8] sm:$0xff]
  %v135 = vld [vmem:[%s0 + $0x3b0] sm:$0xff]
  %v136 = vld [vmem:[%s0 + $0x3b8] sm:$0xff]
  %v137 = vld [vmem:[%s0 + $0x3c0] sm:$0xff]
  %v138 = vld [vmem:[%s0 + $0x3c8] sm:$0xff]
  %v139 = vld [vmem:[%s0 + $0x3d0] sm:$0xf]
  %v140 = vld [vmem:[%s0 + $0x3d4] sm:$0xff]
  %v141 = vld [vmem:[%s0 + $0x3dc] sm:$0xff]
  %v142 = vld [vmem:[%s0 + $0x3e4] sm:$0xff]
  %v143 = vld [vmem:[%s0 + $0x3ec] sm:$0xff]
  %v144 = vld [vmem:[%s0 + $0x3f4] sm:$0xff]
  %v145 = vld [vmem:[%s0 + $0x3fc] sm:$0xff]
  %v146 = vld [vmem:[%s0 + $0x404] sm:$0xff]
  %v147 = vld [vmem:[%s0 + $0x40c] sm:$0xff]
  %v148 = vld [vmem:[%s0 + $0x414] sm:$0xff]
  %v149 = vld [vmem:[%s0 + $0x41c] sm:$0xff]
  %v150 = vld [vmem:[%s0 + $0x424] sm:$0xff]
  %v151 = vld [vmem:[%s0 + $0x42c] sm:$0xff]
  %v152 = vld [vmem:[%s0 + $0x434] sm:$0xff]
  %v153 = vld [vmem:[%s0 + $0x43c] sm:$0xff]
  %v154 = vld [vmem:[%s0 + $0x444] sm:$0xff]
  %v155 = vld [vmem:[%s0 + $0x44c] sm:$0xff]
  %v156 = vld [vmem:[%s0 + $0x454] sm:$0xff]
  %v157 = vld [vmem:[%s0 + $0x45c] sm:$0xff]
  %v158 = vld [vmem:[%s0 + $0x464] sm:$0xff]
  %v159 = vld [vmem:[%s0 + $0x46c] sm:$0xff]
  %v160 = vld [vmem:[%s0 + $0x474] sm:$0xff]
  %v161 = vld [vmem:[%s0 + $0x47c] sm:$0xff]
  %v162 = vld [vmem:[%s0 + $0x484] sm:$0xff]
  %v163 = vld [vmem:[%s0 + $0x48c] sm:$0xff]
  %v164 = vld [vmem:[%s0 + $0x494] sm:$0xf]
  %v165 = vld [vmem:[%s0 + $0x498] sm:$0xff]
  %v166 = vld [vmem:[%s0 + $0x4a0] sm:$0xff]
  %v167 = vld [vmem:[%s0 + $0x4a8] sm:$0xff]
  %v168 = vld [vmem:[%s0 + $0x4b0] sm:$0xff]
  %v169 = vld [vmem:[%s0 + $0x4b8] sm:$0xff]
  %v170 = vld [vmem:[%s0 + $0x4c0] sm:$0xff]
  %v171 = vld [vmem:[%s0 + $0x4c8] sm:$0xff]
  %v172 = vld [vmem:[%s0 + $0x4d0] sm:$0xff]
  %v173 = vld [vmem:[%s0 + $0x4d8] sm:$0xff]
  %v174 = vld [vmem:[%s0 + $0x4e0] sm:$0xff]
  %v175 = vld [vmem:[%s0 + $0x4e8] sm:$0xff]
  %v176 = vld [vmem:[%s0 + $0x4f0] sm:$0xff]
  %v177 = vld [vmem:[%s0 + $0x4f8] sm:$0xff]
  %v178 = vld [vmem:[%s0 + $0x500] sm:$0xff]
  %v179 = vld [vmem:[%s0 + $0x508] sm:$0xff]
  %v180 = vld [vmem:[%s0 + $0x510] sm:$0xff]
  %v181 = vld [vmem:[%s0 + $0x518] sm:$0xff]
  %v182 = vld [vmem:[%s0 + $0x520] sm:$0xff]
  %v183 = vld [vmem:[%s0 + $0x528] sm:$0xff]
  %v184 = vld [vmem:[%s0 + $0x530] sm:$0xff]
  %v185 = vld [vmem:[%s0 + $0x538] sm:$0xff]
  %v186 = vld [vmem:[%s0 + $0x540] sm:$0xff]
  %v187 = vld [vmem:[%s0 + $0x548] sm:$0xff]
  %v188 = vld [vmem:[%s0 + $0x550] sm:$0xff]
  %v189 = vld [vmem:[%s0 + $0x558] sm:$0xf]
  %v190 = vld [vmem:[%s0 + $0x55c] sm:$0xff]
  %v191 = vld [vmem:[%s0 + $0x564] sm:$0xff]
  %v192 = vld [vmem:[%s0 + $0x56c] sm:$0xff]
  %v193 = vld [vmem:[%s0 + $0x574] sm:$0xff]
  %v194 = vld [vmem:[%s0 + $0x57c] sm:$0xff]
  %v195 = vld [vmem:[%s0 + $0x584] sm:$0xff]
  %v196 = vld [vmem:[%s0 + $0x58c] sm:$0xff]
  %v197 = vld [vmem:[%s0 + $0x594] sm:$0xff]
  %v198 = vld [vmem:[%s0 + $0x59c] sm:$0xff]
  %v199 = vld [vmem:[%s0 + $0x5a4] sm:$0xff]
  %v200 = vld [vmem:[%s0 + $0x5ac] sm:$0xff]
  %v201 = vld [vmem:[%s0 + $0x5b4] sm:$0xff]
  %v202 = vld [vmem:[%s0 + $0x5bc] sm:$0xff]
  %v203 = vld [vmem:[%s0 + $0x5c4] sm:$0xff]
  %v204 = vld [vmem:[%s0 + $0x5cc] sm:$0xff]
  %v205 = vld [vmem:[%s0 + $0x5d4] sm:$0xff]
  %v206 = vld [vmem:[%s0 + $0x5dc] sm:$0xff]
  %v207 = vld [vmem:[%s0 + $0x5e4] sm:$0xff]
  %v208 = vld [vmem:[%s0 + $0x5ec] sm:$0xff]
  %v209 = vld [vmem:[%s0 + $0x5f4] sm:$0xff]
  %v210 = vld [vmem:[%s0 + $0x5fc] sm:$0xff]
  %v211 = vld [vmem:[%s0 + $0x604] sm:$0xff]
  %v212 = vld [vmem:[%s0 + $0x60c] sm:$0xff]
  %v213 = vld [vmem:[%s0 + $0x614] sm:$0xff]
  %v214 = vld [vmem:[%s0 + $0x61c] sm:$0xf]
  %v215 = vld [vmem:[%s0 + $0x620] sm:$0xff]
  %v216 = vld [vmem:[%s0 + $0x628] sm:$0xff]
  %v217 = vld [vmem:[%s0 + $0x630] sm:$0xff]
  %v218 = vld [vmem:[%s0 + $0x638] sm:$0xff]
  %v219 = vld [vmem:[%s0 + $0x640] sm:$0xff]
  %v220 = vld [vmem:[%s0 + $0x648] sm:$0xff]
  %v221 = vld [vmem:[%s0 + $0x650] sm:$0xff]
  %v222 = vld [vmem:[%s0 + $0x658] sm:$0xff]
  %v223 = vld [vmem:[%s0 + $0x660] sm:$0xff]
  %v224 = vld [vmem:[%s0 + $0x668] sm:$0xff]
  %v225 = vld [vmem:[%s0 + $0x670] sm:$0xff]
  %v226 = vld [vmem:[%s0 + $0x678] sm:$0xff]
  %v227 = vld [vmem:[%s0 + $0x680] sm:$0xff]
  %v228 = vld [vmem:[%s0 + $0x688] sm:$0xff]
  %v229 = vld [vmem:[%s0 + $0x690] sm:$0xff]
  %v230 = vld [vmem:[%s0 + $0x698] sm:$0xff]
  %v231 = vld [vmem:[%s0 + $0x6a0] sm:$0xff]
  %v232 = vld [vmem:[%s0 + $0x6a8] sm:$0xff]
  %v233 = vld [vmem:[%s0 + $0x6b0] sm:$0xff]
  %v234 = vld [vmem:[%s0 + $0x6b8] sm:$0xff]
  %v235 = vld [vmem:[%s0 + $0x6c0] sm:$0xff]
  %v236 = vld [vmem:[%s0 + $0x6c8] sm:$0xff]
  %v237 = vld [vmem:[%s0 + $0x6d0] sm:$0xff]
  %v238 = vld [vmem:[%s0 + $0x6d8] sm:$0xff]
  %v239 = vld [vmem:[%s0 + $0x6e0] sm:$0xf]
  %v240 = vld [vmem:[%s0 + $0x6e4] sm:$0xff]
  %v241 = vld [vmem:[%s0 + $0x6ec] sm:$0xff]
  %v242 = vld [vmem:[%s0 + $0x6f4] sm:$0xff]
  %v243 = vld [vmem:[%s0 + $0x6fc] sm:$0xff]
  %v244 = vld [vmem:[%s0 + $0x704] sm:$0xff]
  %v245 = vld [vmem:[%s0 + $0x70c] sm:$0xff]
  %v246 = vld [vmem:[%s0 + $0x714] sm:$0xff]
  %v247 = vld [vmem:[%s0 + $0x71c] sm:$0xff]
  %v248 = vld [vmem:[%s0 + $0x724] sm:$0xff]
  %v249 = vld [vmem:[%s0 + $0x72c] sm:$0xff]
  %v250 = vld [vmem:[%s0 + $0x734] sm:$0xff]
  %v251 = vld [vmem:[%s0 + $0x73c] sm:$0xff]
  %v252 = vld [vmem:[%s0 + $0x744] sm:$0xff]
  %v253 = vld [vmem:[%s0 + $0x74c] sm:$0xff]
  %v254 = vld [vmem:[%s0 + $0x754] sm:$0xff]
  %v255 = vld [vmem:[%s0 + $0x75c] sm:$0xff]
  %v256 = vld [vmem:[%s0 + $0x764] sm:$0xff]
  %v257 = vld [vmem:[%s0 + $0x76c] sm:$0xff]
  %v258 = vld [vmem:[%s0 + $0x774] sm:$0xff]
  %v259 = vld [vmem:[%s0 + $0x77c] sm:$0xff]
  %v260 = vld [vmem:[%s0 + $0x784] sm:$0xff]
  %v261 = vld [vmem:[%s0 + $0x78c] sm:$0xff]
  %v262 = vld [vmem:[%s0 + $0x794] sm:$0xff]
  %v263 = vld [vmem:[%s0 + $0x79c] sm:$0xff]
  %v264 = vld [vmem:[%s0 + $0x7a4] sm:$0xf]
  %v265 = vld [vmem:[%s0 + $0x7a8] sm:$0xff]
  %v266 = vld [vmem:[%s0 + $0x7b0] sm:$0xff]
  %v267 = vld [vmem:[%s0 + $0x7b8] sm:$0xff]
  %v268 = vld [vmem:[%s0 + $0x7c0] sm:$0xff]
  %v269 = vld [vmem:[%s0 + $0x7c8] sm:$0xff]
  %v270 = vld [vmem:[%s0 + $0x7d0] sm:$0xff]
  %v271 = vld [vmem:[%s0 + $0x7d8] sm:$0xff]
  %v272 = vld [vmem:[%s0 + $0x7e0] sm:$0xff]
  %v273 = vld [vmem:[%s0 + $0x7e8] sm:$0xff]
  %v274 = vld [vmem:[%s0 + $0x7f0] sm:$0xff]
  %v275 = vld [vmem:[%s0 + $0x7f8] sm:$0xff]
  %v276 = vld [vmem:[%s0 + $0x800] sm:$0xff]
  %v277 = vld [vmem:[%s0 + $0x808] sm:$0xff]
  %v278 = vld [vmem:[%s0 + $0x810] sm:$0xff]
  %v279 = vld [vmem:[%s0 + $0x818] sm:$0xff]
  %v280 = vld [vmem:[%s0 + $0x820] sm:$0xff]
  %v281 = vld [vmem:[%s0 + $0x828] sm:$0xff]
  %v282 = vld [vmem:[%s0 + $0x830] sm:$0xff]
  %v283 = vld [vmem:[%s0 + $0x838] sm:$0xff]
  %v284 = vld [vmem:[%s0 + $0x840] sm:$0xff]
  %v285 = vld [vmem:[%s0 + $0x848] sm:$0xff]
  %v286 = vld [vmem:[%s0 + $0x850] sm:$0xff]
  %v287 = vld [vmem:[%s0 + $0x858] sm:$0xff]
  %v288 = vld [vmem:[%s0 + $0x860] sm:$0xff]
  %v289 = vld [vmem:[%s0 + $0x868] sm:$0xf]
  %v290 = vld [vmem:[%s0 + $0x86c] sm:$0xff]
  %v291 = vld [vmem:[%s0 + $0x874] sm:$0xff]
  %v292 = vld [vmem:[%s0 + $0x87c] sm:$0xff]
  %v293 = vld [vmem:[%s0 + $0x884] sm:$0xff]
  %v294 = vld [vmem:[%s0 + $0x88c] sm:$0xff]
  %v295 = vld [vmem:[%s0 + $0x894] sm:$0xff]
  %v296 = vld [vmem:[%s0 + $0x89c] sm:$0xff]
  %v297 = vld [vmem:[%s0 + $0x8a4] sm:$0xff]
  %v298 = vld [vmem:[%s0 + $0x8ac] sm:$0xff]
  %v299 = vld [vmem:[%s0 + $0x8b4] sm:$0xff]
  %v300 = vld [vmem:[%s0 + $0x8bc] sm:$0xff]
  %v301 = vld [vmem:[%s0 + $0x8c4] sm:$0xff]
  %v302 = vld [vmem:[%s0 + $0x8cc] sm:$0xff]
  %v303 = vld [vmem:[%s0 + $0x8d4] sm:$0xff]
  %v304 = vld [vmem:[%s0 + $0x8dc] sm:$0xff]
  %v305 = vld [vmem:[%s0 + $0x8e4] sm:$0xff]
  %v306 = vld [vmem:[%s0 + $0x8ec] sm:$0xff]
  %v307 = vld [vmem:[%s0 + $0x8f4] sm:$0xff]
  %v308 = vld [vmem:[%s0 + $0x8fc] sm:$0xff]
  %v309 = vld [vmem:[%s0 + $0x904] sm:$0xff]
  %v310 = vld [vmem:[%s0 + $0x90c] sm:$0xff]
  %v311 = vld [vmem:[%s0 + $0x914] sm:$0xff]
  %v312 = vld [vmem:[%s0 + $0x91c] sm:$0xff]
  %v313 = vld [vmem:[%s0 + $0x924] sm:$0xff]
  %v314 = vld [vmem:[%s0 + $0x92c] sm:$0xf]
  %v315 = vld [vmem:[%s0 + $0x930] sm:$0xff]
  %v316 = vld [vmem:[%s0 + $0x938] sm:$0xff]
  %v317 = vld [vmem:[%s0 + $0x940] sm:$0xff]
  %v318 = vld [vmem:[%s0 + $0x948] sm:$0xff]
  %v319 = vld [vmem:[%s0 + $0x950] sm:$0xff]
  %v320 = vld [vmem:[%s0 + $0x958] sm:$0xff]
  %v321 = vld [vmem:[%s0 + $0x960] sm:$0xff]
  %v322 = vld [vmem:[%s0 + $0x968] sm:$0xff]
  %v323 = vld [vmem:[%s0 + $0x970] sm:$0xff]
  %v324 = vld [vmem:[%s0 + $0x978] sm:$0xff]
  %v325 = vld [vmem:[%s0 + $0x980] sm:$0xff]
  %v326 = vld [vmem:[%s0 + $0x988] sm:$0xff]
  %v327 = vld [vmem:[%s0 + $0x990] sm:$0xff]
  %v328 = vld [vmem:[%s0 + $0x998] sm:$0xff]
  %v329 = vld [vmem:[%s0 + $0x9a0] sm:$0xff]
  %v330 = vld [vmem:[%s0 + $0x9a8] sm:$0xff]
  %v331 = vld [vmem:[%s0 + $0x9b0] sm:$0xff]
  %v332 = vld [vmem:[%s0 + $0x9b8] sm:$0xff]
  %v333 = vld [vmem:[%s0 + $0x9c0] sm:$0xff]
  %v334 = vld [vmem:[%s0 + $0x9c8] sm:$0xff]
  %v335 = vld [vmem:[%s0 + $0x9d0] sm:$0xff]
  %v336 = vld [vmem:[%s0 + $0x9d8] sm:$0xff]
  %v337 = vld [vmem:[%s0 + $0x9e0] sm:$0xff]
  %v338 = vld [vmem:[%s0 + $0x9e8] sm:$0xff]
  %v339 = vld [vmem:[%s0 + $0x9f0] sm:$0xf]
  %v340 = vld [vmem:[%s0 + $0x9f4] sm:$0xff]
  %v341 = vld [vmem:[%s0 + $0x9fc] sm:$0xff]
  %v342 = vld [vmem:[%s0 + $0xa04] sm:$0xff]
  %v343 = vld [vmem:[%s0 + $0xa0c] sm:$0xff]
  %v344 = vld [vmem:[%s0 + $0xa14] sm:$0xff]
  %v345 = vld [vmem:[%s0 + $0xa1c] sm:$0xff]
  %v346 = vld [vmem:[%s0 + $0xa24] sm:$0xff]
  %v347 = vld [vmem:[%s0 + $0xa2c] sm:$0xff]
  %v348 = vld [vmem:[%s0 + $0xa34] sm:$0xff]
  %v349 = vld [vmem:[%s0 + $0xa3c] sm:$0xff]
  %v350 = vld [vmem:[%s0 + $0xa44] sm:$0xff]
  %v351 = vld [vmem:[%s0 + $0xa4c] sm:$0xff]
  %v352 = vld [vmem:[%s0 + $0xa54] sm:$0xff]
  %v353 = vld [vmem:[%s0 + $0xa5c] sm:$0xff]
  %v354 = vld [vmem:[%s0 + $0xa64] sm:$0xff]
  %v355 = vld [vmem:[%s0 + $0xa6c] sm:$0xff]
  %v356 = vld [vmem:[%s0 + $0xa74] sm:$0xff]
  %v357 = vld [vmem:[%s0 + $0xa7c] sm:$0xff]
  %v358 = vld [vmem:[%s0 + $0xa84] sm:$0xff]
  %v359 = vld [vmem:[%s0 + $0xa8c] sm:$0xff]
  %v360 = vld [vmem:[%s0 + $0xa94] sm:$0xff]
  %v361 = vld [vmem:[%s0 + $0xa9c] sm:$0xff]
  %v362 = vld [vmem:[%s0 + $0xaa4] sm:$0xff]
  %v363 = vld [vmem:[%s0 + $0xaac] sm:$0xff]
  %v364 = vld [vmem:[%s0 + $0xab4] sm:$0xf]
  %v365 = vld [vmem:[%s0 + $0xab8] sm:$0xff]
  %v366 = vld [vmem:[%s0 + $0xac0] sm:$0xff]
  %v367 = vld [vmem:[%s0 + $0xac8] sm:$0xff]
  %v368 = vld [vmem:[%s0 + $0xad0] sm:$0xff]
  %v369 = vld [vmem:[%s0 + $0xad8] sm:$0xff]
  %v370 = vld [vmem:[%s0 + $0xae0] sm:$0xff]
  %v371 = vld [vmem:[%s0 + $0xae8] sm:$0xff]
  %v372 = vld [vmem:[%s0 + $0xaf0] sm:$0xff]
  %v373 = vld [vmem:[%s0 + $0xaf8] sm:$0xff]
  %v374 = vld [vmem:[%s0 + $0xb00] sm:$0xff]
  %v375 = vld [vmem:[%s0 + $0xb08] sm:$0xff]
  %v376 = vld [vmem:[%s0 + $0xb10] sm:$0xff]
  %v377 = vld [vmem:[%s0 + $0xb18] sm:$0xff]
  %v378 = vld [vmem:[%s0 + $0xb20] sm:$0xff]
  %v379 = vld [vmem:[%s0 + $0xb28] sm:$0xff]
  %v380 = vld [vmem:[%s0 + $0xb30] sm:$0xff]
  %v381 = vld [vmem:[%s0 + $0xb38] sm:$0xff]
  %v382 = vld [vmem:[%s0 + $0xb40] sm:$0xff]
  %v383 = vld [vmem:[%s0 + $0xb48] sm:$0xff]
  %v384 = vld [vmem:[%s0 + $0xb50] sm:$0xff]
  %v385 = vld [vmem:[%s0 + $0xb58] sm:$0xff]
  %v386 = vld [vmem:[%s0 + $0xb60] sm:$0xff]
  %v387 = vld [vmem:[%s0 + $0xb68] sm:$0xff]
  %v388 = vld [vmem:[%s0 + $0xb70] sm:$0xff]
  %v389 = vld [vmem:[%s0 + $0xb78] sm:$0xf]
  %v390 = vld [vmem:[%s0 + $0xb7c] sm:$0xff]
  %v391 = vld [vmem:[%s0 + $0xb84] sm:$0xff]
  %v392 = vld [vmem:[%s0 + $0xb8c] sm:$0xff]
  %v393 = vld [vmem:[%s0 + $0xb94] sm:$0xff]
  %v394 = vld [vmem:[%s0 + $0xb9c] sm:$0xff]
  %v395 = vld [vmem:[%s0 + $0xba4] sm:$0xff]
  %v396 = vld [vmem:[%s0 + $0xbac] sm:$0xff]
  %v397 = vld [vmem:[%s0 + $0xbb4] sm:$0xff]
  %v398 = vld [vmem:[%s0 + $0xbbc] sm:$0xff]
  %v399 = vld [vmem:[%s0 + $0xbc4] sm:$0xff]
  %v400 = vld [vmem:[%s0 + $0xbcc] sm:$0xff]
  %v401 = vld [vmem:[%s0 + $0xbd4] sm:$0xff]
  %v402 = vld [vmem:[%s0 + $0xbdc] sm:$0xff]
  %v403 = vld [vmem:[%s0 + $0xbe4] sm:$0xff]
  %v404 = vld [vmem:[%s0 + $0xbec] sm:$0xff]
  %v405 = vld [vmem:[%s0 + $0xbf4] sm:$0xff]
  %v406 = vld [vmem:[%s0 + $0xbfc] sm:$0xff]
  %v407 = vld [vmem:[%s0 + $0xc04] sm:$0xff]
  %v408 = vld [vmem:[%s0 + $0xc0c] sm:$0xff]
  %v409 = vld [vmem:[%s0 + $0xc14] sm:$0xff]
  %v410 = vld [vmem:[%s0 + $0xc1c] sm:$0xff]
  %v411 = vld [vmem:[%s0 + $0xc24] sm:$0xff]
  %v412 = vld [vmem:[%s0 + $0xc2c] sm:$0xff]
  %v413 = vld [vmem:[%s0 + $0xc34] sm:$0xff]
  %v414 = vld [vmem:[%s0 + $0xc3c] sm:$0xf]
  %v415 = vld [vmem:[%s1] sm:$0xf]
  %v416 = vld [vmem:[%s1 + $0x4] sm:$0xf]
  %v417 = vld [vmem:[%s1 + $0x8] sm:$0xf]
  %v418 = vld [vmem:[%s1 + $0xc] sm:$0xf]
  %v419 = vld [vmem:[%s1 + $0x10] sm:$0xf]
  %v420 = vld [vmem:[%s1 + $0x14] sm:$0xf]
  %v421 = vld [vmem:[%s1 + $0x18] sm:$0xf]
  %v422 = vld [vmem:[%s1 + $0x1c] sm:$0xf]
  %v423 = vld [vmem:[%s1 + $0x20] sm:$0xf]
  %v424 = vld [vmem:[%s1 + $0x24] sm:$0xf]
  %v425 = vld [vmem:[%s1 + $0x28] sm:$0xf]
  %v426 = vld [vmem:[%s1 + $0x2c] sm:$0xf]
  %v427 = vld [vmem:[%s1 + $0x30] sm:$0xf]
  %v428 = vld [vmem:[%s1 + $0x34] sm:$0xf]
  %v429 = vld [vmem:[%s1 + $0x38] sm:$0xf]
  %v430 = vld [vmem:[%s1 + $0x3c] sm:$0xf]
  %v431 = vld [vmem:[%s1 + $0x40] sm:$0xf]
  %v432 = vld [vmem:[%s1 + $0x44] sm:$0xf]
  %v433 = vld [vmem:[%s1 + $0x48] sm:$0xf]
  %v434 = vld [vmem:[%s1 + $0x4c] sm:$0xf]
  %v435 = vld [vmem:[%s1 + $0x50] sm:$0xf]
  %v436 = vld [vmem:[%s1 + $0x54] sm:$0xf]
  %v437 = vld [vmem:[%s1 + $0x58] sm:$0xf]
  %v438 = vld [vmem:[%s1 + $0x5c] sm:$0xf]
  %v439 = vld [vmem:[%s1 + $0x60] sm:$0xf]
  %v440 = vld [vmem:[%s1 + $0x64] sm:$0xf]
  %v441 = vld [vmem:[%s1 + $0x68] sm:$0xf]
  %v442 = vld [vmem:[%s1 + $0x6c] sm:$0xf]
  %v443 = vld [vmem:[%s1 + $0x70] sm:$0xf]
  %v444 = vld [vmem:[%s1 + $0x74] sm:$0xf]
  %v445 = vld [vmem:[%s1 + $0x78] sm:$0xf]
  %v446 = vld [vmem:[%s1 + $0x7c] sm:$0xf]
  %v447 = vld [vmem:[%s1 + $0x80] sm:$0xf]
  %v448 = vld [vmem:[%s1 + $0x84] sm:$0xf]
  %v449 = vld [vmem:[%s1 + $0x88] sm:$0xf]
  %v450 = vld [vmem:[%s1 + $0x8c] sm:$0xf]
  %v451 = vld [vmem:[%s1 + $0x90] sm:$0xf]
  %v452 = vld [vmem:[%s1 + $0x94] sm:$0xf]
  %v453 = vld [vmem:[%s1 + $0x98] sm:$0xf]
  %v454 = vld [vmem:[%s1 + $0x9c] sm:$0xf]
  %v455 = vld [vmem:[%s1 + $0xa0] sm:$0xf]
  %v456 = vld [vmem:[%s1 + $0xa4] sm:$0xf]
  %v457 = vld [vmem:[%s1 + $0xa8] sm:$0xf]
  %v458 = vld [vmem:[%s1 + $0xac] sm:$0xf]
  %v459 = vld [vmem:[%s1 + $0xb0] sm:$0xf]
  %v460 = vld [vmem:[%s1 + $0xb4] sm:$0xf]
  %v461 = vld [vmem:[%s1 + $0xb8] sm:$0xf]
  %v462 = vld [vmem:[%s1 + $0xbc] sm:$0xf]
  %v463 = vld [vmem:[%s1 + $0xc0] sm:$0xf]
  %v464 = vld [vmem:[%s1 + $0xc4] sm:$0xf]
  %v465 = vld [vmem:[%s1 + $0xc8] sm:$0xf]
  %v466 = vld [vmem:[%s1 + $0xcc] sm:$0xf]
  %v467 = vld [vmem:[%s1 + $0xd0] sm:$0xf]
  %v468 = vld [vmem:[%s1 + $0xd4] sm:$0xf]
  %v469 = vld [vmem:[%s1 + $0xd8] sm:$0xf]
  %v470 = vld [vmem:[%s1 + $0xdc] sm:$0xf]
  %v471 = vld [vmem:[%s1 + $0xe0] sm:$0xf]
  %v472 = vld [vmem:[%s1 + $0xe4] sm:$0xf]
  %v473 = vld [vmem:[%s1 + $0xe8] sm:$0xf]
  %v474 = vld [vmem:[%s1 + $0xec] sm:$0xf]
  %v475 = vld [vmem:[%s1 + $0xf0] sm:$0xf]
  %v476 = vld [vmem:[%s1 + $0xf4] sm:$0xf]
  %v477 = vld [vmem:[%s1 + $0xf8] sm:$0xf]
  %v478 = vld [vmem:[%s1 + $0xfc] sm:$0xf]
  %v479 = vld [vmem:[%s1 + $0x100] sm:$0xf]
  %v480 = vld [vmem:[%s1 + $0x104] sm:$0xf]
  %v481 = vld [vmem:[%s1 + $0x108] sm:$0xf]
  %v482 = vld [vmem:[%s1 + $0x10c] sm:$0xf]
  %v483 = vld [vmem:[%s1 + $0x110] sm:$0xf]
  %v484 = vld [vmem:[%s1 + $0x114] sm:$0xf]
  %v485 = vld [vmem:[%s1 + $0x118] sm:$0xf]
  %v486 = vld [vmem:[%s1 + $0x11c] sm:$0xf]
  %v487 = vld [vmem:[%s1 + $0x120] sm:$0xf]
  %v488 = vld [vmem:[%s1 + $0x124] sm:$0xf]
  %v489 = vld [vmem:[%s1 + $0x128] sm:$0xf]
  %v490 = vld [vmem:[%s1 + $0x12c] sm:$0xf]
  %v491 = vld [vmem:[%s1 + $0x130] sm:$0xf]
  %v492 = vld [vmem:[%s1 + $0x134] sm:$0xf]
  %v493 = vld [vmem:[%s1 + $0x138] sm:$0xf]
  %v494 = vld [vmem:[%s1 + $0x13c] sm:$0xf]
  %v495 = vld [vmem:[%s1 + $0x140] sm:$0xf]
  %v496 = vld [vmem:[%s1 + $0x144] sm:$0xf]
  %v497 = vld [vmem:[%s1 + $0x148] sm:$0xf]
  %v498 = vld [vmem:[%s1 + $0x14c] sm:$0xf]
  %v499 = vld [vmem:[%s1 + $0x150] sm:$0xf]
  %v500 = vld [vmem:[%s1 + $0x154] sm:$0xf]
  %v501 = vld [vmem:[%s1 + $0x158] sm:$0xf]
  %v502 = vld [vmem:[%s1 + $0x15c] sm:$0xf]
  %v503 = vld [vmem:[%s1 + $0x160] sm:$0xf]
  %v504 = vld [vmem:[%s1 + $0x164] sm:$0xf]
  %v505 = vld [vmem:[%s1 + $0x168] sm:$0xf]
  %v506 = vld [vmem:[%s1 + $0x16c] sm:$0xf]
  %v507 = vld [vmem:[%s1 + $0x170] sm:$0xf]
  %v508 = vld [vmem:[%s1 + $0x174] sm:$0xf]
  %v509 = vld [vmem:[%s1 + $0x178] sm:$0xf]
  %v510 = vld [vmem:[%s1 + $0x17c] sm:$0xf]
  %v511 = vld [vmem:[%s1 + $0x180] sm:$0xf]
  %v512 = vld [vmem:[%s1 + $0x184] sm:$0xf]
  %v513 = vld [vmem:[%s1 + $0x188] sm:$0xf]
  %v514 = vld [vmem:[%s1 + $0x18c] sm:$0xf]
  %v515 = vld [vmem:[%s1 + $0x190] sm:$0xf]
  %v516 = vld [vmem:[%s1 + $0x194] sm:$0xf]
  %v517 = vld [vmem:[%s1 + $0x198] sm:$0xf]
  %v518 = vld [vmem:[%s1 + $0x19c] sm:$0xf]
  %v519 = vld [vmem:[%s1 + $0x1a0] sm:$0xf]
  %v520 = vld [vmem:[%s1 + $0x1a4] sm:$0xf]
  %v521 = vld [vmem:[%s1 + $0x1a8] sm:$0xf]
  %v522 = vld [vmem:[%s1 + $0x1ac] sm:$0xf]
  %v523 = vld [vmem:[%s1 + $0x1b0] sm:$0xf]
  %v524 = vld [vmem:[%s1 + $0x1b4] sm:$0xf]
  %v525 = vld [vmem:[%s1 + $0x1b8] sm:$0xf]
  %v526 = vld [vmem:[%s1 + $0x1bc] sm:$0xf]
  %v527 = vld [vmem:[%s1 + $0x1c0] sm:$0xf]
  %v528 = vld [vmem:[%s1 + $0x1c4] sm:$0xf]
  %v529 = vld [vmem:[%s1 + $0x1c8] sm:$0xf]
  %v530 = vld [vmem:[%s1 + $0x1cc] sm:$0xf]
  %v531 = vld [vmem:[%s1 + $0x1d0] sm:$0xf]
  %v532 = vld [vmem:[%s1 + $0x1d4] sm:$0xf]
  %v533 = vld [vmem:[%s1 + $0x1d8] sm:$0xf]
  %v534 = vld [vmem:[%s1 + $0x1dc] sm:$0xf]
  %v535 = vld [vmem:[%s1 + $0x1e0] sm:$0xf]
  %v536 = vld [vmem:[%s1 + $0x1e4] sm:$0xf]
  %v537 = vld [vmem:[%s1 + $0x1e8] sm:$0xf]
  %v538 = vld [vmem:[%s1 + $0x1ec] sm:$0xf]
  %v539 = vld [vmem:[%s1 + $0x1f0] sm:$0xf]
  %v540 = vld [vmem:[%s1 + $0x1f4] sm:$0xf]
  %v541 = vld [vmem:[%s1 + $0x1f8] sm:$0xf]
  %v542 = vld [vmem:[%s1 + $0x1fc] sm:$0xf]
  %v543 = vld [vmem:[%s1 + $0x200] sm:$0xf]
  %v544 = vld [vmem:[%s1 + $0x204] sm:$0xf]
  %v545 = vld [vmem:[%s1 + $0x208] sm:$0xf]
  %v546 = vld [vmem:[%s1 + $0x20c] sm:$0xf]
  %v547 = vld [vmem:[%s1 + $0x210] sm:$0xf]
  %v548 = vld [vmem:[%s1 + $0x214] sm:$0xf]
  %v549 = vld [vmem:[%s1 + $0x218] sm:$0xf]
  %v550 = vld [vmem:[%s1 + $0x21c] sm:$0xf]
  %v551 = vld [vmem:[%s1 + $0x220] sm:$0xf]
  %v552 = vld [vmem:[%s1 + $0x224] sm:$0xf]
  %v553 = vld [vmem:[%s1 + $0x228] sm:$0xf]
  %v554 = vld [vmem:[%s1 + $0x22c] sm:$0xf]
  %v555 = vld [vmem:[%s1 + $0x230] sm:$0xf]
  %v556 = vld [vmem:[%s1 + $0x234] sm:$0xf]
  %v557 = vld [vmem:[%s1 + $0x238] sm:$0xf]
  %v558 = vld [vmem:[%s1 + $0x23c] sm:$0xf]
  %v559 = vld [vmem:[%s1 + $0x240] sm:$0xf]
  %v560 = vld [vmem:[%s1 + $0x244] sm:$0xf]
  %v561 = vld [vmem:[%s1 + $0x248] sm:$0xf]
  %v562 = vld [vmem:[%s1 + $0x24c] sm:$0xf]
  %v563 = vld [vmem:[%s1 + $0x250] sm:$0xf]
  %v564 = vld [vmem:[%s1 + $0x254] sm:$0xf]
  %v565 = vld [vmem:[%s1 + $0x258] sm:$0xf]
  %v566 = vld [vmem:[%s1 + $0x25c] sm:$0xf]
  %v567 = vld [vmem:[%s1 + $0x260] sm:$0xf]
  %v568 = vld [vmem:[%s1 + $0x264] sm:$0xf]
  %v569 = vld [vmem:[%s1 + $0x268] sm:$0xf]
  %v570 = vld [vmem:[%s1 + $0x26c] sm:$0xf]
  %v571 = vld [vmem:[%s1 + $0x270] sm:$0xf]
  %v572 = vld [vmem:[%s1 + $0x274] sm:$0xf]
  %v573 = vld [vmem:[%s1 + $0x278] sm:$0xf]
  %v574 = vld [vmem:[%s1 + $0x27c] sm:$0xf]
  %v575 = vld [vmem:[%s1 + $0x280] sm:$0xf]
  %v576 = vld [vmem:[%s1 + $0x284] sm:$0xf]
  %v577 = vld [vmem:[%s1 + $0x288] sm:$0xf]
  %v578 = vld [vmem:[%s1 + $0x28c] sm:$0xf]
  %v579 = vld [vmem:[%s1 + $0x290] sm:$0xf]
  %v580 = vld [vmem:[%s1 + $0x294] sm:$0xf]
  %v581 = vld [vmem:[%s1 + $0x298] sm:$0xf]
  %v582 = vld [vmem:[%s1 + $0x29c] sm:$0xf]
  %v583 = vld [vmem:[%s1 + $0x2a0] sm:$0xf]
  %v584 = vld [vmem:[%s1 + $0x2a4] sm:$0xf]
  %v585 = vld [vmem:[%s1 + $0x2a8] sm:$0xf]
  %v586 = vld [vmem:[%s1 + $0x2ac] sm:$0xf]
  %v587 = vld [vmem:[%s1 + $0x2b0] sm:$0xf]
  %v588 = vld [vmem:[%s1 + $0x2b4] sm:$0xf]
  %v589 = vld [vmem:[%s1 + $0x2b8] sm:$0xf]
  %v590 = vld [vmem:[%s1 + $0x2bc] sm:$0xf]
  %v591 = vld [vmem:[%s1 + $0x2c0] sm:$0xf]
  %v592 = vld [vmem:[%s1 + $0x2c4] sm:$0xf]
  %v593 = vld [vmem:[%s1 + $0x2c8] sm:$0xf]
  %v594 = vld [vmem:[%s1 + $0x2cc] sm:$0xf]
  %v595 = vld [vmem:[%s1 + $0x2d0] sm:$0xf]
  %v596 = vld [vmem:[%s1 + $0x2d4] sm:$0xf]
  %v597 = vld [vmem:[%s1 + $0x2d8] sm:$0xf]
  %v598 = vld [vmem:[%s1 + $0x2dc] sm:$0xf]
  %v599 = vld [vmem:[%s1 + $0x2e0] sm:$0xf]
  %v600 = vld [vmem:[%s1 + $0x2e4] sm:$0xf]
  %v601 = vld [vmem:[%s1 + $0x2e8] sm:$0xf]
  %v602 = vld [vmem:[%s1 + $0x2ec] sm:$0xf]
  %v603 = vld [vmem:[%s1 + $0x2f0] sm:$0xf]
  %v604 = vld [vmem:[%s1 + $0x2f4] sm:$0xf]
  %v605 = vld [vmem:[%s1 + $0x2f8] sm:$0xf]
  %v606 = vld [vmem:[%s1 + $0x2fc] sm:$0xf]
  %v607 = vld [vmem:[%s1 + $0x300] sm:$0xf]
  %v608 = vld [vmem:[%s1 + $0x304] sm:$0xf]
  %v609 = vld [vmem:[%s1 + $0x308] sm:$0xf]
  %v610 = vld [vmem:[%s1 + $0x30c] sm:$0xf]
  %v611 = vld [vmem:[%s1 + $0x310] sm:$0xf]
  %v612 = vld [vmem:[%s1 + $0x314] sm:$0xf]
  %v613 = vld [vmem:[%s1 + $0x318] sm:$0xf]
  %v614 = vld [vmem:[%s1 + $0x31c] sm:$0xf]
  %v615 = vld [vmem:[%s1 + $0x320] sm:$0xf]
  %v616 = vld [vmem:[%s1 + $0x324] sm:$0xf]
  %v617 = vld [vmem:[%s1 + $0x328] sm:$0xf]
  %v618 = vld [vmem:[%s1 + $0x32c] sm:$0xf]
  %v619 = vld [vmem:[%s1 + $0x330] sm:$0xf]
  %v620 = vld [vmem:[%s1 + $0x334] sm:$0xf]
  %v621 = vld [vmem:[%s1 + $0x338] sm:$0xf]
  %v622 = vld [vmem:[%s1 + $0x33c] sm:$0xf]
  %v623 = vld [vmem:[%s1 + $0x340] sm:$0xf]
  %v624 = vld [vmem:[%s1 + $0x344] sm:$0xf]
  %v625 = vld [vmem:[%s1 + $0x348] sm:$0xf]
  %v626 = vld [vmem:[%s1 + $0x34c] sm:$0xf]
  %v627 = vld [vmem:[%s1 + $0x350] sm:$0xf]
  %v628 = vld [vmem:[%s1 + $0x354] sm:$0xf]
  %v629 = vld [vmem:[%s1 + $0x358] sm:$0xf]
  %v630 = vld [vmem:[%s1 + $0x35c] sm:$0xf]
  %v631 = vld [vmem:[%s1 + $0x360] sm:$0xf]
  %v632 = vld [vmem:[%s1 + $0x364] sm:$0xf]
  %v633 = vld [vmem:[%s1 + $0x368] sm:$0xf]
  %v634 = vld [vmem:[%s1 + $0x36c] sm:$0xf]
  %v635 = vld [vmem:[%s1 + $0x370] sm:$0xf]
  %v636 = vld [vmem:[%s1 + $0x374] sm:$0xf]
  %v637 = vld [vmem:[%s1 + $0x378] sm:$0xf]
  %v638 = vld [vmem:[%s1 + $0x37c] sm:$0xf]
  %v639 = vld [vmem:[%s1 + $0x380] sm:$0xf]
  %v640 = vld [vmem:[%s1 + $0x384] sm:$0xf]
  %v641 = vld [vmem:[%s1 + $0x388] sm:$0xf]
  %v642 = vld [vmem:[%s1 + $0x38c] sm:$0xf]
  %v643 = vld [vmem:[%s1 + $0x390] sm:$0xf]
  %v644 = vld [vmem:[%s1 + $0x394] sm:$0xf]
  %v645 = vld [vmem:[%s1 + $0x398] sm:$0xf]
  %v646 = vld [vmem:[%s1 + $0x39c] sm:$0xf]
  %v647 = vld [vmem:[%s1 + $0x3a0] sm:$0xf]
  %v648 = vld [vmem:[%s1 + $0x3a4] sm:$0xf]
  %v649 = vld [vmem:[%s1 + $0x3a8] sm:$0xf]
  %v650 = vld [vmem:[%s1 + $0x3ac] sm:$0xf]
  %v651 = vld [vmem:[%s1 + $0x3b0] sm:$0xf]
  %v652 = vld [vmem:[%s1 + $0x3b4] sm:$0xf]
  %v653 = vld [vmem:[%s1 + $0x3b8] sm:$0xf]
  %v654 = vld [vmem:[%s1 + $0x3bc] sm:$0xf]
  %v655 = vld [vmem:[%s1 + $0x3c0] sm:$0xf]
  %v656 = vld [vmem:[%s1 + $0x3c4] sm:$0xf]
  %v657 = vld [vmem:[%s1 + $0x3c8] sm:$0xf]
  %v658 = vld [vmem:[%s1 + $0x3cc] sm:$0xf]
  %v659 = vld [vmem:[%s1 + $0x3d0] sm:$0xf]
  %v660 = vld [vmem:[%s1 + $0x3d4] sm:$0xf]
  %v661 = vld [vmem:[%s1 + $0x3d8] sm:$0xf]
  %v662 = vld [vmem:[%s1 + $0x3dc] sm:$0xf]
  %v663 = vld [vmem:[%s1 + $0x3e0] sm:$0xf]
  %v664 = vld [vmem:[%s1 + $0x3e4] sm:$0xf]
  %v665 = vld [vmem:[%s1 + $0x3e8] sm:$0xf]
  %v666 = vld [vmem:[%s1 + $0x3ec] sm:$0xf]
  %v667 = vld [vmem:[%s1 + $0x3f0] sm:$0xf]
  %v668 = vld [vmem:[%s1 + $0x3f4] sm:$0xf]
  %v669 = vld [vmem:[%s1 + $0x3f8] sm:$0xf]
  %v670 = vld [vmem:[%s1 + $0x3fc] sm:$0xf]
  %v671 = vld [vmem:[%s1 + $0x400] sm:$0xf]
  %v672 = vld [vmem:[%s1 + $0x404] sm:$0xf]
  %v673 = vld [vmem:[%s1 + $0x408] sm:$0xf]
  %v674 = vld [vmem:[%s1 + $0x40c] sm:$0xf]
  %v675 = vld [vmem:[%s1 + $0x410] sm:$0xf]
  %v676 = vld [vmem:[%s1 + $0x414] sm:$0xf]
  %v677 = vld [vmem:[%s1 + $0x418] sm:$0xf]
  %v678 = vld [vmem:[%s1 + $0x41c] sm:$0xf]
  %v679 = vld [vmem:[%s1 + $0x420] sm:$0xf]
  %v680 = vld [vmem:[%s1 + $0x424] sm:$0xf]
  %v681 = vld [vmem:[%s1 + $0x428] sm:$0xf]
  %v682 = vld [vmem:[%s1 + $0x42c] sm:$0xf]
  %v683 = vld [vmem:[%s1 + $0x430] sm:$0xf]
  %v684 = vld [vmem:[%s1 + $0x434] sm:$0xf]
  %v685 = vld [vmem:[%s1 + $0x438] sm:$0xf]
  %v686 = vld [vmem:[%s1 + $0x43c] sm:$0xf]
  %v687 = vld [vmem:[%s1 + $0x440] sm:$0xf]
  %v688 = vld [vmem:[%s1 + $0x444] sm:$0xf]
  %v689 = vld [vmem:[%s1 + $0x448] sm:$0xf]
  %v690 = vld [vmem:[%s1 + $0x44c] sm:$0xf]
  %v691 = vld [vmem:[%s1 + $0x450] sm:$0xf]
  %v692 = vld [vmem:[%s1 + $0x454] sm:$0xf]
  %v693 = vld [vmem:[%s1 + $0x458] sm:$0xf]
  %v694 = vld [vmem:[%s1 + $0x45c] sm:$0xf]
  %v695 = vld [vmem:[%s1 + $0x460] sm:$0xf]
  %v696 = vld [vmem:[%s1 + $0x464] sm:$0xf]
  %v697 = vld [vmem:[%s1 + $0x468] sm:$0xf]
  %v698 = vld [vmem:[%s1 + $0x46c] sm:$0xf]
  %v699 = vld [vmem:[%s1 + $0x470] sm:$0xf]
  %v700 = vld [vmem:[%s1 + $0x474] sm:$0xf]
  %v701 = vld [vmem:[%s1 + $0x478] sm:$0xf]
  %v702 = vld [vmem:[%s1 + $0x47c] sm:$0xf]
  %v703 = vld [vmem:[%s1 + $0x480] sm:$0xf]
  %v704 = vld [vmem:[%s1 + $0x484] sm:$0xf]
  %v705 = vld [vmem:[%s1 + $0x488] sm:$0xf]
  %v706 = vld [vmem:[%s1 + $0x48c] sm:$0xf]
  %v707 = vld [vmem:[%s1 + $0x490] sm:$0xf]
  %v708 = vld [vmem:[%s1 + $0x494] sm:$0xf]
  %v709 = vld [vmem:[%s1 + $0x498] sm:$0xf]
  %v710 = vld [vmem:[%s1 + $0x49c] sm:$0xf]
  %v711 = vld [vmem:[%s1 + $0x4a0] sm:$0xf]
  %v712 = vld [vmem:[%s1 + $0x4a4] sm:$0xf]
  %v713 = vld [vmem:[%s1 + $0x4a8] sm:$0xf]
  %v714 = vld [vmem:[%s1 + $0x4ac] sm:$0xf]
  %v715 = vld [vmem:[%s1 + $0x4b0] sm:$0xf]
  %v716 = vld [vmem:[%s1 + $0x4b4] sm:$0xf]
  %v717 = vld [vmem:[%s1 + $0x4b8] sm:$0xf]
  %v718 = vld [vmem:[%s1 + $0x4bc] sm:$0xf]
  %v719 = vld [vmem:[%s1 + $0x4c0] sm:$0xf]
  %v720 = vld [vmem:[%s1 + $0x4c4] sm:$0xf]
  %v721 = vld [vmem:[%s1 + $0x4c8] sm:$0xf]
  %v722 = vld [vmem:[%s1 + $0x4cc] sm:$0xf]
  %v723 = vld [vmem:[%s1 + $0x4d0] sm:$0xf]
  %v724 = vld [vmem:[%s1 + $0x4d4] sm:$0xf]
  %v725 = vld [vmem:[%s1 + $0x4d8] sm:$0xf]
  %v726 = vld [vmem:[%s1 + $0x4dc] sm:$0xf]
  %v727 = vld [vmem:[%s1 + $0x4e0] sm:$0xf]
  %v728 = vld [vmem:[%s1 + $0x4e4] sm:$0xf]
  %v729 = vld [vmem:[%s1 + $0x4e8] sm:$0xf]
  %v730 = vld [vmem:[%s1 + $0x4ec] sm:$0xf]
  %v731 = vld [vmem:[%s1 + $0x4f0] sm:$0xf]
  %v732 = vld [vmem:[%s1 + $0x4f4] sm:$0xf]
  %v733 = vld [vmem:[%s1 + $0x4f8] sm:$0xf]
  %v734 = vld [vmem:[%s1 + $0x4fc] sm:$0xf]
  %v735 = vld [vmem:[%s1 + $0x500] sm:$0xf]
  %v736 = vld [vmem:[%s1 + $0x504] sm:$0xf]
  %v737 = vld [vmem:[%s1 + $0x508] sm:$0xf]
  %v738 = vld [vmem:[%s1 + $0x50c] sm:$0xf]
  %v739 = vld [vmem:[%s1 + $0x510] sm:$0xf]
  %v740 = vld [vmem:[%s1 + $0x514] sm:$0xf]
  %v741 = vld [vmem:[%s1 + $0x518] sm:$0xf]
  %v742 = vld [vmem:[%s1 + $0x51c] sm:$0xf]
  %v743 = vld [vmem:[%s1 + $0x520] sm:$0xf]
  %v744 = vld [vmem:[%s1 + $0x524] sm:$0xf]
  %v745 = vld [vmem:[%s1 + $0x528] sm:$0xf]
  %v746 = vld [vmem:[%s1 + $0x52c] sm:$0xf]
  %v747 = vld [vmem:[%s1 + $0x530] sm:$0xf]
  %v748 = vld [vmem:[%s1 + $0x534] sm:$0xf]
  %v749 = vld [vmem:[%s1 + $0x538] sm:$0xf]
  %v750 = vld [vmem:[%s1 + $0x53c] sm:$0xf]
  %v751 = vld [vmem:[%s1 + $0x540] sm:$0xf]
  %v752 = vld [vmem:[%s1 + $0x544] sm:$0xf]
  %v753 = vld [vmem:[%s1 + $0x548] sm:$0xf]
  %v754 = vld [vmem:[%s1 + $0x54c] sm:$0xf]
  %v755 = vld [vmem:[%s1 + $0x550] sm:$0xf]
  %v756 = vld [vmem:[%s1 + $0x554] sm:$0xf]
  %v757 = vld [vmem:[%s1 + $0x558] sm:$0xf]
  %v758 = vld [vmem:[%s1 + $0x55c] sm:$0xf]
  %v759 = vld [vmem:[%s1 + $0x560] sm:$0xf]
  %v760 = vld [vmem:[%s1 + $0x564] sm:$0xf]
  %v761 = vld [vmem:[%s1 + $0x568] sm:$0xf]
  %v762 = vld [vmem:[%s1 + $0x56c] sm:$0xf]
  %v763 = vld [vmem:[%s1 + $0x570] sm:$0xf]
  %v764 = vld [vmem:[%s1 + $0x574] sm:$0xf]
  %v765 = vld [vmem:[%s1 + $0x578] sm:$0xf]
  %v766 = vld [vmem:[%s1 + $0x57c] sm:$0xf]
  %v767 = vld [vmem:[%s1 + $0x580] sm:$0xf]
  %v768 = vld [vmem:[%s1 + $0x584] sm:$0xf]
  %v769 = vld [vmem:[%s1 + $0x588] sm:$0xf]
  %v770 = vld [vmem:[%s1 + $0x58c] sm:$0xf]
  %v771 = vld [vmem:[%s1 + $0x590] sm:$0xf]
  %v772 = vld [vmem:[%s1 + $0x594] sm:$0xf]
  %v773 = vld [vmem:[%s1 + $0x598] sm:$0xf]
  %v774 = vld [vmem:[%s1 + $0x59c] sm:$0xf]
  %v775 = vld [vmem:[%s1 + $0x5a0] sm:$0xf]
  %v776 = vld [vmem:[%s1 + $0x5a4] sm:$0xf]
  %v777 = vld [vmem:[%s1 + $0x5a8] sm:$0xf]
  %v778 = vld [vmem:[%s1 + $0x5ac] sm:$0xf]
  %v779 = vld [vmem:[%s1 + $0x5b0] sm:$0xf]
  %v780 = vld [vmem:[%s1 + $0x5b4] sm:$0xf]
  %v781 = vld [vmem:[%s1 + $0x5b8] sm:$0xf]
  %v782 = vld [vmem:[%s1 + $0x5bc] sm:$0xf]
  %v783 = vld [vmem:[%s1 + $0x5c0] sm:$0xf]
  %v784 = vld [vmem:[%s1 + $0x5c4] sm:$0xf]
  %v785 = vld [vmem:[%s1 + $0x5c8] sm:$0xf]
  %v786 = vld [vmem:[%s1 + $0x5cc] sm:$0xf]
  %v787 = vld [vmem:[%s1 + $0x5d0] sm:$0xf]
  %v788 = vld [vmem:[%s1 + $0x5d4] sm:$0xf]
  %v789 = vld [vmem:[%s1 + $0x5d8] sm:$0xf]
  %v790 = vld [vmem:[%s1 + $0x5dc] sm:$0xf]
  %v791 = vld [vmem:[%s1 + $0x5e0] sm:$0xf]
  %v792 = vld [vmem:[%s1 + $0x5e4] sm:$0xf]
  %v793 = vld [vmem:[%s1 + $0x5e8] sm:$0xf]
  %v794 = vld [vmem:[%s1 + $0x5ec] sm:$0xf]
  %v795 = vld [vmem:[%s1 + $0x5f0] sm:$0xf]
  %v796 = vld [vmem:[%s1 + $0x5f4] sm:$0xf]
  %v797 = vld [vmem:[%s1 + $0x5f8] sm:$0xf]
  %v798 = vld [vmem:[%s1 + $0x5fc] sm:$0xf]
  %v799 = vld [vmem:[%s1 + $0x600] sm:$0xf]
  %v800 = vld [vmem:[%s1 + $0x604] sm:$0xf]
  %v801 = vld [vmem:[%s1 + $0x608] sm:$0xf]
  %v802 = vld [vmem:[%s1 + $0x60c] sm:$0xf]
  %v803 = vld [vmem:[%s1 + $0x610] sm:$0xf]
  %v804 = vld [vmem:[%s1 + $0x614] sm:$0xf]
  %v805 = vld [vmem:[%s1 + $0x618] sm:$0xf]
  %v806 = vld [vmem:[%s1 + $0x61c] sm:$0xf]
  %v807 = vld [vmem:[%s1 + $0x620] sm:$0xf]
  %v808 = vld [vmem:[%s1 + $0x624] sm:$0xf]
  %v809 = vld [vmem:[%s1 + $0x628] sm:$0xf]
  %v810 = vld [vmem:[%s1 + $0x62c] sm:$0xf]
  %v811 = vld [vmem:[%s1 + $0x630] sm:$0xf]
  %v812 = vld [vmem:[%s1 + $0x634] sm:$0xf]
  %v813 = vld [vmem:[%s1 + $0x638] sm:$0xf]
  %v814 = vld [vmem:[%s1 + $0x63c] sm:$0xf]
  %v815 = vld [vmem:[%s1 + $0x640] sm:$0xf]
  %v816 = vld [vmem:[%s1 + $0x644] sm:$0xf]
  %v817 = vld [vmem:[%s1 + $0x648] sm:$0xf]
  %v818 = vld [vmem:[%s1 + $0x64c] sm:$0xf]
  %v819 = vld [vmem:[%s1 + $0x650] sm:$0xf]
  %v820 = vld [vmem:[%s1 + $0x654] sm:$0xf]
  %v821 = vld [vmem:[%s1 + $0x658] sm:$0xf]
  %v822 = vld [vmem:[%s1 + $0x65c] sm:$0xf]
  %v823 = vld [vmem:[%s1 + $0x660] sm:$0xf]
  %v824 = vld [vmem:[%s1 + $0x664] sm:$0xf]
  %v825 = vld [vmem:[%s1 + $0x668] sm:$0xf]
  %v826 = vld [vmem:[%s1 + $0x66c] sm:$0xf]
  %v827 = vld [vmem:[%s1 + $0x670] sm:$0xf]
  %v828 = vld [vmem:[%s1 + $0x674] sm:$0xf]
  %v829 = vld [vmem:[%s1 + $0x678] sm:$0xf]
  %v830 = vld [vmem:[%s1 + $0x67c] sm:$0xf]
  %v831 = vld [vmem:[%s1 + $0x680] sm:$0xf]
  %v832 = vld [vmem:[%s1 + $0x684] sm:$0xf]
  %v833 = vld [vmem:[%s1 + $0x688] sm:$0xf]
  %v834 = vld [vmem:[%s1 + $0x68c] sm:$0xf]
  %v835 = vld [vmem:[%s1 + $0x690] sm:$0xf]
  %v836 = vld [vmem:[%s1 + $0x694] sm:$0xf]
  %v837 = vld [vmem:[%s1 + $0x698] sm:$0xf]
  %v838 = vld [vmem:[%s1 + $0x69c] sm:$0xf]
  %v839 = vld [vmem:[%s1 + $0x6a0] sm:$0xf]
  %v840 = vld [vmem:[%s1 + $0x6a4] sm:$0xf]
  %v841 = vld [vmem:[%s1 + $0x6a8] sm:$0xf]
  %v842 = vld [vmem:[%s1 + $0x6ac] sm:$0xf]
  %v843 = vld [vmem:[%s1 + $0x6b0] sm:$0xf]
  %v844 = vld [vmem:[%s1 + $0x6b4] sm:$0xf]
  %v845 = vld [vmem:[%s1 + $0x6b8] sm:$0xf]
  %v846 = vld [vmem:[%s1 + $0x6bc] sm:$0xf]
  %v847 = vld [vmem:[%s1 + $0x6c0] sm:$0xf]
  %v848 = vld [vmem:[%s1 + $0x6c4] sm:$0xf]
  %v849 = vld [vmem:[%s1 + $0x6c8] sm:$0xf]
  %v850 = vld [vmem:[%s1 + $0x6cc] sm:$0xf]
  %v851 = vld [vmem:[%s1 + $0x6d0] sm:$0xf]
  %v852 = vld [vmem:[%s1 + $0x6d4] sm:$0xf]
  %v853 = vld [vmem:[%s1 + $0x6d8] sm:$0xf]
  %v854 = vld [vmem:[%s1 + $0x6dc] sm:$0xf]
  %v855 = vld [vmem:[%s1 + $0x6e0] sm:$0xf]
  %v856 = vld [vmem:[%s1 + $0x6e4] sm:$0xf]
  %v857 = vld [vmem:[%s1 + $0x6e8] sm:$0xf]
  %v858 = vld [vmem:[%s1 + $0x6ec] sm:$0xf]
  %v859 = vld [vmem:[%s1 + $0x6f0] sm:$0xf]
  %v860 = vld [vmem:[%s1 + $0x6f4] sm:$0xf]
  %v861 = vld [vmem:[%s1 + $0x6f8] sm:$0xf]
  %v862 = vld [vmem:[%s1 + $0x6fc] sm:$0xf]
  %v863 = vld [vmem:[%s1 + $0x700] sm:$0xf]
  %v864 = vld [vmem:[%s1 + $0x704] sm:$0xf]
  %v865 = vld [vmem:[%s1 + $0x708] sm:$0xf]
  %v866 = vld [vmem:[%s1 + $0x70c] sm:$0xf]
  %v867 = vld [vmem:[%s1 + $0x710] sm:$0xf]
  %v868 = vld [vmem:[%s1 + $0x714] sm:$0xf]
  %v869 = vld [vmem:[%s1 + $0x718] sm:$0xf]
  %v870 = vld [vmem:[%s1 + $0x71c] sm:$0xf]
  %v871 = vld [vmem:[%s1 + $0x720] sm:$0xf]
  %v872 = vld [vmem:[%s1 + $0x724] sm:$0xf]
  %v873 = vld [vmem:[%s1 + $0x728] sm:$0xf]
  %v874 = vld [vmem:[%s1 + $0x72c] sm:$0xf]
  %v875 = vld [vmem:[%s1 + $0x730] sm:$0xf]
  %v876 = vld [vmem:[%s1 + $0x734] sm:$0xf]
  %v877 = vld [vmem:[%s1 + $0x738] sm:$0xf]
  %v878 = vld [vmem:[%s1 + $0x73c] sm:$0xf]
  %v879 = vld [vmem:[%s1 + $0x740] sm:$0xf]
  %v880 = vld [vmem:[%s1 + $0x744] sm:$0xf]
  %v881 = vld [vmem:[%s1 + $0x748] sm:$0xf]
  %v882 = vld [vmem:[%s1 + $0x74c] sm:$0xf]
  %v883 = vld [vmem:[%s1 + $0x750] sm:$0xf]
  %v884 = vld [vmem:[%s1 + $0x754] sm:$0xf]
  %v885 = vld [vmem:[%s1 + $0x758] sm:$0xf]
  %v886 = vld [vmem:[%s1 + $0x75c] sm:$0xf]
  %v887 = vld [vmem:[%s1 + $0x760] sm:$0xf]
  %v888 = vld [vmem:[%s1 + $0x764] sm:$0xf]
  %v889 = vld [vmem:[%s1 + $0x768] sm:$0xf]
  %v890 = vld [vmem:[%s1 + $0x76c] sm:$0xf]
  %v891 = vld [vmem:[%s1 + $0x770] sm:$0xf]
  %v892 = vld [vmem:[%s1 + $0x774] sm:$0xf]
  %v893 = vld [vmem:[%s1 + $0x778] sm:$0xf]
  %v894 = vld [vmem:[%s1 + $0x77c] sm:$0xf]
  %v895 = vld [vmem:[%s1 + $0x780] sm:$0xf]
  %v896 = vld [vmem:[%s1 + $0x784] sm:$0xf]
  %v897 = vld [vmem:[%s1 + $0x788] sm:$0xf]
  %v898 = vld [vmem:[%s1 + $0x78c] sm:$0xf]
  %v899 = vld [vmem:[%s1 + $0x790] sm:$0xf]
  %v900 = vld [vmem:[%s1 + $0x794] sm:$0xf]
  %v901 = vld [vmem:[%s1 + $0x798] sm:$0xf]
  %v902 = vld [vmem:[%s1 + $0x79c] sm:$0xf]
  %v903 = vld [vmem:[%s1 + $0x7a0] sm:$0xf]
  %v904 = vld [vmem:[%s1 + $0x7a4] sm:$0xf]
  %v905 = vld [vmem:[%s1 + $0x7a8] sm:$0xf]
  %v906 = vld [vmem:[%s1 + $0x7ac] sm:$0xf]
  %v907 = vld [vmem:[%s1 + $0x7b0] sm:$0xf]
  %v908 = vld [vmem:[%s1 + $0x7b4] sm:$0xf]
  %v909 = vld [vmem:[%s1 + $0x7b8] sm:$0xf]
  %v910 = vld [vmem:[%s1 + $0x7bc] sm:$0xf]
  %v911 = vld [vmem:[%s1 + $0x7c0] sm:$0xf]
  %v912 = vld [vmem:[%s1 + $0x7c4] sm:$0xf]
  %v913 = vld [vmem:[%s1 + $0x7c8] sm:$0xf]
  %v914 = vld [vmem:[%s1 + $0x7cc] sm:$0xf]
  %v915 = vld [vmem:[%s1 + $0x7d0] sm:$0xf]
  %v916 = vld [vmem:[%s1 + $0x7d4] sm:$0xf]
  %v917 = vld [vmem:[%s1 + $0x7d8] sm:$0xf]
  %v918 = vld [vmem:[%s1 + $0x7dc] sm:$0xf]
  %v919 = vld [vmem:[%s1 + $0x7e0] sm:$0xf]
  %v920 = vld [vmem:[%s1 + $0x7e4] sm:$0xf]
  %v921 = vld [vmem:[%s1 + $0x7e8] sm:$0xf]
  %v922 = vld [vmem:[%s1 + $0x7ec] sm:$0xf]
  %v923 = vld [vmem:[%s1 + $0x7f0] sm:$0xf]
  %v924 = vld [vmem:[%s1 + $0x7f4] sm:$0xf]
  %v925 = vld [vmem:[%s1 + $0x7f8] sm:$0xf]
  %v926 = vld [vmem:[%s1 + $0x7fc] sm:$0xf]
  %v927 = vld [vmem:[%s1 + $0x800] sm:$0xf]
  %v928 = vld [vmem:[%s1 + $0x804] sm:$0xf]
  %v929 = vld [vmem:[%s1 + $0x808] sm:$0xf]
  %v930 = vld [vmem:[%s1 + $0x80c] sm:$0xf]
  %v931 = vld [vmem:[%s1 + $0x810] sm:$0xf]
  %v932 = vld [vmem:[%s1 + $0x814] sm:$0xf]
  %v933 = vld [vmem:[%s1 + $0x818] sm:$0xf]
  %v934 = vld [vmem:[%s1 + $0x81c] sm:$0xf]
  %v935 = vld [vmem:[%s1 + $0x820] sm:$0xf]
  %v936 = vld [vmem:[%s1 + $0x824] sm:$0xf]
  %v937 = vld [vmem:[%s1 + $0x828] sm:$0xf]
  %v938 = vld [vmem:[%s1 + $0x82c] sm:$0xf]
  %v939 = vld [vmem:[%s1 + $0x830] sm:$0xf]
  %v940 = vld [vmem:[%s1 + $0x834] sm:$0xf]
  %v941 = vld [vmem:[%s1 + $0x838] sm:$0xf]
  %v942 = vld [vmem:[%s1 + $0x83c] sm:$0xf]
  %v943 = vld [vmem:[%s1 + $0x840] sm:$0xf]
  %v944 = vld [vmem:[%s1 + $0x844] sm:$0xf]
  %v945 = vld [vmem:[%s1 + $0x848] sm:$0xf]
  %v946 = vld [vmem:[%s1 + $0x84c] sm:$0xf]
  %v947 = vld [vmem:[%s1 + $0x850] sm:$0xf]
  %v948 = vld [vmem:[%s1 + $0x854] sm:$0xf]
  %v949 = vld [vmem:[%s1 + $0x858] sm:$0xf]
  %v950 = vld [vmem:[%s1 + $0x85c] sm:$0xf]
  %v951 = vld [vmem:[%s1 + $0x860] sm:$0xf]
  %v952 = vld [vmem:[%s1 + $0x864] sm:$0xf]
  %v953 = vld [vmem:[%s1 + $0x868] sm:$0xf]
  %v954 = vld [vmem:[%s1 + $0x86c] sm:$0xf]
  %v955 = vld [vmem:[%s1 + $0x870] sm:$0xf]
  %v956 = vld [vmem:[%s1 + $0x874] sm:$0xf]
  %v957 = vld [vmem:[%s1 + $0x878] sm:$0xf]
  %v958 = vld [vmem:[%s1 + $0x87c] sm:$0xf]
  %v959 = vld [vmem:[%s1 + $0x880] sm:$0xf]
  %v960 = vld [vmem:[%s1 + $0x884] sm:$0xf]
  %v961 = vld [vmem:[%s1 + $0x888] sm:$0xf]
  %v962 = vld [vmem:[%s1 + $0x88c] sm:$0xf]
  %v963 = vld [vmem:[%s1 + $0x890] sm:$0xf]
  %v964 = vld [vmem:[%s1 + $0x894] sm:$0xf]
  %v965 = vld [vmem:[%s1 + $0x898] sm:$0xf]
  %v966 = vld [vmem:[%s1 + $0x89c] sm:$0xf]
  %v967 = vld [vmem:[%s1 + $0x8a0] sm:$0xf]
  %v968 = vld [vmem:[%s1 + $0x8a4] sm:$0xf]
  %v969 = vld [vmem:[%s1 + $0x8a8] sm:$0xf]
  %v970 = vld [vmem:[%s1 + $0x8ac] sm:$0xf]
  %v971 = vld [vmem:[%s1 + $0x8b0] sm:$0xf]
  %v972 = vld [vmem:[%s1 + $0x8b4] sm:$0xf]
  %v973 = vld [vmem:[%s1 + $0x8b8] sm:$0xf]
  %v974 = vld [vmem:[%s1 + $0x8bc] sm:$0xf]
  %v975 = vld [vmem:[%s1 + $0x8c0] sm:$0xf]
  %v976 = vld [vmem:[%s1 + $0x8c4] sm:$0xf]
  %v977 = vld [vmem:[%s1 + $0x8c8] sm:$0xf]
  %v978 = vld [vmem:[%s1 + $0x8cc] sm:$0xf]
  %v979 = vld [vmem:[%s1 + $0x8d0] sm:$0xf]
  %v980 = vld [vmem:[%s1 + $0x8d4] sm:$0xf]
  %v981 = vld [vmem:[%s1 + $0x8d8] sm:$0xf]
  %v982 = vld [vmem:[%s1 + $0x8dc] sm:$0xf]
  %v983 = vld [vmem:[%s1 + $0x8e0] sm:$0xf]
  %v984 = vld [vmem:[%s1 + $0x8e4] sm:$0xf]
  %v985 = vld [vmem:[%s1 + $0x8e8] sm:$0xf]
  %v986 = vld [vmem:[%s1 + $0x8ec] sm:$0xf]
  %v987 = vld [vmem:[%s1 + $0x8f0] sm:$0xf]
  %v988 = vld [vmem:[%s1 + $0x8f4] sm:$0xf]
  %v989 = vld [vmem:[%s1 + $0x8f8] sm:$0xf]
  %v990 = vld [vmem:[%s1 + $0x8fc] sm:$0xf]
  %v991 = vld [vmem:[%s1 + $0x900] sm:$0xf]
  %v992 = vld [vmem:[%s1 + $0x904] sm:$0xf]
  %v993 = vld [vmem:[%s1 + $0x908] sm:$0xf]
  %v994 = vld [vmem:[%s1 + $0x90c] sm:$0xf]
  %v995 = vld [vmem:[%s1 + $0x910] sm:$0xf]
  %v996 = vld [vmem:[%s1 + $0x914] sm:$0xf]
  %v997 = vld [vmem:[%s1 + $0x918] sm:$0xf]
  %v998 = vld [vmem:[%s1 + $0x91c] sm:$0xf]
  %v999 = vld [vmem:[%s1 + $0x920] sm:$0xf]
  %v1000 = vld [vmem:[%s1 + $0x924] sm:$0xf]
  %v1001 = vld [vmem:[%s1 + $0x928] sm:$0xf]
  %v1002 = vld [vmem:[%s1 + $0x92c] sm:$0xf]
  %v1003 = vld [vmem:[%s1 + $0x930] sm:$0xf]
  %v1004 = vld [vmem:[%s1 + $0x934] sm:$0xf]
  %v1005 = vld [vmem:[%s1 + $0x938] sm:$0xf]
  %v1006 = vld [vmem:[%s1 + $0x93c] sm:$0xf]
  %v1007 = vld [vmem:[%s1 + $0x940] sm:$0xf]
  %v1008 = vld [vmem:[%s1 + $0x944] sm:$0xf]
  %v1009 = vld [vmem:[%s1 + $0x948] sm:$0xf]
  %v1010 = vld [vmem:[%s1 + $0x94c] sm:$0xf]
  %v1011 = vld [vmem:[%s1 + $0x950] sm:$0xf]
  %v1012 = vld [vmem:[%s1 + $0x954] sm:$0xf]
  %v1013 = vld [vmem:[%s1 + $0x958] sm:$0xf]
  %v1014 = vld [vmem:[%s1 + $0x95c] sm:$0xf]
  %v1015 = vld [vmem:[%s1 + $0x960] sm:$0xf]
  %v1016 = vld [vmem:[%s1 + $0x964] sm:$0xf]
  %v1017 = vld [vmem:[%s1 + $0x968] sm:$0xf]
  %v1018 = vld [vmem:[%s1 + $0x96c] sm:$0xf]
  %v1019 = vld [vmem:[%s1 + $0x970] sm:$0xf]
  %v1020 = vld [vmem:[%s1 + $0x974] sm:$0xf]
  %v1021 = vld [vmem:[%s1 + $0x978] sm:$0xf]
  %v1022 = vld [vmem:[%s1 + $0x97c] sm:$0xf]
  %v1023 = vld [vmem:[%s1 + $0x980] sm:$0xf]
  %v1024 = vld [vmem:[%s1 + $0x984] sm:$0xf]
  %v1025 = vld [vmem:[%s1 + $0x988] sm:$0xf]
  %v1026 = vld [vmem:[%s1 + $0x98c] sm:$0xf]
  %v1027 = vld [vmem:[%s1 + $0x990] sm:$0xf]
  %v1028 = vld [vmem:[%s1 + $0x994] sm:$0xf]
  %v1029 = vld [vmem:[%s1 + $0x998] sm:$0xf]
  %v1030 = vld [vmem:[%s1 + $0x99c] sm:$0xf]
  %v1031 = vld [vmem:[%s1 + $0x9a0] sm:$0xf]
  %v1032 = vld [vmem:[%s1 + $0x9a4] sm:$0xf]
  %v1033 = vld [vmem:[%s1 + $0x9a8] sm:$0xf]
  %v1034 = vld [vmem:[%s1 + $0x9ac] sm:$0xf]
  %v1035 = vld [vmem:[%s1 + $0x9b0] sm:$0xf]
  %v1036 = vld [vmem:[%s1 + $0x9b4] sm:$0xf]
  %v1037 = vld [vmem:[%s1 + $0x9b8] sm:$0xf]
  %v1038 = vld [vmem:[%s1 + $0x9bc] sm:$0xf]
  %v1039 = vld [vmem:[%s1 + $0x9c0] sm:$0xf]
  %v1040 = vld [vmem:[%s1 + $0x9c4] sm:$0xf]
  %v1041 = vld [vmem:[%s1 + $0x9c8] sm:$0xf]
  %v1042 = vld [vmem:[%s1 + $0x9cc] sm:$0xf]
  %v1043 = vld [vmem:[%s1 + $0x9d0] sm:$0xf]
  %v1044 = vld [vmem:[%s1 + $0x9d4] sm:$0xf]
  %v1045 = vld [vmem:[%s1 + $0x9d8] sm:$0xf]
  %v1046 = vld [vmem:[%s1 + $0x9dc] sm:$0xf]
  %v1047 = vld [vmem:[%s1 + $0x9e0] sm:$0xf]
  %v1048 = vld [vmem:[%s1 + $0x9e4] sm:$0xf]
  %v1049 = vld [vmem:[%s1 + $0x9e8] sm:$0xf]
  %v1050 = vld [vmem:[%s1 + $0x9ec] sm:$0xf]
  %v1051 = vld [vmem:[%s1 + $0x9f0] sm:$0xf]
  %v1052 = vld [vmem:[%s1 + $0x9f4] sm:$0xf]
  %v1053 = vld [vmem:[%s1 + $0x9f8] sm:$0xf]
  %v1054 = vld [vmem:[%s1 + $0x9fc] sm:$0xf]
  %v1055 = vld [vmem:[%s1 + $0xa00] sm:$0xf]
  %v1056 = vld [vmem:[%s1 + $0xa04] sm:$0xf]
  %v1057 = vld [vmem:[%s1 + $0xa08] sm:$0xf]
  %v1058 = vld [vmem:[%s1 + $0xa0c] sm:$0xf]
  %v1059 = vld [vmem:[%s1 + $0xa10] sm:$0xf]
  %v1060 = vld [vmem:[%s1 + $0xa14] sm:$0xf]
  %v1061 = vld [vmem:[%s1 + $0xa18] sm:$0xf]
  %v1062 = vld [vmem:[%s1 + $0xa1c] sm:$0xf]
  %v1063 = vld [vmem:[%s1 + $0xa20] sm:$0xf]
  %v1064 = vld [vmem:[%s1 + $0xa24] sm:$0xf]
  %v1065 = vld [vmem:[%s1 + $0xa28] sm:$0xf]
  %v1066 = vld [vmem:[%s1 + $0xa2c] sm:$0xf]
  %v1067 = vld [vmem:[%s1 + $0xa30] sm:$0xf]
  %v1068 = vld [vmem:[%s1 + $0xa34] sm:$0xf]
  %v1069 = vld [vmem:[%s1 + $0xa38] sm:$0xf]
  %v1070 = vld [vmem:[%s1 + $0xa3c] sm:$0xf]
  %v1071 = vld [vmem:[%s1 + $0xa40] sm:$0xf]
  %v1072 = vld [vmem:[%s1 + $0xa44] sm:$0xf]
  %v1073 = vld [vmem:[%s1 + $0xa48] sm:$0xf]
  %v1074 = vld [vmem:[%s1 + $0xa4c] sm:$0xf]
  %v1075 = vld [vmem:[%s1 + $0xa50] sm:$0xf]
  %v1076 = vld [vmem:[%s1 + $0xa54] sm:$0xf]
  %v1077 = vld [vmem:[%s1 + $0xa58] sm:$0xf]
  %v1078 = vld [vmem:[%s1 + $0xa5c] sm:$0xf]
  %v1079 = vld [vmem:[%s1 + $0xa60] sm:$0xf]
  %v1080 = vld [vmem:[%s1 + $0xa64] sm:$0xf]
  %v1081 = vld [vmem:[%s1 + $0xa68] sm:$0xf]
  %v1082 = vld [vmem:[%s1 + $0xa6c] sm:$0xf]
  %v1083 = vld [vmem:[%s1 + $0xa70] sm:$0xf]
  %v1084 = vld [vmem:[%s1 + $0xa74] sm:$0xf]
  %v1085 = vld [vmem:[%s1 + $0xa78] sm:$0xf]
  %v1086 = vld [vmem:[%s1 + $0xa7c] sm:$0xf]
  %v1087 = vld [vmem:[%s1 + $0xa80] sm:$0xf]
  %v1088 = vld [vmem:[%s1 + $0xa84] sm:$0xf]
  %v1089 = vld [vmem:[%s1 + $0xa88] sm:$0xf]
  %v1090 = vld [vmem:[%s1 + $0xa8c] sm:$0xf]
  %v1091 = vld [vmem:[%s1 + $0xa90] sm:$0xf]
  %v1092 = vld [vmem:[%s1 + $0xa94] sm:$0xf]
  %v1093 = vld [vmem:[%s1 + $0xa98] sm:$0xf]
  %v1094 = vld [vmem:[%s1 + $0xa9c] sm:$0xf]
  %v1095 = vld [vmem:[%s1 + $0xaa0] sm:$0xf]
  %v1096 = vld [vmem:[%s1 + $0xaa4] sm:$0xf]
  %v1097 = vld [vmem:[%s1 + $0xaa8] sm:$0xf]
  %v1098 = vld [vmem:[%s1 + $0xaac] sm:$0xf]
  %v1099 = vld [vmem:[%s1 + $0xab0] sm:$0xf]
  %v1100 = vld [vmem:[%s1 + $0xab4] sm:$0xf]
  %v1101 = vld [vmem:[%s1 + $0xab8] sm:$0xf]
  %v1102 = vld [vmem:[%s1 + $0xabc] sm:$0xf]
  %v1103 = vld [vmem:[%s1 + $0xac0] sm:$0xf]
  %v1104 = vld [vmem:[%s1 + $0xac4] sm:$0xf]
  %v1105 = vld [vmem:[%s1 + $0xac8] sm:$0xf]
  %v1106 = vld [vmem:[%s1 + $0xacc] sm:$0xf]
  %v1107 = vld [vmem:[%s1 + $0xad0] sm:$0xf]
  %v1108 = vld [vmem:[%s1 + $0xad4] sm:$0xf]
  %v1109 = vld [vmem:[%s1 + $0xad8] sm:$0xf]
  %v1110 = vld [vmem:[%s1 + $0xadc] sm:$0xf]
  %v1111 = vld [vmem:[%s1 + $0xae0] sm:$0xf]
  %v1112 = vld [vmem:[%s1 + $0xae4] sm:$0xf]
  %v1113 = vld [vmem:[%s1 + $0xae8] sm:$0xf]
  %v1114 = vld [vmem:[%s1 + $0xaec] sm:$0xf]
  %v1115 = vld [vmem:[%s1 + $0xaf0] sm:$0xf]
  %v1116 = vld [vmem:[%s1 + $0xaf4] sm:$0xf]
  %v1117 = vld [vmem:[%s1 + $0xaf8] sm:$0xf]
  %v1118 = vld [vmem:[%s1 + $0xafc] sm:$0xf]
  %v1119 = vld [vmem:[%s1 + $0xb00] sm:$0xf]
  %v1120 = vld [vmem:[%s1 + $0xb04] sm:$0xf]
  %v1121 = vld [vmem:[%s1 + $0xb08] sm:$0xf]
  %v1122 = vld [vmem:[%s1 + $0xb0c] sm:$0xf]
  %v1123 = vld [vmem:[%s1 + $0xb10] sm:$0xf]
  %v1124 = vld [vmem:[%s1 + $0xb14] sm:$0xf]
  %v1125 = vld [vmem:[%s1 + $0xb18] sm:$0xf]
  %v1126 = vld [vmem:[%s1 + $0xb1c] sm:$0xf]
  %v1127 = vld [vmem:[%s1 + $0xb20] sm:$0xf]
  %v1128 = vld [vmem:[%s1 + $0xb24] sm:$0xf]
  %v1129 = vld [vmem:[%s1 + $0xb28] sm:$0xf]
  %v1130 = vld [vmem:[%s1 + $0xb2c] sm:$0xf]
  %v1131 = vld [vmem:[%s1 + $0xb30] sm:$0xf]
  %v1132 = vld [vmem:[%s1 + $0xb34] sm:$0xf]
  %v1133 = vld [vmem:[%s1 + $0xb38] sm:$0xf]
  %v1134 = vld [vmem:[%s1 + $0xb3c] sm:$0xf]
  %v1135 = vld [vmem:[%s1 + $0xb40] sm:$0xf]
  %v1136 = vld [vmem:[%s1 + $0xb44] sm:$0xf]
  %v1137 = vld [vmem:[%s1 + $0xb48] sm:$0xf]
  %v1138 = vld [vmem:[%s1 + $0xb4c] sm:$0xf]
  %v1139 = vld [vmem:[%s1 + $0xb50] sm:$0xf]
  %v1140 = vld [vmem:[%s1 + $0xb54] sm:$0xf]
  %v1141 = vld [vmem:[%s1 + $0xb58] sm:$0xf]
  %v1142 = vld [vmem:[%s1 + $0xb5c] sm:$0xf]
  %v1143 = vld [vmem:[%s1 + $0xb60] sm:$0xf]
  %v1144 = vld [vmem:[%s1 + $0xb64] sm:$0xf]
  %v1145 = vld [vmem:[%s1 + $0xb68] sm:$0xf]
  %v1146 = vld [vmem:[%s1 + $0xb6c] sm:$0xf]
  %v1147 = vld [vmem:[%s1 + $0xb70] sm:$0xf]
  %v1148 = vld [vmem:[%s1 + $0xb74] sm:$0xf]
  %v1149 = vld [vmem:[%s1 + $0xb78] sm:$0xf]
  %v1150 = vld [vmem:[%s1 + $0xb7c] sm:$0xf]
  %v1151 = vld [vmem:[%s1 + $0xb80] sm:$0xf]
  %v1152 = vld [vmem:[%s1 + $0xb84] sm:$0xf]
  %v1153 = vld [vmem:[%s1 + $0xb88] sm:$0xf]
  %v1154 = vld [vmem:[%s1 + $0xb8c] sm:$0xf]
  %v1155 = vld [vmem:[%s1 + $0xb90] sm:$0xf]
  %v1156 = vld [vmem:[%s1 + $0xb94] sm:$0xf]
  %v1157 = vld [vmem:[%s1 + $0xb98] sm:$0xf]
  %v1158 = vld [vmem:[%s1 + $0xb9c] sm:$0xf]
  %v1159 = vld [vmem:[%s1 + $0xba0] sm:$0xf]
  %v1160 = vld [vmem:[%s1 + $0xba4] sm:$0xf]
  %v1161 = vld [vmem:[%s1 + $0xba8] sm:$0xf]
  %v1162 = vld [vmem:[%s1 + $0xbac] sm:$0xf]
  %v1163 = vld [vmem:[%s1 + $0xbb0] sm:$0xf]
  %v1164 = vld [vmem:[%s1 + $0xbb4] sm:$0xf]
  %v1165 = vld [vmem:[%s1 + $0xbb8] sm:$0xf]
  %v1166 = vld [vmem:[%s1 + $0xbbc] sm:$0xf]
  %v1167 = vld [vmem:[%s1 + $0xbc0] sm:$0xf]
  %v1168 = vld [vmem:[%s1 + $0xbc4] sm:$0xf]
  %v1169 = vld [vmem:[%s1 + $0xbc8] sm:$0xf]
  %v1170 = vld [vmem:[%s1 + $0xbcc] sm:$0xf]
  %v1171 = vld [vmem:[%s1 + $0xbd0] sm:$0xf]
  %v1172 = vld [vmem:[%s1 + $0xbd4] sm:$0xf]
  %v1173 = vld [vmem:[%s1 + $0xbd8] sm:$0xf]
  %v1174 = vld [vmem:[%s1 + $0xbdc] sm:$0xf]
  %v1175 = vld [vmem:[%s1 + $0xbe0] sm:$0xf]
  %v1176 = vld [vmem:[%s1 + $0xbe4] sm:$0xf]
  %v1177 = vld [vmem:[%s1 + $0xbe8] sm:$0xf]
  %v1178 = vld [vmem:[%s1 + $0xbec] sm:$0xf]
  %v1179 = vld [vmem:[%s1 + $0xbf0] sm:$0xf]
  %v1180 = vld [vmem:[%s1 + $0xbf4] sm:$0xf]
  %v1181 = vld [vmem:[%s1 + $0xbf8] sm:$0xf]
  %v1182 = vld [vmem:[%s1 + $0xbfc] sm:$0xf]
  %v1183 = vld [vmem:[%s1 + $0xc00] sm:$0xf]
  %v1184 = vld [vmem:[%s1 + $0xc04] sm:$0xf]
  %v1185 = vld [vmem:[%s1 + $0xc08] sm:$0xf]
  %v1186 = vld [vmem:[%s1 + $0xc0c] sm:$0xf]
  %v1187 = vld [vmem:[%s1 + $0xc10] sm:$0xf]
  %v1188 = vld [vmem:[%s1 + $0xc14] sm:$0xf]
  %v1189 = vld [vmem:[%s1 + $0xc18] sm:$0xf]
  %v1190 = vld [vmem:[%s1 + $0xc1c] sm:$0xf]
  %v1191 = vld [vmem:[%s1 + $0xc20] sm:$0xf]
  %v1192 = vld [vmem:[%s1 + $0xc24] sm:$0xf]
  %v1193 = vld [vmem:[%s1 + $0xc28] sm:$0xf]
  %v1194 = vld [vmem:[%s1 + $0xc2c] sm:$0xf]
  %v1195 = vld [vmem:[%s1 + $0xc30] sm:$0xf]
  %v1196 = vld [vmem:[%s1 + $0xc34] sm:$0xf]
  %v1197 = vld [vmem:[%s1 + $0xc38] sm:$0xf]
  %v1198 = vld [vmem:[%s1 + $0xc3c] sm:$0xf]
  %v1199 = vld [vmem:[%s2] sm:$0x1]
  %v1201 = vlaneseq
  %v1202 = vshrl.u32 %v1201, 7
  %v1203 = vsub.s32 0, %v1202
  %v1204 = vrot.slane %v1199, %v1203
  %v1606 = vunpack.c.l.b16 %v15
  %v1607 = vunpack.c.h.b16 %v15
  %v1608 = vunpack.c.l.b16 %v16
  %v1609 = vunpack.c.h.b16 %v16
  %v1610 = vunpack.c.l.b16 %v17
  %v1611 = vunpack.c.h.b16 %v17
  %v1612 = vunpack.c.l.b16 %v18
  %v1613 = vunpack.c.h.b16 %v18
  %v1614 = vunpack.c.l.b16 %v19
  %v1615 = vunpack.c.h.b16 %v19
  %v1616 = vunpack.c.l.b16 %v20
  %v1617 = vunpack.c.h.b16 %v20
  %v1618 = vunpack.c.l.b16 %v21
  %v1619 = vunpack.c.h.b16 %v21
  %v1620 = vunpack.c.l.b16 %v22
  %v1621 = vunpack.c.h.b16 %v22
  %v1622 = vunpack.c.l.b16 %v23
  %v1623 = vunpack.c.h.b16 %v23
  %v1624 = vunpack.c.l.b16 %v24
  %v1625 = vunpack.c.h.b16 %v24
  %v1626 = vunpack.c.l.b16 %v25
  %v1627 = vunpack.c.h.b16 %v25
  %v1628 = vunpack.c.l.b16 %v26
  %v1629 = vunpack.c.h.b16 %v26
  %v1630 = vunpack.c.l.b16 %v27
  %v1631 = vunpack.c.h.b16 %v27
  %v1632 = vunpack.c.l.b16 %v28
  %v1633 = vunpack.c.h.b16 %v28
  %v1634 = vunpack.c.l.b16 %v29
  %v1635 = vunpack.c.h.b16 %v29
  %v1636 = vunpack.c.l.b16 %v30
  %v1637 = vunpack.c.h.b16 %v30
  %v1638 = vunpack.c.l.b16 %v31
  %v1639 = vunpack.c.h.b16 %v31
  %v1640 = vunpack.c.l.b16 %v32
  %v1641 = vunpack.c.h.b16 %v32
  %v1642 = vunpack.c.l.b16 %v33
  %v1643 = vunpack.c.h.b16 %v33
  %v1644 = vunpack.c.l.b16 %v34
  %v1645 = vunpack.c.h.b16 %v34
  %v1646 = vunpack.c.l.b16 %v35
  %v1647 = vunpack.c.h.b16 %v35
  %v1648 = vunpack.c.l.b16 %v36
  %v1649 = vunpack.c.h.b16 %v36
  %v1650 = vunpack.c.l.b16 %v37
  %v1651 = vunpack.c.h.b16 %v37
  %v1652 = vunpack.c.l.b16 %v38
  %v1653 = vunpack.c.h.b16 %v38
  %v1654 = vunpack.c.l.b16 %v39
  %v1655 = vunpack.c.l.b16 %v40
  %v1656 = vunpack.c.h.b16 %v40
  %v1657 = vunpack.c.l.b16 %v41
  %v1658 = vunpack.c.h.b16 %v41
  %v1659 = vunpack.c.l.b16 %v42
  %v1660 = vunpack.c.h.b16 %v42
  %v1661 = vunpack.c.l.b16 %v43
  %v1662 = vunpack.c.h.b16 %v43
  %v1663 = vunpack.c.l.b16 %v44
  %v1664 = vunpack.c.h.b16 %v44
  %v1665 = vunpack.c.l.b16 %v45
  %v1666 = vunpack.c.h.b16 %v45
  %v1667 = vunpack.c.l.b16 %v46
  %v1668 = vunpack.c.h.b16 %v46
  %v1669 = vunpack.c.l.b16 %v47
  %v1670 = vunpack.c.h.b16 %v47
  %v1671 = vunpack.c.l.b16 %v48
  %v1672 = vunpack.c.h.b16 %v48
  %v1673 = vunpack.c.l.b16 %v49
  %v1674 = vunpack.c.h.b16 %v49
  %v1675 = vunpack.c.l.b16 %v50
  %v1676 = vunpack.c.h.b16 %v50
  %v1677 = vunpack.c.l.b16 %v51
  %v1678 = vunpack.c.h.b16 %v51
  %v1679 = vunpack.c.l.b16 %v52
  %v1680 = vunpack.c.h.b16 %v52
  %v1681 = vunpack.c.l.b16 %v53
  %v1682 = vunpack.c.h.b16 %v53
  %v1683 = vunpack.c.l.b16 %v54
  %v1684 = vunpack.c.h.b16 %v54
  %v1685 = vunpack.c.l.b16 %v55
  %v1686 = vunpack.c.h.b16 %v55
  %v1687 = vunpack.c.l.b16 %v56
  %v1688 = vunpack.c.h.b16 %v56
  %v1689 = vunpack.c.l.b16 %v57
  %v1690 = vunpack.c.h.b16 %v57
  %v1691 = vunpack.c.l.b16 %v58
  %v1692 = vunpack.c.h.b16 %v58
  %v1693 = vunpack.c.l.b16 %v59
  %v1694 = vunpack.c.h.b16 %v59
  %v1695 = vunpack.c.l.b16 %v60
  %v1696 = vunpack.c.h.b16 %v60
  %v1697 = vunpack.c.l.b16 %v61
  %v1698 = vunpack.c.h.b16 %v61
  %v1699 = vunpack.c.l.b16 %v62
  %v1700 = vunpack.c.h.b16 %v62
  %v1701 = vunpack.c.l.b16 %v63
  %v1702 = vunpack.c.h.b16 %v63
  %v1703 = vunpack.c.l.b16 %v64
  %v1704 = vunpack.c.l.b16 %v65
  %v1705 = vunpack.c.h.b16 %v65
  %v1706 = vunpack.c.l.b16 %v66
  %v1707 = vunpack.c.h.b16 %v66
  %v1708 = vunpack.c.l.b16 %v67
  %v1709 = vunpack.c.h.b16 %v67
  %v1710 = vunpack.c.l.b16 %v68
  %v1711 = vunpack.c.h.b16 %v68
  %v1712 = vunpack.c.l.b16 %v69
  %v1713 = vunpack.c.h.b16 %v69
  %v1714 = vunpack.c.l.b16 %v70
  %v1715 = vunpack.c.h.b16 %v70
  %v1716 = vunpack.c.l.b16 %v71
  %v1717 = vunpack.c.h.b16 %v71
  %v1718 = vunpack.c.l.b16 %v72
  %v1719 = vunpack.c.h.b16 %v72
  %v1720 = vunpack.c.l.b16 %v73
  %v1721 = vunpack.c.h.b16 %v73
  %v1722 = vunpack.c.l.b16 %v74
  %v1723 = vunpack.c.h.b16 %v74
  %v1724 = vunpack.c.l.b16 %v75
  %v1725 = vunpack.c.h.b16 %v75
  %v1726 = vunpack.c.l.b16 %v76
  %v1727 = vunpack.c.h.b16 %v76
  %v1728 = vunpack.c.l.b16 %v77
  %v1729 = vunpack.c.h.b16 %v77
  %v1730 = vunpack.c.l.b16 %v78
  %v1731 = vunpack.c.h.b16 %v78
  %v1732 = vunpack.c.l.b16 %v79
  %v1733 = vunpack.c.h.b16 %v79
  %v1734 = vunpack.c.l.b16 %v80
  %v1735 = vunpack.c.h.b16 %v80
  %v1736 = vunpack.c.l.b16 %v81
  %v1737 = vunpack.c.h.b16 %v81
  %v1738 = vunpack.c.l.b16 %v82
  %v1739 = vunpack.c.h.b16 %v82
  %v1740 = vunpack.c.l.b16 %v83
  %v1741 = vunpack.c.h.b16 %v83
  %v1742 = vunpack.c.l.b16 %v84
  %v1743 = vunpack.c.h.b16 %v84
  %v1744 = vunpack.c.l.b16 %v85
  %v1745 = vunpack.c.h.b16 %v85
  %v1746 = vunpack.c.l.b16 %v86
  %v1747 = vunpack.c.h.b16 %v86
  %v1748 = vunpack.c.l.b16 %v87
  %v1749 = vunpack.c.h.b16 %v87
  %v1750 = vunpack.c.l.b16 %v88
  %v1751 = vunpack.c.h.b16 %v88
  %v1752 = vunpack.c.l.b16 %v89
  %v1753 = vunpack.c.l.b16 %v90
  %v1754 = vunpack.c.h.b16 %v90
  %v1755 = vunpack.c.l.b16 %v91
  %v1756 = vunpack.c.h.b16 %v91
  %v1757 = vunpack.c.l.b16 %v92
  %v1758 = vunpack.c.h.b16 %v92
  %v1759 = vunpack.c.l.b16 %v93
  %v1760 = vunpack.c.h.b16 %v93
  %v1761 = vunpack.c.l.b16 %v94
  %v1762 = vunpack.c.h.b16 %v94
  %v1763 = vunpack.c.l.b16 %v95
  %v1764 = vunpack.c.h.b16 %v95
  %v1765 = vunpack.c.l.b16 %v96
  %v1766 = vunpack.c.h.b16 %v96
  %v1767 = vunpack.c.l.b16 %v97
  %v1768 = vunpack.c.h.b16 %v97
  %v1769 = vunpack.c.l.b16 %v98
  %v1770 = vunpack.c.h.b16 %v98
  %v1771 = vunpack.c.l.b16 %v99
  %v1772 = vunpack.c.h.b16 %v99
  %v1773 = vunpack.c.l.b16 %v100
  %v1774 = vunpack.c.h.b16 %v100
  %v1775 = vunpack.c.l.b16 %v101
  %v1776 = vunpack.c.h.b16 %v101
  %v1777 = vunpack.c.l.b16 %v102
  %v1778 = vunpack.c.h.b16 %v102
  %v1779 = vunpack.c.l.b16 %v103
  %v1780 = vunpack.c.h.b16 %v103
  %v1781 = vunpack.c.l.b16 %v104
  %v1782 = vunpack.c.h.b16 %v104
  %v1783 = vunpack.c.l.b16 %v105
  %v1784 = vunpack.c.h.b16 %v105
  %v1785 = vunpack.c.l.b16 %v106
  %v1786 = vunpack.c.h.b16 %v106
  %v1787 = vunpack.c.l.b16 %v107
  %v1788 = vunpack.c.h.b16 %v107
  %v1789 = vunpack.c.l.b16 %v108
  %v1790 = vunpack.c.h.b16 %v108
  %v1791 = vunpack.c.l.b16 %v109
  %v1792 = vunpack.c.h.b16 %v109
  %v1793 = vunpack.c.l.b16 %v110
  %v1794 = vunpack.c.h.b16 %v110
  %v1795 = vunpack.c.l.b16 %v111
  %v1796 = vunpack.c.h.b16 %v111
  %v1797 = vunpack.c.l.b16 %v112
  %v1798 = vunpack.c.h.b16 %v112
  %v1799 = vunpack.c.l.b16 %v113
  %v1800 = vunpack.c.h.b16 %v113
  %v1801 = vunpack.c.l.b16 %v114
  %v1802 = vunpack.c.l.b16 %v115
  %v1803 = vunpack.c.h.b16 %v115
  %v1804 = vunpack.c.l.b16 %v116
  %v1805 = vunpack.c.h.b16 %v116
  %v1806 = vunpack.c.l.b16 %v117
  %v1807 = vunpack.c.h.b16 %v117
  %v1808 = vunpack.c.l.b16 %v118
  %v1809 = vunpack.c.h.b16 %v118
  %v1810 = vunpack.c.l.b16 %v119
  %v1811 = vunpack.c.h.b16 %v119
  %v1812 = vunpack.c.l.b16 %v120
  %v1813 = vunpack.c.h.b16 %v120
  %v1814 = vunpack.c.l.b16 %v121
  %v1815 = vunpack.c.h.b16 %v121
  %v1816 = vunpack.c.l.b16 %v122
  %v1817 = vunpack.c.h.b16 %v122
  %v1818 = vunpack.c.l.b16 %v123
  %v1819 = vunpack.c.h.b16 %v123
  %v1820 = vunpack.c.l.b16 %v124
  %v1821 = vunpack.c.h.b16 %v124
  %v1822 = vunpack.c.l.b16 %v125
  %v1823 = vunpack.c.h.b16 %v125
  %v1824 = vunpack.c.l.b16 %v126
  %v1825 = vunpack.c.h.b16 %v126
  %v1826 = vunpack.c.l.b16 %v127
  %v1827 = vunpack.c.h.b16 %v127
  %v1828 = vunpack.c.l.b16 %v128
  %v1829 = vunpack.c.h.b16 %v128
  %v1830 = vunpack.c.l.b16 %v129
  %v1831 = vunpack.c.h.b16 %v129
  %v1832 = vunpack.c.l.b16 %v130
  %v1833 = vunpack.c.h.b16 %v130
  %v1834 = vunpack.c.l.b16 %v131
  %v1835 = vunpack.c.h.b16 %v131
  %v1836 = vunpack.c.l.b16 %v132
  %v1837 = vunpack.c.h.b16 %v132
  %v1838 = vunpack.c.l.b16 %v133
  %v1839 = vunpack.c.h.b16 %v133
  %v1840 = vunpack.c.l.b16 %v134
  %v1841 = vunpack.c.h.b16 %v134
  %v1842 = vunpack.c.l.b16 %v135
  %v1843 = vunpack.c.h.b16 %v135
  %v1844 = vunpack.c.l.b16 %v136
  %v1845 = vunpack.c.h.b16 %v136
  %v1846 = vunpack.c.l.b16 %v137
  %v1847 = vunpack.c.h.b16 %v137
  %v1848 = vunpack.c.l.b16 %v138
  %v1849 = vunpack.c.h.b16 %v138
  %v1850 = vunpack.c.l.b16 %v139
  %v1851 = vunpack.c.l.b16 %v140
  %v1852 = vunpack.c.h.b16 %v140
  %v1853 = vunpack.c.l.b16 %v141
  %v1854 = vunpack.c.h.b16 %v141
  %v1855 = vunpack.c.l.b16 %v142
  %v1856 = vunpack.c.h.b16 %v142
  %v1857 = vunpack.c.l.b16 %v143
  %v1858 = vunpack.c.h.b16 %v143
  %v1859 = vunpack.c.l.b16 %v144
  %v1860 = vunpack.c.h.b16 %v144
  %v1861 = vunpack.c.l.b16 %v145
  %v1862 = vunpack.c.h.b16 %v145
  %v1863 = vunpack.c.l.b16 %v146
  %v1864 = vunpack.c.h.b16 %v146
  %v1865 = vunpack.c.l.b16 %v147
  %v1866 = vunpack.c.h.b16 %v147
  %v1867 = vunpack.c.l.b16 %v148
  %v1868 = vunpack.c.h.b16 %v148
  %v1869 = vunpack.c.l.b16 %v149
  %v1870 = vunpack.c.h.b16 %v149
  %v1871 = vunpack.c.l.b16 %v150
  %v1872 = vunpack.c.h.b16 %v150
  %v1873 = vunpack.c.l.b16 %v151
  %v1874 = vunpack.c.h.b16 %v151
  %v1875 = vunpack.c.l.b16 %v152
  %v1876 = vunpack.c.h.b16 %v152
  %v1877 = vunpack.c.l.b16 %v153
  %v1878 = vunpack.c.h.b16 %v153
  %v1879 = vunpack.c.l.b16 %v154
  %v1880 = vunpack.c.h.b16 %v154
  %v1881 = vunpack.c.l.b16 %v155
  %v1882 = vunpack.c.h.b16 %v155
  %v1883 = vunpack.c.l.b16 %v156
  %v1884 = vunpack.c.h.b16 %v156
  %v1885 = vunpack.c.l.b16 %v157
  %v1886 = vunpack.c.h.b16 %v157
  %v1887 = vunpack.c.l.b16 %v158
  %v1888 = vunpack.c.h.b16 %v158
  %v1889 = vunpack.c.l.b16 %v159
  %v1890 = vunpack.c.h.b16 %v159
  %v1891 = vunpack.c.l.b16 %v160
  %v1892 = vunpack.c.h.b16 %v160
  %v1893 = vunpack.c.l.b16 %v161
  %v1894 = vunpack.c.h.b16 %v161
  %v1895 = vunpack.c.l.b16 %v162
  %v1896 = vunpack.c.h.b16 %v162
  %v1897 = vunpack.c.l.b16 %v163
  %v1898 = vunpack.c.h.b16 %v163
  %v1899 = vunpack.c.l.b16 %v164
  %v1900 = vunpack.c.l.b16 %v165
  %v1901 = vunpack.c.h.b16 %v165
  %v1902 = vunpack.c.l.b16 %v166
  %v1903 = vunpack.c.h.b16 %v166
  %v1904 = vunpack.c.l.b16 %v167
  %v1905 = vunpack.c.h.b16 %v167
  %v1906 = vunpack.c.l.b16 %v168
  %v1907 = vunpack.c.h.b16 %v168
  %v1908 = vunpack.c.l.b16 %v169
  %v1909 = vunpack.c.h.b16 %v169
  %v1910 = vunpack.c.l.b16 %v170
  %v1911 = vunpack.c.h.b16 %v170
  %v1912 = vunpack.c.l.b16 %v171
  %v1913 = vunpack.c.h.b16 %v171
  %v1914 = vunpack.c.l.b16 %v172
  %v1915 = vunpack.c.h.b16 %v172
  %v1916 = vunpack.c.l.b16 %v173
  %v1917 = vunpack.c.h.b16 %v173
  %v1918 = vunpack.c.l.b16 %v174
  %v1919 = vunpack.c.h.b16 %v174
  %v1920 = vunpack.c.l.b16 %v175
  %v1921 = vunpack.c.h.b16 %v175
  %v1922 = vunpack.c.l.b16 %v176
  %v1923 = vunpack.c.h.b16 %v176
  %v1924 = vunpack.c.l.b16 %v177
  %v1925 = vunpack.c.h.b16 %v177
  %v1926 = vunpack.c.l.b16 %v178
  %v1927 = vunpack.c.h.b16 %v178
  %v1928 = vunpack.c.l.b16 %v179
  %v1929 = vunpack.c.h.b16 %v179
  %v1930 = vunpack.c.l.b16 %v180
  %v1931 = vunpack.c.h.b16 %v180
  %v1932 = vunpack.c.l.b16 %v181
  %v1933 = vunpack.c.h.b16 %v181
  %v1934 = vunpack.c.l.b16 %v182
  %v1935 = vunpack.c.h.b16 %v182
  %v1936 = vunpack.c.l.b16 %v183
  %v1937 = vunpack.c.h.b16 %v183
  %v1938 = vunpack.c.l.b16 %v184
  %v1939 = vunpack.c.h.b16 %v184
  %v1940 = vunpack.c.l.b16 %v185
  %v1941 = vunpack.c.h.b16 %v185
  %v1942 = vunpack.c.l.b16 %v186
  %v1943 = vunpack.c.h.b16 %v186
  %v1944 = vunpack.c.l.b16 %v187
  %v1945 = vunpack.c.h.b16 %v187
  %v1946 = vunpack.c.l.b16 %v188
  %v1947 = vunpack.c.h.b16 %v188
  %v1948 = vunpack.c.l.b16 %v189
  %v1949 = vunpack.c.l.b16 %v190
  %v1950 = vunpack.c.h.b16 %v190
  %v1951 = vunpack.c.l.b16 %v191
  %v1952 = vunpack.c.h.b16 %v191
  %v1953 = vunpack.c.l.b16 %v192
  %v1954 = vunpack.c.h.b16 %v192
  %v1955 = vunpack.c.l.b16 %v193
  %v1956 = vunpack.c.h.b16 %v193
  %v1957 = vunpack.c.l.b16 %v194
  %v1958 = vunpack.c.h.b16 %v194
  %v1959 = vunpack.c.l.b16 %v195
  %v1960 = vunpack.c.h.b16 %v195
  %v1961 = vunpack.c.l.b16 %v196
  %v1962 = vunpack.c.h.b16 %v196
  %v1963 = vunpack.c.l.b16 %v197
  %v1964 = vunpack.c.h.b16 %v197
  %v1965 = vunpack.c.l.b16 %v198
  %v1966 = vunpack.c.h.b16 %v198
  %v1967 = vunpack.c.l.b16 %v199
  %v1968 = vunpack.c.h.b16 %v199
  %v1969 = vunpack.c.l.b16 %v200
  %v1970 = vunpack.c.h.b16 %v200
  %v1971 = vunpack.c.l.b16 %v201
  %v1972 = vunpack.c.h.b16 %v201
  %v1973 = vunpack.c.l.b16 %v202
  %v1974 = vunpack.c.h.b16 %v202
  %v1975 = vunpack.c.l.b16 %v203
  %v1976 = vunpack.c.h.b16 %v203
  %v1977 = vunpack.c.l.b16 %v204
  %v1978 = vunpack.c.h.b16 %v204
  %v1979 = vunpack.c.l.b16 %v205
  %v1980 = vunpack.c.h.b16 %v205
  %v1981 = vunpack.c.l.b16 %v206
  %v1982 = vunpack.c.h.b16 %v206
  %v1983 = vunpack.c.l.b16 %v207
  %v1984 = vunpack.c.h.b16 %v207
  %v1985 = vunpack.c.l.b16 %v208
  %v1986 = vunpack.c.h.b16 %v208
  %v1987 = vunpack.c.l.b16 %v209
  %v1988 = vunpack.c.h.b16 %v209
  %v1989 = vunpack.c.l.b16 %v210
  %v1990 = vunpack.c.h.b16 %v210
  %v1991 = vunpack.c.l.b16 %v211
  %v1992 = vunpack.c.h.b16 %v211
  %v1993 = vunpack.c.l.b16 %v212
  %v1994 = vunpack.c.h.b16 %v212
  %v1995 = vunpack.c.l.b16 %v213
  %v1996 = vunpack.c.h.b16 %v213
  %v1997 = vunpack.c.l.b16 %v214
  %v1998 = vunpack.c.l.b16 %v215
  %v1999 = vunpack.c.h.b16 %v215
  %v2000 = vunpack.c.l.b16 %v216
  %v2001 = vunpack.c.h.b16 %v216
  %v2002 = vunpack.c.l.b16 %v217
  %v2003 = vunpack.c.h.b16 %v217
  %v2004 = vunpack.c.l.b16 %v218
  %v2005 = vunpack.c.h.b16 %v218
  %v2006 = vunpack.c.l.b16 %v219
  %v2007 = vunpack.c.h.b16 %v219
  %v2008 = vunpack.c.l.b16 %v220
  %v2009 = vunpack.c.h.b16 %v220
  %v2010 = vunpack.c.l.b16 %v221
  %v2011 = vunpack.c.h.b16 %v221
  %v2012 = vunpack.c.l.b16 %v222
  %v2013 = vunpack.c.h.b16 %v222
  %v2014 = vunpack.c.l.b16 %v223
  %v2015 = vunpack.c.h.b16 %v223
  %v2016 = vunpack.c.l.b16 %v224
  %v2017 = vunpack.c.h.b16 %v224
  %v2018 = vunpack.c.l.b16 %v225
  %v2019 = vunpack.c.h.b16 %v225
  %v2020 = vunpack.c.l.b16 %v226
  %v2021 = vunpack.c.h.b16 %v226
  %v2022 = vunpack.c.l.b16 %v227
  %v2023 = vunpack.c.h.b16 %v227
  %v2024 = vunpack.c.l.b16 %v228
  %v2025 = vunpack.c.h.b16 %v228
  %v2026 = vunpack.c.l.b16 %v229
  %v2027 = vunpack.c.h.b16 %v229
  %v2028 = vunpack.c.l.b16 %v230
  %v2029 = vunpack.c.h.b16 %v230
  %v2030 = vunpack.c.l.b16 %v231
  %v2031 = vunpack.c.h.b16 %v231
  %v2032 = vunpack.c.l.b16 %v232
  %v2033 = vunpack.c.h.b16 %v232
  %v2034 = vunpack.c.l.b16 %v233
  %v2035 = vunpack.c.h.b16 %v233
  %v2036 = vunpack.c.l.b16 %v234
  %v2037 = vunpack.c.h.b16 %v234
  %v2038 = vunpack.c.l.b16 %v235
  %v2039 = vunpack.c.h.b16 %v235
  %v2040 = vunpack.c.l.b16 %v236
  %v2041 = vunpack.c.h.b16 %v236
  %v2042 = vunpack.c.l.b16 %v237
  %v2043 = vunpack.c.h.b16 %v237
  %v2044 = vunpack.c.l.b16 %v238
  %v2045 = vunpack.c.h.b16 %v238
  %v2046 = vunpack.c.l.b16 %v239
  %v2047 = vunpack.c.l.b16 %v240
  %v2048 = vunpack.c.h.b16 %v240
  %v2049 = vunpack.c.l.b16 %v241
  %v2050 = vunpack.c.h.b16 %v241
  %v2051 = vunpack.c.l.b16 %v242
  %v2052 = vunpack.c.h.b16 %v242
  %v2053 = vunpack.c.l.b16 %v243
  %v2054 = vunpack.c.h.b16 %v243
  %v2055 = vunpack.c.l.b16 %v244
  %v2056 = vunpack.c.h.b16 %v244
  %v2057 = vunpack.c.l.b16 %v245
  %v2058 = vunpack.c.h.b16 %v245
  %v2059 = vunpack.c.l.b16 %v246
  %v2060 = vunpack.c.h.b16 %v246
  %v2061 = vunpack.c.l.b16 %v247
  %v2062 = vunpack.c.h.b16 %v247
  %v2063 = vunpack.c.l.b16 %v248
  %v2064 = vunpack.c.h.b16 %v248
  %v2065 = vunpack.c.l.b16 %v249
  %v2066 = vunpack.c.h.b16 %v249
  %v2067 = vunpack.c.l.b16 %v250
  %v2068 = vunpack.c.h.b16 %v250
  %v2069 = vunpack.c.l.b16 %v251
  %v2070 = vunpack.c.h.b16 %v251
  %v2071 = vunpack.c.l.b16 %v252
  %v2072 = vunpack.c.h.b16 %v252
  %v2073 = vunpack.c.l.b16 %v253
  %v2074 = vunpack.c.h.b16 %v253
  %v2075 = vunpack.c.l.b16 %v254
  %v2076 = vunpack.c.h.b16 %v254
  %v2077 = vunpack.c.l.b16 %v255
  %v2078 = vunpack.c.h.b16 %v255
  %v2079 = vunpack.c.l.b16 %v256
  %v2080 = vunpack.c.h.b16 %v256
  %v2081 = vunpack.c.l.b16 %v257
  %v2082 = vunpack.c.h.b16 %v257
  %v2083 = vunpack.c.l.b16 %v258
  %v2084 = vunpack.c.h.b16 %v258
  %v2085 = vunpack.c.l.b16 %v259
  %v2086 = vunpack.c.h.b16 %v259
  %v2087 = vunpack.c.l.b16 %v260
  %v2088 = vunpack.c.h.b16 %v260
  %v2089 = vunpack.c.l.b16 %v261
  %v2090 = vunpack.c.h.b16 %v261
  %v2091 = vunpack.c.l.b16 %v262
  %v2092 = vunpack.c.h.b16 %v262
  %v2093 = vunpack.c.l.b16 %v263
  %v2094 = vunpack.c.h.b16 %v263
  %v2095 = vunpack.c.l.b16 %v264
  %v2096 = vunpack.c.l.b16 %v265
  %v2097 = vunpack.c.h.b16 %v265
  %v2098 = vunpack.c.l.b16 %v266
  %v2099 = vunpack.c.h.b16 %v266
  %v2100 = vunpack.c.l.b16 %v267
  %v2101 = vunpack.c.h.b16 %v267
  %v2102 = vunpack.c.l.b16 %v268
  %v2103 = vunpack.c.h.b16 %v268
  %v2104 = vunpack.c.l.b16 %v269
  %v2105 = vunpack.c.h.b16 %v269
  %v2106 = vunpack.c.l.b16 %v270
  %v2107 = vunpack.c.h.b16 %v270
  %v2108 = vunpack.c.l.b16 %v271
  %v2109 = vunpack.c.h.b16 %v271
  %v2110 = vunpack.c.l.b16 %v272
  %v2111 = vunpack.c.h.b16 %v272
  %v2112 = vunpack.c.l.b16 %v273
  %v2113 = vunpack.c.h.b16 %v273
  %v2114 = vunpack.c.l.b16 %v274
  %v2115 = vunpack.c.h.b16 %v274
  %v2116 = vunpack.c.l.b16 %v275
  %v2117 = vunpack.c.h.b16 %v275
  %v2118 = vunpack.c.l.b16 %v276
  %v2119 = vunpack.c.h.b16 %v276
  %v2120 = vunpack.c.l.b16 %v277
  %v2121 = vunpack.c.h.b16 %v277
  %v2122 = vunpack.c.l.b16 %v278
  %v2123 = vunpack.c.h.b16 %v278
  %v2124 = vunpack.c.l.b16 %v279
  %v2125 = vunpack.c.h.b16 %v279
  %v2126 = vunpack.c.l.b16 %v280
  %v2127 = vunpack.c.h.b16 %v280
  %v2128 = vunpack.c.l.b16 %v281
  %v2129 = vunpack.c.h.b16 %v281
  %v2130 = vunpack.c.l.b16 %v282
  %v2131 = vunpack.c.h.b16 %v282
  %v2132 = vunpack.c.l.b16 %v283
  %v2133 = vunpack.c.h.b16 %v283
  %v2134 = vunpack.c.l.b16 %v284
  %v2135 = vunpack.c.h.b16 %v284
  %v2136 = vunpack.c.l.b16 %v285
  %v2137 = vunpack.c.h.b16 %v285
  %v2138 = vunpack.c.l.b16 %v286
  %v2139 = vunpack.c.h.b16 %v286
  %v2140 = vunpack.c.l.b16 %v287
  %v2141 = vunpack.c.h.b16 %v287
  %v2142 = vunpack.c.l.b16 %v288
  %v2143 = vunpack.c.h.b16 %v288
  %v2144 = vunpack.c.l.b16 %v289
  %v2145 = vunpack.c.l.b16 %v290
  %v2146 = vunpack.c.h.b16 %v290
  %v2147 = vunpack.c.l.b16 %v291
  %v2148 = vunpack.c.h.b16 %v291
  %v2149 = vunpack.c.l.b16 %v292
  %v2150 = vunpack.c.h.b16 %v292
  %v2151 = vunpack.c.l.b16 %v293
  %v2152 = vunpack.c.h.b16 %v293
  %v2153 = vunpack.c.l.b16 %v294
  %v2154 = vunpack.c.h.b16 %v294
  %v2155 = vunpack.c.l.b16 %v295
  %v2156 = vunpack.c.h.b16 %v295
  %v2157 = vunpack.c.l.b16 %v296
  %v2158 = vunpack.c.h.b16 %v296
  %v2159 = vunpack.c.l.b16 %v297
  %v2160 = vunpack.c.h.b16 %v297
  %v2161 = vunpack.c.l.b16 %v298
  %v2162 = vunpack.c.h.b16 %v298
  %v2163 = vunpack.c.l.b16 %v299
  %v2164 = vunpack.c.h.b16 %v299
  %v2165 = vunpack.c.l.b16 %v300
  %v2166 = vunpack.c.h.b16 %v300
  %v2167 = vunpack.c.l.b16 %v301
  %v2168 = vunpack.c.h.b16 %v301
  %v2169 = vunpack.c.l.b16 %v302
  %v2170 = vunpack.c.h.b16 %v302
  %v2171 = vunpack.c.l.b16 %v303
  %v2172 = vunpack.c.h.b16 %v303
  %v2173 = vunpack.c.l.b16 %v304
  %v2174 = vunpack.c.h.b16 %v304
  %v2175 = vunpack.c.l.b16 %v305
  %v2176 = vunpack.c.h.b16 %v305
  %v2177 = vunpack.c.l.b16 %v306
  %v2178 = vunpack.c.h.b16 %v306
  %v2179 = vunpack.c.l.b16 %v307
  %v2180 = vunpack.c.h.b16 %v307
  %v2181 = vunpack.c.l.b16 %v308
  %v2182 = vunpack.c.h.b16 %v308
  %v2183 = vunpack.c.l.b16 %v309
  %v2184 = vunpack.c.h.b16 %v309
  %v2185 = vunpack.c.l.b16 %v310
  %v2186 = vunpack.c.h.b16 %v310
  %v2187 = vunpack.c.l.b16 %v311
  %v2188 = vunpack.c.h.b16 %v311
  %v2189 = vunpack.c.l.b16 %v312
  %v2190 = vunpack.c.h.b16 %v312
  %v2191 = vunpack.c.l.b16 %v313
  %v2192 = vunpack.c.h.b16 %v313
  %v2193 = vunpack.c.l.b16 %v314
  %v2194 = vunpack.c.l.b16 %v315
  %v2195 = vunpack.c.h.b16 %v315
  %v2196 = vunpack.c.l.b16 %v316
  %v2197 = vunpack.c.h.b16 %v316
  %v2198 = vunpack.c.l.b16 %v317
  %v2199 = vunpack.c.h.b16 %v317
  %v2200 = vunpack.c.l.b16 %v318
  %v2201 = vunpack.c.h.b16 %v318
  %v2202 = vunpack.c.l.b16 %v319
  %v2203 = vunpack.c.h.b16 %v319
  %v2204 = vunpack.c.l.b16 %v320
  %v2205 = vunpack.c.h.b16 %v320
  %v2206 = vunpack.c.l.b16 %v321
  %v2207 = vunpack.c.h.b16 %v321
  %v2208 = vunpack.c.l.b16 %v322
  %v2209 = vunpack.c.h.b16 %v322
  %v2210 = vunpack.c.l.b16 %v323
  %v2211 = vunpack.c.h.b16 %v323
  %v2212 = vunpack.c.l.b16 %v324
  %v2213 = vunpack.c.h.b16 %v324
  %v2214 = vunpack.c.l.b16 %v325
  %v2215 = vunpack.c.h.b16 %v325
  %v2216 = vunpack.c.l.b16 %v326
  %v2217 = vunpack.c.h.b16 %v326
  %v2218 = vunpack.c.l.b16 %v327
  %v2219 = vunpack.c.h.b16 %v327
  %v2220 = vunpack.c.l.b16 %v328
  %v2221 = vunpack.c.h.b16 %v328
  %v2222 = vunpack.c.l.b16 %v329
  %v2223 = vunpack.c.h.b16 %v329
  %v2224 = vunpack.c.l.b16 %v330
  %v2225 = vunpack.c.h.b16 %v330
  %v2226 = vunpack.c.l.b16 %v331
  %v2227 = vunpack.c.h.b16 %v331
  %v2228 = vunpack.c.l.b16 %v332
  %v2229 = vunpack.c.h.b16 %v332
  %v2230 = vunpack.c.l.b16 %v333
  %v2231 = vunpack.c.h.b16 %v333
  %v2232 = vunpack.c.l.b16 %v334
  %v2233 = vunpack.c.h.b16 %v334
  %v2234 = vunpack.c.l.b16 %v335
  %v2235 = vunpack.c.h.b16 %v335
  %v2236 = vunpack.c.l.b16 %v336
  %v2237 = vunpack.c.h.b16 %v336
  %v2238 = vunpack.c.l.b16 %v337
  %v2239 = vunpack.c.h.b16 %v337
  %v2240 = vunpack.c.l.b16 %v338
  %v2241 = vunpack.c.h.b16 %v338
  %v2242 = vunpack.c.l.b16 %v339
  %v2243 = vunpack.c.l.b16 %v340
  %v2244 = vunpack.c.h.b16 %v340
  %v2245 = vunpack.c.l.b16 %v341
  %v2246 = vunpack.c.h.b16 %v341
  %v2247 = vunpack.c.l.b16 %v342
  %v2248 = vunpack.c.h.b16 %v342
  %v2249 = vunpack.c.l.b16 %v343
  %v2250 = vunpack.c.h.b16 %v343
  %v2251 = vunpack.c.l.b16 %v344
  %v2252 = vunpack.c.h.b16 %v344
  %v2253 = vunpack.c.l.b16 %v345
  %v2254 = vunpack.c.h.b16 %v345
  %v2255 = vunpack.c.l.b16 %v346
  %v2256 = vunpack.c.h.b16 %v346
  %v2257 = vunpack.c.l.b16 %v347
  %v2258 = vunpack.c.h.b16 %v347
  %v2259 = vunpack.c.l.b16 %v348
  %v2260 = vunpack.c.h.b16 %v348
  %v2261 = vunpack.c.l.b16 %v349
  %v2262 = vunpack.c.h.b16 %v349
  %v2263 = vunpack.c.l.b16 %v350
  %v2264 = vunpack.c.h.b16 %v350
  %v2265 = vunpack.c.l.b16 %v351
  %v2266 = vunpack.c.h.b16 %v351
  %v2267 = vunpack.c.l.b16 %v352
  %v2268 = vunpack.c.h.b16 %v352
  %v2269 = vunpack.c.l.b16 %v353
  %v2270 = vunpack.c.h.b16 %v353
  %v2271 = vunpack.c.l.b16 %v354
  %v2272 = vunpack.c.h.b16 %v354
  %v2273 = vunpack.c.l.b16 %v355
  %v2274 = vunpack.c.h.b16 %v355
  %v2275 = vunpack.c.l.b16 %v356
  %v2276 = vunpack.c.h.b16 %v356
  %v2277 = vunpack.c.l.b16 %v357
  %v2278 = vunpack.c.h.b16 %v357
  %v2279 = vunpack.c.l.b16 %v358
  %v2280 = vunpack.c.h.b16 %v358
  %v2281 = vunpack.c.l.b16 %v359
  %v2282 = vunpack.c.h.b16 %v359
  %v2283 = vunpack.c.l.b16 %v360
  %v2284 = vunpack.c.h.b16 %v360
  %v2285 = vunpack.c.l.b16 %v361
  %v2286 = vunpack.c.h.b16 %v361
  %v2287 = vunpack.c.l.b16 %v362
  %v2288 = vunpack.c.h.b16 %v362
  %v2289 = vunpack.c.l.b16 %v363
  %v2290 = vunpack.c.h.b16 %v363
  %v2291 = vunpack.c.l.b16 %v364
  %v2292 = vunpack.c.l.b16 %v365
  %v2293 = vunpack.c.h.b16 %v365
  %v2294 = vunpack.c.l.b16 %v366
  %v2295 = vunpack.c.h.b16 %v366
  %v2296 = vunpack.c.l.b16 %v367
  %v2297 = vunpack.c.h.b16 %v367
  %v2298 = vunpack.c.l.b16 %v368
  %v2299 = vunpack.c.h.b16 %v368
  %v2300 = vunpack.c.l.b16 %v369
  %v2301 = vunpack.c.h.b16 %v369
  %v2302 = vunpack.c.l.b16 %v370
  %v2303 = vunpack.c.h.b16 %v370
  %v2304 = vunpack.c.l.b16 %v371
  %v2305 = vunpack.c.h.b16 %v371
  %v2306 = vunpack.c.l.b16 %v372
  %v2307 = vunpack.c.h.b16 %v372
  %v2308 = vunpack.c.l.b16 %v373
  %v2309 = vunpack.c.h.b16 %v373
  %v2310 = vunpack.c.l.b16 %v374
  %v2311 = vunpack.c.h.b16 %v374
  %v2312 = vunpack.c.l.b16 %v375
  %v2313 = vunpack.c.h.b16 %v375
  %v2314 = vunpack.c.l.b16 %v376
  %v2315 = vunpack.c.h.b16 %v376
  %v2316 = vunpack.c.l.b16 %v377
  %v2317 = vunpack.c.h.b16 %v377
  %v2318 = vunpack.c.l.b16 %v378
  %v2319 = vunpack.c.h.b16 %v378
  %v2320 = vunpack.c.l.b16 %v379
  %v2321 = vunpack.c.h.b16 %v379
  %v2322 = vunpack.c.l.b16 %v380
  %v2323 = vunpack.c.h.b16 %v380
  %v2324 = vunpack.c.l.b16 %v381
  %v2325 = vunpack.c.h.b16 %v381
  %v2326 = vunpack.c.l.b16 %v382
  %v2327 = vunpack.c.h.b16 %v382
  %v2328 = vunpack.c.l.b16 %v383
  %v2329 = vunpack.c.h.b16 %v383
  %v2330 = vunpack.c.l.b16 %v384
  %v2331 = vunpack.c.h.b16 %v384
  %v2332 = vunpack.c.l.b16 %v385
  %v2333 = vunpack.c.h.b16 %v385
  %v2334 = vunpack.c.l.b16 %v386
  %v2335 = vunpack.c.h.b16 %v386
  %v2336 = vunpack.c.l.b16 %v387
  %v2337 = vunpack.c.h.b16 %v387
  %v2338 = vunpack.c.l.b16 %v388
  %v2339 = vunpack.c.h.b16 %v388
  %v2340 = vunpack.c.l.b16 %v389
  %v2341 = vunpack.c.l.b16 %v390
  %v2342 = vunpack.c.h.b16 %v390
  %v2343 = vunpack.c.l.b16 %v391
  %v2344 = vunpack.c.h.b16 %v391
  %v2345 = vunpack.c.l.b16 %v392
  %v2346 = vunpack.c.h.b16 %v392
  %v2347 = vunpack.c.l.b16 %v393
  %v2348 = vunpack.c.h.b16 %v393
  %v2349 = vunpack.c.l.b16 %v394
  %v2350 = vunpack.c.h.b16 %v394
  %v2351 = vunpack.c.l.b16 %v395
  %v2352 = vunpack.c.h.b16 %v395
  %v2353 = vunpack.c.l.b16 %v396
  %v2354 = vunpack.c.h.b16 %v396
  %v2355 = vunpack.c.l.b16 %v397
  %v2356 = vunpack.c.h.b16 %v397
  %v2357 = vunpack.c.l.b16 %v398
  %v2358 = vunpack.c.h.b16 %v398
  %v2359 = vunpack.c.l.b16 %v399
  %v2360 = vunpack.c.h.b16 %v399
  %v2361 = vunpack.c.l.b16 %v400
  %v2362 = vunpack.c.h.b16 %v400
  %v2363 = vunpack.c.l.b16 %v401
  %v2364 = vunpack.c.h.b16 %v401
  %v2365 = vunpack.c.l.b16 %v402
  %v2366 = vunpack.c.h.b16 %v402
  %v2367 = vunpack.c.l.b16 %v403
  %v2368 = vunpack.c.h.b16 %v403
  %v2369 = vunpack.c.l.b16 %v404
  %v2370 = vunpack.c.h.b16 %v404
  %v2371 = vunpack.c.l.b16 %v405
  %v2372 = vunpack.c.h.b16 %v405
  %v2373 = vunpack.c.l.b16 %v406
  %v2374 = vunpack.c.h.b16 %v406
  %v2375 = vunpack.c.l.b16 %v407
  %v2376 = vunpack.c.h.b16 %v407
  %v2377 = vunpack.c.l.b16 %v408
  %v2378 = vunpack.c.h.b16 %v408
  %v2379 = vunpack.c.l.b16 %v409
  %v2380 = vunpack.c.h.b16 %v409
  %v2381 = vunpack.c.l.b16 %v410
  %v2382 = vunpack.c.h.b16 %v410
  %v2383 = vunpack.c.l.b16 %v411
  %v2384 = vunpack.c.h.b16 %v411
  %v2385 = vunpack.c.l.b16 %v412
  %v2386 = vunpack.c.h.b16 %v412
  %v2387 = vunpack.c.l.b16 %v413
  %v2388 = vunpack.c.h.b16 %v413
  %v2389 = vunpack.c.l.b16 %v414
  %v2390 = vpack.c.b16 %v1655, %v1606
  %v2391 = vpack.c.b16 %v1656, %v1607
  %v2392 = vpack.c.b16 %v1657, %v1608
  %v2393 = vpack.c.b16 %v1658, %v1609
  %v2394 = vpack.c.b16 %v1659, %v1610
  %v2395 = vpack.c.b16 %v1660, %v1611
  %v2396 = vpack.c.b16 %v1661, %v1612
  %v2397 = vpack.c.b16 %v1662, %v1613
  %v2398 = vpack.c.b16 %v1663, %v1614
  %v2399 = vpack.c.b16 %v1664, %v1615
  %v2400 = vpack.c.b16 %v1665, %v1616
  %v2401 = vpack.c.b16 %v1666, %v1617
  %v2402 = vpack.c.b16 %v1667, %v1618
  %v2403 = vpack.c.b16 %v1668, %v1619
  %v2404 = vpack.c.b16 %v1669, %v1620
  %v2405 = vpack.c.b16 %v1670, %v1621
  %v2406 = vpack.c.b16 %v1671, %v1622
  %v2407 = vpack.c.b16 %v1672, %v1623
  %v2408 = vpack.c.b16 %v1673, %v1624
  %v2409 = vpack.c.b16 %v1674, %v1625
  %v2410 = vpack.c.b16 %v1675, %v1626
  %v2411 = vpack.c.b16 %v1676, %v1627
  %v2412 = vpack.c.b16 %v1677, %v1628
  %v2413 = vpack.c.b16 %v1678, %v1629
  %v2414 = vpack.c.b16 %v1679, %v1630
  %v2415 = vpack.c.b16 %v1680, %v1631
  %v2416 = vpack.c.b16 %v1681, %v1632
  %v2417 = vpack.c.b16 %v1682, %v1633
  %v2418 = vpack.c.b16 %v1683, %v1634
  %v2419 = vpack.c.b16 %v1684, %v1635
  %v2420 = vpack.c.b16 %v1685, %v1636
  %v2421 = vpack.c.b16 %v1686, %v1637
  %v2422 = vpack.c.b16 %v1687, %v1638
  %v2423 = vpack.c.b16 %v1688, %v1639
  %v2424 = vpack.c.b16 %v1689, %v1640
  %v2425 = vpack.c.b16 %v1690, %v1641
  %v2426 = vpack.c.b16 %v1691, %v1642
  %v2427 = vpack.c.b16 %v1692, %v1643
  %v2428 = vpack.c.b16 %v1693, %v1644
  %v2429 = vpack.c.b16 %v1694, %v1645
  %v2430 = vpack.c.b16 %v1695, %v1646
  %v2431 = vpack.c.b16 %v1696, %v1647
  %v2432 = vpack.c.b16 %v1697, %v1648
  %v2433 = vpack.c.b16 %v1698, %v1649
  %v2434 = vpack.c.b16 %v1699, %v1650
  %v2435 = vpack.c.b16 %v1700, %v1651
  %v2436 = vpack.c.b16 %v1701, %v1652
  %v2437 = vpack.c.b16 %v1702, %v1653
  %v2438 = vpack.c.b16 %v1703, %v1654
  %v2439 = vpack.c.b16 %v1753, %v1704
  %v2440 = vpack.c.b16 %v1754, %v1705
  %v2441 = vpack.c.b16 %v1755, %v1706
  %v2442 = vpack.c.b16 %v1756, %v1707
  %v2443 = vpack.c.b16 %v1757, %v1708
  %v2444 = vpack.c.b16 %v1758, %v1709
  %v2445 = vpack.c.b16 %v1759, %v1710
  %v2446 = vpack.c.b16 %v1760, %v1711
  %v2447 = vpack.c.b16 %v1761, %v1712
  %v2448 = vpack.c.b16 %v1762, %v1713
  %v2449 = vpack.c.b16 %v1763, %v1714
  %v2450 = vpack.c.b16 %v1764, %v1715
  %v2451 = vpack.c.b16 %v1765, %v1716
  %v2452 = vpack.c.b16 %v1766, %v1717
  %v2453 = vpack.c.b16 %v1767, %v1718
  %v2454 = vpack.c.b16 %v1768, %v1719
  %v2455 = vpack.c.b16 %v1769, %v1720
  %v2456 = vpack.c.b16 %v1770, %v1721
  %v2457 = vpack.c.b16 %v1771, %v1722
  %v2458 = vpack.c.b16 %v1772, %v1723
  %v2459 = vpack.c.b16 %v1773, %v1724
  %v2460 = vpack.c.b16 %v1774, %v1725
  %v2461 = vpack.c.b16 %v1775, %v1726
  %v2462 = vpack.c.b16 %v1776, %v1727
  %v2463 = vpack.c.b16 %v1777, %v1728
  %v2464 = vpack.c.b16 %v1778, %v1729
  %v2465 = vpack.c.b16 %v1779, %v1730
  %v2466 = vpack.c.b16 %v1780, %v1731
  %v2467 = vpack.c.b16 %v1781, %v1732
  %v2468 = vpack.c.b16 %v1782, %v1733
  %v2469 = vpack.c.b16 %v1783, %v1734
  %v2470 = vpack.c.b16 %v1784, %v1735
  %v2471 = vpack.c.b16 %v1785, %v1736
  %v2472 = vpack.c.b16 %v1786, %v1737
  %v2473 = vpack.c.b16 %v1787, %v1738
  %v2474 = vpack.c.b16 %v1788, %v1739
  %v2475 = vpack.c.b16 %v1789, %v1740
  %v2476 = vpack.c.b16 %v1790, %v1741
  %v2477 = vpack.c.b16 %v1791, %v1742
  %v2478 = vpack.c.b16 %v1792, %v1743
  %v2479 = vpack.c.b16 %v1793, %v1744
  %v2480 = vpack.c.b16 %v1794, %v1745
  %v2481 = vpack.c.b16 %v1795, %v1746
  %v2482 = vpack.c.b16 %v1796, %v1747
  %v2483 = vpack.c.b16 %v1797, %v1748
  %v2484 = vpack.c.b16 %v1798, %v1749
  %v2485 = vpack.c.b16 %v1799, %v1750
  %v2486 = vpack.c.b16 %v1800, %v1751
  %v2487 = vpack.c.b16 %v1801, %v1752
  %v2488 = vpack.c.b16 %v1851, %v1802
  %v2489 = vpack.c.b16 %v1852, %v1803
  %v2490 = vpack.c.b16 %v1853, %v1804
  %v2491 = vpack.c.b16 %v1854, %v1805
  %v2492 = vpack.c.b16 %v1855, %v1806
  %v2493 = vpack.c.b16 %v1856, %v1807
  %v2494 = vpack.c.b16 %v1857, %v1808
  %v2495 = vpack.c.b16 %v1858, %v1809
  %v2496 = vpack.c.b16 %v1859, %v1810
  %v2497 = vpack.c.b16 %v1860, %v1811
  %v2498 = vpack.c.b16 %v1861, %v1812
  %v2499 = vpack.c.b16 %v1862, %v1813
  %v2500 = vpack.c.b16 %v1863, %v1814
  %v2501 = vpack.c.b16 %v1864, %v1815
  %v2502 = vpack.c.b16 %v1865, %v1816
  %v2503 = vpack.c.b16 %v1866, %v1817
  %v2504 = vpack.c.b16 %v1867, %v1818
  %v2505 = vpack.c.b16 %v1868, %v1819
  %v2506 = vpack.c.b16 %v1869, %v1820
  %v2507 = vpack.c.b16 %v1870, %v1821
  %v2508 = vpack.c.b16 %v1871, %v1822
  %v2509 = vpack.c.b16 %v1872, %v1823
  %v2510 = vpack.c.b16 %v1873, %v1824
  %v2511 = vpack.c.b16 %v1874, %v1825
  %v2512 = vpack.c.b16 %v1875, %v1826
  %v2513 = vpack.c.b16 %v1876, %v1827
  %v2514 = vpack.c.b16 %v1877, %v1828
  %v2515 = vpack.c.b16 %v1878, %v1829
  %v2516 = vpack.c.b16 %v1879, %v1830
  %v2517 = vpack.c.b16 %v1880, %v1831
  %v2518 = vpack.c.b16 %v1881, %v1832
  %v2519 = vpack.c.b16 %v1882, %v1833
  %v2520 = vpack.c.b16 %v1883, %v1834
  %v2521 = vpack.c.b16 %v1884, %v1835
  %v2522 = vpack.c.b16 %v1885, %v1836
  %v2523 = vpack.c.b16 %v1886, %v1837
  %v2524 = vpack.c.b16 %v1887, %v1838
  %v2525 = vpack.c.b16 %v1888, %v1839
  %v2526 = vpack.c.b16 %v1889, %v1840
  %v2527 = vpack.c.b16 %v1890, %v1841
  %v2528 = vpack.c.b16 %v1891, %v1842
  %v2529 = vpack.c.b16 %v1892, %v1843
  %v2530 = vpack.c.b16 %v1893, %v1844
  %v2531 = vpack.c.b16 %v1894, %v1845
  %v2532 = vpack.c.b16 %v1895, %v1846
  %v2533 = vpack.c.b16 %v1896, %v1847
  %v2534 = vpack.c.b16 %v1897, %v1848
  %v2535 = vpack.c.b16 %v1898, %v1849
  %v2536 = vpack.c.b16 %v1899, %v1850
  %v2537 = vpack.c.b16 %v1949, %v1900
  %v2538 = vpack.c.b16 %v1950, %v1901
  %v2539 = vpack.c.b16 %v1951, %v1902
  %v2540 = vpack.c.b16 %v1952, %v1903
  %v2541 = vpack.c.b16 %v1953, %v1904
  %v2542 = vpack.c.b16 %v1954, %v1905
  %v2543 = vpack.c.b16 %v1955, %v1906
  %v2544 = vpack.c.b16 %v1956, %v1907
  %v2545 = vpack.c.b16 %v1957, %v1908
  %v2546 = vpack.c.b16 %v1958, %v1909
  %v2547 = vpack.c.b16 %v1959, %v1910
  %v2548 = vpack.c.b16 %v1960, %v1911
  %v2549 = vpack.c.b16 %v1961, %v1912
  %v2550 = vpack.c.b16 %v1962, %v1913
  %v2551 = vpack.c.b16 %v1963, %v1914
  %v2552 = vpack.c.b16 %v1964, %v1915
  %v2553 = vpack.c.b16 %v1965, %v1916
  %v2554 = vpack.c.b16 %v1966, %v1917
  %v2555 = vpack.c.b16 %v1967, %v1918
  %v2556 = vpack.c.b16 %v1968, %v1919
  %v2557 = vpack.c.b16 %v1969, %v1920
  %v2558 = vpack.c.b16 %v1970, %v1921
  %v2559 = vpack.c.b16 %v1971, %v1922
  %v2560 = vpack.c.b16 %v1972, %v1923
  %v2561 = vpack.c.b16 %v1973, %v1924
  %v2562 = vpack.c.b16 %v1974, %v1925
  %v2563 = vpack.c.b16 %v1975, %v1926
  %v2564 = vpack.c.b16 %v1976, %v1927
  %v2565 = vpack.c.b16 %v1977, %v1928
  %v2566 = vpack.c.b16 %v1978, %v1929
  %v2567 = vpack.c.b16 %v1979, %v1930
  %v2568 = vpack.c.b16 %v1980, %v1931
  %v2569 = vpack.c.b16 %v1981, %v1932
  %v2570 = vpack.c.b16 %v1982, %v1933
  %v2571 = vpack.c.b16 %v1983, %v1934
  %v2572 = vpack.c.b16 %v1984, %v1935
  %v2573 = vpack.c.b16 %v1985, %v1936
  %v2574 = vpack.c.b16 %v1986, %v1937
  %v2575 = vpack.c.b16 %v1987, %v1938
  %v2576 = vpack.c.b16 %v1988, %v1939
  %v2577 = vpack.c.b16 %v1989, %v1940
  %v2578 = vpack.c.b16 %v1990, %v1941
  %v2579 = vpack.c.b16 %v1991, %v1942
  %v2580 = vpack.c.b16 %v1992, %v1943
  %v2581 = vpack.c.b16 %v1993, %v1944
  %v2582 = vpack.c.b16 %v1994, %v1945
  %v2583 = vpack.c.b16 %v1995, %v1946
  %v2584 = vpack.c.b16 %v1996, %v1947
  %v2585 = vpack.c.b16 %v1997, %v1948
  %v2586 = vpack.c.b16 %v2047, %v1998
  %v2587 = vpack.c.b16 %v2048, %v1999
  %v2588 = vpack.c.b16 %v2049, %v2000
  %v2589 = vpack.c.b16 %v2050, %v2001
  %v2590 = vpack.c.b16 %v2051, %v2002
  %v2591 = vpack.c.b16 %v2052, %v2003
  %v2592 = vpack.c.b16 %v2053, %v2004
  %v2593 = vpack.c.b16 %v2054, %v2005
  %v2594 = vpack.c.b16 %v2055, %v2006
  %v2595 = vpack.c.b16 %v2056, %v2007
  %v2596 = vpack.c.b16 %v2057, %v2008
  %v2597 = vpack.c.b16 %v2058, %v2009
  %v2598 = vpack.c.b16 %v2059, %v2010
  %v2599 = vpack.c.b16 %v2060, %v2011
  %v2600 = vpack.c.b16 %v2061, %v2012
  %v2601 = vpack.c.b16 %v2062, %v2013
  %v2602 = vpack.c.b16 %v2063, %v2014
  %v2603 = vpack.c.b16 %v2064, %v2015
  %v2604 = vpack.c.b16 %v2065, %v2016
  %v2605 = vpack.c.b16 %v2066, %v2017
  %v2606 = vpack.c.b16 %v2067, %v2018
  %v2607 = vpack.c.b16 %v2068, %v2019
  %v2608 = vpack.c.b16 %v2069, %v2020
  %v2609 = vpack.c.b16 %v2070, %v2021
  %v2610 = vpack.c.b16 %v2071, %v2022
  %v2611 = vpack.c.b16 %v2072, %v2023
  %v2612 = vpack.c.b16 %v2073, %v2024
  %v2613 = vpack.c.b16 %v2074, %v2025
  %v2614 = vpack.c.b16 %v2075, %v2026
  %v2615 = vpack.c.b16 %v2076, %v2027
  %v2616 = vpack.c.b16 %v2077, %v2028
  %v2617 = vpack.c.b16 %v2078, %v2029
  %v2618 = vpack.c.b16 %v2079, %v2030
  %v2619 = vpack.c.b16 %v2080, %v2031
  %v2620 = vpack.c.b16 %v2081, %v2032
  %v2621 = vpack.c.b16 %v2082, %v2033
  %v2622 = vpack.c.b16 %v2083, %v2034
  %v2623 = vpack.c.b16 %v2084, %v2035
  %v2624 = vpack.c.b16 %v2085, %v2036
  %v2625 = vpack.c.b16 %v2086, %v2037
  %v2626 = vpack.c.b16 %v2087, %v2038
  %v2627 = vpack.c.b16 %v2088, %v2039
  %v2628 = vpack.c.b16 %v2089, %v2040
  %v2629 = vpack.c.b16 %v2090, %v2041
  %v2630 = vpack.c.b16 %v2091, %v2042
  %v2631 = vpack.c.b16 %v2092, %v2043
  %v2632 = vpack.c.b16 %v2093, %v2044
  %v2633 = vpack.c.b16 %v2094, %v2045
  %v2634 = vpack.c.b16 %v2095, %v2046
  %v2635 = vpack.c.b16 %v2145, %v2096
  %v2636 = vpack.c.b16 %v2146, %v2097
  %v2637 = vpack.c.b16 %v2147, %v2098
  %v2638 = vpack.c.b16 %v2148, %v2099
  %v2639 = vpack.c.b16 %v2149, %v2100
  %v2640 = vpack.c.b16 %v2150, %v2101
  %v2641 = vpack.c.b16 %v2151, %v2102
  %v2642 = vpack.c.b16 %v2152, %v2103
  %v2643 = vpack.c.b16 %v2153, %v2104
  %v2644 = vpack.c.b16 %v2154, %v2105
  %v2645 = vpack.c.b16 %v2155, %v2106
  %v2646 = vpack.c.b16 %v2156, %v2107
  %v2647 = vpack.c.b16 %v2157, %v2108
  %v2648 = vpack.c.b16 %v2158, %v2109
  %v2649 = vpack.c.b16 %v2159, %v2110
  %v2650 = vpack.c.b16 %v2160, %v2111
  %v2651 = vpack.c.b16 %v2161, %v2112
  %v2652 = vpack.c.b16 %v2162, %v2113
  %v2653 = vpack.c.b16 %v2163, %v2114
  %v2654 = vpack.c.b16 %v2164, %v2115
  %v2655 = vpack.c.b16 %v2165, %v2116
  %v2656 = vpack.c.b16 %v2166, %v2117
  %v2657 = vpack.c.b16 %v2167, %v2118
  %v2658 = vpack.c.b16 %v2168, %v2119
  %v2659 = vpack.c.b16 %v2169, %v2120
  %v2660 = vpack.c.b16 %v2170, %v2121
  %v2661 = vpack.c.b16 %v2171, %v2122
  %v2662 = vpack.c.b16 %v2172, %v2123
  %v2663 = vpack.c.b16 %v2173, %v2124
  %v2664 = vpack.c.b16 %v2174, %v2125
  %v2665 = vpack.c.b16 %v2175, %v2126
  %v2666 = vpack.c.b16 %v2176, %v2127
  %v2667 = vpack.c.b16 %v2177, %v2128
  %v2668 = vpack.c.b16 %v2178, %v2129
  %v2669 = vpack.c.b16 %v2179, %v2130
  %v2670 = vpack.c.b16 %v2180, %v2131
  %v2671 = vpack.c.b16 %v2181, %v2132
  %v2672 = vpack.c.b16 %v2182, %v2133
  %v2673 = vpack.c.b16 %v2183, %v2134
  %v2674 = vpack.c.b16 %v2184, %v2135
  %v2675 = vpack.c.b16 %v2185, %v2136
  %v2676 = vpack.c.b16 %v2186, %v2137
  %v2677 = vpack.c.b16 %v2187, %v2138
  %v2678 = vpack.c.b16 %v2188, %v2139
  %v2679 = vpack.c.b16 %v2189, %v2140
  %v2680 = vpack.c.b16 %v2190, %v2141
  %v2681 = vpack.c.b16 %v2191, %v2142
  %v2682 = vpack.c.b16 %v2192, %v2143
  %v2683 = vpack.c.b16 %v2193, %v2144
  %v2684 = vpack.c.b16 %v2243, %v2194
  %v2685 = vpack.c.b16 %v2244, %v2195
  %v2686 = vpack.c.b16 %v2245, %v2196
  %v2687 = vpack.c.b16 %v2246, %v2197
  %v2688 = vpack.c.b16 %v2247, %v2198
  %v2689 = vpack.c.b16 %v2248, %v2199
  %v2690 = vpack.c.b16 %v2249, %v2200
  %v2691 = vpack.c.b16 %v2250, %v2201
  %v2692 = vpack.c.b16 %v2251, %v2202
  %v2693 = vpack.c.b16 %v2252, %v2203
  %v2694 = vpack.c.b16 %v2253, %v2204
  %v2695 = vpack.c.b16 %v2254, %v2205
  %v2696 = vpack.c.b16 %v2255, %v2206
  %v2697 = vpack.c.b16 %v2256, %v2207
  %v2698 = vpack.c.b16 %v2257, %v2208
  %v2699 = vpack.c.b16 %v2258, %v2209
  %v2700 = vpack.c.b16 %v2259, %v2210
  %v2701 = vpack.c.b16 %v2260, %v2211
  %v2702 = vpack.c.b16 %v2261, %v2212
  %v2703 = vpack.c.b16 %v2262, %v2213
  %v2704 = vpack.c.b16 %v2263, %v2214
  %v2705 = vpack.c.b16 %v2264, %v2215
  %v2706 = vpack.c.b16 %v2265, %v2216
  %v2707 = vpack.c.b16 %v2266, %v2217
  %v2708 = vpack.c.b16 %v2267, %v2218
  %v2709 = vpack.c.b16 %v2268, %v2219
  %v2710 = vpack.c.b16 %v2269, %v2220
  %v2711 = vpack.c.b16 %v2270, %v2221
  %v2712 = vpack.c.b16 %v2271, %v2222
  %v2713 = vpack.c.b16 %v2272, %v2223
  %v2714 = vpack.c.b16 %v2273, %v2224
  %v2715 = vpack.c.b16 %v2274, %v2225
  %v2716 = vpack.c.b16 %v2275, %v2226
  %v2717 = vpack.c.b16 %v2276, %v2227
  %v2718 = vpack.c.b16 %v2277, %v2228
  %v2719 = vpack.c.b16 %v2278, %v2229
  %v2720 = vpack.c.b16 %v2279, %v2230
  %v2721 = vpack.c.b16 %v2280, %v2231
  %v2722 = vpack.c.b16 %v2281, %v2232
  %v2723 = vpack.c.b16 %v2282, %v2233
  %v2724 = vpack.c.b16 %v2283, %v2234
  %v2725 = vpack.c.b16 %v2284, %v2235
  %v2726 = vpack.c.b16 %v2285, %v2236
  %v2727 = vpack.c.b16 %v2286, %v2237
  %v2728 = vpack.c.b16 %v2287, %v2238
  %v2729 = vpack.c.b16 %v2288, %v2239
  %v2730 = vpack.c.b16 %v2289, %v2240
  %v2731 = vpack.c.b16 %v2290, %v2241
  %v2732 = vpack.c.b16 %v2291, %v2242
  %v2733 = vpack.c.b16 %v2341, %v2292
  %v2734 = vpack.c.b16 %v2342, %v2293
  %v2735 = vpack.c.b16 %v2343, %v2294
  %v2736 = vpack.c.b16 %v2344, %v2295
  %v2737 = vpack.c.b16 %v2345, %v2296
  %v2738 = vpack.c.b16 %v2346, %v2297
  %v2739 = vpack.c.b16 %v2347, %v2298
  %v2740 = vpack.c.b16 %v2348, %v2299
  %v2741 = vpack.c.b16 %v2349, %v2300
  %v2742 = vpack.c.b16 %v2350, %v2301
  %v2743 = vpack.c.b16 %v2351, %v2302
  %v2744 = vpack.c.b16 %v2352, %v2303
  %v2745 = vpack.c.b16 %v2353, %v2304
  %v2746 = vpack.c.b16 %v2354, %v2305
  %v2747 = vpack.c.b16 %v2355, %v2306
  %v2748 = vpack.c.b16 %v2356, %v2307
  %v2749 = vpack.c.b16 %v2357, %v2308
  %v2750 = vpack.c.b16 %v2358, %v2309
  %v2751 = vpack.c.b16 %v2359, %v2310
  %v2752 = vpack.c.b16 %v2360, %v2311
  %v2753 = vpack.c.b16 %v2361, %v2312
  %v2754 = vpack.c.b16 %v2362, %v2313
  %v2755 = vpack.c.b16 %v2363, %v2314
  %v2756 = vpack.c.b16 %v2364, %v2315
  %v2757 = vpack.c.b16 %v2365, %v2316
  %v2758 = vpack.c.b16 %v2366, %v2317
  %v2759 = vpack.c.b16 %v2367, %v2318
  %v2760 = vpack.c.b16 %v2368, %v2319
  %v2761 = vpack.c.b16 %v2369, %v2320
  %v2762 = vpack.c.b16 %v2370, %v2321
  %v2763 = vpack.c.b16 %v2371, %v2322
  %v2764 = vpack.c.b16 %v2372, %v2323
  %v2765 = vpack.c.b16 %v2373, %v2324
  %v2766 = vpack.c.b16 %v2374, %v2325
  %v2767 = vpack.c.b16 %v2375, %v2326
  %v2768 = vpack.c.b16 %v2376, %v2327
  %v2769 = vpack.c.b16 %v2377, %v2328
  %v2770 = vpack.c.b16 %v2378, %v2329
  %v2771 = vpack.c.b16 %v2379, %v2330
  %v2772 = vpack.c.b16 %v2380, %v2331
  %v2773 = vpack.c.b16 %v2381, %v2332
  %v2774 = vpack.c.b16 %v2382, %v2333
  %v2775 = vpack.c.b16 %v2383, %v2334
  %v2776 = vpack.c.b16 %v2384, %v2335
  %v2777 = vpack.c.b16 %v2385, %v2336
  %v2778 = vpack.c.b16 %v2386, %v2337
  %v2779 = vpack.c.b16 %v2387, %v2338
  %v2780 = vpack.c.b16 %v2388, %v2339
  %v2781 = vpack.c.b16 %v2389, %v2340
  %v3958 = vunpack.c.l.b16 %v415
  %v3959 = vunpack.c.l.b16 %v416
  %v3960 = vunpack.c.l.b16 %v417
  %v3961 = vunpack.c.l.b16 %v418
  %v3962 = vunpack.c.l.b16 %v419
  %v3963 = vunpack.c.l.b16 %v420
  %v3964 = vunpack.c.l.b16 %v421
  %v3965 = vunpack.c.l.b16 %v422
  %v3966 = vunpack.c.l.b16 %v423
  %v3967 = vunpack.c.l.b16 %v424
  %v3968 = vunpack.c.l.b16 %v425
  %v3969 = vunpack.c.l.b16 %v426
  %v3970 = vunpack.c.l.b16 %v427
  %v3971 = vunpack.c.l.b16 %v428
  %v3972 = vunpack.c.l.b16 %v429
  %v3973 = vunpack.c.l.b16 %v430
  %v3974 = vunpack.c.l.b16 %v431
  %v3975 = vunpack.c.l.b16 %v432
  %v3976 = vunpack.c.l.b16 %v433
  %v3977 = vunpack.c.l.b16 %v434
  %v3978 = vunpack.c.l.b16 %v435
  %v3979 = vunpack.c.l.b16 %v436
  %v3980 = vunpack.c.l.b16 %v437
  %v3981 = vunpack.c.l.b16 %v438
  %v3982 = vunpack.c.l.b16 %v439
  %v3983 = vunpack.c.l.b16 %v440
  %v3984 = vunpack.c.l.b16 %v441
  %v3985 = vunpack.c.l.b16 %v442
  %v3986 = vunpack.c.l.b16 %v443
  %v3987 = vunpack.c.l.b16 %v444
  %v3988 = vunpack.c.l.b16 %v445
  %v3989 = vunpack.c.l.b16 %v446
  %v3990 = vunpack.c.l.b16 %v447
  %v3991 = vunpack.c.l.b16 %v448
  %v3992 = vunpack.c.l.b16 %v449
  %v3993 = vunpack.c.l.b16 %v450
  %v3994 = vunpack.c.l.b16 %v451
  %v3995 = vunpack.c.l.b16 %v452
  %v3996 = vunpack.c.l.b16 %v453
  %v3997 = vunpack.c.l.b16 %v454
  %v3998 = vunpack.c.l.b16 %v455
  %v3999 = vunpack.c.l.b16 %v456
  %v4000 = vunpack.c.l.b16 %v457
  %v4001 = vunpack.c.l.b16 %v458
  %v4002 = vunpack.c.l.b16 %v459
  %v4003 = vunpack.c.l.b16 %v460
  %v4004 = vunpack.c.l.b16 %v461
  %v4005 = vunpack.c.l.b16 %v462
  %v4006 = vunpack.c.l.b16 %v463
  %v4007 = vunpack.c.l.b16 %v464
  %v4008 = vunpack.c.l.b16 %v465
  %v4009 = vunpack.c.l.b16 %v466
  %v4010 = vunpack.c.l.b16 %v467
  %v4011 = vunpack.c.l.b16 %v468
  %v4012 = vunpack.c.l.b16 %v469
  %v4013 = vunpack.c.l.b16 %v470
  %v4014 = vunpack.c.l.b16 %v471
  %v4015 = vunpack.c.l.b16 %v472
  %v4016 = vunpack.c.l.b16 %v473
  %v4017 = vunpack.c.l.b16 %v474
  %v4018 = vunpack.c.l.b16 %v475
  %v4019 = vunpack.c.l.b16 %v476
  %v4020 = vunpack.c.l.b16 %v477
  %v4021 = vunpack.c.l.b16 %v478
  %v4022 = vunpack.c.l.b16 %v479
  %v4023 = vunpack.c.l.b16 %v480
  %v4024 = vunpack.c.l.b16 %v481
  %v4025 = vunpack.c.l.b16 %v482
  %v4026 = vunpack.c.l.b16 %v483
  %v4027 = vunpack.c.l.b16 %v484
  %v4028 = vunpack.c.l.b16 %v485
  %v4029 = vunpack.c.l.b16 %v486
  %v4030 = vunpack.c.l.b16 %v487
  %v4031 = vunpack.c.l.b16 %v488
  %v4032 = vunpack.c.l.b16 %v489
  %v4033 = vunpack.c.l.b16 %v490
  %v4034 = vunpack.c.l.b16 %v491
  %v4035 = vunpack.c.l.b16 %v492
  %v4036 = vunpack.c.l.b16 %v493
  %v4037 = vunpack.c.l.b16 %v494
  %v4038 = vunpack.c.l.b16 %v495
  %v4039 = vunpack.c.l.b16 %v496
  %v4040 = vunpack.c.l.b16 %v497
  %v4041 = vunpack.c.l.b16 %v498
  %v4042 = vunpack.c.l.b16 %v499
  %v4043 = vunpack.c.l.b16 %v500
  %v4044 = vunpack.c.l.b16 %v501
  %v4045 = vunpack.c.l.b16 %v502
  %v4046 = vunpack.c.l.b16 %v503
  %v4047 = vunpack.c.l.b16 %v504
  %v4048 = vunpack.c.l.b16 %v505
  %v4049 = vunpack.c.l.b16 %v506
  %v4050 = vunpack.c.l.b16 %v507
  %v4051 = vunpack.c.l.b16 %v508
  %v4052 = vunpack.c.l.b16 %v509
  %v4053 = vunpack.c.l.b16 %v510
  %v4054 = vunpack.c.l.b16 %v511
  %v4055 = vunpack.c.l.b16 %v512
  %v4056 = vunpack.c.l.b16 %v513
  %v4057 = vunpack.c.l.b16 %v514
  %v4058 = vunpack.c.l.b16 %v515
  %v4059 = vunpack.c.l.b16 %v516
  %v4060 = vunpack.c.l.b16 %v517
  %v4061 = vunpack.c.l.b16 %v518
  %v4062 = vunpack.c.l.b16 %v519
  %v4063 = vunpack.c.l.b16 %v520
  %v4064 = vunpack.c.l.b16 %v521
  %v4065 = vunpack.c.l.b16 %v522
  %v4066 = vunpack.c.l.b16 %v523
  %v4067 = vunpack.c.l.b16 %v524
  %v4068 = vunpack.c.l.b16 %v525
  %v4069 = vunpack.c.l.b16 %v526
  %v4070 = vunpack.c.l.b16 %v527
  %v4071 = vunpack.c.l.b16 %v528
  %v4072 = vunpack.c.l.b16 %v529
  %v4073 = vunpack.c.l.b16 %v530
  %v4074 = vunpack.c.l.b16 %v531
  %v4075 = vunpack.c.l.b16 %v532
  %v4076 = vunpack.c.l.b16 %v533
  %v4077 = vunpack.c.l.b16 %v534
  %v4078 = vunpack.c.l.b16 %v535
  %v4079 = vunpack.c.l.b16 %v536
  %v4080 = vunpack.c.l.b16 %v537
  %v4081 = vunpack.c.l.b16 %v538
  %v4082 = vunpack.c.l.b16 %v539
  %v4083 = vunpack.c.l.b16 %v540
  %v4084 = vunpack.c.l.b16 %v541
  %v4085 = vunpack.c.l.b16 %v542
  %v4086 = vunpack.c.l.b16 %v543
  %v4087 = vunpack.c.l.b16 %v544
  %v4088 = vunpack.c.l.b16 %v545
  %v4089 = vunpack.c.l.b16 %v546
  %v4090 = vunpack.c.l.b16 %v547
  %v4091 = vunpack.c.l.b16 %v548
  %v4092 = vunpack.c.l.b16 %v549
  %v4093 = vunpack.c.l.b16 %v550
  %v4094 = vunpack.c.l.b16 %v551
  %v4095 = vunpack.c.l.b16 %v552
  %v4096 = vunpack.c.l.b16 %v553
  %v4097 = vunpack.c.l.b16 %v554
  %v4098 = vunpack.c.l.b16 %v555
  %v4099 = vunpack.c.l.b16 %v556
  %v4100 = vunpack.c.l.b16 %v557
  %v4101 = vunpack.c.l.b16 %v558
  %v4102 = vunpack.c.l.b16 %v559
  %v4103 = vunpack.c.l.b16 %v560
  %v4104 = vunpack.c.l.b16 %v561
  %v4105 = vunpack.c.l.b16 %v562
  %v4106 = vunpack.c.l.b16 %v563
  %v4107 = vunpack.c.l.b16 %v564
  %v4108 = vunpack.c.l.b16 %v565
  %v4109 = vunpack.c.l.b16 %v566
  %v4110 = vunpack.c.l.b16 %v567
  %v4111 = vunpack.c.l.b16 %v568
  %v4112 = vunpack.c.l.b16 %v569
  %v4113 = vunpack.c.l.b16 %v570
  %v4114 = vunpack.c.l.b16 %v571
  %v4115 = vunpack.c.l.b16 %v572
  %v4116 = vunpack.c.l.b16 %v573
  %v4117 = vunpack.c.l.b16 %v574
  %v4118 = vunpack.c.l.b16 %v575
  %v4119 = vunpack.c.l.b16 %v576
  %v4120 = vunpack.c.l.b16 %v577
  %v4121 = vunpack.c.l.b16 %v578
  %v4122 = vunpack.c.l.b16 %v579
  %v4123 = vunpack.c.l.b16 %v580
  %v4124 = vunpack.c.l.b16 %v581
  %v4125 = vunpack.c.l.b16 %v582
  %v4126 = vunpack.c.l.b16 %v583
  %v4127 = vunpack.c.l.b16 %v584
  %v4128 = vunpack.c.l.b16 %v585
  %v4129 = vunpack.c.l.b16 %v586
  %v4130 = vunpack.c.l.b16 %v587
  %v4131 = vunpack.c.l.b16 %v588
  %v4132 = vunpack.c.l.b16 %v589
  %v4133 = vunpack.c.l.b16 %v590
  %v4134 = vunpack.c.l.b16 %v591
  %v4135 = vunpack.c.l.b16 %v592
  %v4136 = vunpack.c.l.b16 %v593
  %v4137 = vunpack.c.l.b16 %v594
  %v4138 = vunpack.c.l.b16 %v595
  %v4139 = vunpack.c.l.b16 %v596
  %v4140 = vunpack.c.l.b16 %v597
  %v4141 = vunpack.c.l.b16 %v598
  %v4142 = vunpack.c.l.b16 %v599
  %v4143 = vunpack.c.l.b16 %v600
  %v4144 = vunpack.c.l.b16 %v601
  %v4145 = vunpack.c.l.b16 %v602
  %v4146 = vunpack.c.l.b16 %v603
  %v4147 = vunpack.c.l.b16 %v604
  %v4148 = vunpack.c.l.b16 %v605
  %v4149 = vunpack.c.l.b16 %v606
  %v4150 = vunpack.c.l.b16 %v607
  %v4151 = vunpack.c.l.b16 %v608
  %v4152 = vunpack.c.l.b16 %v609
  %v4153 = vunpack.c.l.b16 %v610
  %v4154 = vunpack.c.l.b16 %v611
  %v4155 = vunpack.c.l.b16 %v612
  %v4156 = vunpack.c.l.b16 %v613
  %v4157 = vunpack.c.l.b16 %v614
  %v4158 = vunpack.c.l.b16 %v615
  %v4159 = vunpack.c.l.b16 %v616
  %v4160 = vunpack.c.l.b16 %v617
  %v4161 = vunpack.c.l.b16 %v618
  %v4162 = vunpack.c.l.b16 %v619
  %v4163 = vunpack.c.l.b16 %v620
  %v4164 = vunpack.c.l.b16 %v621
  %v4165 = vunpack.c.l.b16 %v622
  %v4166 = vunpack.c.l.b16 %v623
  %v4167 = vunpack.c.l.b16 %v624
  %v4168 = vunpack.c.l.b16 %v625
  %v4169 = vunpack.c.l.b16 %v626
  %v4170 = vunpack.c.l.b16 %v627
  %v4171 = vunpack.c.l.b16 %v628
  %v4172 = vunpack.c.l.b16 %v629
  %v4173 = vunpack.c.l.b16 %v630
  %v4174 = vunpack.c.l.b16 %v631
  %v4175 = vunpack.c.l.b16 %v632
  %v4176 = vunpack.c.l.b16 %v633
  %v4177 = vunpack.c.l.b16 %v634
  %v4178 = vunpack.c.l.b16 %v635
  %v4179 = vunpack.c.l.b16 %v636
  %v4180 = vunpack.c.l.b16 %v637
  %v4181 = vunpack.c.l.b16 %v638
  %v4182 = vunpack.c.l.b16 %v639
  %v4183 = vunpack.c.l.b16 %v640
  %v4184 = vunpack.c.l.b16 %v641
  %v4185 = vunpack.c.l.b16 %v642
  %v4186 = vunpack.c.l.b16 %v643
  %v4187 = vunpack.c.l.b16 %v644
  %v4188 = vunpack.c.l.b16 %v645
  %v4189 = vunpack.c.l.b16 %v646
  %v4190 = vunpack.c.l.b16 %v647
  %v4191 = vunpack.c.l.b16 %v648
  %v4192 = vunpack.c.l.b16 %v649
  %v4193 = vunpack.c.l.b16 %v650
  %v4194 = vunpack.c.l.b16 %v651
  %v4195 = vunpack.c.l.b16 %v652
  %v4196 = vunpack.c.l.b16 %v653
  %v4197 = vunpack.c.l.b16 %v654
  %v4198 = vunpack.c.l.b16 %v655
  %v4199 = vunpack.c.l.b16 %v656
  %v4200 = vunpack.c.l.b16 %v657
  %v4201 = vunpack.c.l.b16 %v658
  %v4202 = vunpack.c.l.b16 %v659
  %v4203 = vunpack.c.l.b16 %v660
  %v4204 = vunpack.c.l.b16 %v661
  %v4205 = vunpack.c.l.b16 %v662
  %v4206 = vunpack.c.l.b16 %v663
  %v4207 = vunpack.c.l.b16 %v664
  %v4208 = vunpack.c.l.b16 %v665
  %v4209 = vunpack.c.l.b16 %v666
  %v4210 = vunpack.c.l.b16 %v667
  %v4211 = vunpack.c.l.b16 %v668
  %v4212 = vunpack.c.l.b16 %v669
  %v4213 = vunpack.c.l.b16 %v670
  %v4214 = vunpack.c.l.b16 %v671
  %v4215 = vunpack.c.l.b16 %v672
  %v4216 = vunpack.c.l.b16 %v673
  %v4217 = vunpack.c.l.b16 %v674
  %v4218 = vunpack.c.l.b16 %v675
  %v4219 = vunpack.c.l.b16 %v676
  %v4220 = vunpack.c.l.b16 %v677
  %v4221 = vunpack.c.l.b16 %v678
  %v4222 = vunpack.c.l.b16 %v679
  %v4223 = vunpack.c.l.b16 %v680
  %v4224 = vunpack.c.l.b16 %v681
  %v4225 = vunpack.c.l.b16 %v682
  %v4226 = vunpack.c.l.b16 %v683
  %v4227 = vunpack.c.l.b16 %v684
  %v4228 = vunpack.c.l.b16 %v685
  %v4229 = vunpack.c.l.b16 %v686
  %v4230 = vunpack.c.l.b16 %v687
  %v4231 = vunpack.c.l.b16 %v688
  %v4232 = vunpack.c.l.b16 %v689
  %v4233 = vunpack.c.l.b16 %v690
  %v4234 = vunpack.c.l.b16 %v691
  %v4235 = vunpack.c.l.b16 %v692
  %v4236 = vunpack.c.l.b16 %v693
  %v4237 = vunpack.c.l.b16 %v694
  %v4238 = vunpack.c.l.b16 %v695
  %v4239 = vunpack.c.l.b16 %v696
  %v4240 = vunpack.c.l.b16 %v697
  %v4241 = vunpack.c.l.b16 %v698
  %v4242 = vunpack.c.l.b16 %v699
  %v4243 = vunpack.c.l.b16 %v700
  %v4244 = vunpack.c.l.b16 %v701
  %v4245 = vunpack.c.l.b16 %v702
  %v4246 = vunpack.c.l.b16 %v703
  %v4247 = vunpack.c.l.b16 %v704
  %v4248 = vunpack.c.l.b16 %v705
  %v4249 = vunpack.c.l.b16 %v706
  %v4250 = vunpack.c.l.b16 %v707
  %v4251 = vunpack.c.l.b16 %v708
  %v4252 = vunpack.c.l.b16 %v709
  %v4253 = vunpack.c.l.b16 %v710
  %v4254 = vunpack.c.l.b16 %v711
  %v4255 = vunpack.c.l.b16 %v712
  %v4256 = vunpack.c.l.b16 %v713
  %v4257 = vunpack.c.l.b16 %v714
  %v4258 = vunpack.c.l.b16 %v715
  %v4259 = vunpack.c.l.b16 %v716
  %v4260 = vunpack.c.l.b16 %v717
  %v4261 = vunpack.c.l.b16 %v718
  %v4262 = vunpack.c.l.b16 %v719
  %v4263 = vunpack.c.l.b16 %v720
  %v4264 = vunpack.c.l.b16 %v721
  %v4265 = vunpack.c.l.b16 %v722
  %v4266 = vunpack.c.l.b16 %v723
  %v4267 = vunpack.c.l.b16 %v724
  %v4268 = vunpack.c.l.b16 %v725
  %v4269 = vunpack.c.l.b16 %v726
  %v4270 = vunpack.c.l.b16 %v727
  %v4271 = vunpack.c.l.b16 %v728
  %v4272 = vunpack.c.l.b16 %v729
  %v4273 = vunpack.c.l.b16 %v730
  %v4274 = vunpack.c.l.b16 %v731
  %v4275 = vunpack.c.l.b16 %v732
  %v4276 = vunpack.c.l.b16 %v733
  %v4277 = vunpack.c.l.b16 %v734
  %v4278 = vunpack.c.l.b16 %v735
  %v4279 = vunpack.c.l.b16 %v736
  %v4280 = vunpack.c.l.b16 %v737
  %v4281 = vunpack.c.l.b16 %v738
  %v4282 = vunpack.c.l.b16 %v739
  %v4283 = vunpack.c.l.b16 %v740
  %v4284 = vunpack.c.l.b16 %v741
  %v4285 = vunpack.c.l.b16 %v742
  %v4286 = vunpack.c.l.b16 %v743
  %v4287 = vunpack.c.l.b16 %v744
  %v4288 = vunpack.c.l.b16 %v745
  %v4289 = vunpack.c.l.b16 %v746
  %v4290 = vunpack.c.l.b16 %v747
  %v4291 = vunpack.c.l.b16 %v748
  %v4292 = vunpack.c.l.b16 %v749
  %v4293 = vunpack.c.l.b16 %v750
  %v4294 = vunpack.c.l.b16 %v751
  %v4295 = vunpack.c.l.b16 %v752
  %v4296 = vunpack.c.l.b16 %v753
  %v4297 = vunpack.c.l.b16 %v754
  %v4298 = vunpack.c.l.b16 %v755
  %v4299 = vunpack.c.l.b16 %v756
  %v4300 = vunpack.c.l.b16 %v757
  %v4301 = vunpack.c.l.b16 %v758
  %v4302 = vunpack.c.l.b16 %v759
  %v4303 = vunpack.c.l.b16 %v760
  %v4304 = vunpack.c.l.b16 %v761
  %v4305 = vunpack.c.l.b16 %v762
  %v4306 = vunpack.c.l.b16 %v763
  %v4307 = vunpack.c.l.b16 %v764
  %v4308 = vunpack.c.l.b16 %v765
  %v4309 = vunpack.c.l.b16 %v766
  %v4310 = vunpack.c.l.b16 %v767
  %v4311 = vunpack.c.l.b16 %v768
  %v4312 = vunpack.c.l.b16 %v769
  %v4313 = vunpack.c.l.b16 %v770
  %v4314 = vunpack.c.l.b16 %v771
  %v4315 = vunpack.c.l.b16 %v772
  %v4316 = vunpack.c.l.b16 %v773
  %v4317 = vunpack.c.l.b16 %v774
  %v4318 = vunpack.c.l.b16 %v775
  %v4319 = vunpack.c.l.b16 %v776
  %v4320 = vunpack.c.l.b16 %v777
  %v4321 = vunpack.c.l.b16 %v778
  %v4322 = vunpack.c.l.b16 %v779
  %v4323 = vunpack.c.l.b16 %v780
  %v4324 = vunpack.c.l.b16 %v781
  %v4325 = vunpack.c.l.b16 %v782
  %v4326 = vunpack.c.l.b16 %v783
  %v4327 = vunpack.c.l.b16 %v784
  %v4328 = vunpack.c.l.b16 %v785
  %v4329 = vunpack.c.l.b16 %v786
  %v4330 = vunpack.c.l.b16 %v787
  %v4331 = vunpack.c.l.b16 %v788
  %v4332 = vunpack.c.l.b16 %v789
  %v4333 = vunpack.c.l.b16 %v790
  %v4334 = vunpack.c.l.b16 %v791
  %v4335 = vunpack.c.l.b16 %v792
  %v4336 = vunpack.c.l.b16 %v793
  %v4337 = vunpack.c.l.b16 %v794
  %v4338 = vunpack.c.l.b16 %v795
  %v4339 = vunpack.c.l.b16 %v796
  %v4340 = vunpack.c.l.b16 %v797
  %v4341 = vunpack.c.l.b16 %v798
  %v4342 = vunpack.c.l.b16 %v799
  %v4343 = vunpack.c.l.b16 %v800
  %v4344 = vunpack.c.l.b16 %v801
  %v4345 = vunpack.c.l.b16 %v802
  %v4346 = vunpack.c.l.b16 %v803
  %v4347 = vunpack.c.l.b16 %v804
  %v4348 = vunpack.c.l.b16 %v805
  %v4349 = vunpack.c.l.b16 %v806
  %v4350 = vunpack.c.l.b16 %v807
  %v4351 = vunpack.c.l.b16 %v808
  %v4352 = vunpack.c.l.b16 %v809
  %v4353 = vunpack.c.l.b16 %v810
  %v4354 = vunpack.c.l.b16 %v811
  %v4355 = vunpack.c.l.b16 %v812
  %v4356 = vunpack.c.l.b16 %v813
  %v4357 = vunpack.c.l.b16 %v814
  %v4358 = vunpack.c.l.b16 %v815
  %v4359 = vunpack.c.l.b16 %v816
  %v4360 = vunpack.c.l.b16 %v817
  %v4361 = vunpack.c.l.b16 %v818
  %v4362 = vunpack.c.l.b16 %v819
  %v4363 = vunpack.c.l.b16 %v820
  %v4364 = vunpack.c.l.b16 %v821
  %v4365 = vunpack.c.l.b16 %v822
  %v4366 = vunpack.c.l.b16 %v823
  %v4367 = vunpack.c.l.b16 %v824
  %v4368 = vunpack.c.l.b16 %v825
  %v4369 = vunpack.c.l.b16 %v826
  %v4370 = vunpack.c.l.b16 %v827
  %v4371 = vunpack.c.l.b16 %v828
  %v4372 = vunpack.c.l.b16 %v829
  %v4373 = vunpack.c.l.b16 %v830
  %v4374 = vunpack.c.l.b16 %v831
  %v4375 = vunpack.c.l.b16 %v832
  %v4376 = vunpack.c.l.b16 %v833
  %v4377 = vunpack.c.l.b16 %v834
  %v4378 = vunpack.c.l.b16 %v835
  %v4379 = vunpack.c.l.b16 %v836
  %v4380 = vunpack.c.l.b16 %v837
  %v4381 = vunpack.c.l.b16 %v838
  %v4382 = vunpack.c.l.b16 %v839
  %v4383 = vunpack.c.l.b16 %v840
  %v4384 = vunpack.c.l.b16 %v841
  %v4385 = vunpack.c.l.b16 %v842
  %v4386 = vunpack.c.l.b16 %v843
  %v4387 = vunpack.c.l.b16 %v844
  %v4388 = vunpack.c.l.b16 %v845
  %v4389 = vunpack.c.l.b16 %v846
  %v4390 = vunpack.c.l.b16 %v847
  %v4391 = vunpack.c.l.b16 %v848
  %v4392 = vunpack.c.l.b16 %v849
  %v4393 = vunpack.c.l.b16 %v850
  %v4394 = vunpack.c.l.b16 %v851
  %v4395 = vunpack.c.l.b16 %v852
  %v4396 = vunpack.c.l.b16 %v853
  %v4397 = vunpack.c.l.b16 %v854
  %v4398 = vunpack.c.l.b16 %v855
  %v4399 = vunpack.c.l.b16 %v856
  %v4400 = vunpack.c.l.b16 %v857
  %v4401 = vunpack.c.l.b16 %v858
  %v4402 = vunpack.c.l.b16 %v859
  %v4403 = vunpack.c.l.b16 %v860
  %v4404 = vunpack.c.l.b16 %v861
  %v4405 = vunpack.c.l.b16 %v862
  %v4406 = vunpack.c.l.b16 %v863
  %v4407 = vunpack.c.l.b16 %v864
  %v4408 = vunpack.c.l.b16 %v865
  %v4409 = vunpack.c.l.b16 %v866
  %v4410 = vunpack.c.l.b16 %v867
  %v4411 = vunpack.c.l.b16 %v868
  %v4412 = vunpack.c.l.b16 %v869
  %v4413 = vunpack.c.l.b16 %v870
  %v4414 = vunpack.c.l.b16 %v871
  %v4415 = vunpack.c.l.b16 %v872
  %v4416 = vunpack.c.l.b16 %v873
  %v4417 = vunpack.c.l.b16 %v874
  %v4418 = vunpack.c.l.b16 %v875
  %v4419 = vunpack.c.l.b16 %v876
  %v4420 = vunpack.c.l.b16 %v877
  %v4421 = vunpack.c.l.b16 %v878
  %v4422 = vunpack.c.l.b16 %v879
  %v4423 = vunpack.c.l.b16 %v880
  %v4424 = vunpack.c.l.b16 %v881
  %v4425 = vunpack.c.l.b16 %v882
  %v4426 = vunpack.c.l.b16 %v883
  %v4427 = vunpack.c.l.b16 %v884
  %v4428 = vunpack.c.l.b16 %v885
  %v4429 = vunpack.c.l.b16 %v886
  %v4430 = vunpack.c.l.b16 %v887
  %v4431 = vunpack.c.l.b16 %v888
  %v4432 = vunpack.c.l.b16 %v889
  %v4433 = vunpack.c.l.b16 %v890
  %v4434 = vunpack.c.l.b16 %v891
  %v4435 = vunpack.c.l.b16 %v892
  %v4436 = vunpack.c.l.b16 %v893
  %v4437 = vunpack.c.l.b16 %v894
  %v4438 = vunpack.c.l.b16 %v895
  %v4439 = vunpack.c.l.b16 %v896
  %v4440 = vunpack.c.l.b16 %v897
  %v4441 = vunpack.c.l.b16 %v898
  %v4442 = vunpack.c.l.b16 %v899
  %v4443 = vunpack.c.l.b16 %v900
  %v4444 = vunpack.c.l.b16 %v901
  %v4445 = vunpack.c.l.b16 %v902
  %v4446 = vunpack.c.l.b16 %v903
  %v4447 = vunpack.c.l.b16 %v904
  %v4448 = vunpack.c.l.b16 %v905
  %v4449 = vunpack.c.l.b16 %v906
  %v4450 = vunpack.c.l.b16 %v907
  %v4451 = vunpack.c.l.b16 %v908
  %v4452 = vunpack.c.l.b16 %v909
  %v4453 = vunpack.c.l.b16 %v910
  %v4454 = vunpack.c.l.b16 %v911
  %v4455 = vunpack.c.l.b16 %v912
  %v4456 = vunpack.c.l.b16 %v913
  %v4457 = vunpack.c.l.b16 %v914
  %v4458 = vunpack.c.l.b16 %v915
  %v4459 = vunpack.c.l.b16 %v916
  %v4460 = vunpack.c.l.b16 %v917
  %v4461 = vunpack.c.l.b16 %v918
  %v4462 = vunpack.c.l.b16 %v919
  %v4463 = vunpack.c.l.b16 %v920
  %v4464 = vunpack.c.l.b16 %v921
  %v4465 = vunpack.c.l.b16 %v922
  %v4466 = vunpack.c.l.b16 %v923
  %v4467 = vunpack.c.l.b16 %v924
  %v4468 = vunpack.c.l.b16 %v925
  %v4469 = vunpack.c.l.b16 %v926
  %v4470 = vunpack.c.l.b16 %v927
  %v4471 = vunpack.c.l.b16 %v928
  %v4472 = vunpack.c.l.b16 %v929
  %v4473 = vunpack.c.l.b16 %v930
  %v4474 = vunpack.c.l.b16 %v931
  %v4475 = vunpack.c.l.b16 %v932
  %v4476 = vunpack.c.l.b16 %v933
  %v4477 = vunpack.c.l.b16 %v934
  %v4478 = vunpack.c.l.b16 %v935
  %v4479 = vunpack.c.l.b16 %v936
  %v4480 = vunpack.c.l.b16 %v937
  %v4481 = vunpack.c.l.b16 %v938
  %v4482 = vunpack.c.l.b16 %v939
  %v4483 = vunpack.c.l.b16 %v940
  %v4484 = vunpack.c.l.b16 %v941
  %v4485 = vunpack.c.l.b16 %v942
  %v4486 = vunpack.c.l.b16 %v943
  %v4487 = vunpack.c.l.b16 %v944
  %v4488 = vunpack.c.l.b16 %v945
  %v4489 = vunpack.c.l.b16 %v946
  %v4490 = vunpack.c.l.b16 %v947
  %v4491 = vunpack.c.l.b16 %v948
  %v4492 = vunpack.c.l.b16 %v949
  %v4493 = vunpack.c.l.b16 %v950
  %v4494 = vunpack.c.l.b16 %v951
  %v4495 = vunpack.c.l.b16 %v952
  %v4496 = vunpack.c.l.b16 %v953
  %v4497 = vunpack.c.l.b16 %v954
  %v4498 = vunpack.c.l.b16 %v955
  %v4499 = vunpack.c.l.b16 %v956
  %v4500 = vunpack.c.l.b16 %v957
  %v4501 = vunpack.c.l.b16 %v958
  %v4502 = vunpack.c.l.b16 %v959
  %v4503 = vunpack.c.l.b16 %v960
  %v4504 = vunpack.c.l.b16 %v961
  %v4505 = vunpack.c.l.b16 %v962
  %v4506 = vunpack.c.l.b16 %v963
  %v4507 = vunpack.c.l.b16 %v964
  %v4508 = vunpack.c.l.b16 %v965
  %v4509 = vunpack.c.l.b16 %v966
  %v4510 = vunpack.c.l.b16 %v967
  %v4511 = vunpack.c.l.b16 %v968
  %v4512 = vunpack.c.l.b16 %v969
  %v4513 = vunpack.c.l.b16 %v970
  %v4514 = vunpack.c.l.b16 %v971
  %v4515 = vunpack.c.l.b16 %v972
  %v4516 = vunpack.c.l.b16 %v973
  %v4517 = vunpack.c.l.b16 %v974
  %v4518 = vunpack.c.l.b16 %v975
  %v4519 = vunpack.c.l.b16 %v976
  %v4520 = vunpack.c.l.b16 %v977
  %v4521 = vunpack.c.l.b16 %v978
  %v4522 = vunpack.c.l.b16 %v979
  %v4523 = vunpack.c.l.b16 %v980
  %v4524 = vunpack.c.l.b16 %v981
  %v4525 = vunpack.c.l.b16 %v982
  %v4526 = vunpack.c.l.b16 %v983
  %v4527 = vunpack.c.l.b16 %v984
  %v4528 = vunpack.c.l.b16 %v985
  %v4529 = vunpack.c.l.b16 %v986
  %v4530 = vunpack.c.l.b16 %v987
  %v4531 = vunpack.c.l.b16 %v988
  %v4532 = vunpack.c.l.b16 %v989
  %v4533 = vunpack.c.l.b16 %v990
  %v4534 = vunpack.c.l.b16 %v991
  %v4535 = vunpack.c.l.b16 %v992
  %v4536 = vunpack.c.l.b16 %v993
  %v4537 = vunpack.c.l.b16 %v994
  %v4538 = vunpack.c.l.b16 %v995
  %v4539 = vunpack.c.l.b16 %v996
  %v4540 = vunpack.c.l.b16 %v997
  %v4541 = vunpack.c.l.b16 %v998
  %v4542 = vunpack.c.l.b16 %v999
  %v4543 = vunpack.c.l.b16 %v1000
  %v4544 = vunpack.c.l.b16 %v1001
  %v4545 = vunpack.c.l.b16 %v1002
  %v4546 = vunpack.c.l.b16 %v1003
  %v4547 = vunpack.c.l.b16 %v1004
  %v4548 = vunpack.c.l.b16 %v1005
  %v4549 = vunpack.c.l.b16 %v1006
  %v4550 = vunpack.c.l.b16 %v1007
  %v4551 = vunpack.c.l.b16 %v1008
  %v4552 = vunpack.c.l.b16 %v1009
  %v4553 = vunpack.c.l.b16 %v1010
  %v4554 = vunpack.c.l.b16 %v1011
  %v4555 = vunpack.c.l.b16 %v1012
  %v4556 = vunpack.c.l.b16 %v1013
  %v4557 = vunpack.c.l.b16 %v1014
  %v4558 = vunpack.c.l.b16 %v1015
  %v4559 = vunpack.c.l.b16 %v1016
  %v4560 = vunpack.c.l.b16 %v1017
  %v4561 = vunpack.c.l.b16 %v1018
  %v4562 = vunpack.c.l.b16 %v1019
  %v4563 = vunpack.c.l.b16 %v1020
  %v4564 = vunpack.c.l.b16 %v1021
  %v4565 = vunpack.c.l.b16 %v1022
  %v4566 = vunpack.c.l.b16 %v1023
  %v4567 = vunpack.c.l.b16 %v1024
  %v4568 = vunpack.c.l.b16 %v1025
  %v4569 = vunpack.c.l.b16 %v1026
  %v4570 = vunpack.c.l.b16 %v1027
  %v4571 = vunpack.c.l.b16 %v1028
  %v4572 = vunpack.c.l.b16 %v1029
  %v4573 = vunpack.c.l.b16 %v1030
  %v4574 = vunpack.c.l.b16 %v1031
  %v4575 = vunpack.c.l.b16 %v1032
  %v4576 = vunpack.c.l.b16 %v1033
  %v4577 = vunpack.c.l.b16 %v1034
  %v4578 = vunpack.c.l.b16 %v1035
  %v4579 = vunpack.c.l.b16 %v1036
  %v4580 = vunpack.c.l.b16 %v1037
  %v4581 = vunpack.c.l.b16 %v1038
  %v4582 = vunpack.c.l.b16 %v1039
  %v4583 = vunpack.c.l.b16 %v1040
  %v4584 = vunpack.c.l.b16 %v1041
  %v4585 = vunpack.c.l.b16 %v1042
  %v4586 = vunpack.c.l.b16 %v1043
  %v4587 = vunpack.c.l.b16 %v1044
  %v4588 = vunpack.c.l.b16 %v1045
  %v4589 = vunpack.c.l.b16 %v1046
  %v4590 = vunpack.c.l.b16 %v1047
  %v4591 = vunpack.c.l.b16 %v1048
  %v4592 = vunpack.c.l.b16 %v1049
  %v4593 = vunpack.c.l.b16 %v1050
  %v4594 = vunpack.c.l.b16 %v1051
  %v4595 = vunpack.c.l.b16 %v1052
  %v4596 = vunpack.c.l.b16 %v1053
  %v4597 = vunpack.c.l.b16 %v1054
  %v4598 = vunpack.c.l.b16 %v1055
  %v4599 = vunpack.c.l.b16 %v1056
  %v4600 = vunpack.c.l.b16 %v1057
  %v4601 = vunpack.c.l.b16 %v1058
  %v4602 = vunpack.c.l.b16 %v1059
  %v4603 = vunpack.c.l.b16 %v1060
  %v4604 = vunpack.c.l.b16 %v1061
  %v4605 = vunpack.c.l.b16 %v1062
  %v4606 = vunpack.c.l.b16 %v1063
  %v4607 = vunpack.c.l.b16 %v1064
  %v4608 = vunpack.c.l.b16 %v1065
  %v4609 = vunpack.c.l.b16 %v1066
  %v4610 = vunpack.c.l.b16 %v1067
  %v4611 = vunpack.c.l.b16 %v1068
  %v4612 = vunpack.c.l.b16 %v1069
  %v4613 = vunpack.c.l.b16 %v1070
  %v4614 = vunpack.c.l.b16 %v1071
  %v4615 = vunpack.c.l.b16 %v1072
  %v4616 = vunpack.c.l.b16 %v1073
  %v4617 = vunpack.c.l.b16 %v1074
  %v4618 = vunpack.c.l.b16 %v1075
  %v4619 = vunpack.c.l.b16 %v1076
  %v4620 = vunpack.c.l.b16 %v1077
  %v4621 = vunpack.c.l.b16 %v1078
  %v4622 = vunpack.c.l.b16 %v1079
  %v4623 = vunpack.c.l.b16 %v1080
  %v4624 = vunpack.c.l.b16 %v1081
  %v4625 = vunpack.c.l.b16 %v1082
  %v4626 = vunpack.c.l.b16 %v1083
  %v4627 = vunpack.c.l.b16 %v1084
  %v4628 = vunpack.c.l.b16 %v1085
  %v4629 = vunpack.c.l.b16 %v1086
  %v4630 = vunpack.c.l.b16 %v1087
  %v4631 = vunpack.c.l.b16 %v1088
  %v4632 = vunpack.c.l.b16 %v1089
  %v4633 = vunpack.c.l.b16 %v1090
  %v4634 = vunpack.c.l.b16 %v1091
  %v4635 = vunpack.c.l.b16 %v1092
  %v4636 = vunpack.c.l.b16 %v1093
  %v4637 = vunpack.c.l.b16 %v1094
  %v4638 = vunpack.c.l.b16 %v1095
  %v4639 = vunpack.c.l.b16 %v1096
  %v4640 = vunpack.c.l.b16 %v1097
  %v4641 = vunpack.c.l.b16 %v1098
  %v4642 = vunpack.c.l.b16 %v1099
  %v4643 = vunpack.c.l.b16 %v1100
  %v4644 = vunpack.c.l.b16 %v1101
  %v4645 = vunpack.c.l.b16 %v1102
  %v4646 = vunpack.c.l.b16 %v1103
  %v4647 = vunpack.c.l.b16 %v1104
  %v4648 = vunpack.c.l.b16 %v1105
  %v4649 = vunpack.c.l.b16 %v1106
  %v4650 = vunpack.c.l.b16 %v1107
  %v4651 = vunpack.c.l.b16 %v1108
  %v4652 = vunpack.c.l.b16 %v1109
  %v4653 = vunpack.c.l.b16 %v1110
  %v4654 = vunpack.c.l.b16 %v1111
  %v4655 = vunpack.c.l.b16 %v1112
  %v4656 = vunpack.c.l.b16 %v1113
  %v4657 = vunpack.c.l.b16 %v1114
  %v4658 = vunpack.c.l.b16 %v1115
  %v4659 = vunpack.c.l.b16 %v1116
  %v4660 = vunpack.c.l.b16 %v1117
  %v4661 = vunpack.c.l.b16 %v1118
  %v4662 = vunpack.c.l.b16 %v1119
  %v4663 = vunpack.c.l.b16 %v1120
  %v4664 = vunpack.c.l.b16 %v1121
  %v4665 = vunpack.c.l.b16 %v1122
  %v4666 = vunpack.c.l.b16 %v1123
  %v4667 = vunpack.c.l.b16 %v1124
  %v4668 = vunpack.c.l.b16 %v1125
  %v4669 = vunpack.c.l.b16 %v1126
  %v4670 = vunpack.c.l.b16 %v1127
  %v4671 = vunpack.c.l.b16 %v1128
  %v4672 = vunpack.c.l.b16 %v1129
  %v4673 = vunpack.c.l.b16 %v1130
  %v4674 = vunpack.c.l.b16 %v1131
  %v4675 = vunpack.c.l.b16 %v1132
  %v4676 = vunpack.c.l.b16 %v1133
  %v4677 = vunpack.c.l.b16 %v1134
  %v4678 = vunpack.c.l.b16 %v1135
  %v4679 = vunpack.c.l.b16 %v1136
  %v4680 = vunpack.c.l.b16 %v1137
  %v4681 = vunpack.c.l.b16 %v1138
  %v4682 = vunpack.c.l.b16 %v1139
  %v4683 = vunpack.c.l.b16 %v1140
  %v4684 = vunpack.c.l.b16 %v1141
  %v4685 = vunpack.c.l.b16 %v1142
  %v4686 = vunpack.c.l.b16 %v1143
  %v4687 = vunpack.c.l.b16 %v1144
  %v4688 = vunpack.c.l.b16 %v1145
  %v4689 = vunpack.c.l.b16 %v1146
  %v4690 = vunpack.c.l.b16 %v1147
  %v4691 = vunpack.c.l.b16 %v1148
  %v4692 = vunpack.c.l.b16 %v1149
  %v4693 = vunpack.c.l.b16 %v1150
  %v4694 = vunpack.c.l.b16 %v1151
  %v4695 = vunpack.c.l.b16 %v1152
  %v4696 = vunpack.c.l.b16 %v1153
  %v4697 = vunpack.c.l.b16 %v1154
  %v4698 = vunpack.c.l.b16 %v1155
  %v4699 = vunpack.c.l.b16 %v1156
  %v4700 = vunpack.c.l.b16 %v1157
  %v4701 = vunpack.c.l.b16 %v1158
  %v4702 = vunpack.c.l.b16 %v1159
  %v4703 = vunpack.c.l.b16 %v1160
  %v4704 = vunpack.c.l.b16 %v1161
  %v4705 = vunpack.c.l.b16 %v1162
  %v4706 = vunpack.c.l.b16 %v1163
  %v4707 = vunpack.c.l.b16 %v1164
  %v4708 = vunpack.c.l.b16 %v1165
  %v4709 = vunpack.c.l.b16 %v1166
  %v4710 = vunpack.c.l.b16 %v1167
  %v4711 = vunpack.c.l.b16 %v1168
  %v4712 = vunpack.c.l.b16 %v1169
  %v4713 = vunpack.c.l.b16 %v1170
  %v4714 = vunpack.c.l.b16 %v1171
  %v4715 = vunpack.c.l.b16 %v1172
  %v4716 = vunpack.c.l.b16 %v1173
  %v4717 = vunpack.c.l.b16 %v1174
  %v4718 = vunpack.c.l.b16 %v1175
  %v4719 = vunpack.c.l.b16 %v1176
  %v4720 = vunpack.c.l.b16 %v1177
  %v4721 = vunpack.c.l.b16 %v1178
  %v4722 = vunpack.c.l.b16 %v1179
  %v4723 = vunpack.c.l.b16 %v1180
  %v4724 = vunpack.c.l.b16 %v1181
  %v4725 = vunpack.c.l.b16 %v1182
  %v4726 = vunpack.c.l.b16 %v1183
  %v4727 = vunpack.c.l.b16 %v1184
  %v4728 = vunpack.c.l.b16 %v1185
  %v4729 = vunpack.c.l.b16 %v1186
  %v4730 = vunpack.c.l.b16 %v1187
  %v4731 = vunpack.c.l.b16 %v1188
  %v4732 = vunpack.c.l.b16 %v1189
  %v4733 = vunpack.c.l.b16 %v1190
  %v4734 = vunpack.c.l.b16 %v1191
  %v4735 = vunpack.c.l.b16 %v1192
  %v4736 = vunpack.c.l.b16 %v1193
  %v4737 = vunpack.c.l.b16 %v1194
  %v4738 = vunpack.c.l.b16 %v1195
  %v4739 = vunpack.c.l.b16 %v1196
  %v4740 = vunpack.c.l.b16 %v1197
  %v4741 = vunpack.c.l.b16 %v1198
  %v4742 = vpack.c.b16 %v3959, %v3958
  %v4743 = vpack.c.b16 %v3961, %v3960
  %v4744 = vpack.c.b16 %v3963, %v3962
  %v4745 = vpack.c.b16 %v3965, %v3964
  %v4746 = vpack.c.b16 %v3967, %v3966
  %v4747 = vpack.c.b16 %v3969, %v3968
  %v4748 = vpack.c.b16 %v3971, %v3970
  %v4749 = vpack.c.b16 %v3973, %v3972
  %v4750 = vpack.c.b16 %v3975, %v3974
  %v4751 = vpack.c.b16 %v3977, %v3976
  %v4752 = vpack.c.b16 %v3979, %v3978
  %v4753 = vpack.c.b16 %v3981, %v3980
  %v4754 = vpack.c.b16 %v3983, %v3982
  %v4755 = vpack.c.b16 %v3985, %v3984
  %v4756 = vpack.c.b16 %v3987, %v3986
  %v4757 = vpack.c.b16 %v3989, %v3988
  %v4758 = vpack.c.b16 %v3991, %v3990
  %v4759 = vpack.c.b16 %v3993, %v3992
  %v4760 = vpack.c.b16 %v3995, %v3994
  %v4761 = vpack.c.b16 %v3997, %v3996
  %v4762 = vpack.c.b16 %v3999, %v3998
  %v4763 = vpack.c.b16 %v4001, %v4000
  %v4764 = vpack.c.b16 %v4003, %v4002
  %v4765 = vpack.c.b16 %v4005, %v4004
  %v4766 = vpack.c.b16 %v4007, %v4006
  %v4767 = vpack.c.b16 %v4009, %v4008
  %v4768 = vpack.c.b16 %v4011, %v4010
  %v4769 = vpack.c.b16 %v4013, %v4012
  %v4770 = vpack.c.b16 %v4015, %v4014
  %v4771 = vpack.c.b16 %v4017, %v4016
  %v4772 = vpack.c.b16 %v4019, %v4018
  %v4773 = vpack.c.b16 %v4021, %v4020
  %v4774 = vpack.c.b16 %v4023, %v4022
  %v4775 = vpack.c.b16 %v4025, %v4024
  %v4776 = vpack.c.b16 %v4027, %v4026
  %v4777 = vpack.c.b16 %v4029, %v4028
  %v4778 = vpack.c.b16 %v4031, %v4030
  %v4779 = vpack.c.b16 %v4033, %v4032
  %v4780 = vpack.c.b16 %v4035, %v4034
  %v4781 = vpack.c.b16 %v4037, %v4036
  %v4782 = vpack.c.b16 %v4039, %v4038
  %v4783 = vpack.c.b16 %v4041, %v4040
  %v4784 = vpack.c.b16 %v4043, %v4042
  %v4785 = vpack.c.b16 %v4045, %v4044
  %v4786 = vpack.c.b16 %v4047, %v4046
  %v4787 = vpack.c.b16 %v4049, %v4048
  %v4788 = vpack.c.b16 %v4051, %v4050
  %v4789 = vpack.c.b16 %v4053, %v4052
  %v4790 = vpack.c.b16 %v4055, %v4054
  %v4791 = vpack.c.b16 %v4057, %v4056
  %v4792 = vpack.c.b16 %v4059, %v4058
  %v4793 = vpack.c.b16 %v4061, %v4060
  %v4794 = vpack.c.b16 %v4063, %v4062
  %v4795 = vpack.c.b16 %v4065, %v4064
  %v4796 = vpack.c.b16 %v4067, %v4066
  %v4797 = vpack.c.b16 %v4069, %v4068
  %v4798 = vpack.c.b16 %v4071, %v4070
  %v4799 = vpack.c.b16 %v4073, %v4072
  %v4800 = vpack.c.b16 %v4075, %v4074
  %v4801 = vpack.c.b16 %v4077, %v4076
  %v4802 = vpack.c.b16 %v4079, %v4078
  %v4803 = vpack.c.b16 %v4081, %v4080
  %v4804 = vpack.c.b16 %v4083, %v4082
  %v4805 = vpack.c.b16 %v4085, %v4084
  %v4806 = vpack.c.b16 %v4087, %v4086
  %v4807 = vpack.c.b16 %v4089, %v4088
  %v4808 = vpack.c.b16 %v4091, %v4090
  %v4809 = vpack.c.b16 %v4093, %v4092
  %v4810 = vpack.c.b16 %v4095, %v4094
  %v4811 = vpack.c.b16 %v4097, %v4096
  %v4812 = vpack.c.b16 %v4099, %v4098
  %v4813 = vpack.c.b16 %v4101, %v4100
  %v4814 = vpack.c.b16 %v4103, %v4102
  %v4815 = vpack.c.b16 %v4105, %v4104
  %v4816 = vpack.c.b16 %v4107, %v4106
  %v4817 = vpack.c.b16 %v4109, %v4108
  %v4818 = vpack.c.b16 %v4111, %v4110
  %v4819 = vpack.c.b16 %v4113, %v4112
  %v4820 = vpack.c.b16 %v4115, %v4114
  %v4821 = vpack.c.b16 %v4117, %v4116
  %v4822 = vpack.c.b16 %v4119, %v4118
  %v4823 = vpack.c.b16 %v4121, %v4120
  %v4824 = vpack.c.b16 %v4123, %v4122
  %v4825 = vpack.c.b16 %v4125, %v4124
  %v4826 = vpack.c.b16 %v4127, %v4126
  %v4827 = vpack.c.b16 %v4129, %v4128
  %v4828 = vpack.c.b16 %v4131, %v4130
  %v4829 = vpack.c.b16 %v4133, %v4132
  %v4830 = vpack.c.b16 %v4135, %v4134
  %v4831 = vpack.c.b16 %v4137, %v4136
  %v4832 = vpack.c.b16 %v4139, %v4138
  %v4833 = vpack.c.b16 %v4141, %v4140
  %v4834 = vpack.c.b16 %v4143, %v4142
  %v4835 = vpack.c.b16 %v4145, %v4144
  %v4836 = vpack.c.b16 %v4147, %v4146
  %v4837 = vpack.c.b16 %v4149, %v4148
  %v4838 = vpack.c.b16 %v4151, %v4150
  %v4839 = vpack.c.b16 %v4153, %v4152
  %v4840 = vpack.c.b16 %v4155, %v4154
  %v4841 = vpack.c.b16 %v4157, %v4156
  %v4842 = vpack.c.b16 %v4159, %v4158
  %v4843 = vpack.c.b16 %v4161, %v4160
  %v4844 = vpack.c.b16 %v4163, %v4162
  %v4845 = vpack.c.b16 %v4165, %v4164
  %v4846 = vpack.c.b16 %v4167, %v4166
  %v4847 = vpack.c.b16 %v4169, %v4168
  %v4848 = vpack.c.b16 %v4171, %v4170
  %v4849 = vpack.c.b16 %v4173, %v4172
  %v4850 = vpack.c.b16 %v4175, %v4174
  %v4851 = vpack.c.b16 %v4177, %v4176
  %v4852 = vpack.c.b16 %v4179, %v4178
  %v4853 = vpack.c.b16 %v4181, %v4180
  %v4854 = vpack.c.b16 %v4183, %v4182
  %v4855 = vpack.c.b16 %v4185, %v4184
  %v4856 = vpack.c.b16 %v4187, %v4186
  %v4857 = vpack.c.b16 %v4189, %v4188
  %v4858 = vpack.c.b16 %v4191, %v4190
  %v4859 = vpack.c.b16 %v4193, %v4192
  %v4860 = vpack.c.b16 %v4195, %v4194
  %v4861 = vpack.c.b16 %v4197, %v4196
  %v4862 = vpack.c.b16 %v4199, %v4198
  %v4863 = vpack.c.b16 %v4201, %v4200
  %v4864 = vpack.c.b16 %v4203, %v4202
  %v4865 = vpack.c.b16 %v4205, %v4204
  %v4866 = vpack.c.b16 %v4207, %v4206
  %v4867 = vpack.c.b16 %v4209, %v4208
  %v4868 = vpack.c.b16 %v4211, %v4210
  %v4869 = vpack.c.b16 %v4213, %v4212
  %v4870 = vpack.c.b16 %v4215, %v4214
  %v4871 = vpack.c.b16 %v4217, %v4216
  %v4872 = vpack.c.b16 %v4219, %v4218
  %v4873 = vpack.c.b16 %v4221, %v4220
  %v4874 = vpack.c.b16 %v4223, %v4222
  %v4875 = vpack.c.b16 %v4225, %v4224
  %v4876 = vpack.c.b16 %v4227, %v4226
  %v4877 = vpack.c.b16 %v4229, %v4228
  %v4878 = vpack.c.b16 %v4231, %v4230
  %v4879 = vpack.c.b16 %v4233, %v4232
  %v4880 = vpack.c.b16 %v4235, %v4234
  %v4881 = vpack.c.b16 %v4237, %v4236
  %v4882 = vpack.c.b16 %v4239, %v4238
  %v4883 = vpack.c.b16 %v4241, %v4240
  %v4884 = vpack.c.b16 %v4243, %v4242
  %v4885 = vpack.c.b16 %v4245, %v4244
  %v4886 = vpack.c.b16 %v4247, %v4246
  %v4887 = vpack.c.b16 %v4249, %v4248
  %v4888 = vpack.c.b16 %v4251, %v4250
  %v4889 = vpack.c.b16 %v4253, %v4252
  %v4890 = vpack.c.b16 %v4255, %v4254
  %v4891 = vpack.c.b16 %v4257, %v4256
  %v4892 = vpack.c.b16 %v4259, %v4258
  %v4893 = vpack.c.b16 %v4261, %v4260
  %v4894 = vpack.c.b16 %v4263, %v4262
  %v4895 = vpack.c.b16 %v4265, %v4264
  %v4896 = vpack.c.b16 %v4267, %v4266
  %v4897 = vpack.c.b16 %v4269, %v4268
  %v4898 = vpack.c.b16 %v4271, %v4270
  %v4899 = vpack.c.b16 %v4273, %v4272
  %v4900 = vpack.c.b16 %v4275, %v4274
  %v4901 = vpack.c.b16 %v4277, %v4276
  %v4902 = vpack.c.b16 %v4279, %v4278
  %v4903 = vpack.c.b16 %v4281, %v4280
  %v4904 = vpack.c.b16 %v4283, %v4282
  %v4905 = vpack.c.b16 %v4285, %v4284
  %v4906 = vpack.c.b16 %v4287, %v4286
  %v4907 = vpack.c.b16 %v4289, %v4288
  %v4908 = vpack.c.b16 %v4291, %v4290
  %v4909 = vpack.c.b16 %v4293, %v4292
  %v4910 = vpack.c.b16 %v4295, %v4294
  %v4911 = vpack.c.b16 %v4297, %v4296
  %v4912 = vpack.c.b16 %v4299, %v4298
  %v4913 = vpack.c.b16 %v4301, %v4300
  %v4914 = vpack.c.b16 %v4303, %v4302
  %v4915 = vpack.c.b16 %v4305, %v4304
  %v4916 = vpack.c.b16 %v4307, %v4306
  %v4917 = vpack.c.b16 %v4309, %v4308
  %v4918 = vpack.c.b16 %v4311, %v4310
  %v4919 = vpack.c.b16 %v4313, %v4312
  %v4920 = vpack.c.b16 %v4315, %v4314
  %v4921 = vpack.c.b16 %v4317, %v4316
  %v4922 = vpack.c.b16 %v4319, %v4318
  %v4923 = vpack.c.b16 %v4321, %v4320
  %v4924 = vpack.c.b16 %v4323, %v4322
  %v4925 = vpack.c.b16 %v4325, %v4324
  %v4926 = vpack.c.b16 %v4327, %v4326
  %v4927 = vpack.c.b16 %v4329, %v4328
  %v4928 = vpack.c.b16 %v4331, %v4330
  %v4929 = vpack.c.b16 %v4333, %v4332
  %v4930 = vpack.c.b16 %v4335, %v4334
  %v4931 = vpack.c.b16 %v4337, %v4336
  %v4932 = vpack.c.b16 %v4339, %v4338
  %v4933 = vpack.c.b16 %v4341, %v4340
  %v4934 = vpack.c.b16 %v4343, %v4342
  %v4935 = vpack.c.b16 %v4345, %v4344
  %v4936 = vpack.c.b16 %v4347, %v4346
  %v4937 = vpack.c.b16 %v4349, %v4348
  %v4938 = vpack.c.b16 %v4351, %v4350
  %v4939 = vpack.c.b16 %v4353, %v4352
  %v4940 = vpack.c.b16 %v4355, %v4354
  %v4941 = vpack.c.b16 %v4357, %v4356
  %v4942 = vpack.c.b16 %v4359, %v4358
  %v4943 = vpack.c.b16 %v4361, %v4360
  %v4944 = vpack.c.b16 %v4363, %v4362
  %v4945 = vpack.c.b16 %v4365, %v4364
  %v4946 = vpack.c.b16 %v4367, %v4366
  %v4947 = vpack.c.b16 %v4369, %v4368
  %v4948 = vpack.c.b16 %v4371, %v4370
  %v4949 = vpack.c.b16 %v4373, %v4372
  %v4950 = vpack.c.b16 %v4375, %v4374
  %v4951 = vpack.c.b16 %v4377, %v4376
  %v4952 = vpack.c.b16 %v4379, %v4378
  %v4953 = vpack.c.b16 %v4381, %v4380
  %v4954 = vpack.c.b16 %v4383, %v4382
  %v4955 = vpack.c.b16 %v4385, %v4384
  %v4956 = vpack.c.b16 %v4387, %v4386
  %v4957 = vpack.c.b16 %v4389, %v4388
  %v4958 = vpack.c.b16 %v4391, %v4390
  %v4959 = vpack.c.b16 %v4393, %v4392
  %v4960 = vpack.c.b16 %v4395, %v4394
  %v4961 = vpack.c.b16 %v4397, %v4396
  %v4962 = vpack.c.b16 %v4399, %v4398
  %v4963 = vpack.c.b16 %v4401, %v4400
  %v4964 = vpack.c.b16 %v4403, %v4402
  %v4965 = vpack.c.b16 %v4405, %v4404
  %v4966 = vpack.c.b16 %v4407, %v4406
  %v4967 = vpack.c.b16 %v4409, %v4408
  %v4968 = vpack.c.b16 %v4411, %v4410
  %v4969 = vpack.c.b16 %v4413, %v4412
  %v4970 = vpack.c.b16 %v4415, %v4414
  %v4971 = vpack.c.b16 %v4417, %v4416
  %v4972 = vpack.c.b16 %v4419, %v4418
  %v4973 = vpack.c.b16 %v4421, %v4420
  %v4974 = vpack.c.b16 %v4423, %v4422
  %v4975 = vpack.c.b16 %v4425, %v4424
  %v4976 = vpack.c.b16 %v4427, %v4426
  %v4977 = vpack.c.b16 %v4429, %v4428
  %v4978 = vpack.c.b16 %v4431, %v4430
  %v4979 = vpack.c.b16 %v4433, %v4432
  %v4980 = vpack.c.b16 %v4435, %v4434
  %v4981 = vpack.c.b16 %v4437, %v4436
  %v4982 = vpack.c.b16 %v4439, %v4438
  %v4983 = vpack.c.b16 %v4441, %v4440
  %v4984 = vpack.c.b16 %v4443, %v4442
  %v4985 = vpack.c.b16 %v4445, %v4444
  %v4986 = vpack.c.b16 %v4447, %v4446
  %v4987 = vpack.c.b16 %v4449, %v4448
  %v4988 = vpack.c.b16 %v4451, %v4450
  %v4989 = vpack.c.b16 %v4453, %v4452
  %v4990 = vpack.c.b16 %v4455, %v4454
  %v4991 = vpack.c.b16 %v4457, %v4456
  %v4992 = vpack.c.b16 %v4459, %v4458
  %v4993 = vpack.c.b16 %v4461, %v4460
  %v4994 = vpack.c.b16 %v4463, %v4462
  %v4995 = vpack.c.b16 %v4465, %v4464
  %v4996 = vpack.c.b16 %v4467, %v4466
  %v4997 = vpack.c.b16 %v4469, %v4468
  %v4998 = vpack.c.b16 %v4471, %v4470
  %v4999 = vpack.c.b16 %v4473, %v4472
  %v5000 = vpack.c.b16 %v4475, %v4474
  %v5001 = vpack.c.b16 %v4477, %v4476
  %v5002 = vpack.c.b16 %v4479, %v4478
  %v5003 = vpack.c.b16 %v4481, %v4480
  %v5004 = vpack.c.b16 %v4483, %v4482
  %v5005 = vpack.c.b16 %v4485, %v4484
  %v5006 = vpack.c.b16 %v4487, %v4486
  %v5007 = vpack.c.b16 %v4489, %v4488
  %v5008 = vpack.c.b16 %v4491, %v4490
  %v5009 = vpack.c.b16 %v4493, %v4492
  %v5010 = vpack.c.b16 %v4495, %v4494
  %v5011 = vpack.c.b16 %v4497, %v4496
  %v5012 = vpack.c.b16 %v4499, %v4498
  %v5013 = vpack.c.b16 %v4501, %v4500
  %v5014 = vpack.c.b16 %v4503, %v4502
  %v5015 = vpack.c.b16 %v4505, %v4504
  %v5016 = vpack.c.b16 %v4507, %v4506
  %v5017 = vpack.c.b16 %v4509, %v4508
  %v5018 = vpack.c.b16 %v4511, %v4510
  %v5019 = vpack.c.b16 %v4513, %v4512
  %v5020 = vpack.c.b16 %v4515, %v4514
  %v5021 = vpack.c.b16 %v4517, %v4516
  %v5022 = vpack.c.b16 %v4519, %v4518
  %v5023 = vpack.c.b16 %v4521, %v4520
  %v5024 = vpack.c.b16 %v4523, %v4522
  %v5025 = vpack.c.b16 %v4525, %v4524
  %v5026 = vpack.c.b16 %v4527, %v4526
  %v5027 = vpack.c.b16 %v4529, %v4528
  %v5028 = vpack.c.b16 %v4531, %v4530
  %v5029 = vpack.c.b16 %v4533, %v4532
  %v5030 = vpack.c.b16 %v4535, %v4534
  %v5031 = vpack.c.b16 %v4537, %v4536
  %v5032 = vpack.c.b16 %v4539, %v4538
  %v5033 = vpack.c.b16 %v4541, %v4540
  %v5034 = vpack.c.b16 %v4543, %v4542
  %v5035 = vpack.c.b16 %v4545, %v4544
  %v5036 = vpack.c.b16 %v4547, %v4546
  %v5037 = vpack.c.b16 %v4549, %v4548
  %v5038 = vpack.c.b16 %v4551, %v4550
  %v5039 = vpack.c.b16 %v4553, %v4552
  %v5040 = vpack.c.b16 %v4555, %v4554
  %v5041 = vpack.c.b16 %v4557, %v4556
  %v5042 = vpack.c.b16 %v4559, %v4558
  %v5043 = vpack.c.b16 %v4561, %v4560
  %v5044 = vpack.c.b16 %v4563, %v4562
  %v5045 = vpack.c.b16 %v4565, %v4564
  %v5046 = vpack.c.b16 %v4567, %v4566
  %v5047 = vpack.c.b16 %v4569, %v4568
  %v5048 = vpack.c.b16 %v4571, %v4570
  %v5049 = vpack.c.b16 %v4573, %v4572
  %v5050 = vpack.c.b16 %v4575, %v4574
  %v5051 = vpack.c.b16 %v4577, %v4576
  %v5052 = vpack.c.b16 %v4579, %v4578
  %v5053 = vpack.c.b16 %v4581, %v4580
  %v5054 = vpack.c.b16 %v4583, %v4582
  %v5055 = vpack.c.b16 %v4585, %v4584
  %v5056 = vpack.c.b16 %v4587, %v4586
  %v5057 = vpack.c.b16 %v4589, %v4588
  %v5058 = vpack.c.b16 %v4591, %v4590
  %v5059 = vpack.c.b16 %v4593, %v4592
  %v5060 = vpack.c.b16 %v4595, %v4594
  %v5061 = vpack.c.b16 %v4597, %v4596
  %v5062 = vpack.c.b16 %v4599, %v4598
  %v5063 = vpack.c.b16 %v4601, %v4600
  %v5064 = vpack.c.b16 %v4603, %v4602
  %v5065 = vpack.c.b16 %v4605, %v4604
  %v5066 = vpack.c.b16 %v4607, %v4606
  %v5067 = vpack.c.b16 %v4609, %v4608
  %v5068 = vpack.c.b16 %v4611, %v4610
  %v5069 = vpack.c.b16 %v4613, %v4612
  %v5070 = vpack.c.b16 %v4615, %v4614
  %v5071 = vpack.c.b16 %v4617, %v4616
  %v5072 = vpack.c.b16 %v4619, %v4618
  %v5073 = vpack.c.b16 %v4621, %v4620
  %v5074 = vpack.c.b16 %v4623, %v4622
  %v5075 = vpack.c.b16 %v4625, %v4624
  %v5076 = vpack.c.b16 %v4627, %v4626
  %v5077 = vpack.c.b16 %v4629, %v4628
  %v5078 = vpack.c.b16 %v4631, %v4630
  %v5079 = vpack.c.b16 %v4633, %v4632
  %v5080 = vpack.c.b16 %v4635, %v4634
  %v5081 = vpack.c.b16 %v4637, %v4636
  %v5082 = vpack.c.b16 %v4639, %v4638
  %v5083 = vpack.c.b16 %v4641, %v4640
  %v5084 = vpack.c.b16 %v4643, %v4642
  %v5085 = vpack.c.b16 %v4645, %v4644
  %v5086 = vpack.c.b16 %v4647, %v4646
  %v5087 = vpack.c.b16 %v4649, %v4648
  %v5088 = vpack.c.b16 %v4651, %v4650
  %v5089 = vpack.c.b16 %v4653, %v4652
  %v5090 = vpack.c.b16 %v4655, %v4654
  %v5091 = vpack.c.b16 %v4657, %v4656
  %v5092 = vpack.c.b16 %v4659, %v4658
  %v5093 = vpack.c.b16 %v4661, %v4660
  %v5094 = vpack.c.b16 %v4663, %v4662
  %v5095 = vpack.c.b16 %v4665, %v4664
  %v5096 = vpack.c.b16 %v4667, %v4666
  %v5097 = vpack.c.b16 %v4669, %v4668
  %v5098 = vpack.c.b16 %v4671, %v4670
  %v5099 = vpack.c.b16 %v4673, %v4672
  %v5100 = vpack.c.b16 %v4675, %v4674
  %v5101 = vpack.c.b16 %v4677, %v4676
  %v5102 = vpack.c.b16 %v4679, %v4678
  %v5103 = vpack.c.b16 %v4681, %v4680
  %v5104 = vpack.c.b16 %v4683, %v4682
  %v5105 = vpack.c.b16 %v4685, %v4684
  %v5106 = vpack.c.b16 %v4687, %v4686
  %v5107 = vpack.c.b16 %v4689, %v4688
  %v5108 = vpack.c.b16 %v4691, %v4690
  %v5109 = vpack.c.b16 %v4693, %v4692
  %v5110 = vpack.c.b16 %v4695, %v4694
  %v5111 = vpack.c.b16 %v4697, %v4696
  %v5112 = vpack.c.b16 %v4699, %v4698
  %v5113 = vpack.c.b16 %v4701, %v4700
  %v5114 = vpack.c.b16 %v4703, %v4702
  %v5115 = vpack.c.b16 %v4705, %v4704
  %v5116 = vpack.c.b16 %v4707, %v4706
  %v5117 = vpack.c.b16 %v4709, %v4708
  %v5118 = vpack.c.b16 %v4711, %v4710
  %v5119 = vpack.c.b16 %v4713, %v4712
  %v5120 = vpack.c.b16 %v4715, %v4714
  %v5121 = vpack.c.b16 %v4717, %v4716
  %v5122 = vpack.c.b16 %v4719, %v4718
  %v5123 = vpack.c.b16 %v4721, %v4720
  %v5124 = vpack.c.b16 %v4723, %v4722
  %v5125 = vpack.c.b16 %v4725, %v4724
  %v5126 = vpack.c.b16 %v4727, %v4726
  %v5127 = vpack.c.b16 %v4729, %v4728
  %v5128 = vpack.c.b16 %v4731, %v4730
  %v5129 = vpack.c.b16 %v4733, %v4732
  %v5130 = vpack.c.b16 %v4735, %v4734
  %v5131 = vpack.c.b16 %v4737, %v4736
  %v5132 = vpack.c.b16 %v4739, %v4738
  %v5133 = vpack.c.b16 %v4741, %v4740
  %5526 = vmatprep.subr.bf16.mxu0 0
  %5527 = vmatpush1.bf16.msra.mxu0 %v4742
  %5528 = vmatprep.subr.bf16.mxu0 0
  %5529 = vmatpush1.bf16.msra.mxu0 %v4743
  %5530 = vmatprep.subr.bf16.mxu0 0
  %5531 = vmatpush1.bf16.msra.mxu0 %v4744
  %5532 = vmatprep.subr.bf16.mxu0 0
  %5533 = vmatpush1.bf16.msra.mxu0 %v4745
  %5534 = vmatprep.subr.bf16.mxu0 0
  %5535 = vmatpush1.bf16.msra.mxu0 %v4746
  %5536 = vmatprep.subr.bf16.mxu0 0
  %5537 = vmatpush1.bf16.msra.mxu0 %v4747
  %5538 = vmatprep.subr.bf16.mxu0 0
  %5539 = vmatpush1.bf16.msra.mxu0 %v4748
  %5540 = vmatprep.subr.bf16.mxu0 0
  %5541 = vmatpush1.bf16.msra.mxu0 %v4749
  %5542 = vmatprep.subr.bf16.mxu0 0
  %5543 = vmatpush1.bf16.msra.mxu0 %v4750
  %5544 = vmatprep.subr.bf16.mxu0 0
  %5545 = vmatpush1.bf16.msra.mxu0 %v4751
  %5546 = vmatprep.subr.bf16.mxu0 0
  %5547 = vmatpush1.bf16.msra.mxu0 %v4752
  %5548 = vmatprep.subr.bf16.mxu0 0
  %5549 = vmatpush1.bf16.msra.mxu0 %v4753
  %5550 = vmatprep.subr.bf16.mxu0 0
  %5551 = vmatpush1.bf16.msra.mxu0 %v4754
  %5552 = vmatprep.subr.bf16.mxu0 0
  %5553 = vmatpush1.bf16.msra.mxu0 %v4755
  %5554 = vmatprep.subr.bf16.mxu0 0
  %5555 = vmatpush1.bf16.msra.mxu0 %v4756
  %5556 = vmatprep.subr.bf16.mxu0 0
  %5557 = vmatpush1.bf16.msra.mxu0 %v4757
  %5558 = vmatprep.mubr.bf16.mxu0 %v2391
  %5559 = vmatmul.mubr.bf16.gmra.mrb[0].mxu0 %v2390
  %v5560 = vpop.f32.mrb[0].mxu0
  %v5561 = vadd.f32 %v1204, %v5560
  %v5562 = vpop.f32.mrb[0].mxu0
  %v5563 = vpop.f32.mrb[0].mxu0
  %v5564 = vadd.f32 %v1204, %v5563
  %v5565 = vpop.f32.mrb[0].mxu0
  %5566 = vmatprep.mubr.bf16.mxu0 %v2440
  %5567 = vmatmul.mubr.bf16.gmra.mrb[0].mxu0 %v2439
  %v5568 = vpop.f32.mrb[0].mxu0
  %v5569 = vadd.f32 %v1204, %v5568
  %v5570 = vpop.f32.mrb[0].mxu0
  %v5571 = vpop.f32.mrb[0].mxu0
  %v5572 = vadd.f32 %v1204, %v5571
  %v5573 = vpop.f32.mrb[0].mxu0
  %5574 = vmatprep.mubr.bf16.mxu0 %v2489
  %5575 = vmatmul.mubr.bf16.gmra.mrb[0].mxu0 %v2488
  %v5576 = vpop.f32.mrb[0].mxu0
  %v5577 = vadd.f32 %v1204, %v5576
  %v5578 = vpop.f32.mrb[0].mxu0
  %v5579 = vpop.f32.mrb[0].mxu0
  %v5580 = vadd.f32 %v1204, %v5579
  %v5581 = vpop.f32.mrb[0].mxu0
  %5582 = vmatprep.mubr.bf16.mxu0 %v2538
  %5583 = vmatmul.mubr.bf16.gmra.mrb[0].mxu0 %v2537
  %v5584 = vpop.f32.mrb[0].mxu0
  %v5585 = vadd.f32 %v1204, %v5584
  %v5586 = vpop.f32.mrb[0].mxu0
  %v5587 = vpop.f32.mrb[0].mxu0
  %v5588 = vadd.f32 %v1204, %v5587
  %v5589 = vpop.f32.mrb[0].mxu0
  %5590 = vmatprep.mubr.bf16.mxu0 %v2587
  %5591 = vmatmul.mubr.bf16.gmra.mrb[0].mxu0 %v2586
  %v5592 = vpop.f32.mrb[0].mxu0
  %v5593 = vadd.f32 %v1204, %v5592
  %v5594 = vpop.f32.mrb[0].mxu0
  %v5595 = vpop.f32.mrb[0].mxu0
  %v5596 = vadd.f32 %v1204, %v5595
  %v5597 = vpop.f32.mrb[0].mxu0
  %5598 = vmatprep.mubr.bf16.mxu0 %v2636
  %5599 = vmatmul.mubr.bf16.gmra.mrb[0].mxu0 %v2635
  %v5600 = vpop.f32.mrb[0].mxu0
  %v5601 = vadd.f32 %v1204, %v5600
  %v5602 = vpop.f32.mrb[0].mxu0
  %v5603 = vpop.f32.mrb[0].mxu0
  %v5604 = vadd.f32 %v1204, %v5603
  %v5605 = vpop.f32.mrb[0].mxu0
  %5606 = vmatprep.mubr.bf16.mxu0 %v2685
  %5607 = vmatmul.mubr.bf16.gmra.mrb[0].mxu0 %v2684
  %v5608 = vpop.f32.mrb[0].mxu0
  %v5609 = vadd.f32 %v1204, %v5608
  %v5610 = vpop.f32.mrb[0].mxu0
  %v5611 = vpop.f32.mrb[0].mxu0
  %v5612 = vadd.f32 %v1204, %v5611
  %v5613 = vpop.f32.mrb[0].mxu0
  %5614 = vmatprep.mubr.bf16.mxu0 %v2734
  %5615 = vmatmul.mubr.bf16.gmra.mrb[0].mxu0 %v2733
  %v5616 = vpop.f32.mrb[0].mxu0
  %v5617 = vadd.f32 %v1204, %v5616
  %v5618 = vpop.f32.mrb[0].mxu0
  %v5619 = vpop.f32.mrb[0].mxu0
  %v5620 = vadd.f32 %v1204, %v5619
  %v5621 = vpop.f32.mrb[0].mxu0
  %5622 = vdwg.mxu0
  %5623 = vmatprep.subr.bf16.mxu0 0
  %5624 = vmatpush1.bf16.msra.mxu0 %v4758
  %5625 = vmatprep.subr.bf16.mxu0 0
  %5626 = vmatpush1.bf16.msra.mxu0 %v4759
  %5627 = vmatprep.subr.bf16.mxu0 0
  %5628 = vmatpush1.bf16.msra.mxu0 %v4760
  %5629 = vmatprep.subr.bf16.mxu0 0
  %5630 = vmatpush1.bf16.msra.mxu0 %v4761
  %5631 = vmatprep.subr.bf16.mxu0 0
  %5632 = vmatpush1.bf16.msra.mxu0 %v4762
  %5633 = vmatprep.subr.bf16.mxu0 0
  %5634 = vmatpush1.bf16.msra.mxu0 %v4763
  %5635 = vmatprep.subr.bf16.mxu0 0
  %5636 = vmatpush1.bf16.msra.mxu0 %v4764
  %5637 = vmatprep.subr.bf16.mxu0 0
  %5638 = vmatpush1.bf16.msra.mxu0 %v4765
  %5639 = vmatprep.subr.bf16.mxu0 0
  %5640 = vmatpush1.bf16.msra.mxu0 %v4766
  %5641 = vmatprep.subr.bf16.mxu0 0
  %5642 = vmatpush1.bf16.msra.mxu0 %v4767
  %5643 = vmatprep.subr.bf16.mxu0 0
  %5644 = vmatpush1.bf16.msra.mxu0 %v4768
  %5645 = vmatprep.subr.bf16.mxu0 0
  %5646 = vmatpush1.bf16.msra.mxu0 %v4769
  %5647 = vmatprep.subr.bf16.mxu0 0
  %5648 = vmatpush1.bf16.msra.mxu0 %v4770
  %5649 = vmatprep.subr.bf16.mxu0 0
  %5650 = vmatpush1.bf16.msra.mxu0 %v4771
  %5651 = vmatprep.subr.bf16.mxu0 0
  %5652 = vmatpush1.bf16.msra.mxu0 %v4772
  %5653 = vmatprep.subr.bf16.mxu0 0
  %5654 = vmatpush1.bf16.msra.mxu0 %v4773
  %5655 = vmatprep.mubr.bf16.mxu0 %v2393
  %5656 = vmatmul.mubr.bf16.gmra.mrb[0].mxu0 %v2392
  %v5657 = vpop.f32.mrb[0].mxu0
  %v5658 = vadd.f32 %v5561, %v5657
  %v5659 = vpop.f32.mrb[0].mxu0
  %v5660 = vpop.f32.mrb[0].mxu0
  %v5661 = vadd.f32 %v5564, %v5660
  %v5662 = vpop.f32.mrb[0].mxu0
  %5663 = vmatprep.mubr.bf16.mxu0 %v2442
  %5664 = vmatmul.mubr.bf16.gmra.mrb[0].mxu0 %v2441
  %v5665 = vpop.f32.mrb[0].mxu0
  %v5666 = vadd.f32 %v5569, %v5665
  %v5667 = vpop.f32.mrb[0].mxu0
  %v5668 = vpop.f32.mrb[0].mxu0
  %v5669 = vadd.f32 %v5572, %v5668
  %v5670 = vpop.f32.mrb[0].mxu0
  %5671 = vmatprep.mubr.bf16.mxu0 %v2491
  %5672 = vmatmul.mubr.bf16.gmra.mrb[0].mxu0 %v2490
  %v5673 = vpop.f32.mrb[0].mxu0
  %v5674 = vadd.f32 %v5577, %v5673
  %v5675 = vpop.f32.mrb[0].mxu0
  %v5676 = vpop.f32.mrb[0].mxu0
  %v5677 = vadd.f32 %v5580, %v5676
  %v5678 = vpop.f32.mrb[0].mxu0
  %5679 = vmatprep.mubr.bf16.mxu0 %v2540
  %5680 = vmatmul.mubr.bf16.gmra.mrb[0].mxu0 %v2539
  %v5681 = vpop.f32.mrb[0].mxu0
  %v5682 = vadd.f32 %v5585, %v5681
  %v5683 = vpop.f32.mrb[0].mxu0
  %v5684 = vpop.f32.mrb[0].mxu0
  %v5685 = vadd.f32 %v5588, %v5684
  %v5686 = vpop.f32.mrb[0].mxu0
  %5687 = vmatprep.mubr.bf16.mxu0 %v2589
  %5688 = vmatmul.mubr.bf16.gmra.mrb[0].mxu0 %v2588
  %v5689 = vpop.f32.mrb[0].mxu0
  %v5690 = vadd.f32 %v5593, %v5689
  %v5691 = vpop.f32.mrb[0].mxu0
  %v5692 = vpop.f32.mrb[0].mxu0
  %v5693 = vadd.f32 %v5596, %v5692
  %v5694 = vpop.f32.mrb[0].mxu0
  %5695 = vmatprep.mubr.bf16.mxu0 %v2638
  %5696 = vmatmul.mubr.bf16.gmra.mrb[0].mxu0 %v2637
  %v5697 = vpop.f32.mrb[0].mxu0
  %v5698 = vadd.f32 %v5601, %v5697
  %v5699 = vpop.f32.mrb[0].mxu0
  %v5700 = vpop.f32.mrb[0].mxu0
  %v5701 = vadd.f32 %v5604, %v5700
  %v5702 = vpop.f32.mrb[0].mxu0
  %5703 = vmatprep.mubr.bf16.mxu0 %v2687
  %5704 = vmatmul.mubr.bf16.gmra.mrb[0].mxu0 %v2686
  %v5705 = vpop.f32.mrb[0].mxu0
  %v5706 = vadd.f32 %v5609, %v5705
  %v5707 = vpop.f32.mrb[0].mxu0
  %v5708 = vpop.f32.mrb[0].mxu0
  %v5709 = vadd.f32 %v5612, %v5708
  %v5710 = vpop.f32.mrb[0].mxu0
  %5711 = vmatprep.mubr.bf16.mxu0 %v2736
  %5712 = vmatmul.mubr.bf16.gmra.mrb[0].mxu0 %v2735
  %v5713 = vpop.f32.mrb[0].mxu0
  %v5714 = vadd.f32 %v5617, %v5713
  %v5715 = vpop.f32.mrb[0].mxu0
  %v5716 = vpop.f32.mrb[0].mxu0
  %v5717 = vadd.f32 %v5620, %v5716
  %v5718 = vpop.f32.mrb[0].mxu0
  %5719 = vdwg.mxu0
  %5720 = vmatprep.subr.bf16.mxu0 0
  %5721 = vmatpush1.bf16.msra.mxu0 %v4774
  %5722 = vmatprep.subr.bf16.mxu0 0
  %5723 = vmatpush1.bf16.msra.mxu0 %v4775
  %5724 = vmatprep.subr.bf16.mxu0 0
  %5725 = vmatpush1.bf16.msra.mxu0 %v4776
  %5726 = vmatprep.subr.bf16.mxu0 0
  %5727 = vmatpush1.bf16.msra.mxu0 %v4777
  %5728 = vmatprep.subr.bf16.mxu0 0
  %5729 = vmatpush1.bf16.msra.mxu0 %v4778
  %5730 = vmatprep.subr.bf16.mxu0 0
  %5731 = vmatpush1.bf16.msra.mxu0 %v4779
  %5732 = vmatprep.subr.bf16.mxu0 0
  %5733 = vmatpush1.bf16.msra.mxu0 %v4780
  %5734 = vmatprep.subr.bf16.mxu0 0
  %5735 = vmatpush1.bf16.msra.mxu0 %v4781
  %5736 = vmatprep.subr.bf16.mxu0 0
  %5737 = vmatpush1.bf16.msra.mxu0 %v4782
  %5738 = vmatprep.subr.bf16.mxu0 0
  %5739 = vmatpush1.bf16.msra.mxu0 %v4783
  %5740 = vmatprep.subr.bf16.mxu0 0
  %5741 = vmatpush1.bf16.msra.mxu0 %v4784
  %5742 = vmatprep.subr.bf16.mxu0 0
  %5743 = vmatpush1.bf16.msra.mxu0 %v4785
  %5744 = vmatprep.subr.bf16.mxu0 0
  %5745 = vmatpush1.bf16.msra.mxu0 %v4786
  %5746 = vmatprep.subr.bf16.mxu0 0
  %5747 = vmatpush1.bf16.msra.mxu0 %v4787
  %5748 = vmatprep.subr.bf16.mxu0 0
  %5749 = vmatpush1.bf16.msra.mxu0 %v4788
  %5750 = vmatprep.subr.bf16.mxu0 0
  %5751 = vmatpush1.bf16.msra.mxu0 %v4789
  %5752 = vmatprep.mubr.bf16.mxu0 %v2395
  %5753 = vmatmul.mubr.bf16.gmra.mrb[0].mxu0 %v2394
  %v5754 = vpop.f32.mrb[0].mxu0
  %v5755 = vadd.f32 %v5658, %v5754
  %v5756 = vpop.f32.mrb[0].mxu0
  %v5757 = vpop.f32.mrb[0].mxu0
  %v5758 = vadd.f32 %v5661, %v5757
  %v5759 = vpop.f32.mrb[0].mxu0
  %5760 = vmatprep.mubr.bf16.mxu0 %v2444
  %5761 = vmatmul.mubr.bf16.gmra.mrb[0].mxu0 %v2443
  %v5762 = vpop.f32.mrb[0].mxu0
  %v5763 = vadd.f32 %v5666, %v5762
  %v5764 = vpop.f32.mrb[0].mxu0
  %v5765 = vpop.f32.mrb[0].mxu0
  %v5766 = vadd.f32 %v5669, %v5765
  %v5767 = vpop.f32.mrb[0].mxu0
  %5768 = vmatprep.mubr.bf16.mxu0 %v2493
  %5769 = vmatmul.mubr.bf16.gmra.mrb[0].mxu0 %v2492
  %v5770 = vpop.f32.mrb[0].mxu0
  %v5771 = vadd.f32 %v5674, %v5770
  %v5772 = vpop.f32.mrb[0].mxu0
  %v5773 = vpop.f32.mrb[0].mxu0
  %v5774 = vadd.f32 %v5677, %v5773
  %v5775 = vpop.f32.mrb[0].mxu0
  %5776 = vmatprep.mubr.bf16.mxu0 %v2542
  %5777 = vmatmul.mubr.bf16.gmra.mrb[0].mxu0 %v2541
  %v5778 = vpop.f32.mrb[0].mxu0
  %v5779 = vadd.f32 %v5682, %v5778
  %v5780 = vpop.f32.mrb[0].mxu0
  %v5781 = vpop.f32.mrb[0].mxu0
  %v5782 = vadd.f32 %v5685, %v5781
  %v5783 = vpop.f32.mrb[0].mxu0
  %5784 = vmatprep.mubr.bf16.mxu0 %v2591
  %5785 = vmatmul.mubr.bf16.gmra.mrb[0].mxu0 %v2590
  %v5786 = vpop.f32.mrb[0].mxu0
  %v5787 = vadd.f32 %v5690, %v5786
  %v5788 = vpop.f32.mrb[0].mxu0
  %v5789 = vpop.f32.mrb[0].mxu0
  %v5790 = vadd.f32 %v5693, %v5789
  %v5791 = vpop.f32.mrb[0].mxu0
  %5792 = vmatprep.mubr.bf16.mxu0 %v2640
  %5793 = vmatmul.mubr.bf16.gmra.mrb[0].mxu0 %v2639
  %v5794 = vpop.f32.mrb[0].mxu0
  %v5795 = vadd.f32 %v5698, %v5794
  %v5796 = vpop.f32.mrb[0].mxu0
  %v5797 = vpop.f32.mrb[0].mxu0
  %v5798 = vadd.f32 %v5701, %v5797
  %v5799 = vpop.f32.mrb[0].mxu0
  %5800 = vmatprep.mubr.bf16.mxu0 %v2689
  %5801 = vmatmul.mubr.bf16.gmra.mrb[0].mxu0 %v2688
  %v5802 = vpop.f32.mrb[0].mxu0
  %v5803 = vadd.f32 %v5706, %v5802
  %v5804 = vpop.f32.mrb[0].mxu0
  %v5805 = vpop.f32.mrb[0].mxu0
  %v5806 = vadd.f32 %v5709, %v5805
  %v5807 = vpop.f32.mrb[0].mxu0
  %5808 = vmatprep.mubr.bf16.mxu0 %v2738
  %5809 = vmatmul.mubr.bf16.gmra.mrb[0].mxu0 %v2737
  %v5810 = vpop.f32.mrb[0].mxu0
  %v5811 = vadd.f32 %v5714, %v5810
  %v5812 = vpop.f32.mrb[0].mxu0
  %v5813 = vpop.f32.mrb[0].mxu0
  %v5814 = vadd.f32 %v5717, %v5813
  %v5815 = vpop.f32.mrb[0].mxu0
  %5816 = vdwg.mxu0
  %5817 = vmatprep.subr.bf16.mxu0 0
  %5818 = vmatpush1.bf16.msra.mxu0 %v4790
  %5819 = vmatprep.subr.bf16.mxu0 0
  %5820 = vmatpush1.bf16.msra.mxu0 %v4791
  %5821 = vmatprep.subr.bf16.mxu0 0
  %5822 = vmatpush1.bf16.msra.mxu0 %v4792
  %5823 = vmatprep.subr.bf16.mxu0 0
  %5824 = vmatpush1.bf16.msra.mxu0 %v4793
  %5825 = vmatprep.subr.bf16.mxu0 0
  %5826 = vmatpush1.bf16.msra.mxu0 %v4794
  %5827 = vmatprep.subr.bf16.mxu0 0
  %5828 = vmatpush1.bf16.msra.mxu0 %v4795
  %5829 = vmatprep.subr.bf16.mxu0 0
  %5830 = vmatpush1.bf16.msra.mxu0 %v4796
  %5831 = vmatprep.subr.bf16.mxu0 0
  %5832 = vmatpush1.bf16.msra.mxu0 %v4797
  %5833 = vmatprep.subr.bf16.mxu0 0
  %5834 = vmatpush1.bf16.msra.mxu0 %v4798
  %5835 = vmatprep.subr.bf16.mxu0 0
  %5836 = vmatpush1.bf16.msra.mxu0 %v4799
  %5837 = vmatprep.subr.bf16.mxu0 0
  %5838 = vmatpush1.bf16.msra.mxu0 %v4800
  %5839 = vmatprep.subr.bf16.mxu0 0
  %5840 = vmatpush1.bf16.msra.mxu0 %v4801
  %5841 = vmatprep.subr.bf16.mxu0 0
  %5842 = vmatpush1.bf16.msra.mxu0 %v4802
  %5843 = vmatprep.subr.bf16.mxu0 0
  %5844 = vmatpush1.bf16.msra.mxu0 %v4803
  %5845 = vmatprep.subr.bf16.mxu0 0
  %5846 = vmatpush1.bf16.msra.mxu0 %v4804
  %5847 = vmatprep.subr.bf16.mxu0 0
  %5848 = vmatpush1.bf16.msra.mxu0 %v4805
  %5849 = vmatprep.mubr.bf16.mxu0 %v2397
  %5850 = vmatmul.mubr.bf16.gmra.mrb[0].mxu0 %v2396
  %v5851 = vpop.f32.mrb[0].mxu0
  %v5852 = vadd.f32 %v5755, %v5851
  %v5853 = vpop.f32.mrb[0].mxu0
  %v5854 = vpop.f32.mrb[0].mxu0
  %v5855 = vadd.f32 %v5758, %v5854
  %v5856 = vpop.f32.mrb[0].mxu0
  %5857 = vmatprep.mubr.bf16.mxu0 %v2446
  %5858 = vmatmul.mubr.bf16.gmra.mrb[0].mxu0 %v2445
  %v5859 = vpop.f32.mrb[0].mxu0
  %v5860 = vadd.f32 %v5763, %v5859
  %v5861 = vpop.f32.mrb[0].mxu0
  %v5862 = vpop.f32.mrb[0].mxu0
  %v5863 = vadd.f32 %v5766, %v5862
  %v5864 = vpop.f32.mrb[0].mxu0
  %5865 = vmatprep.mubr.bf16.mxu0 %v2495
  %5866 = vmatmul.mubr.bf16.gmra.mrb[0].mxu0 %v2494
  %v5867 = vpop.f32.mrb[0].mxu0
  %v5868 = vadd.f32 %v5771, %v5867
  %v5869 = vpop.f32.mrb[0].mxu0
  %v5870 = vpop.f32.mrb[0].mxu0
  %v5871 = vadd.f32 %v5774, %v5870
  %v5872 = vpop.f32.mrb[0].mxu0
  %5873 = vmatprep.mubr.bf16.mxu0 %v2544
  %5874 = vmatmul.mubr.bf16.gmra.mrb[0].mxu0 %v2543
  %v5875 = vpop.f32.mrb[0].mxu0
  %v5876 = vadd.f32 %v5779, %v5875
  %v5877 = vpop.f32.mrb[0].mxu0
  %v5878 = vpop.f32.mrb[0].mxu0
  %v5879 = vadd.f32 %v5782, %v5878
  %v5880 = vpop.f32.mrb[0].mxu0
  %5881 = vmatprep.mubr.bf16.mxu0 %v2593
  %5882 = vmatmul.mubr.bf16.gmra.mrb[0].mxu0 %v2592
  %v5883 = vpop.f32.mrb[0].mxu0
  %v5884 = vadd.f32 %v5787, %v5883
  %v5885 = vpop.f32.mrb[0].mxu0
  %v5886 = vpop.f32.mrb[0].mxu0
  %v5887 = vadd.f32 %v5790, %v5886
  %v5888 = vpop.f32.mrb[0].mxu0
  %5889 = vmatprep.mubr.bf16.mxu0 %v2642
  %5890 = vmatmul.mubr.bf16.gmra.mrb[0].mxu0 %v2641
  %v5891 = vpop.f32.mrb[0].mxu0
  %v5892 = vadd.f32 %v5795, %v5891
  %v5893 = vpop.f32.mrb[0].mxu0
  %v5894 = vpop.f32.mrb[0].mxu0
  %v5895 = vadd.f32 %v5798, %v5894
  %v5896 = vpop.f32.mrb[0].mxu0
  %5897 = vmatprep.mubr.bf16.mxu0 %v2691
  %5898 = vmatmul.mubr.bf16.gmra.mrb[0].mxu0 %v2690
  %v5899 = vpop.f32.mrb[0].mxu0
  %v5900 = vadd.f32 %v5803, %v5899
  %v5901 = vpop.f32.mrb[0].mxu0
  %v5902 = vpop.f32.mrb[0].mxu0
  %v5903 = vadd.f32 %v5806, %v5902
  %v5904 = vpop.f32.mrb[0].mxu0
  %5905 = vmatprep.mubr.bf16.mxu0 %v2740
  %5906 = vmatmul.mubr.bf16.gmra.mrb[0].mxu0 %v2739
  %v5907 = vpop.f32.mrb[0].mxu0
  %v5908 = vadd.f32 %v5811, %v5907
  %v5909 = vpop.f32.mrb[0].mxu0
  %v5910 = vpop.f32.mrb[0].mxu0
  %v5911 = vadd.f32 %v5814, %v5910
  %v5912 = vpop.f32.mrb[0].mxu0
  %5913 = vdwg.mxu0
  %5914 = vmatprep.subr.bf16.mxu0 0
  %5915 = vmatpush1.bf16.msra.mxu0 %v4806
  %5916 = vmatprep.subr.bf16.mxu0 0
  %5917 = vmatpush1.bf16.msra.mxu0 %v4807
  %5918 = vmatprep.subr.bf16.mxu0 0
  %5919 = vmatpush1.bf16.msra.mxu0 %v4808
  %5920 = vmatprep.subr.bf16.mxu0 0
  %5921 = vmatpush1.bf16.msra.mxu0 %v4809
  %5922 = vmatprep.subr.bf16.mxu0 0
  %5923 = vmatpush1.bf16.msra.mxu0 %v4810
  %5924 = vmatprep.subr.bf16.mxu0 0
  %5925 = vmatpush1.bf16.msra.mxu0 %v4811
  %5926 = vmatprep.subr.bf16.mxu0 0
  %5927 = vmatpush1.bf16.msra.mxu0 %v4812
  %5928 = vmatprep.subr.bf16.mxu0 0
  %5929 = vmatpush1.bf16.msra.mxu0 %v4813
  %5930 = vmatprep.subr.bf16.mxu0 0
  %5931 = vmatpush1.bf16.msra.mxu0 %v4814
  %5932 = vmatprep.subr.bf16.mxu0 0
  %5933 = vmatpush1.bf16.msra.mxu0 %v4815
  %5934 = vmatprep.subr.bf16.mxu0 0
  %5935 = vmatpush1.bf16.msra.mxu0 %v4816
  %5936 = vmatprep.subr.bf16.mxu0 0
  %5937 = vmatpush1.bf16.msra.mxu0 %v4817
  %5938 = vmatprep.subr.bf16.mxu0 0
  %5939 = vmatpush1.bf16.msra.mxu0 %v4818
  %5940 = vmatprep.subr.bf16.mxu0 0
  %5941 = vmatpush1.bf16.msra.mxu0 %v4819
  %5942 = vmatprep.subr.bf16.mxu0 0
  %5943 = vmatpush1.bf16.msra.mxu0 %v4820
  %5944 = vmatprep.subr.bf16.mxu0 0
  %5945 = vmatpush1.bf16.msra.mxu0 %v4821
  %5946 = vmatprep.mubr.bf16.mxu0 %v2399
  %5947 = vmatmul.mubr.bf16.gmra.mrb[0].mxu0 %v2398
  %v5948 = vpop.f32.mrb[0].mxu0
  %v5949 = vadd.f32 %v5852, %v5948
  %v5950 = vpop.f32.mrb[0].mxu0
  %v5951 = vpop.f32.mrb[0].mxu0
  %v5952 = vadd.f32 %v5855, %v5951
  %v5953 = vpop.f32.mrb[0].mxu0
  %5954 = vmatprep.mubr.bf16.mxu0 %v2448
  %5955 = vmatmul.mubr.bf16.gmra.mrb[0].mxu0 %v2447
  %v5956 = vpop.f32.mrb[0].mxu0
  %v5957 = vadd.f32 %v5860, %v5956
  %v5958 = vpop.f32.mrb[0].mxu0
  %v5959 = vpop.f32.mrb[0].mxu0
  %v5960 = vadd.f32 %v5863, %v5959
  %v5961 = vpop.f32.mrb[0].mxu0
  %5962 = vmatprep.mubr.bf16.mxu0 %v2497
  %5963 = vmatmul.mubr.bf16.gmra.mrb[0].mxu0 %v2496
  %v5964 = vpop.f32.mrb[0].mxu0
  %v5965 = vadd.f32 %v5868, %v5964
  %v5966 = vpop.f32.mrb[0].mxu0
  %v5967 = vpop.f32.mrb[0].mxu0
  %v5968 = vadd.f32 %v5871, %v5967
  %v5969 = vpop.f32.mrb[0].mxu0
  %5970 = vmatprep.mubr.bf16.mxu0 %v2546
  %5971 = vmatmul.mubr.bf16.gmra.mrb[0].mxu0 %v2545
  %v5972 = vpop.f32.mrb[0].mxu0
  %v5973 = vadd.f32 %v5876, %v5972
  %v5974 = vpop.f32.mrb[0].mxu0
  %v5975 = vpop.f32.mrb[0].mxu0
  %v5976 = vadd.f32 %v5879, %v5975
  %v5977 = vpop.f32.mrb[0].mxu0
  %5978 = vmatprep.mubr.bf16.mxu0 %v2595
  %5979 = vmatmul.mubr.bf16.gmra.mrb[0].mxu0 %v2594
  %v5980 = vpop.f32.mrb[0].mxu0
  %v5981 = vadd.f32 %v5884, %v5980
  %v5982 = vpop.f32.mrb[0].mxu0
  %v5983 = vpop.f32.mrb[0].mxu0
  %v5984 = vadd.f32 %v5887, %v5983
  %v5985 = vpop.f32.mrb[0].mxu0
  %5986 = vmatprep.mubr.bf16.mxu0 %v2644
  %5987 = vmatmul.mubr.bf16.gmra.mrb[0].mxu0 %v2643
  %v5988 = vpop.f32.mrb[0].mxu0
  %v5989 = vadd.f32 %v5892, %v5988
  %v5990 = vpop.f32.mrb[0].mxu0
  %v5991 = vpop.f32.mrb[0].mxu0
  %v5992 = vadd.f32 %v5895, %v5991
  %v5993 = vpop.f32.mrb[0].mxu0
  %5994 = vmatprep.mubr.bf16.mxu0 %v2693
  %5995 = vmatmul.mubr.bf16.gmra.mrb[0].mxu0 %v2692
  %v5996 = vpop.f32.mrb[0].mxu0
  %v5997 = vadd.f32 %v5900, %v5996
  %v5998 = vpop.f32.mrb[0].mxu0
  %v5999 = vpop.f32.mrb[0].mxu0
  %v6000 = vadd.f32 %v5903, %v5999
  %v6001 = vpop.f32.mrb[0].mxu0
  %6002 = vmatprep.mubr.bf16.mxu0 %v2742
  %6003 = vmatmul.mubr.bf16.gmra.mrb[0].mxu0 %v2741
  %v6004 = vpop.f32.mrb[0].mxu0
  %v6005 = vadd.f32 %v5908, %v6004
  %v6006 = vpop.f32.mrb[0].mxu0
  %v6007 = vpop.f32.mrb[0].mxu0
  %v6008 = vadd.f32 %v5911, %v6007
  %v6009 = vpop.f32.mrb[0].mxu0
  %6010 = vdwg.mxu0
  %6011 = vmatprep.subr.bf16.mxu0 0
  %6012 = vmatpush1.bf16.msra.mxu0 %v4822
  %6013 = vmatprep.subr.bf16.mxu0 0
  %6014 = vmatpush1.bf16.msra.mxu0 %v4823
  %6015 = vmatprep.subr.bf16.mxu0 0
  %6016 = vmatpush1.bf16.msra.mxu0 %v4824
  %6017 = vmatprep.subr.bf16.mxu0 0
  %6018 = vmatpush1.bf16.msra.mxu0 %v4825
  %6019 = vmatprep.subr.bf16.mxu0 0
  %6020 = vmatpush1.bf16.msra.mxu0 %v4826
  %6021 = vmatprep.subr.bf16.mxu0 0
  %6022 = vmatpush1.bf16.msra.mxu0 %v4827
  %6023 = vmatprep.subr.bf16.mxu0 0
  %6024 = vmatpush1.bf16.msra.mxu0 %v4828
  %6025 = vmatprep.subr.bf16.mxu0 0
  %6026 = vmatpush1.bf16.msra.mxu0 %v4829
  %6027 = vmatprep.subr.bf16.mxu0 0
  %6028 = vmatpush1.bf16.msra.mxu0 %v4830
  %6029 = vmatprep.subr.bf16.mxu0 0
  %6030 = vmatpush1.bf16.msra.mxu0 %v4831
  %6031 = vmatprep.subr.bf16.mxu0 0
  %6032 = vmatpush1.bf16.msra.mxu0 %v4832
  %6033 = vmatprep.subr.bf16.mxu0 0
  %6034 = vmatpush1.bf16.msra.mxu0 %v4833
  %6035 = vmatprep.subr.bf16.mxu0 0
  %6036 = vmatpush1.bf16.msra.mxu0 %v4834
  %6037 = vmatprep.subr.bf16.mxu0 0
  %6038 = vmatpush1.bf16.msra.mxu0 %v4835
  %6039 = vmatprep.subr.bf16.mxu0 0
  %6040 = vmatpush1.bf16.msra.mxu0 %v4836
  %6041 = vmatprep.subr.bf16.mxu0 0
  %6042 = vmatpush1.bf16.msra.mxu0 %v4837
  %6043 = vmatprep.mubr.bf16.mxu0 %v2401
  %6044 = vmatmul.mubr.bf16.gmra.mrb[0].mxu0 %v2400
  %v6045 = vpop.f32.mrb[0].mxu0
  %v6046 = vadd.f32 %v5949, %v6045
  %v6047 = vpop.f32.mrb[0].mxu0
  %v6048 = vpop.f32.mrb[0].mxu0
  %v6049 = vadd.f32 %v5952, %v6048
  %v6050 = vpop.f32.mrb[0].mxu0
  %6051 = vmatprep.mubr.bf16.mxu0 %v2450
  %6052 = vmatmul.mubr.bf16.gmra.mrb[0].mxu0 %v2449
  %v6053 = vpop.f32.mrb[0].mxu0
  %v6054 = vadd.f32 %v5957, %v6053
  %v6055 = vpop.f32.mrb[0].mxu0
  %v6056 = vpop.f32.mrb[0].mxu0
  %v6057 = vadd.f32 %v5960, %v6056
  %v6058 = vpop.f32.mrb[0].mxu0
  %6059 = vmatprep.mubr.bf16.mxu0 %v2499
  %6060 = vmatmul.mubr.bf16.gmra.mrb[0].mxu0 %v2498
  %v6061 = vpop.f32.mrb[0].mxu0
  %v6062 = vadd.f32 %v5965, %v6061
  %v6063 = vpop.f32.mrb[0].mxu0
  %v6064 = vpop.f32.mrb[0].mxu0
  %v6065 = vadd.f32 %v5968, %v6064
  %v6066 = vpop.f32.mrb[0].mxu0
  %6067 = vmatprep.mubr.bf16.mxu0 %v2548
  %6068 = vmatmul.mubr.bf16.gmra.mrb[0].mxu0 %v2547
  %v6069 = vpop.f32.mrb[0].mxu0
  %v6070 = vadd.f32 %v5973, %v6069
  %v6071 = vpop.f32.mrb[0].mxu0
  %v6072 = vpop.f32.mrb[0].mxu0
  %v6073 = vadd.f32 %v5976, %v6072
  %v6074 = vpop.f32.mrb[0].mxu0
  %6075 = vmatprep.mubr.bf16.mxu0 %v2597
  %6076 = vmatmul.mubr.bf16.gmra.mrb[0].mxu0 %v2596
  %v6077 = vpop.f32.mrb[0].mxu0
  %v6078 = vadd.f32 %v5981, %v6077
  %v6079 = vpop.f32.mrb[0].mxu0
  %v6080 = vpop.f32.mrb[0].mxu0
  %v6081 = vadd.f32 %v5984, %v6080
  %v6082 = vpop.f32.mrb[0].mxu0
  %6083 = vmatprep.mubr.bf16.mxu0 %v2646
  %6084 = vmatmul.mubr.bf16.gmra.mrb[0].mxu0 %v2645
  %v6085 = vpop.f32.mrb[0].mxu0
  %v6086 = vadd.f32 %v5989, %v6085
  %v6087 = vpop.f32.mrb[0].mxu0
  %v6088 = vpop.f32.mrb[0].mxu0
  %v6089 = vadd.f32 %v5992, %v6088
  %v6090 = vpop.f32.mrb[0].mxu0
  %6091 = vmatprep.mubr.bf16.mxu0 %v2695
  %6092 = vmatmul.mubr.bf16.gmra.mrb[0].mxu0 %v2694
  %v6093 = vpop.f32.mrb[0].mxu0
  %v6094 = vadd.f32 %v5997, %v6093
  %v6095 = vpop.f32.mrb[0].mxu0
  %v6096 = vpop.f32.mrb[0].mxu0
  %v6097 = vadd.f32 %v6000, %v6096
  %v6098 = vpop.f32.mrb[0].mxu0
  %6099 = vmatprep.mubr.bf16.mxu0 %v2744
  %6100 = vmatmul.mubr.bf16.gmra.mrb[0].mxu0 %v2743
  %v6101 = vpop.f32.mrb[0].mxu0
  %v6102 = vadd.f32 %v6005, %v6101
  %v6103 = vpop.f32.mrb[0].mxu0
  %v6104 = vpop.f32.mrb[0].mxu0
  %v6105 = vadd.f32 %v6008, %v6104
  %v6106 = vpop.f32.mrb[0].mxu0
  %6107 = vdwg.mxu0
  %6108 = vmatprep.subr.bf16.mxu0 0
  %6109 = vmatpush1.bf16.msra.mxu0 %v4838
  %6110 = vmatprep.subr.bf16.mxu0 0
  %6111 = vmatpush1.bf16.msra.mxu0 %v4839
  %6112 = vmatprep.subr.bf16.mxu0 0
  %6113 = vmatpush1.bf16.msra.mxu0 %v4840
  %6114 = vmatprep.subr.bf16.mxu0 0
  %6115 = vmatpush1.bf16.msra.mxu0 %v4841
  %6116 = vmatprep.subr.bf16.mxu0 0
  %6117 = vmatpush1.bf16.msra.mxu0 %v4842
  %6118 = vmatprep.subr.bf16.mxu0 0
  %6119 = vmatpush1.bf16.msra.mxu0 %v4843
  %6120 = vmatprep.subr.bf16.mxu0 0
  %6121 = vmatpush1.bf16.msra.mxu0 %v4844
  %6122 = vmatprep.subr.bf16.mxu0 0
  %6123 = vmatpush1.bf16.msra.mxu0 %v4845
  %6124 = vmatprep.subr.bf16.mxu0 0
  %6125 = vmatpush1.bf16.msra.mxu0 %v4846
  %6126 = vmatprep.subr.bf16.mxu0 0
  %6127 = vmatpush1.bf16.msra.mxu0 %v4847
  %6128 = vmatprep.subr.bf16.mxu0 0
  %6129 = vmatpush1.bf16.msra.mxu0 %v4848
  %6130 = vmatprep.subr.bf16.mxu0 0
  %6131 = vmatpush1.bf16.msra.mxu0 %v4849
  %6132 = vmatprep.subr.bf16.mxu0 0
  %6133 = vmatpush1.bf16.msra.mxu0 %v4850
  %6134 = vmatprep.subr.bf16.mxu0 0
  %6135 = vmatpush1.bf16.msra.mxu0 %v4851
  %6136 = vmatprep.subr.bf16.mxu0 0
  %6137 = vmatpush1.bf16.msra.mxu0 %v4852
  %6138 = vmatprep.subr.bf16.mxu0 0
  %6139 = vmatpush1.bf16.msra.mxu0 %v4853
  %6140 = vmatprep.mubr.bf16.mxu0 %v2403
  %6141 = vmatmul.mubr.bf16.gmra.mrb[0].mxu0 %v2402
  %v6142 = vpop.f32.mrb[0].mxu0
  %v6143 = vadd.f32 %v6046, %v6142
  %v6144 = vpop.f32.mrb[0].mxu0
  %v6145 = vpop.f32.mrb[0].mxu0
  %v6146 = vadd.f32 %v6049, %v6145
  %v6147 = vpop.f32.mrb[0].mxu0
  %6148 = vmatprep.mubr.bf16.mxu0 %v2452
  %6149 = vmatmul.mubr.bf16.gmra.mrb[0].mxu0 %v2451
  %v6150 = vpop.f32.mrb[0].mxu0
  %v6151 = vadd.f32 %v6054, %v6150
  %v6152 = vpop.f32.mrb[0].mxu0
  %v6153 = vpop.f32.mrb[0].mxu0
  %v6154 = vadd.f32 %v6057, %v6153
  %v6155 = vpop.f32.mrb[0].mxu0
  %6156 = vmatprep.mubr.bf16.mxu0 %v2501
  %6157 = vmatmul.mubr.bf16.gmra.mrb[0].mxu0 %v2500
  %v6158 = vpop.f32.mrb[0].mxu0
  %v6159 = vadd.f32 %v6062, %v6158
  %v6160 = vpop.f32.mrb[0].mxu0
  %v6161 = vpop.f32.mrb[0].mxu0
  %v6162 = vadd.f32 %v6065, %v6161
  %v6163 = vpop.f32.mrb[0].mxu0
  %6164 = vmatprep.mubr.bf16.mxu0 %v2550
  %6165 = vmatmul.mubr.bf16.gmra.mrb[0].mxu0 %v2549
  %v6166 = vpop.f32.mrb[0].mxu0
  %v6167 = vadd.f32 %v6070, %v6166
  %v6168 = vpop.f32.mrb[0].mxu0
  %v6169 = vpop.f32.mrb[0].mxu0
  %v6170 = vadd.f32 %v6073, %v6169
  %v6171 = vpop.f32.mrb[0].mxu0
  %6172 = vmatprep.mubr.bf16.mxu0 %v2599
  %6173 = vmatmul.mubr.bf16.gmra.mrb[0].mxu0 %v2598
  %v6174 = vpop.f32.mrb[0].mxu0
  %v6175 = vadd.f32 %v6078, %v6174
  %v6176 = vpop.f32.mrb[0].mxu0
  %v6177 = vpop.f32.mrb[0].mxu0
  %v6178 = vadd.f32 %v6081, %v6177
  %v6179 = vpop.f32.mrb[0].mxu0
  %6180 = vmatprep.mubr.bf16.mxu0 %v2648
  %6181 = vmatmul.mubr.bf16.gmra.mrb[0].mxu0 %v2647
  %v6182 = vpop.f32.mrb[0].mxu0
  %v6183 = vadd.f32 %v6086, %v6182
  %v6184 = vpop.f32.mrb[0].mxu0
  %v6185 = vpop.f32.mrb[0].mxu0
  %v6186 = vadd.f32 %v6089, %v6185
  %v6187 = vpop.f32.mrb[0].mxu0
  %6188 = vmatprep.mubr.bf16.mxu0 %v2697
  %6189 = vmatmul.mubr.bf16.gmra.mrb[0].mxu0 %v2696
  %v6190 = vpop.f32.mrb[0].mxu0
  %v6191 = vadd.f32 %v6094, %v6190
  %v6192 = vpop.f32.mrb[0].mxu0
  %v6193 = vpop.f32.mrb[0].mxu0
  %v6194 = vadd.f32 %v6097, %v6193
  %v6195 = vpop.f32.mrb[0].mxu0
  %6196 = vmatprep.mubr.bf16.mxu0 %v2746
  %6197 = vmatmul.mubr.bf16.gmra.mrb[0].mxu0 %v2745
  %v6198 = vpop.f32.mrb[0].mxu0
  %v6199 = vadd.f32 %v6102, %v6198
  %v6200 = vpop.f32.mrb[0].mxu0
  %v6201 = vpop.f32.mrb[0].mxu0
  %v6202 = vadd.f32 %v6105, %v6201
  %v6203 = vpop.f32.mrb[0].mxu0
  %6204 = vdwg.mxu0
  %6205 = vmatprep.subr.bf16.mxu0 0
  %6206 = vmatpush1.bf16.msra.mxu0 %v4854
  %6207 = vmatprep.subr.bf16.mxu0 0
  %6208 = vmatpush1.bf16.msra.mxu0 %v4855
  %6209 = vmatprep.subr.bf16.mxu0 0
  %6210 = vmatpush1.bf16.msra.mxu0 %v4856
  %6211 = vmatprep.subr.bf16.mxu0 0
  %6212 = vmatpush1.bf16.msra.mxu0 %v4857
  %6213 = vmatprep.subr.bf16.mxu0 0
  %6214 = vmatpush1.bf16.msra.mxu0 %v4858
  %6215 = vmatprep.subr.bf16.mxu0 0
  %6216 = vmatpush1.bf16.msra.mxu0 %v4859
  %6217 = vmatprep.subr.bf16.mxu0 0
  %6218 = vmatpush1.bf16.msra.mxu0 %v4860
  %6219 = vmatprep.subr.bf16.mxu0 0
  %6220 = vmatpush1.bf16.msra.mxu0 %v4861
  %6221 = vmatprep.subr.bf16.mxu0 0
  %6222 = vmatpush1.bf16.msra.mxu0 %v4862
  %6223 = vmatprep.subr.bf16.mxu0 0
  %6224 = vmatpush1.bf16.msra.mxu0 %v4863
  %6225 = vmatprep.subr.bf16.mxu0 0
  %6226 = vmatpush1.bf16.msra.mxu0 %v4864
  %6227 = vmatprep.subr.bf16.mxu0 0
  %6228 = vmatpush1.bf16.msra.mxu0 %v4865
  %6229 = vmatprep.subr.bf16.mxu0 0
  %6230 = vmatpush1.bf16.msra.mxu0 %v4866
  %6231 = vmatprep.subr.bf16.mxu0 0
  %6232 = vmatpush1.bf16.msra.mxu0 %v4867
  %6233 = vmatprep.subr.bf16.mxu0 0
  %6234 = vmatpush1.bf16.msra.mxu0 %v4868
  %6235 = vmatprep.subr.bf16.mxu0 0
  %6236 = vmatpush1.bf16.msra.mxu0 %v4869
  %6237 = vmatprep.mubr.bf16.mxu0 %v2405
  %6238 = vmatmul.mubr.bf16.gmra.mrb[0].mxu0 %v2404
  %v6239 = vpop.f32.mrb[0].mxu0
  %v6240 = vadd.f32 %v6143, %v6239
  %v6241 = vpop.f32.mrb[0].mxu0
  %v6242 = vpop.f32.mrb[0].mxu0
  %v6243 = vadd.f32 %v6146, %v6242
  %v6244 = vpop.f32.mrb[0].mxu0
  %6245 = vmatprep.mubr.bf16.mxu0 %v2454
  %6246 = vmatmul.mubr.bf16.gmra.mrb[0].mxu0 %v2453
  %v6247 = vpop.f32.mrb[0].mxu0
  %v6248 = vadd.f32 %v6151, %v6247
  %v6249 = vpop.f32.mrb[0].mxu0
  %v6250 = vpop.f32.mrb[0].mxu0
  %v6251 = vadd.f32 %v6154, %v6250
  %v6252 = vpop.f32.mrb[0].mxu0
  %6253 = vmatprep.mubr.bf16.mxu0 %v2503
  %6254 = vmatmul.mubr.bf16.gmra.mrb[0].mxu0 %v2502
  %v6255 = vpop.f32.mrb[0].mxu0
  %v6256 = vadd.f32 %v6159, %v6255
  %v6257 = vpop.f32.mrb[0].mxu0
  %v6258 = vpop.f32.mrb[0].mxu0
  %v6259 = vadd.f32 %v6162, %v6258
  %v6260 = vpop.f32.mrb[0].mxu0
  %6261 = vmatprep.mubr.bf16.mxu0 %v2552
  %6262 = vmatmul.mubr.bf16.gmra.mrb[0].mxu0 %v2551
  %v6263 = vpop.f32.mrb[0].mxu0
  %v6264 = vadd.f32 %v6167, %v6263
  %v6265 = vpop.f32.mrb[0].mxu0
  %v6266 = vpop.f32.mrb[0].mxu0
  %v6267 = vadd.f32 %v6170, %v6266
  %v6268 = vpop.f32.mrb[0].mxu0
  %6269 = vmatprep.mubr.bf16.mxu0 %v2601
  %6270 = vmatmul.mubr.bf16.gmra.mrb[0].mxu0 %v2600
  %v6271 = vpop.f32.mrb[0].mxu0
  %v6272 = vadd.f32 %v6175, %v6271
  %v6273 = vpop.f32.mrb[0].mxu0
  %v6274 = vpop.f32.mrb[0].mxu0
  %v6275 = vadd.f32 %v6178, %v6274
  %v6276 = vpop.f32.mrb[0].mxu0
  %6277 = vmatprep.mubr.bf16.mxu0 %v2650
  %6278 = vmatmul.mubr.bf16.gmra.mrb[0].mxu0 %v2649
  %v6279 = vpop.f32.mrb[0].mxu0
  %v6280 = vadd.f32 %v6183, %v6279
  %v6281 = vpop.f32.mrb[0].mxu0
  %v6282 = vpop.f32.mrb[0].mxu0
  %v6283 = vadd.f32 %v6186, %v6282
  %v6284 = vpop.f32.mrb[0].mxu0
  %6285 = vmatprep.mubr.bf16.mxu0 %v2699
  %6286 = vmatmul.mubr.bf16.gmra.mrb[0].mxu0 %v2698
  %v6287 = vpop.f32.mrb[0].mxu0
  %v6288 = vadd.f32 %v6191, %v6287
  %v6289 = vpop.f32.mrb[0].mxu0
  %v6290 = vpop.f32.mrb[0].mxu0
  %v6291 = vadd.f32 %v6194, %v6290
  %v6292 = vpop.f32.mrb[0].mxu0
  %6293 = vmatprep.mubr.bf16.mxu0 %v2748
  %6294 = vmatmul.mubr.bf16.gmra.mrb[0].mxu0 %v2747
  %v6295 = vpop.f32.mrb[0].mxu0
  %v6296 = vadd.f32 %v6199, %v6295
  %v6297 = vpop.f32.mrb[0].mxu0
  %v6298 = vpop.f32.mrb[0].mxu0
  %v6299 = vadd.f32 %v6202, %v6298
  %v6300 = vpop.f32.mrb[0].mxu0
  %6301 = vdwg.mxu0
  %6302 = vmatprep.subr.bf16.mxu0 0
  %6303 = vmatpush1.bf16.msra.mxu0 %v4870
  %6304 = vmatprep.subr.bf16.mxu0 0
  %6305 = vmatpush1.bf16.msra.mxu0 %v4871
  %6306 = vmatprep.subr.bf16.mxu0 0
  %6307 = vmatpush1.bf16.msra.mxu0 %v4872
  %6308 = vmatprep.subr.bf16.mxu0 0
  %6309 = vmatpush1.bf16.msra.mxu0 %v4873
  %6310 = vmatprep.subr.bf16.mxu0 0
  %6311 = vmatpush1.bf16.msra.mxu0 %v4874
  %6312 = vmatprep.subr.bf16.mxu0 0
  %6313 = vmatpush1.bf16.msra.mxu0 %v4875
  %6314 = vmatprep.subr.bf16.mxu0 0
  %6315 = vmatpush1.bf16.msra.mxu0 %v4876
  %6316 = vmatprep.subr.bf16.mxu0 0
  %6317 = vmatpush1.bf16.msra.mxu0 %v4877
  %6318 = vmatprep.subr.bf16.mxu0 0
  %6319 = vmatpush1.bf16.msra.mxu0 %v4878
  %6320 = vmatprep.subr.bf16.mxu0 0
  %6321 = vmatpush1.bf16.msra.mxu0 %v4879
  %6322 = vmatprep.subr.bf16.mxu0 0
  %6323 = vmatpush1.bf16.msra.mxu0 %v4880
  %6324 = vmatprep.subr.bf16.mxu0 0
  %6325 = vmatpush1.bf16.msra.mxu0 %v4881
  %6326 = vmatprep.subr.bf16.mxu0 0
  %6327 = vmatpush1.bf16.msra.mxu0 %v4882
  %6328 = vmatprep.subr.bf16.mxu0 0
  %6329 = vmatpush1.bf16.msra.mxu0 %v4883
  %6330 = vmatprep.subr.bf16.mxu0 0
  %6331 = vmatpush1.bf16.msra.mxu0 %v4884
  %6332 = vmatprep.subr.bf16.mxu0 0
  %6333 = vmatpush1.bf16.msra.mxu0 %v4885
  %6334 = vmatprep.mubr.bf16.mxu0 %v2407
  %6335 = vmatmul.mubr.bf16.gmra.mrb[0].mxu0 %v2406
  %v6336 = vpop.f32.mrb[0].mxu0
  %v6337 = vadd.f32 %v6240, %v6336
  %v6338 = vpop.f32.mrb[0].mxu0
  %v6339 = vpop.f32.mrb[0].mxu0
  %v6340 = vadd.f32 %v6243, %v6339
  %v6341 = vpop.f32.mrb[0].mxu0
  %6342 = vmatprep.mubr.bf16.mxu0 %v2456
  %6343 = vmatmul.mubr.bf16.gmra.mrb[0].mxu0 %v2455
  %v6344 = vpop.f32.mrb[0].mxu0
  %v6345 = vadd.f32 %v6248, %v6344
  %v6346 = vpop.f32.mrb[0].mxu0
  %v6347 = vpop.f32.mrb[0].mxu0
  %v6348 = vadd.f32 %v6251, %v6347
  %v6349 = vpop.f32.mrb[0].mxu0
  %6350 = vmatprep.mubr.bf16.mxu0 %v2505
  %6351 = vmatmul.mubr.bf16.gmra.mrb[0].mxu0 %v2504
  %v6352 = vpop.f32.mrb[0].mxu0
  %v6353 = vadd.f32 %v6256, %v6352
  %v6354 = vpop.f32.mrb[0].mxu0
  %v6355 = vpop.f32.mrb[0].mxu0
  %v6356 = vadd.f32 %v6259, %v6355
  %v6357 = vpop.f32.mrb[0].mxu0
  %6358 = vmatprep.mubr.bf16.mxu0 %v2554
  %6359 = vmatmul.mubr.bf16.gmra.mrb[0].mxu0 %v2553
  %v6360 = vpop.f32.mrb[0].mxu0
  %v6361 = vadd.f32 %v6264, %v6360
  %v6362 = vpop.f32.mrb[0].mxu0
  %v6363 = vpop.f32.mrb[0].mxu0
  %v6364 = vadd.f32 %v6267, %v6363
  %v6365 = vpop.f32.mrb[0].mxu0
  %6366 = vmatprep.mubr.bf16.mxu0 %v2603
  %6367 = vmatmul.mubr.bf16.gmra.mrb[0].mxu0 %v2602
  %v6368 = vpop.f32.mrb[0].mxu0
  %v6369 = vadd.f32 %v6272, %v6368
  %v6370 = vpop.f32.mrb[0].mxu0
  %v6371 = vpop.f32.mrb[0].mxu0
  %v6372 = vadd.f32 %v6275, %v6371
  %v6373 = vpop.f32.mrb[0].mxu0
  %6374 = vmatprep.mubr.bf16.mxu0 %v2652
  %6375 = vmatmul.mubr.bf16.gmra.mrb[0].mxu0 %v2651
  %v6376 = vpop.f32.mrb[0].mxu0
  %v6377 = vadd.f32 %v6280, %v6376
  %v6378 = vpop.f32.mrb[0].mxu0
  %v6379 = vpop.f32.mrb[0].mxu0
  %v6380 = vadd.f32 %v6283, %v6379
  %v6381 = vpop.f32.mrb[0].mxu0
  %6382 = vmatprep.mubr.bf16.mxu0 %v2701
  %6383 = vmatmul.mubr.bf16.gmra.mrb[0].mxu0 %v2700
  %v6384 = vpop.f32.mrb[0].mxu0
  %v6385 = vadd.f32 %v6288, %v6384
  %v6386 = vpop.f32.mrb[0].mxu0
  %v6387 = vpop.f32.mrb[0].mxu0
  %v6388 = vadd.f32 %v6291, %v6387
  %v6389 = vpop.f32.mrb[0].mxu0
  %6390 = vmatprep.mubr.bf16.mxu0 %v2750
  %6391 = vmatmul.mubr.bf16.gmra.mrb[0].mxu0 %v2749
  %v6392 = vpop.f32.mrb[0].mxu0
  %v6393 = vadd.f32 %v6296, %v6392
  %v6394 = vpop.f32.mrb[0].mxu0
  %v6395 = vpop.f32.mrb[0].mxu0
  %v6396 = vadd.f32 %v6299, %v6395
  %v6397 = vpop.f32.mrb[0].mxu0
  %6398 = vdwg.mxu0
  %6399 = vmatprep.subr.bf16.mxu0 0
  %6400 = vmatpush1.bf16.msra.mxu0 %v4886
  %6401 = vmatprep.subr.bf16.mxu0 0
  %6402 = vmatpush1.bf16.msra.mxu0 %v4887
  %6403 = vmatprep.subr.bf16.mxu0 0
  %6404 = vmatpush1.bf16.msra.mxu0 %v4888
  %6405 = vmatprep.subr.bf16.mxu0 0
  %6406 = vmatpush1.bf16.msra.mxu0 %v4889
  %6407 = vmatprep.subr.bf16.mxu0 0
  %6408 = vmatpush1.bf16.msra.mxu0 %v4890
  %6409 = vmatprep.subr.bf16.mxu0 0
  %6410 = vmatpush1.bf16.msra.mxu0 %v4891
  %6411 = vmatprep.subr.bf16.mxu0 0
  %6412 = vmatpush1.bf16.msra.mxu0 %v4892
  %6413 = vmatprep.subr.bf16.mxu0 0
  %6414 = vmatpush1.bf16.msra.mxu0 %v4893
  %6415 = vmatprep.subr.bf16.mxu0 0
  %6416 = vmatpush1.bf16.msra.mxu0 %v4894
  %6417 = vmatprep.subr.bf16.mxu0 0
  %6418 = vmatpush1.bf16.msra.mxu0 %v4895
  %6419 = vmatprep.subr.bf16.mxu0 0
  %6420 = vmatpush1.bf16.msra.mxu0 %v4896
  %6421 = vmatprep.subr.bf16.mxu0 0
  %6422 = vmatpush1.bf16.msra.mxu0 %v4897
  %6423 = vmatprep.subr.bf16.mxu0 0
  %6424 = vmatpush1.bf16.msra.mxu0 %v4898
  %6425 = vmatprep.subr.bf16.mxu0 0
  %6426 = vmatpush1.bf16.msra.mxu0 %v4899
  %6427 = vmatprep.subr.bf16.mxu0 0
  %6428 = vmatpush1.bf16.msra.mxu0 %v4900
  %6429 = vmatprep.subr.bf16.mxu0 0
  %6430 = vmatpush1.bf16.msra.mxu0 %v4901
  %6431 = vmatprep.mubr.bf16.mxu0 %v2409
  %6432 = vmatmul.mubr.bf16.gmra.mrb[0].mxu0 %v2408
  %v6433 = vpop.f32.mrb[0].mxu0
  %v6434 = vadd.f32 %v6337, %v6433
  %v6435 = vpop.f32.mrb[0].mxu0
  %v6436 = vpop.f32.mrb[0].mxu0
  %v6437 = vadd.f32 %v6340, %v6436
  %v6438 = vpop.f32.mrb[0].mxu0
  %6439 = vmatprep.mubr.bf16.mxu0 %v2458
  %6440 = vmatmul.mubr.bf16.gmra.mrb[0].mxu0 %v2457
  %v6441 = vpop.f32.mrb[0].mxu0
  %v6442 = vadd.f32 %v6345, %v6441
  %v6443 = vpop.f32.mrb[0].mxu0
  %v6444 = vpop.f32.mrb[0].mxu0
  %v6445 = vadd.f32 %v6348, %v6444
  %v6446 = vpop.f32.mrb[0].mxu0
  %6447 = vmatprep.mubr.bf16.mxu0 %v2507
  %6448 = vmatmul.mubr.bf16.gmra.mrb[0].mxu0 %v2506
  %v6449 = vpop.f32.mrb[0].mxu0
  %v6450 = vadd.f32 %v6353, %v6449
  %v6451 = vpop.f32.mrb[0].mxu0
  %v6452 = vpop.f32.mrb[0].mxu0
  %v6453 = vadd.f32 %v6356, %v6452
  %v6454 = vpop.f32.mrb[0].mxu0
  %6455 = vmatprep.mubr.bf16.mxu0 %v2556
  %6456 = vmatmul.mubr.bf16.gmra.mrb[0].mxu0 %v2555
  %v6457 = vpop.f32.mrb[0].mxu0
  %v6458 = vadd.f32 %v6361, %v6457
  %v6459 = vpop.f32.mrb[0].mxu0
  %v6460 = vpop.f32.mrb[0].mxu0
  %v6461 = vadd.f32 %v6364, %v6460
  %v6462 = vpop.f32.mrb[0].mxu0
  %6463 = vmatprep.mubr.bf16.mxu0 %v2605
  %6464 = vmatmul.mubr.bf16.gmra.mrb[0].mxu0 %v2604
  %v6465 = vpop.f32.mrb[0].mxu0
  %v6466 = vadd.f32 %v6369, %v6465
  %v6467 = vpop.f32.mrb[0].mxu0
  %v6468 = vpop.f32.mrb[0].mxu0
  %v6469 = vadd.f32 %v6372, %v6468
  %v6470 = vpop.f32.mrb[0].mxu0
  %6471 = vmatprep.mubr.bf16.mxu0 %v2654
  %6472 = vmatmul.mubr.bf16.gmra.mrb[0].mxu0 %v2653
  %v6473 = vpop.f32.mrb[0].mxu0
  %v6474 = vadd.f32 %v6377, %v6473
  %v6475 = vpop.f32.mrb[0].mxu0
  %v6476 = vpop.f32.mrb[0].mxu0
  %v6477 = vadd.f32 %v6380, %v6476
  %v6478 = vpop.f32.mrb[0].mxu0
  %6479 = vmatprep.mubr.bf16.mxu0 %v2703
  %6480 = vmatmul.mubr.bf16.gmra.mrb[0].mxu0 %v2702
  %v6481 = vpop.f32.mrb[0].mxu0
  %v6482 = vadd.f32 %v6385, %v6481
  %v6483 = vpop.f32.mrb[0].mxu0
  %v6484 = vpop.f32.mrb[0].mxu0
  %v6485 = vadd.f32 %v6388, %v6484
  %v6486 = vpop.f32.mrb[0].mxu0
  %6487 = vmatprep.mubr.bf16.mxu0 %v2752
  %6488 = vmatmul.mubr.bf16.gmra.mrb[0].mxu0 %v2751
  %v6489 = vpop.f32.mrb[0].mxu0
  %v6490 = vadd.f32 %v6393, %v6489
  %v6491 = vpop.f32.mrb[0].mxu0
  %v6492 = vpop.f32.mrb[0].mxu0
  %v6493 = vadd.f32 %v6396, %v6492
  %v6494 = vpop.f32.mrb[0].mxu0
  %6495 = vdwg.mxu0
  %6496 = vmatprep.subr.bf16.mxu0 0
  %6497 = vmatpush1.bf16.msra.mxu0 %v4902
  %6498 = vmatprep.subr.bf16.mxu0 0
  %6499 = vmatpush1.bf16.msra.mxu0 %v4903
  %6500 = vmatprep.subr.bf16.mxu0 0
  %6501 = vmatpush1.bf16.msra.mxu0 %v4904
  %6502 = vmatprep.subr.bf16.mxu0 0
  %6503 = vmatpush1.bf16.msra.mxu0 %v4905
  %6504 = vmatprep.subr.bf16.mxu0 0
  %6505 = vmatpush1.bf16.msra.mxu0 %v4906
  %6506 = vmatprep.subr.bf16.mxu0 0
  %6507 = vmatpush1.bf16.msra.mxu0 %v4907
  %6508 = vmatprep.subr.bf16.mxu0 0
  %6509 = vmatpush1.bf16.msra.mxu0 %v4908
  %6510 = vmatprep.subr.bf16.mxu0 0
  %6511 = vmatpush1.bf16.msra.mxu0 %v4909
  %6512 = vmatprep.subr.bf16.mxu0 0
  %6513 = vmatpush1.bf16.msra.mxu0 %v4910
  %6514 = vmatprep.subr.bf16.mxu0 0
  %6515 = vmatpush1.bf16.msra.mxu0 %v4911
  %6516 = vmatprep.subr.bf16.mxu0 0
  %6517 = vmatpush1.bf16.msra.mxu0 %v4912
  %6518 = vmatprep.subr.bf16.mxu0 0
  %6519 = vmatpush1.bf16.msra.mxu0 %v4913
  %6520 = vmatprep.subr.bf16.mxu0 0
  %6521 = vmatpush1.bf16.msra.mxu0 %v4914
  %6522 = vmatprep.subr.bf16.mxu0 0
  %6523 = vmatpush1.bf16.msra.mxu0 %v4915
  %6524 = vmatprep.subr.bf16.mxu0 0
  %6525 = vmatpush1.bf16.msra.mxu0 %v4916
  %6526 = vmatprep.subr.bf16.mxu0 0
  %6527 = vmatpush1.bf16.msra.mxu0 %v4917
  %6528 = vmatprep.mubr.bf16.mxu0 %v2411
  %6529 = vmatmul.mubr.bf16.gmra.mrb[0].mxu0 %v2410
  %v6530 = vpop.f32.mrb[0].mxu0
  %v6531 = vadd.f32 %v6434, %v6530
  %v6532 = vpop.f32.mrb[0].mxu0
  %v6533 = vpop.f32.mrb[0].mxu0
  %v6534 = vadd.f32 %v6437, %v6533
  %v6535 = vpop.f32.mrb[0].mxu0
  %6536 = vmatprep.mubr.bf16.mxu0 %v2460
  %6537 = vmatmul.mubr.bf16.gmra.mrb[0].mxu0 %v2459
  %v6538 = vpop.f32.mrb[0].mxu0
  %v6539 = vadd.f32 %v6442, %v6538
  %v6540 = vpop.f32.mrb[0].mxu0
  %v6541 = vpop.f32.mrb[0].mxu0
  %v6542 = vadd.f32 %v6445, %v6541
  %v6543 = vpop.f32.mrb[0].mxu0
  %6544 = vmatprep.mubr.bf16.mxu0 %v2509
  %6545 = vmatmul.mubr.bf16.gmra.mrb[0].mxu0 %v2508
  %v6546 = vpop.f32.mrb[0].mxu0
  %v6547 = vadd.f32 %v6450, %v6546
  %v6548 = vpop.f32.mrb[0].mxu0
  %v6549 = vpop.f32.mrb[0].mxu0
  %v6550 = vadd.f32 %v6453, %v6549
  %v6551 = vpop.f32.mrb[0].mxu0
  %6552 = vmatprep.mubr.bf16.mxu0 %v2558
  %6553 = vmatmul.mubr.bf16.gmra.mrb[0].mxu0 %v2557
  %v6554 = vpop.f32.mrb[0].mxu0
  %v6555 = vadd.f32 %v6458, %v6554
  %v6556 = vpop.f32.mrb[0].mxu0
  %v6557 = vpop.f32.mrb[0].mxu0
  %v6558 = vadd.f32 %v6461, %v6557
  %v6559 = vpop.f32.mrb[0].mxu0
  %6560 = vmatprep.mubr.bf16.mxu0 %v2607
  %6561 = vmatmul.mubr.bf16.gmra.mrb[0].mxu0 %v2606
  %v6562 = vpop.f32.mrb[0].mxu0
  %v6563 = vadd.f32 %v6466, %v6562
  %v6564 = vpop.f32.mrb[0].mxu0
  %v6565 = vpop.f32.mrb[0].mxu0
  %v6566 = vadd.f32 %v6469, %v6565
  %v6567 = vpop.f32.mrb[0].mxu0
  %6568 = vmatprep.mubr.bf16.mxu0 %v2656
  %6569 = vmatmul.mubr.bf16.gmra.mrb[0].mxu0 %v2655
  %v6570 = vpop.f32.mrb[0].mxu0
  %v6571 = vadd.f32 %v6474, %v6570
  %v6572 = vpop.f32.mrb[0].mxu0
  %v6573 = vpop.f32.mrb[0].mxu0
  %v6574 = vadd.f32 %v6477, %v6573
  %v6575 = vpop.f32.mrb[0].mxu0
  %6576 = vmatprep.mubr.bf16.mxu0 %v2705
  %6577 = vmatmul.mubr.bf16.gmra.mrb[0].mxu0 %v2704
  %v6578 = vpop.f32.mrb[0].mxu0
  %v6579 = vadd.f32 %v6482, %v6578
  %v6580 = vpop.f32.mrb[0].mxu0
  %v6581 = vpop.f32.mrb[0].mxu0
  %v6582 = vadd.f32 %v6485, %v6581
  %v6583 = vpop.f32.mrb[0].mxu0
  %6584 = vmatprep.mubr.bf16.mxu0 %v2754
  %6585 = vmatmul.mubr.bf16.gmra.mrb[0].mxu0 %v2753
  %v6586 = vpop.f32.mrb[0].mxu0
  %v6587 = vadd.f32 %v6490, %v6586
  %v6588 = vpop.f32.mrb[0].mxu0
  %v6589 = vpop.f32.mrb[0].mxu0
  %v6590 = vadd.f32 %v6493, %v6589
  %v6591 = vpop.f32.mrb[0].mxu0
  %6592 = vdwg.mxu0
  %6593 = vmatprep.subr.bf16.mxu0 0
  %6594 = vmatpush1.bf16.msra.mxu0 %v4918
  %6595 = vmatprep.subr.bf16.mxu0 0
  %6596 = vmatpush1.bf16.msra.mxu0 %v4919
  %6597 = vmatprep.subr.bf16.mxu0 0
  %6598 = vmatpush1.bf16.msra.mxu0 %v4920
  %6599 = vmatprep.subr.bf16.mxu0 0
  %6600 = vmatpush1.bf16.msra.mxu0 %v4921
  %6601 = vmatprep.subr.bf16.mxu0 0
  %6602 = vmatpush1.bf16.msra.mxu0 %v4922
  %6603 = vmatprep.subr.bf16.mxu0 0
  %6604 = vmatpush1.bf16.msra.mxu0 %v4923
  %6605 = vmatprep.subr.bf16.mxu0 0
  %6606 = vmatpush1.bf16.msra.mxu0 %v4924
  %6607 = vmatprep.subr.bf16.mxu0 0
  %6608 = vmatpush1.bf16.msra.mxu0 %v4925
  %6609 = vmatprep.subr.bf16.mxu0 0
  %6610 = vmatpush1.bf16.msra.mxu0 %v4926
  %6611 = vmatprep.subr.bf16.mxu0 0
  %6612 = vmatpush1.bf16.msra.mxu0 %v4927
  %6613 = vmatprep.subr.bf16.mxu0 0
  %6614 = vmatpush1.bf16.msra.mxu0 %v4928
  %6615 = vmatprep.subr.bf16.mxu0 0
  %6616 = vmatpush1.bf16.msra.mxu0 %v4929
  %6617 = vmatprep.subr.bf16.mxu0 0
  %6618 = vmatpush1.bf16.msra.mxu0 %v4930
  %6619 = vmatprep.subr.bf16.mxu0 0
  %6620 = vmatpush1.bf16.msra.mxu0 %v4931
  %6621 = vmatprep.subr.bf16.mxu0 0
  %6622 = vmatpush1.bf16.msra.mxu0 %v4932
  %6623 = vmatprep.subr.bf16.mxu0 0
  %6624 = vmatpush1.bf16.msra.mxu0 %v4933
  %6625 = vmatprep.mubr.bf16.mxu0 %v2413
  %6626 = vmatmul.mubr.bf16.gmra.mrb[0].mxu0 %v2412
  %v6627 = vpop.f32.mrb[0].mxu0
  %v6628 = vadd.f32 %v6531, %v6627
  %v6629 = vpop.f32.mrb[0].mxu0
  %v6630 = vpop.f32.mrb[0].mxu0
  %v6631 = vadd.f32 %v6534, %v6630
  %v6632 = vpop.f32.mrb[0].mxu0
  %6633 = vmatprep.mubr.bf16.mxu0 %v2462
  %6634 = vmatmul.mubr.bf16.gmra.mrb[0].mxu0 %v2461
  %v6635 = vpop.f32.mrb[0].mxu0
  %v6636 = vadd.f32 %v6539, %v6635
  %v6637 = vpop.f32.mrb[0].mxu0
  %v6638 = vpop.f32.mrb[0].mxu0
  %v6639 = vadd.f32 %v6542, %v6638
  %v6640 = vpop.f32.mrb[0].mxu0
  %6641 = vmatprep.mubr.bf16.mxu0 %v2511
  %6642 = vmatmul.mubr.bf16.gmra.mrb[0].mxu0 %v2510
  %v6643 = vpop.f32.mrb[0].mxu0
  %v6644 = vadd.f32 %v6547, %v6643
  %v6645 = vpop.f32.mrb[0].mxu0
  %v6646 = vpop.f32.mrb[0].mxu0
  %v6647 = vadd.f32 %v6550, %v6646
  %v6648 = vpop.f32.mrb[0].mxu0
  %6649 = vmatprep.mubr.bf16.mxu0 %v2560
  %6650 = vmatmul.mubr.bf16.gmra.mrb[0].mxu0 %v2559
  %v6651 = vpop.f32.mrb[0].mxu0
  %v6652 = vadd.f32 %v6555, %v6651
  %v6653 = vpop.f32.mrb[0].mxu0
  %v6654 = vpop.f32.mrb[0].mxu0
  %v6655 = vadd.f32 %v6558, %v6654
  %v6656 = vpop.f32.mrb[0].mxu0
  %6657 = vmatprep.mubr.bf16.mxu0 %v2609
  %6658 = vmatmul.mubr.bf16.gmra.mrb[0].mxu0 %v2608
  %v6659 = vpop.f32.mrb[0].mxu0
  %v6660 = vadd.f32 %v6563, %v6659
  %v6661 = vpop.f32.mrb[0].mxu0
  %v6662 = vpop.f32.mrb[0].mxu0
  %v6663 = vadd.f32 %v6566, %v6662
  %v6664 = vpop.f32.mrb[0].mxu0
  %6665 = vmatprep.mubr.bf16.mxu0 %v2658
  %6666 = vmatmul.mubr.bf16.gmra.mrb[0].mxu0 %v2657
  %v6667 = vpop.f32.mrb[0].mxu0
  %v6668 = vadd.f32 %v6571, %v6667
  %v6669 = vpop.f32.mrb[0].mxu0
  %v6670 = vpop.f32.mrb[0].mxu0
  %v6671 = vadd.f32 %v6574, %v6670
  %v6672 = vpop.f32.mrb[0].mxu0
  %6673 = vmatprep.mubr.bf16.mxu0 %v2707
  %6674 = vmatmul.mubr.bf16.gmra.mrb[0].mxu0 %v2706
  %v6675 = vpop.f32.mrb[0].mxu0
  %v6676 = vadd.f32 %v6579, %v6675
  %v6677 = vpop.f32.mrb[0].mxu0
  %v6678 = vpop.f32.mrb[0].mxu0
  %v6679 = vadd.f32 %v6582, %v6678
  %v6680 = vpop.f32.mrb[0].mxu0
  %6681 = vmatprep.mubr.bf16.mxu0 %v2756
  %6682 = vmatmul.mubr.bf16.gmra.mrb[0].mxu0 %v2755
  %v6683 = vpop.f32.mrb[0].mxu0
  %v6684 = vadd.f32 %v6587, %v6683
  %v6685 = vpop.f32.mrb[0].mxu0
  %v6686 = vpop.f32.mrb[0].mxu0
  %v6687 = vadd.f32 %v6590, %v6686
  %v6688 = vpop.f32.mrb[0].mxu0
  %6689 = vdwg.mxu0
  %6690 = vmatprep.subr.bf16.mxu0 0
  %6691 = vmatpush1.bf16.msra.mxu0 %v4934
  %6692 = vmatprep.subr.bf16.mxu0 0
  %6693 = vmatpush1.bf16.msra.mxu0 %v4935
  %6694 = vmatprep.subr.bf16.mxu0 0
  %6695 = vmatpush1.bf16.msra.mxu0 %v4936
  %6696 = vmatprep.subr.bf16.mxu0 0
  %6697 = vmatpush1.bf16.msra.mxu0 %v4937
  %6698 = vmatprep.subr.bf16.mxu0 0
  %6699 = vmatpush1.bf16.msra.mxu0 %v4938
  %6700 = vmatprep.subr.bf16.mxu0 0
  %6701 = vmatpush1.bf16.msra.mxu0 %v4939
  %6702 = vmatprep.subr.bf16.mxu0 0
  %6703 = vmatpush1.bf16.msra.mxu0 %v4940
  %6704 = vmatprep.subr.bf16.mxu0 0
  %6705 = vmatpush1.bf16.msra.mxu0 %v4941
  %6706 = vmatprep.subr.bf16.mxu0 0
  %6707 = vmatpush1.bf16.msra.mxu0 %v4942
  %6708 = vmatprep.subr.bf16.mxu0 0
  %6709 = vmatpush1.bf16.msra.mxu0 %v4943
  %6710 = vmatprep.subr.bf16.mxu0 0
  %6711 = vmatpush1.bf16.msra.mxu0 %v4944
  %6712 = vmatprep.subr.bf16.mxu0 0
  %6713 = vmatpush1.bf16.msra.mxu0 %v4945
  %6714 = vmatprep.subr.bf16.mxu0 0
  %6715 = vmatpush1.bf16.msra.mxu0 %v4946
  %6716 = vmatprep.subr.bf16.mxu0 0
  %6717 = vmatpush1.bf16.msra.mxu0 %v4947
  %6718 = vmatprep.subr.bf16.mxu0 0
  %6719 = vmatpush1.bf16.msra.mxu0 %v4948
  %6720 = vmatprep.subr.bf16.mxu0 0
  %6721 = vmatpush1.bf16.msra.mxu0 %v4949
  %6722 = vmatprep.mubr.bf16.mxu0 %v2415
  %6723 = vmatmul.mubr.bf16.gmra.mrb[0].mxu0 %v2414
  %v6724 = vpop.f32.mrb[0].mxu0
  %v6725 = vadd.f32 %v6628, %v6724
  %v6726 = vpop.f32.mrb[0].mxu0
  %v6727 = vpop.f32.mrb[0].mxu0
  %v6728 = vadd.f32 %v6631, %v6727
  %v6729 = vpop.f32.mrb[0].mxu0
  %6730 = vmatprep.mubr.bf16.mxu0 %v2464
  %6731 = vmatmul.mubr.bf16.gmra.mrb[0].mxu0 %v2463
  %v6732 = vpop.f32.mrb[0].mxu0
  %v6733 = vadd.f32 %v6636, %v6732
  %v6734 = vpop.f32.mrb[0].mxu0
  %v6735 = vpop.f32.mrb[0].mxu0
  %v6736 = vadd.f32 %v6639, %v6735
  %v6737 = vpop.f32.mrb[0].mxu0
  %6738 = vmatprep.mubr.bf16.mxu0 %v2513
  %6739 = vmatmul.mubr.bf16.gmra.mrb[0].mxu0 %v2512
  %v6740 = vpop.f32.mrb[0].mxu0
  %v6741 = vadd.f32 %v6644, %v6740
  %v6742 = vpop.f32.mrb[0].mxu0
  %v6743 = vpop.f32.mrb[0].mxu0
  %v6744 = vadd.f32 %v6647, %v6743
  %v6745 = vpop.f32.mrb[0].mxu0
  %6746 = vmatprep.mubr.bf16.mxu0 %v2562
  %6747 = vmatmul.mubr.bf16.gmra.mrb[0].mxu0 %v2561
  %v6748 = vpop.f32.mrb[0].mxu0
  %v6749 = vadd.f32 %v6652, %v6748
  %v6750 = vpop.f32.mrb[0].mxu0
  %v6751 = vpop.f32.mrb[0].mxu0
  %v6752 = vadd.f32 %v6655, %v6751
  %v6753 = vpop.f32.mrb[0].mxu0
  %6754 = vmatprep.mubr.bf16.mxu0 %v2611
  %6755 = vmatmul.mubr.bf16.gmra.mrb[0].mxu0 %v2610
  %v6756 = vpop.f32.mrb[0].mxu0
  %v6757 = vadd.f32 %v6660, %v6756
  %v6758 = vpop.f32.mrb[0].mxu0
  %v6759 = vpop.f32.mrb[0].mxu0
  %v6760 = vadd.f32 %v6663, %v6759
  %v6761 = vpop.f32.mrb[0].mxu0
  %6762 = vmatprep.mubr.bf16.mxu0 %v2660
  %6763 = vmatmul.mubr.bf16.gmra.mrb[0].mxu0 %v2659
  %v6764 = vpop.f32.mrb[0].mxu0
  %v6765 = vadd.f32 %v6668, %v6764
  %v6766 = vpop.f32.mrb[0].mxu0
  %v6767 = vpop.f32.mrb[0].mxu0
  %v6768 = vadd.f32 %v6671, %v6767
  %v6769 = vpop.f32.mrb[0].mxu0
  %6770 = vmatprep.mubr.bf16.mxu0 %v2709
  %6771 = vmatmul.mubr.bf16.gmra.mrb[0].mxu0 %v2708
  %v6772 = vpop.f32.mrb[0].mxu0
  %v6773 = vadd.f32 %v6676, %v6772
  %v6774 = vpop.f32.mrb[0].mxu0
  %v6775 = vpop.f32.mrb[0].mxu0
  %v6776 = vadd.f32 %v6679, %v6775
  %v6777 = vpop.f32.mrb[0].mxu0
  %6778 = vmatprep.mubr.bf16.mxu0 %v2758
  %6779 = vmatmul.mubr.bf16.gmra.mrb[0].mxu0 %v2757
  %v6780 = vpop.f32.mrb[0].mxu0
  %v6781 = vadd.f32 %v6684, %v6780
  %v6782 = vpop.f32.mrb[0].mxu0
  %v6783 = vpop.f32.mrb[0].mxu0
  %v6784 = vadd.f32 %v6687, %v6783
  %v6785 = vpop.f32.mrb[0].mxu0
  %6786 = vdwg.mxu0
  %6787 = vmatprep.subr.bf16.mxu0 0
  %6788 = vmatpush1.bf16.msra.mxu0 %v4950
  %6789 = vmatprep.subr.bf16.mxu0 0
  %6790 = vmatpush1.bf16.msra.mxu0 %v4951
  %6791 = vmatprep.subr.bf16.mxu0 0
  %6792 = vmatpush1.bf16.msra.mxu0 %v4952
  %6793 = vmatprep.subr.bf16.mxu0 0
  %6794 = vmatpush1.bf16.msra.mxu0 %v4953
  %6795 = vmatprep.subr.bf16.mxu0 0
  %6796 = vmatpush1.bf16.msra.mxu0 %v4954
  %6797 = vmatprep.subr.bf16.mxu0 0
  %6798 = vmatpush1.bf16.msra.mxu0 %v4955
  %6799 = vmatprep.subr.bf16.mxu0 0
  %6800 = vmatpush1.bf16.msra.mxu0 %v4956
  %6801 = vmatprep.subr.bf16.mxu0 0
  %6802 = vmatpush1.bf16.msra.mxu0 %v4957
  %6803 = vmatprep.subr.bf16.mxu0 0
  %6804 = vmatpush1.bf16.msra.mxu0 %v4958
  %6805 = vmatprep.subr.bf16.mxu0 0
  %6806 = vmatpush1.bf16.msra.mxu0 %v4959
  %6807 = vmatprep.subr.bf16.mxu0 0
  %6808 = vmatpush1.bf16.msra.mxu0 %v4960
  %6809 = vmatprep.subr.bf16.mxu0 0
  %6810 = vmatpush1.bf16.msra.mxu0 %v4961
  %6811 = vmatprep.subr.bf16.mxu0 0
  %6812 = vmatpush1.bf16.msra.mxu0 %v4962
  %6813 = vmatprep.subr.bf16.mxu0 0
  %6814 = vmatpush1.bf16.msra.mxu0 %v4963
  %6815 = vmatprep.subr.bf16.mxu0 0
  %6816 = vmatpush1.bf16.msra.mxu0 %v4964
  %6817 = vmatprep.subr.bf16.mxu0 0
  %6818 = vmatpush1.bf16.msra.mxu0 %v4965
  %6819 = vmatprep.mubr.bf16.mxu0 %v2417
  %6820 = vmatmul.mubr.bf16.gmra.mrb[0].mxu0 %v2416
  %v6821 = vpop.f32.mrb[0].mxu0
  %v6822 = vadd.f32 %v6725, %v6821
  %v6823 = vpop.f32.mrb[0].mxu0
  %v6824 = vpop.f32.mrb[0].mxu0
  %v6825 = vadd.f32 %v6728, %v6824
  %v6826 = vpop.f32.mrb[0].mxu0
  %6827 = vmatprep.mubr.bf16.mxu0 %v2466
  %6828 = vmatmul.mubr.bf16.gmra.mrb[0].mxu0 %v2465
  %v6829 = vpop.f32.mrb[0].mxu0
  %v6830 = vadd.f32 %v6733, %v6829
  %v6831 = vpop.f32.mrb[0].mxu0
  %v6832 = vpop.f32.mrb[0].mxu0
  %v6833 = vadd.f32 %v6736, %v6832
  %v6834 = vpop.f32.mrb[0].mxu0
  %6835 = vmatprep.mubr.bf16.mxu0 %v2515
  %6836 = vmatmul.mubr.bf16.gmra.mrb[0].mxu0 %v2514
  %v6837 = vpop.f32.mrb[0].mxu0
  %v6838 = vadd.f32 %v6741, %v6837
  %v6839 = vpop.f32.mrb[0].mxu0
  %v6840 = vpop.f32.mrb[0].mxu0
  %v6841 = vadd.f32 %v6744, %v6840
  %v6842 = vpop.f32.mrb[0].mxu0
  %6843 = vmatprep.mubr.bf16.mxu0 %v2564
  %6844 = vmatmul.mubr.bf16.gmra.mrb[0].mxu0 %v2563
  %v6845 = vpop.f32.mrb[0].mxu0
  %v6846 = vadd.f32 %v6749, %v6845
  %v6847 = vpop.f32.mrb[0].mxu0
  %v6848 = vpop.f32.mrb[0].mxu0
  %v6849 = vadd.f32 %v6752, %v6848
  %v6850 = vpop.f32.mrb[0].mxu0
  %6851 = vmatprep.mubr.bf16.mxu0 %v2613
  %6852 = vmatmul.mubr.bf16.gmra.mrb[0].mxu0 %v2612
  %v6853 = vpop.f32.mrb[0].mxu0
  %v6854 = vadd.f32 %v6757, %v6853
  %v6855 = vpop.f32.mrb[0].mxu0
  %v6856 = vpop.f32.mrb[0].mxu0
  %v6857 = vadd.f32 %v6760, %v6856
  %v6858 = vpop.f32.mrb[0].mxu0
  %6859 = vmatprep.mubr.bf16.mxu0 %v2662
  %6860 = vmatmul.mubr.bf16.gmra.mrb[0].mxu0 %v2661
  %v6861 = vpop.f32.mrb[0].mxu0
  %v6862 = vadd.f32 %v6765, %v6861
  %v6863 = vpop.f32.mrb[0].mxu0
  %v6864 = vpop.f32.mrb[0].mxu0
  %v6865 = vadd.f32 %v6768, %v6864
  %v6866 = vpop.f32.mrb[0].mxu0
  %6867 = vmatprep.mubr.bf16.mxu0 %v2711
  %6868 = vmatmul.mubr.bf16.gmra.mrb[0].mxu0 %v2710
  %v6869 = vpop.f32.mrb[0].mxu0
  %v6870 = vadd.f32 %v6773, %v6869
  %v6871 = vpop.f32.mrb[0].mxu0
  %v6872 = vpop.f32.mrb[0].mxu0
  %v6873 = vadd.f32 %v6776, %v6872
  %v6874 = vpop.f32.mrb[0].mxu0
  %6875 = vmatprep.mubr.bf16.mxu0 %v2760
  %6876 = vmatmul.mubr.bf16.gmra.mrb[0].mxu0 %v2759
  %v6877 = vpop.f32.mrb[0].mxu0
  %v6878 = vadd.f32 %v6781, %v6877
  %v6879 = vpop.f32.mrb[0].mxu0
  %v6880 = vpop.f32.mrb[0].mxu0
  %v6881 = vadd.f32 %v6784, %v6880
  %v6882 = vpop.f32.mrb[0].mxu0
  %6883 = vdwg.mxu0
  %6884 = vmatprep.subr.bf16.mxu0 0
  %6885 = vmatpush1.bf16.msra.mxu0 %v4966
  %6886 = vmatprep.subr.bf16.mxu0 0
  %6887 = vmatpush1.bf16.msra.mxu0 %v4967
  %6888 = vmatprep.subr.bf16.mxu0 0
  %6889 = vmatpush1.bf16.msra.mxu0 %v4968
  %6890 = vmatprep.subr.bf16.mxu0 0
  %6891 = vmatpush1.bf16.msra.mxu0 %v4969
  %6892 = vmatprep.subr.bf16.mxu0 0
  %6893 = vmatpush1.bf16.msra.mxu0 %v4970
  %6894 = vmatprep.subr.bf16.mxu0 0
  %6895 = vmatpush1.bf16.msra.mxu0 %v4971
  %6896 = vmatprep.subr.bf16.mxu0 0
  %6897 = vmatpush1.bf16.msra.mxu0 %v4972
  %6898 = vmatprep.subr.bf16.mxu0 0
  %6899 = vmatpush1.bf16.msra.mxu0 %v4973
  %6900 = vmatprep.subr.bf16.mxu0 0
  %6901 = vmatpush1.bf16.msra.mxu0 %v4974
  %6902 = vmatprep.subr.bf16.mxu0 0
  %6903 = vmatpush1.bf16.msra.mxu0 %v4975
  %6904 = vmatprep.subr.bf16.mxu0 0
  %6905 = vmatpush1.bf16.msra.mxu0 %v4976
  %6906 = vmatprep.subr.bf16.mxu0 0
  %6907 = vmatpush1.bf16.msra.mxu0 %v4977
  %6908 = vmatprep.subr.bf16.mxu0 0
  %6909 = vmatpush1.bf16.msra.mxu0 %v4978
  %6910 = vmatprep.subr.bf16.mxu0 0
  %6911 = vmatpush1.bf16.msra.mxu0 %v4979
  %6912 = vmatprep.subr.bf16.mxu0 0
  %6913 = vmatpush1.bf16.msra.mxu0 %v4980
  %6914 = vmatprep.subr.bf16.mxu0 0
  %6915 = vmatpush1.bf16.msra.mxu0 %v4981
  %6916 = vmatprep.mubr.bf16.mxu0 %v2419
  %6917 = vmatmul.mubr.bf16.gmra.mrb[0].mxu0 %v2418
  %v6918 = vpop.f32.mrb[0].mxu0
  %v6919 = vadd.f32 %v6822, %v6918
  %v6920 = vpop.f32.mrb[0].mxu0
  %v6921 = vpop.f32.mrb[0].mxu0
  %v6922 = vadd.f32 %v6825, %v6921
  %v6923 = vpop.f32.mrb[0].mxu0
  %6924 = vmatprep.mubr.bf16.mxu0 %v2468
  %6925 = vmatmul.mubr.bf16.gmra.mrb[0].mxu0 %v2467
  %v6926 = vpop.f32.mrb[0].mxu0
  %v6927 = vadd.f32 %v6830, %v6926
  %v6928 = vpop.f32.mrb[0].mxu0
  %v6929 = vpop.f32.mrb[0].mxu0
  %v6930 = vadd.f32 %v6833, %v6929
  %v6931 = vpop.f32.mrb[0].mxu0
  %6932 = vmatprep.mubr.bf16.mxu0 %v2517
  %6933 = vmatmul.mubr.bf16.gmra.mrb[0].mxu0 %v2516
  %v6934 = vpop.f32.mrb[0].mxu0
  %v6935 = vadd.f32 %v6838, %v6934
  %v6936 = vpop.f32.mrb[0].mxu0
  %v6937 = vpop.f32.mrb[0].mxu0
  %v6938 = vadd.f32 %v6841, %v6937
  %v6939 = vpop.f32.mrb[0].mxu0
  %6940 = vmatprep.mubr.bf16.mxu0 %v2566
  %6941 = vmatmul.mubr.bf16.gmra.mrb[0].mxu0 %v2565
  %v6942 = vpop.f32.mrb[0].mxu0
  %v6943 = vadd.f32 %v6846, %v6942
  %v6944 = vpop.f32.mrb[0].mxu0
  %v6945 = vpop.f32.mrb[0].mxu0
  %v6946 = vadd.f32 %v6849, %v6945
  %v6947 = vpop.f32.mrb[0].mxu0
  %6948 = vmatprep.mubr.bf16.mxu0 %v2615
  %6949 = vmatmul.mubr.bf16.gmra.mrb[0].mxu0 %v2614
  %v6950 = vpop.f32.mrb[0].mxu0
  %v6951 = vadd.f32 %v6854, %v6950
  %v6952 = vpop.f32.mrb[0].mxu0
  %v6953 = vpop.f32.mrb[0].mxu0
  %v6954 = vadd.f32 %v6857, %v6953
  %v6955 = vpop.f32.mrb[0].mxu0
  %6956 = vmatprep.mubr.bf16.mxu0 %v2664
  %6957 = vmatmul.mubr.bf16.gmra.mrb[0].mxu0 %v2663
  %v6958 = vpop.f32.mrb[0].mxu0
  %v6959 = vadd.f32 %v6862, %v6958
  %v6960 = vpop.f32.mrb[0].mxu0
  %v6961 = vpop.f32.mrb[0].mxu0
  %v6962 = vadd.f32 %v6865, %v6961
  %v6963 = vpop.f32.mrb[0].mxu0
  %6964 = vmatprep.mubr.bf16.mxu0 %v2713
  %6965 = vmatmul.mubr.bf16.gmra.mrb[0].mxu0 %v2712
  %v6966 = vpop.f32.mrb[0].mxu0
  %v6967 = vadd.f32 %v6870, %v6966
  %v6968 = vpop.f32.mrb[0].mxu0
  %v6969 = vpop.f32.mrb[0].mxu0
  %v6970 = vadd.f32 %v6873, %v6969
  %v6971 = vpop.f32.mrb[0].mxu0
  %6972 = vmatprep.mubr.bf16.mxu0 %v2762
  %6973 = vmatmul.mubr.bf16.gmra.mrb[0].mxu0 %v2761
  %v6974 = vpop.f32.mrb[0].mxu0
  %v6975 = vadd.f32 %v6878, %v6974
  %v6976 = vpop.f32.mrb[0].mxu0
  %v6977 = vpop.f32.mrb[0].mxu0
  %v6978 = vadd.f32 %v6881, %v6977
  %v6979 = vpop.f32.mrb[0].mxu0
  %6980 = vdwg.mxu0
  %6981 = vmatprep.subr.bf16.mxu0 0
  %6982 = vmatpush1.bf16.msra.mxu0 %v4982
  %6983 = vmatprep.subr.bf16.mxu0 0
  %6984 = vmatpush1.bf16.msra.mxu0 %v4983
  %6985 = vmatprep.subr.bf16.mxu0 0
  %6986 = vmatpush1.bf16.msra.mxu0 %v4984
  %6987 = vmatprep.subr.bf16.mxu0 0
  %6988 = vmatpush1.bf16.msra.mxu0 %v4985
  %6989 = vmatprep.subr.bf16.mxu0 0
  %6990 = vmatpush1.bf16.msra.mxu0 %v4986
  %6991 = vmatprep.subr.bf16.mxu0 0
  %6992 = vmatpush1.bf16.msra.mxu0 %v4987
  %6993 = vmatprep.subr.bf16.mxu0 0
  %6994 = vmatpush1.bf16.msra.mxu0 %v4988
  %6995 = vmatprep.subr.bf16.mxu0 0
  %6996 = vmatpush1.bf16.msra.mxu0 %v4989
  %6997 = vmatprep.subr.bf16.mxu0 0
  %6998 = vmatpush1.bf16.msra.mxu0 %v4990
  %6999 = vmatprep.subr.bf16.mxu0 0
  %7000 = vmatpush1.bf16.msra.mxu0 %v4991
  %7001 = vmatprep.subr.bf16.mxu0 0
  %7002 = vmatpush1.bf16.msra.mxu0 %v4992
  %7003 = vmatprep.subr.bf16.mxu0 0
  %7004 = vmatpush1.bf16.msra.mxu0 %v4993
  %7005 = vmatprep.subr.bf16.mxu0 0
  %7006 = vmatpush1.bf16.msra.mxu0 %v4994
  %7007 = vmatprep.subr.bf16.mxu0 0
  %7008 = vmatpush1.bf16.msra.mxu0 %v4995
  %7009 = vmatprep.subr.bf16.mxu0 0
  %7010 = vmatpush1.bf16.msra.mxu0 %v4996
  %7011 = vmatprep.subr.bf16.mxu0 0
  %7012 = vmatpush1.bf16.msra.mxu0 %v4997
  %7013 = vmatprep.mubr.bf16.mxu0 %v2421
  %7014 = vmatmul.mubr.bf16.gmra.mrb[0].mxu0 %v2420
  %v7015 = vpop.f32.mrb[0].mxu0
  %v7016 = vadd.f32 %v6919, %v7015
  %v7017 = vpop.f32.mrb[0].mxu0
  %v7018 = vpop.f32.mrb[0].mxu0
  %v7019 = vadd.f32 %v6922, %v7018
  %v7020 = vpop.f32.mrb[0].mxu0
  %7021 = vmatprep.mubr.bf16.mxu0 %v2470
  %7022 = vmatmul.mubr.bf16.gmra.mrb[0].mxu0 %v2469
  %v7023 = vpop.f32.mrb[0].mxu0
  %v7024 = vadd.f32 %v6927, %v7023
  %v7025 = vpop.f32.mrb[0].mxu0
  %v7026 = vpop.f32.mrb[0].mxu0
  %v7027 = vadd.f32 %v6930, %v7026
  %v7028 = vpop.f32.mrb[0].mxu0
  %7029 = vmatprep.mubr.bf16.mxu0 %v2519
  %7030 = vmatmul.mubr.bf16.gmra.mrb[0].mxu0 %v2518
  %v7031 = vpop.f32.mrb[0].mxu0
  %v7032 = vadd.f32 %v6935, %v7031
  %v7033 = vpop.f32.mrb[0].mxu0
  %v7034 = vpop.f32.mrb[0].mxu0
  %v7035 = vadd.f32 %v6938, %v7034
  %v7036 = vpop.f32.mrb[0].mxu0
  %7037 = vmatprep.mubr.bf16.mxu0 %v2568
  %7038 = vmatmul.mubr.bf16.gmra.mrb[0].mxu0 %v2567
  %v7039 = vpop.f32.mrb[0].mxu0
  %v7040 = vadd.f32 %v6943, %v7039
  %v7041 = vpop.f32.mrb[0].mxu0
  %v7042 = vpop.f32.mrb[0].mxu0
  %v7043 = vadd.f32 %v6946, %v7042
  %v7044 = vpop.f32.mrb[0].mxu0
  %7045 = vmatprep.mubr.bf16.mxu0 %v2617
  %7046 = vmatmul.mubr.bf16.gmra.mrb[0].mxu0 %v2616
  %v7047 = vpop.f32.mrb[0].mxu0
  %v7048 = vadd.f32 %v6951, %v7047
  %v7049 = vpop.f32.mrb[0].mxu0
  %v7050 = vpop.f32.mrb[0].mxu0
  %v7051 = vadd.f32 %v6954, %v7050
  %v7052 = vpop.f32.mrb[0].mxu0
  %7053 = vmatprep.mubr.bf16.mxu0 %v2666
  %7054 = vmatmul.mubr.bf16.gmra.mrb[0].mxu0 %v2665
  %v7055 = vpop.f32.mrb[0].mxu0
  %v7056 = vadd.f32 %v6959, %v7055
  %v7057 = vpop.f32.mrb[0].mxu0
  %v7058 = vpop.f32.mrb[0].mxu0
  %v7059 = vadd.f32 %v6962, %v7058
  %v7060 = vpop.f32.mrb[0].mxu0
  %7061 = vmatprep.mubr.bf16.mxu0 %v2715
  %7062 = vmatmul.mubr.bf16.gmra.mrb[0].mxu0 %v2714
  %v7063 = vpop.f32.mrb[0].mxu0
  %v7064 = vadd.f32 %v6967, %v7063
  %v7065 = vpop.f32.mrb[0].mxu0
  %v7066 = vpop.f32.mrb[0].mxu0
  %v7067 = vadd.f32 %v6970, %v7066
  %v7068 = vpop.f32.mrb[0].mxu0
  %7069 = vmatprep.mubr.bf16.mxu0 %v2764
  %7070 = vmatmul.mubr.bf16.gmra.mrb[0].mxu0 %v2763
  %v7071 = vpop.f32.mrb[0].mxu0
  %v7072 = vadd.f32 %v6975, %v7071
  %v7073 = vpop.f32.mrb[0].mxu0
  %v7074 = vpop.f32.mrb[0].mxu0
  %v7075 = vadd.f32 %v6978, %v7074
  %v7076 = vpop.f32.mrb[0].mxu0
  %7077 = vdwg.mxu0
  %7078 = vmatprep.subr.bf16.mxu0 0
  %7079 = vmatpush1.bf16.msra.mxu0 %v4998
  %7080 = vmatprep.subr.bf16.mxu0 0
  %7081 = vmatpush1.bf16.msra.mxu0 %v4999
  %7082 = vmatprep.subr.bf16.mxu0 0
  %7083 = vmatpush1.bf16.msra.mxu0 %v5000
  %7084 = vmatprep.subr.bf16.mxu0 0
  %7085 = vmatpush1.bf16.msra.mxu0 %v5001
  %7086 = vmatprep.subr.bf16.mxu0 0
  %7087 = vmatpush1.bf16.msra.mxu0 %v5002
  %7088 = vmatprep.subr.bf16.mxu0 0
  %7089 = vmatpush1.bf16.msra.mxu0 %v5003
  %7090 = vmatprep.subr.bf16.mxu0 0
  %7091 = vmatpush1.bf16.msra.mxu0 %v5004
  %7092 = vmatprep.subr.bf16.mxu0 0
  %7093 = vmatpush1.bf16.msra.mxu0 %v5005
  %7094 = vmatprep.subr.bf16.mxu0 0
  %7095 = vmatpush1.bf16.msra.mxu0 %v5006
  %7096 = vmatprep.subr.bf16.mxu0 0
  %7097 = vmatpush1.bf16.msra.mxu0 %v5007
  %7098 = vmatprep.subr.bf16.mxu0 0
  %7099 = vmatpush1.bf16.msra.mxu0 %v5008
  %7100 = vmatprep.subr.bf16.mxu0 0
  %7101 = vmatpush1.bf16.msra.mxu0 %v5009
  %7102 = vmatprep.subr.bf16.mxu0 0
  %7103 = vmatpush1.bf16.msra.mxu0 %v5010
  %7104 = vmatprep.subr.bf16.mxu0 0
  %7105 = vmatpush1.bf16.msra.mxu0 %v5011
  %7106 = vmatprep.subr.bf16.mxu0 0
  %7107 = vmatpush1.bf16.msra.mxu0 %v5012
  %7108 = vmatprep.subr.bf16.mxu0 0
  %7109 = vmatpush1.bf16.msra.mxu0 %v5013
  %7110 = vmatprep.mubr.bf16.mxu0 %v2423
  %7111 = vmatmul.mubr.bf16.gmra.mrb[0].mxu0 %v2422
  %v7112 = vpop.f32.mrb[0].mxu0
  %v7113 = vadd.f32 %v7016, %v7112
  %v7114 = vpop.f32.mrb[0].mxu0
  %v7115 = vpop.f32.mrb[0].mxu0
  %v7116 = vadd.f32 %v7019, %v7115
  %v7117 = vpop.f32.mrb[0].mxu0
  %7118 = vmatprep.mubr.bf16.mxu0 %v2472
  %7119 = vmatmul.mubr.bf16.gmra.mrb[0].mxu0 %v2471
  %v7120 = vpop.f32.mrb[0].mxu0
  %v7121 = vadd.f32 %v7024, %v7120
  %v7122 = vpop.f32.mrb[0].mxu0
  %v7123 = vpop.f32.mrb[0].mxu0
  %v7124 = vadd.f32 %v7027, %v7123
  %v7125 = vpop.f32.mrb[0].mxu0
  %7126 = vmatprep.mubr.bf16.mxu0 %v2521
  %7127 = vmatmul.mubr.bf16.gmra.mrb[0].mxu0 %v2520
  %v7128 = vpop.f32.mrb[0].mxu0
  %v7129 = vadd.f32 %v7032, %v7128
  %v7130 = vpop.f32.mrb[0].mxu0
  %v7131 = vpop.f32.mrb[0].mxu0
  %v7132 = vadd.f32 %v7035, %v7131
  %v7133 = vpop.f32.mrb[0].mxu0
  %7134 = vmatprep.mubr.bf16.mxu0 %v2570
  %7135 = vmatmul.mubr.bf16.gmra.mrb[0].mxu0 %v2569
  %v7136 = vpop.f32.mrb[0].mxu0
  %v7137 = vadd.f32 %v7040, %v7136
  %v7138 = vpop.f32.mrb[0].mxu0
  %v7139 = vpop.f32.mrb[0].mxu0
  %v7140 = vadd.f32 %v7043, %v7139
  %v7141 = vpop.f32.mrb[0].mxu0
  %7142 = vmatprep.mubr.bf16.mxu0 %v2619
  %7143 = vmatmul.mubr.bf16.gmra.mrb[0].mxu0 %v2618
  %v7144 = vpop.f32.mrb[0].mxu0
  %v7145 = vadd.f32 %v7048, %v7144
  %v7146 = vpop.f32.mrb[0].mxu0
  %v7147 = vpop.f32.mrb[0].mxu0
  %v7148 = vadd.f32 %v7051, %v7147
  %v7149 = vpop.f32.mrb[0].mxu0
  %7150 = vmatprep.mubr.bf16.mxu0 %v2668
  %7151 = vmatmul.mubr.bf16.gmra.mrb[0].mxu0 %v2667
  %v7152 = vpop.f32.mrb[0].mxu0
  %v7153 = vadd.f32 %v7056, %v7152
  %v7154 = vpop.f32.mrb[0].mxu0
  %v7155 = vpop.f32.mrb[0].mxu0
  %v7156 = vadd.f32 %v7059, %v7155
  %v7157 = vpop.f32.mrb[0].mxu0
  %7158 = vmatprep.mubr.bf16.mxu0 %v2717
  %7159 = vmatmul.mubr.bf16.gmra.mrb[0].mxu0 %v2716
  %v7160 = vpop.f32.mrb[0].mxu0
  %v7161 = vadd.f32 %v7064, %v7160
  %v7162 = vpop.f32.mrb[0].mxu0
  %v7163 = vpop.f32.mrb[0].mxu0
  %v7164 = vadd.f32 %v7067, %v7163
  %v7165 = vpop.f32.mrb[0].mxu0
  %7166 = vmatprep.mubr.bf16.mxu0 %v2766
  %7167 = vmatmul.mubr.bf16.gmra.mrb[0].mxu0 %v2765
  %v7168 = vpop.f32.mrb[0].mxu0
  %v7169 = vadd.f32 %v7072, %v7168
  %v7170 = vpop.f32.mrb[0].mxu0
  %v7171 = vpop.f32.mrb[0].mxu0
  %v7172 = vadd.f32 %v7075, %v7171
  %v7173 = vpop.f32.mrb[0].mxu0
  %7174 = vdwg.mxu0
  %7175 = vmatprep.subr.bf16.mxu0 0
  %7176 = vmatpush1.bf16.msra.mxu0 %v5014
  %7177 = vmatprep.subr.bf16.mxu0 0
  %7178 = vmatpush1.bf16.msra.mxu0 %v5015
  %7179 = vmatprep.subr.bf16.mxu0 0
  %7180 = vmatpush1.bf16.msra.mxu0 %v5016
  %7181 = vmatprep.subr.bf16.mxu0 0
  %7182 = vmatpush1.bf16.msra.mxu0 %v5017
  %7183 = vmatprep.subr.bf16.mxu0 0
  %7184 = vmatpush1.bf16.msra.mxu0 %v5018
  %7185 = vmatprep.subr.bf16.mxu0 0
  %7186 = vmatpush1.bf16.msra.mxu0 %v5019
  %7187 = vmatprep.subr.bf16.mxu0 0
  %7188 = vmatpush1.bf16.msra.mxu0 %v5020
  %7189 = vmatprep.subr.bf16.mxu0 0
  %7190 = vmatpush1.bf16.msra.mxu0 %v5021
  %7191 = vmatprep.subr.bf16.mxu0 0
  %7192 = vmatpush1.bf16.msra.mxu0 %v5022
  %7193 = vmatprep.subr.bf16.mxu0 0
  %7194 = vmatpush1.bf16.msra.mxu0 %v5023
  %7195 = vmatprep.subr.bf16.mxu0 0
  %7196 = vmatpush1.bf16.msra.mxu0 %v5024
  %7197 = vmatprep.subr.bf16.mxu0 0
  %7198 = vmatpush1.bf16.msra.mxu0 %v5025
  %7199 = vmatprep.subr.bf16.mxu0 0
  %7200 = vmatpush1.bf16.msra.mxu0 %v5026
  %7201 = vmatprep.subr.bf16.mxu0 0
  %7202 = vmatpush1.bf16.msra.mxu0 %v5027
  %7203 = vmatprep.subr.bf16.mxu0 0
  %7204 = vmatpush1.bf16.msra.mxu0 %v5028
  %7205 = vmatprep.subr.bf16.mxu0 0
  %7206 = vmatpush1.bf16.msra.mxu0 %v5029
  %7207 = vmatprep.mubr.bf16.mxu0 %v2425
  %7208 = vmatmul.mubr.bf16.gmra.mrb[0].mxu0 %v2424
  %v7209 = vpop.f32.mrb[0].mxu0
  %v7210 = vadd.f32 %v7113, %v7209
  %v7211 = vpop.f32.mrb[0].mxu0
  %v7212 = vpop.f32.mrb[0].mxu0
  %v7213 = vadd.f32 %v7116, %v7212
  %v7214 = vpop.f32.mrb[0].mxu0
  %7215 = vmatprep.mubr.bf16.mxu0 %v2474
  %7216 = vmatmul.mubr.bf16.gmra.mrb[0].mxu0 %v2473
  %v7217 = vpop.f32.mrb[0].mxu0
  %v7218 = vadd.f32 %v7121, %v7217
  %v7219 = vpop.f32.mrb[0].mxu0
  %v7220 = vpop.f32.mrb[0].mxu0
  %v7221 = vadd.f32 %v7124, %v7220
  %v7222 = vpop.f32.mrb[0].mxu0
  %7223 = vmatprep.mubr.bf16.mxu0 %v2523
  %7224 = vmatmul.mubr.bf16.gmra.mrb[0].mxu0 %v2522
  %v7225 = vpop.f32.mrb[0].mxu0
  %v7226 = vadd.f32 %v7129, %v7225
  %v7227 = vpop.f32.mrb[0].mxu0
  %v7228 = vpop.f32.mrb[0].mxu0
  %v7229 = vadd.f32 %v7132, %v7228
  %v7230 = vpop.f32.mrb[0].mxu0
  %7231 = vmatprep.mubr.bf16.mxu0 %v2572
  %7232 = vmatmul.mubr.bf16.gmra.mrb[0].mxu0 %v2571
  %v7233 = vpop.f32.mrb[0].mxu0
  %v7234 = vadd.f32 %v7137, %v7233
  %v7235 = vpop.f32.mrb[0].mxu0
  %v7236 = vpop.f32.mrb[0].mxu0
  %v7237 = vadd.f32 %v7140, %v7236
  %v7238 = vpop.f32.mrb[0].mxu0
  %7239 = vmatprep.mubr.bf16.mxu0 %v2621
  %7240 = vmatmul.mubr.bf16.gmra.mrb[0].mxu0 %v2620
  %v7241 = vpop.f32.mrb[0].mxu0
  %v7242 = vadd.f32 %v7145, %v7241
  %v7243 = vpop.f32.mrb[0].mxu0
  %v7244 = vpop.f32.mrb[0].mxu0
  %v7245 = vadd.f32 %v7148, %v7244
  %v7246 = vpop.f32.mrb[0].mxu0
  %7247 = vmatprep.mubr.bf16.mxu0 %v2670
  %7248 = vmatmul.mubr.bf16.gmra.mrb[0].mxu0 %v2669
  %v7249 = vpop.f32.mrb[0].mxu0
  %v7250 = vadd.f32 %v7153, %v7249
  %v7251 = vpop.f32.mrb[0].mxu0
  %v7252 = vpop.f32.mrb[0].mxu0
  %v7253 = vadd.f32 %v7156, %v7252
  %v7254 = vpop.f32.mrb[0].mxu0
  %7255 = vmatprep.mubr.bf16.mxu0 %v2719
  %7256 = vmatmul.mubr.bf16.gmra.mrb[0].mxu0 %v2718
  %v7257 = vpop.f32.mrb[0].mxu0
  %v7258 = vadd.f32 %v7161, %v7257
  %v7259 = vpop.f32.mrb[0].mxu0
  %v7260 = vpop.f32.mrb[0].mxu0
  %v7261 = vadd.f32 %v7164, %v7260
  %v7262 = vpop.f32.mrb[0].mxu0
  %7263 = vmatprep.mubr.bf16.mxu0 %v2768
  %7264 = vmatmul.mubr.bf16.gmra.mrb[0].mxu0 %v2767
  %v7265 = vpop.f32.mrb[0].mxu0
  %v7266 = vadd.f32 %v7169, %v7265
  %v7267 = vpop.f32.mrb[0].mxu0
  %v7268 = vpop.f32.mrb[0].mxu0
  %v7269 = vadd.f32 %v7172, %v7268
  %v7270 = vpop.f32.mrb[0].mxu0
  %7271 = vdwg.mxu0
  %7272 = vmatprep.subr.bf16.mxu0 0
  %7273 = vmatpush1.bf16.msra.mxu0 %v5030
  %7274 = vmatprep.subr.bf16.mxu0 0
  %7275 = vmatpush1.bf16.msra.mxu0 %v5031
  %7276 = vmatprep.subr.bf16.mxu0 0
  %7277 = vmatpush1.bf16.msra.mxu0 %v5032
  %7278 = vmatprep.subr.bf16.mxu0 0
  %7279 = vmatpush1.bf16.msra.mxu0 %v5033
  %7280 = vmatprep.subr.bf16.mxu0 0
  %7281 = vmatpush1.bf16.msra.mxu0 %v5034
  %7282 = vmatprep.subr.bf16.mxu0 0
  %7283 = vmatpush1.bf16.msra.mxu0 %v5035
  %7284 = vmatprep.subr.bf16.mxu0 0
  %7285 = vmatpush1.bf16.msra.mxu0 %v5036
  %7286 = vmatprep.subr.bf16.mxu0 0
  %7287 = vmatpush1.bf16.msra.mxu0 %v5037
  %7288 = vmatprep.subr.bf16.mxu0 0
  %7289 = vmatpush1.bf16.msra.mxu0 %v5038
  %7290 = vmatprep.subr.bf16.mxu0 0
  %7291 = vmatpush1.bf16.msra.mxu0 %v5039
  %7292 = vmatprep.subr.bf16.mxu0 0
  %7293 = vmatpush1.bf16.msra.mxu0 %v5040
  %7294 = vmatprep.subr.bf16.mxu0 0
  %7295 = vmatpush1.bf16.msra.mxu0 %v5041
  %7296 = vmatprep.subr.bf16.mxu0 0
  %7297 = vmatpush1.bf16.msra.mxu0 %v5042
  %7298 = vmatprep.subr.bf16.mxu0 0
  %7299 = vmatpush1.bf16.msra.mxu0 %v5043
  %7300 = vmatprep.subr.bf16.mxu0 0
  %7301 = vmatpush1.bf16.msra.mxu0 %v5044
  %7302 = vmatprep.subr.bf16.mxu0 0
  %7303 = vmatpush1.bf16.msra.mxu0 %v5045
  %7304 = vmatprep.mubr.bf16.mxu0 %v2427
  %7305 = vmatmul.mubr.bf16.gmra.mrb[0].mxu0 %v2426
  %v7306 = vpop.f32.mrb[0].mxu0
  %v7307 = vadd.f32 %v7210, %v7306
  %v7308 = vpop.f32.mrb[0].mxu0
  %v7309 = vpop.f32.mrb[0].mxu0
  %v7310 = vadd.f32 %v7213, %v7309
  %v7311 = vpop.f32.mrb[0].mxu0
  %7312 = vmatprep.mubr.bf16.mxu0 %v2476
  %7313 = vmatmul.mubr.bf16.gmra.mrb[0].mxu0 %v2475
  %v7314 = vpop.f32.mrb[0].mxu0
  %v7315 = vadd.f32 %v7218, %v7314
  %v7316 = vpop.f32.mrb[0].mxu0
  %v7317 = vpop.f32.mrb[0].mxu0
  %v7318 = vadd.f32 %v7221, %v7317
  %v7319 = vpop.f32.mrb[0].mxu0
  %7320 = vmatprep.mubr.bf16.mxu0 %v2525
  %7321 = vmatmul.mubr.bf16.gmra.mrb[0].mxu0 %v2524
  %v7322 = vpop.f32.mrb[0].mxu0
  %v7323 = vadd.f32 %v7226, %v7322
  %v7324 = vpop.f32.mrb[0].mxu0
  %v7325 = vpop.f32.mrb[0].mxu0
  %v7326 = vadd.f32 %v7229, %v7325
  %v7327 = vpop.f32.mrb[0].mxu0
  %7328 = vmatprep.mubr.bf16.mxu0 %v2574
  %7329 = vmatmul.mubr.bf16.gmra.mrb[0].mxu0 %v2573
  %v7330 = vpop.f32.mrb[0].mxu0
  %v7331 = vadd.f32 %v7234, %v7330
  %v7332 = vpop.f32.mrb[0].mxu0
  %v7333 = vpop.f32.mrb[0].mxu0
  %v7334 = vadd.f32 %v7237, %v7333
  %v7335 = vpop.f32.mrb[0].mxu0
  %7336 = vmatprep.mubr.bf16.mxu0 %v2623
  %7337 = vmatmul.mubr.bf16.gmra.mrb[0].mxu0 %v2622
  %v7338 = vpop.f32.mrb[0].mxu0
  %v7339 = vadd.f32 %v7242, %v7338
  %v7340 = vpop.f32.mrb[0].mxu0
  %v7341 = vpop.f32.mrb[0].mxu0
  %v7342 = vadd.f32 %v7245, %v7341
  %v7343 = vpop.f32.mrb[0].mxu0
  %7344 = vmatprep.mubr.bf16.mxu0 %v2672
  %7345 = vmatmul.mubr.bf16.gmra.mrb[0].mxu0 %v2671
  %v7346 = vpop.f32.mrb[0].mxu0
  %v7347 = vadd.f32 %v7250, %v7346
  %v7348 = vpop.f32.mrb[0].mxu0
  %v7349 = vpop.f32.mrb[0].mxu0
  %v7350 = vadd.f32 %v7253, %v7349
  %v7351 = vpop.f32.mrb[0].mxu0
  %7352 = vmatprep.mubr.bf16.mxu0 %v2721
  %7353 = vmatmul.mubr.bf16.gmra.mrb[0].mxu0 %v2720
  %v7354 = vpop.f32.mrb[0].mxu0
  %v7355 = vadd.f32 %v7258, %v7354
  %v7356 = vpop.f32.mrb[0].mxu0
  %v7357 = vpop.f32.mrb[0].mxu0
  %v7358 = vadd.f32 %v7261, %v7357
  %v7359 = vpop.f32.mrb[0].mxu0
  %7360 = vmatprep.mubr.bf16.mxu0 %v2770
  %7361 = vmatmul.mubr.bf16.gmra.mrb[0].mxu0 %v2769
  %v7362 = vpop.f32.mrb[0].mxu0
  %v7363 = vadd.f32 %v7266, %v7362
  %v7364 = vpop.f32.mrb[0].mxu0
  %v7365 = vpop.f32.mrb[0].mxu0
  %v7366 = vadd.f32 %v7269, %v7365
  %v7367 = vpop.f32.mrb[0].mxu0
  %7368 = vdwg.mxu0
  %7369 = vmatprep.subr.bf16.mxu0 0
  %7370 = vmatpush1.bf16.msra.mxu0 %v5046
  %7371 = vmatprep.subr.bf16.mxu0 0
  %7372 = vmatpush1.bf16.msra.mxu0 %v5047
  %7373 = vmatprep.subr.bf16.mxu0 0
  %7374 = vmatpush1.bf16.msra.mxu0 %v5048
  %7375 = vmatprep.subr.bf16.mxu0 0
  %7376 = vmatpush1.bf16.msra.mxu0 %v5049
  %7377 = vmatprep.subr.bf16.mxu0 0
  %7378 = vmatpush1.bf16.msra.mxu0 %v5050
  %7379 = vmatprep.subr.bf16.mxu0 0
  %7380 = vmatpush1.bf16.msra.mxu0 %v5051
  %7381 = vmatprep.subr.bf16.mxu0 0
  %7382 = vmatpush1.bf16.msra.mxu0 %v5052
  %7383 = vmatprep.subr.bf16.mxu0 0
  %7384 = vmatpush1.bf16.msra.mxu0 %v5053
  %7385 = vmatprep.subr.bf16.mxu0 0
  %7386 = vmatpush1.bf16.msra.mxu0 %v5054
  %7387 = vmatprep.subr.bf16.mxu0 0
  %7388 = vmatpush1.bf16.msra.mxu0 %v5055
  %7389 = vmatprep.subr.bf16.mxu0 0
  %7390 = vmatpush1.bf16.msra.mxu0 %v5056
  %7391 = vmatprep.subr.bf16.mxu0 0
  %7392 = vmatpush1.bf16.msra.mxu0 %v5057
  %7393 = vmatprep.subr.bf16.mxu0 0
  %7394 = vmatpush1.bf16.msra.mxu0 %v5058
  %7395 = vmatprep.subr.bf16.mxu0 0
  %7396 = vmatpush1.bf16.msra.mxu0 %v5059
  %7397 = vmatprep.subr.bf16.mxu0 0
  %7398 = vmatpush1.bf16.msra.mxu0 %v5060
  %7399 = vmatprep.subr.bf16.mxu0 0
  %7400 = vmatpush1.bf16.msra.mxu0 %v5061
  %7401 = vmatprep.mubr.bf16.mxu0 %v2429
  %7402 = vmatmul.mubr.bf16.gmra.mrb[0].mxu0 %v2428
  %v7403 = vpop.f32.mrb[0].mxu0
  %v7404 = vadd.f32 %v7307, %v7403
  %v7405 = vpop.f32.mrb[0].mxu0
  %v7406 = vpop.f32.mrb[0].mxu0
  %v7407 = vadd.f32 %v7310, %v7406
  %v7408 = vpop.f32.mrb[0].mxu0
  %7409 = vmatprep.mubr.bf16.mxu0 %v2478
  %7410 = vmatmul.mubr.bf16.gmra.mrb[0].mxu0 %v2477
  %v7411 = vpop.f32.mrb[0].mxu0
  %v7412 = vadd.f32 %v7315, %v7411
  %v7413 = vpop.f32.mrb[0].mxu0
  %v7414 = vpop.f32.mrb[0].mxu0
  %v7415 = vadd.f32 %v7318, %v7414
  %v7416 = vpop.f32.mrb[0].mxu0
  %7417 = vmatprep.mubr.bf16.mxu0 %v2527
  %7418 = vmatmul.mubr.bf16.gmra.mrb[0].mxu0 %v2526
  %v7419 = vpop.f32.mrb[0].mxu0
  %v7420 = vadd.f32 %v7323, %v7419
  %v7421 = vpop.f32.mrb[0].mxu0
  %v7422 = vpop.f32.mrb[0].mxu0
  %v7423 = vadd.f32 %v7326, %v7422
  %v7424 = vpop.f32.mrb[0].mxu0
  %7425 = vmatprep.mubr.bf16.mxu0 %v2576
  %7426 = vmatmul.mubr.bf16.gmra.mrb[0].mxu0 %v2575
  %v7427 = vpop.f32.mrb[0].mxu0
  %v7428 = vadd.f32 %v7331, %v7427
  %v7429 = vpop.f32.mrb[0].mxu0
  %v7430 = vpop.f32.mrb[0].mxu0
  %v7431 = vadd.f32 %v7334, %v7430
  %v7432 = vpop.f32.mrb[0].mxu0
  %7433 = vmatprep.mubr.bf16.mxu0 %v2625
  %7434 = vmatmul.mubr.bf16.gmra.mrb[0].mxu0 %v2624
  %v7435 = vpop.f32.mrb[0].mxu0
  %v7436 = vadd.f32 %v7339, %v7435
  %v7437 = vpop.f32.mrb[0].mxu0
  %v7438 = vpop.f32.mrb[0].mxu0
  %v7439 = vadd.f32 %v7342, %v7438
  %v7440 = vpop.f32.mrb[0].mxu0
  %7441 = vmatprep.mubr.bf16.mxu0 %v2674
  %7442 = vmatmul.mubr.bf16.gmra.mrb[0].mxu0 %v2673
  %v7443 = vpop.f32.mrb[0].mxu0
  %v7444 = vadd.f32 %v7347, %v7443
  %v7445 = vpop.f32.mrb[0].mxu0
  %v7446 = vpop.f32.mrb[0].mxu0
  %v7447 = vadd.f32 %v7350, %v7446
  %v7448 = vpop.f32.mrb[0].mxu0
  %7449 = vmatprep.mubr.bf16.mxu0 %v2723
  %7450 = vmatmul.mubr.bf16.gmra.mrb[0].mxu0 %v2722
  %v7451 = vpop.f32.mrb[0].mxu0
  %v7452 = vadd.f32 %v7355, %v7451
  %v7453 = vpop.f32.mrb[0].mxu0
  %v7454 = vpop.f32.mrb[0].mxu0
  %v7455 = vadd.f32 %v7358, %v7454
  %v7456 = vpop.f32.mrb[0].mxu0
  %7457 = vmatprep.mubr.bf16.mxu0 %v2772
  %7458 = vmatmul.mubr.bf16.gmra.mrb[0].mxu0 %v2771
  %v7459 = vpop.f32.mrb[0].mxu0
  %v7460 = vadd.f32 %v7363, %v7459
  %v7461 = vpop.f32.mrb[0].mxu0
  %v7462 = vpop.f32.mrb[0].mxu0
  %v7463 = vadd.f32 %v7366, %v7462
  %v7464 = vpop.f32.mrb[0].mxu0
  %7465 = vdwg.mxu0
  %7466 = vmatprep.subr.bf16.mxu0 0
  %7467 = vmatpush1.bf16.msra.mxu0 %v5062
  %7468 = vmatprep.subr.bf16.mxu0 0
  %7469 = vmatpush1.bf16.msra.mxu0 %v5063
  %7470 = vmatprep.subr.bf16.mxu0 0
  %7471 = vmatpush1.bf16.msra.mxu0 %v5064
  %7472 = vmatprep.subr.bf16.mxu0 0
  %7473 = vmatpush1.bf16.msra.mxu0 %v5065
  %7474 = vmatprep.subr.bf16.mxu0 0
  %7475 = vmatpush1.bf16.msra.mxu0 %v5066
  %7476 = vmatprep.subr.bf16.mxu0 0
  %7477 = vmatpush1.bf16.msra.mxu0 %v5067
  %7478 = vmatprep.subr.bf16.mxu0 0
  %7479 = vmatpush1.bf16.msra.mxu0 %v5068
  %7480 = vmatprep.subr.bf16.mxu0 0
  %7481 = vmatpush1.bf16.msra.mxu0 %v5069
  %7482 = vmatprep.subr.bf16.mxu0 0
  %7483 = vmatpush1.bf16.msra.mxu0 %v5070
  %7484 = vmatprep.subr.bf16.mxu0 0
  %7485 = vmatpush1.bf16.msra.mxu0 %v5071
  %7486 = vmatprep.subr.bf16.mxu0 0
  %7487 = vmatpush1.bf16.msra.mxu0 %v5072
  %7488 = vmatprep.subr.bf16.mxu0 0
  %7489 = vmatpush1.bf16.msra.mxu0 %v5073
  %7490 = vmatprep.subr.bf16.mxu0 0
  %7491 = vmatpush1.bf16.msra.mxu0 %v5074
  %7492 = vmatprep.subr.bf16.mxu0 0
  %7493 = vmatpush1.bf16.msra.mxu0 %v5075
  %7494 = vmatprep.subr.bf16.mxu0 0
  %7495 = vmatpush1.bf16.msra.mxu0 %v5076
  %7496 = vmatprep.subr.bf16.mxu0 0
  %7497 = vmatpush1.bf16.msra.mxu0 %v5077
  %7498 = vmatprep.mubr.bf16.mxu0 %v2431
  %7499 = vmatmul.mubr.bf16.gmra.mrb[0].mxu0 %v2430
  %v7500 = vpop.f32.mrb[0].mxu0
  %v7501 = vadd.f32 %v7404, %v7500
  %v7502 = vpop.f32.mrb[0].mxu0
  %v7503 = vpop.f32.mrb[0].mxu0
  %v7504 = vadd.f32 %v7407, %v7503
  %v7505 = vpop.f32.mrb[0].mxu0
  %7506 = vmatprep.mubr.bf16.mxu0 %v2480
  %7507 = vmatmul.mubr.bf16.gmra.mrb[0].mxu0 %v2479
  %v7508 = vpop.f32.mrb[0].mxu0
  %v7509 = vadd.f32 %v7412, %v7508
  %v7510 = vpop.f32.mrb[0].mxu0
  %v7511 = vpop.f32.mrb[0].mxu0
  %v7512 = vadd.f32 %v7415, %v7511
  %v7513 = vpop.f32.mrb[0].mxu0
  %7514 = vmatprep.mubr.bf16.mxu0 %v2529
  %7515 = vmatmul.mubr.bf16.gmra.mrb[0].mxu0 %v2528
  %v7516 = vpop.f32.mrb[0].mxu0
  %v7517 = vadd.f32 %v7420, %v7516
  %v7518 = vpop.f32.mrb[0].mxu0
  %v7519 = vpop.f32.mrb[0].mxu0
  %v7520 = vadd.f32 %v7423, %v7519
  %v7521 = vpop.f32.mrb[0].mxu0
  %7522 = vmatprep.mubr.bf16.mxu0 %v2578
  %7523 = vmatmul.mubr.bf16.gmra.mrb[0].mxu0 %v2577
  %v7524 = vpop.f32.mrb[0].mxu0
  %v7525 = vadd.f32 %v7428, %v7524
  %v7526 = vpop.f32.mrb[0].mxu0
  %v7527 = vpop.f32.mrb[0].mxu0
  %v7528 = vadd.f32 %v7431, %v7527
  %v7529 = vpop.f32.mrb[0].mxu0
  %7530 = vmatprep.mubr.bf16.mxu0 %v2627
  %7531 = vmatmul.mubr.bf16.gmra.mrb[0].mxu0 %v2626
  %v7532 = vpop.f32.mrb[0].mxu0
  %v7533 = vadd.f32 %v7436, %v7532
  %v7534 = vpop.f32.mrb[0].mxu0
  %v7535 = vpop.f32.mrb[0].mxu0
  %v7536 = vadd.f32 %v7439, %v7535
  %v7537 = vpop.f32.mrb[0].mxu0
  %7538 = vmatprep.mubr.bf16.mxu0 %v2676
  %7539 = vmatmul.mubr.bf16.gmra.mrb[0].mxu0 %v2675
  %v7540 = vpop.f32.mrb[0].mxu0
  %v7541 = vadd.f32 %v7444, %v7540
  %v7542 = vpop.f32.mrb[0].mxu0
  %v7543 = vpop.f32.mrb[0].mxu0
  %v7544 = vadd.f32 %v7447, %v7543
  %v7545 = vpop.f32.mrb[0].mxu0
  %7546 = vmatprep.mubr.bf16.mxu0 %v2725
  %7547 = vmatmul.mubr.bf16.gmra.mrb[0].mxu0 %v2724
  %v7548 = vpop.f32.mrb[0].mxu0
  %v7549 = vadd.f32 %v7452, %v7548
  %v7550 = vpop.f32.mrb[0].mxu0
  %v7551 = vpop.f32.mrb[0].mxu0
  %v7552 = vadd.f32 %v7455, %v7551
  %v7553 = vpop.f32.mrb[0].mxu0
  %7554 = vmatprep.mubr.bf16.mxu0 %v2774
  %7555 = vmatmul.mubr.bf16.gmra.mrb[0].mxu0 %v2773
  %v7556 = vpop.f32.mrb[0].mxu0
  %v7557 = vadd.f32 %v7460, %v7556
  %v7558 = vpop.f32.mrb[0].mxu0
  %v7559 = vpop.f32.mrb[0].mxu0
  %v7560 = vadd.f32 %v7463, %v7559
  %v7561 = vpop.f32.mrb[0].mxu0
  %7562 = vdwg.mxu0
  %7563 = vmatprep.subr.bf16.mxu0 0
  %7564 = vmatpush1.bf16.msra.mxu0 %v5078
  %7565 = vmatprep.subr.bf16.mxu0 0
  %7566 = vmatpush1.bf16.msra.mxu0 %v5079
  %7567 = vmatprep.subr.bf16.mxu0 0
  %7568 = vmatpush1.bf16.msra.mxu0 %v5080
  %7569 = vmatprep.subr.bf16.mxu0 0
  %7570 = vmatpush1.bf16.msra.mxu0 %v5081
  %7571 = vmatprep.subr.bf16.mxu0 0
  %7572 = vmatpush1.bf16.msra.mxu0 %v5082
  %7573 = vmatprep.subr.bf16.mxu0 0
  %7574 = vmatpush1.bf16.msra.mxu0 %v5083
  %7575 = vmatprep.subr.bf16.mxu0 0
  %7576 = vmatpush1.bf16.msra.mxu0 %v5084
  %7577 = vmatprep.subr.bf16.mxu0 0
  %7578 = vmatpush1.bf16.msra.mxu0 %v5085
  %7579 = vmatprep.subr.bf16.mxu0 0
  %7580 = vmatpush1.bf16.msra.mxu0 %v5086
  %7581 = vmatprep.subr.bf16.mxu0 0
  %7582 = vmatpush1.bf16.msra.mxu0 %v5087
  %7583 = vmatprep.subr.bf16.mxu0 0
  %7584 = vmatpush1.bf16.msra.mxu0 %v5088
  %7585 = vmatprep.subr.bf16.mxu0 0
  %7586 = vmatpush1.bf16.msra.mxu0 %v5089
  %7587 = vmatprep.subr.bf16.mxu0 0
  %7588 = vmatpush1.bf16.msra.mxu0 %v5090
  %7589 = vmatprep.subr.bf16.mxu0 0
  %7590 = vmatpush1.bf16.msra.mxu0 %v5091
  %7591 = vmatprep.subr.bf16.mxu0 0
  %7592 = vmatpush1.bf16.msra.mxu0 %v5092
  %7593 = vmatprep.subr.bf16.mxu0 0
  %7594 = vmatpush1.bf16.msra.mxu0 %v5093
  %7595 = vmatprep.mubr.bf16.mxu0 %v2433
  %7596 = vmatmul.mubr.bf16.gmra.mrb[0].mxu0 %v2432
  %v7597 = vpop.f32.mrb[0].mxu0
  %v7598 = vadd.f32 %v7501, %v7597
  %v7599 = vpop.f32.mrb[0].mxu0
  %v7600 = vpop.f32.mrb[0].mxu0
  %v7601 = vadd.f32 %v7504, %v7600
  %v7602 = vpop.f32.mrb[0].mxu0
  %7603 = vmatprep.mubr.bf16.mxu0 %v2482
  %7604 = vmatmul.mubr.bf16.gmra.mrb[0].mxu0 %v2481
  %v7605 = vpop.f32.mrb[0].mxu0
  %v7606 = vadd.f32 %v7509, %v7605
  %v7607 = vpop.f32.mrb[0].mxu0
  %v7608 = vpop.f32.mrb[0].mxu0
  %v7609 = vadd.f32 %v7512, %v7608
  %v7610 = vpop.f32.mrb[0].mxu0
  %7611 = vmatprep.mubr.bf16.mxu0 %v2531
  %7612 = vmatmul.mubr.bf16.gmra.mrb[0].mxu0 %v2530
  %v7613 = vpop.f32.mrb[0].mxu0
  %v7614 = vadd.f32 %v7517, %v7613
  %v7615 = vpop.f32.mrb[0].mxu0
  %v7616 = vpop.f32.mrb[0].mxu0
  %v7617 = vadd.f32 %v7520, %v7616
  %v7618 = vpop.f32.mrb[0].mxu0
  %7619 = vmatprep.mubr.bf16.mxu0 %v2580
  %7620 = vmatmul.mubr.bf16.gmra.mrb[0].mxu0 %v2579
  %v7621 = vpop.f32.mrb[0].mxu0
  %v7622 = vadd.f32 %v7525, %v7621
  %v7623 = vpop.f32.mrb[0].mxu0
  %v7624 = vpop.f32.mrb[0].mxu0
  %v7625 = vadd.f32 %v7528, %v7624
  %v7626 = vpop.f32.mrb[0].mxu0
  %7627 = vmatprep.mubr.bf16.mxu0 %v2629
  %7628 = vmatmul.mubr.bf16.gmra.mrb[0].mxu0 %v2628
  %v7629 = vpop.f32.mrb[0].mxu0
  %v7630 = vadd.f32 %v7533, %v7629
  %v7631 = vpop.f32.mrb[0].mxu0
  %v7632 = vpop.f32.mrb[0].mxu0
  %v7633 = vadd.f32 %v7536, %v7632
  %v7634 = vpop.f32.mrb[0].mxu0
  %7635 = vmatprep.mubr.bf16.mxu0 %v2678
  %7636 = vmatmul.mubr.bf16.gmra.mrb[0].mxu0 %v2677
  %v7637 = vpop.f32.mrb[0].mxu0
  %v7638 = vadd.f32 %v7541, %v7637
  %v7639 = vpop.f32.mrb[0].mxu0
  %v7640 = vpop.f32.mrb[0].mxu0
  %v7641 = vadd.f32 %v7544, %v7640
  %v7642 = vpop.f32.mrb[0].mxu0
  %7643 = vmatprep.mubr.bf16.mxu0 %v2727
  %7644 = vmatmul.mubr.bf16.gmra.mrb[0].mxu0 %v2726
  %v7645 = vpop.f32.mrb[0].mxu0
  %v7646 = vadd.f32 %v7549, %v7645
  %v7647 = vpop.f32.mrb[0].mxu0
  %v7648 = vpop.f32.mrb[0].mxu0
  %v7649 = vadd.f32 %v7552, %v7648
  %v7650 = vpop.f32.mrb[0].mxu0
  %7651 = vmatprep.mubr.bf16.mxu0 %v2776
  %7652 = vmatmul.mubr.bf16.gmra.mrb[0].mxu0 %v2775
  %v7653 = vpop.f32.mrb[0].mxu0
  %v7654 = vadd.f32 %v7557, %v7653
  %v7655 = vpop.f32.mrb[0].mxu0
  %v7656 = vpop.f32.mrb[0].mxu0
  %v7657 = vadd.f32 %v7560, %v7656
  %v7658 = vpop.f32.mrb[0].mxu0
  %7659 = vdwg.mxu0
  %7660 = vmatprep.subr.bf16.mxu0 0
  %7661 = vmatpush1.bf16.msra.mxu0 %v5094
  %7662 = vmatprep.subr.bf16.mxu0 0
  %7663 = vmatpush1.bf16.msra.mxu0 %v5095
  %7664 = vmatprep.subr.bf16.mxu0 0
  %7665 = vmatpush1.bf16.msra.mxu0 %v5096
  %7666 = vmatprep.subr.bf16.mxu0 0
  %7667 = vmatpush1.bf16.msra.mxu0 %v5097
  %7668 = vmatprep.subr.bf16.mxu0 0
  %7669 = vmatpush1.bf16.msra.mxu0 %v5098
  %7670 = vmatprep.subr.bf16.mxu0 0
  %7671 = vmatpush1.bf16.msra.mxu0 %v5099
  %7672 = vmatprep.subr.bf16.mxu0 0
  %7673 = vmatpush1.bf16.msra.mxu0 %v5100
  %7674 = vmatprep.subr.bf16.mxu0 0
  %7675 = vmatpush1.bf16.msra.mxu0 %v5101
  %7676 = vmatprep.subr.bf16.mxu0 0
  %7677 = vmatpush1.bf16.msra.mxu0 %v5102
  %7678 = vmatprep.subr.bf16.mxu0 0
  %7679 = vmatpush1.bf16.msra.mxu0 %v5103
  %7680 = vmatprep.subr.bf16.mxu0 0
  %7681 = vmatpush1.bf16.msra.mxu0 %v5104
  %7682 = vmatprep.subr.bf16.mxu0 0
  %7683 = vmatpush1.bf16.msra.mxu0 %v5105
  %7684 = vmatprep.subr.bf16.mxu0 0
  %7685 = vmatpush1.bf16.msra.mxu0 %v5106
  %7686 = vmatprep.subr.bf16.mxu0 0
  %7687 = vmatpush1.bf16.msra.mxu0 %v5107
  %7688 = vmatprep.subr.bf16.mxu0 0
  %7689 = vmatpush1.bf16.msra.mxu0 %v5108
  %7690 = vmatprep.subr.bf16.mxu0 0
  %7691 = vmatpush1.bf16.msra.mxu0 %v5109
  %7692 = vmatprep.mubr.bf16.mxu0 %v2435
  %7693 = vmatmul.mubr.bf16.gmra.mrb[0].mxu0 %v2434
  %v7694 = vpop.f32.mrb[0].mxu0
  %v7695 = vadd.f32 %v7598, %v7694
  %v7696 = vpop.f32.mrb[0].mxu0
  %v7697 = vpop.f32.mrb[0].mxu0
  %v7698 = vadd.f32 %v7601, %v7697
  %v7699 = vpop.f32.mrb[0].mxu0
  %7700 = vmatprep.mubr.bf16.mxu0 %v2484
  %7701 = vmatmul.mubr.bf16.gmra.mrb[0].mxu0 %v2483
  %v7702 = vpop.f32.mrb[0].mxu0
  %v7703 = vadd.f32 %v7606, %v7702
  %v7704 = vpop.f32.mrb[0].mxu0
  %v7705 = vpop.f32.mrb[0].mxu0
  %v7706 = vadd.f32 %v7609, %v7705
  %v7707 = vpop.f32.mrb[0].mxu0
  %7708 = vmatprep.mubr.bf16.mxu0 %v2533
  %7709 = vmatmul.mubr.bf16.gmra.mrb[0].mxu0 %v2532
  %v7710 = vpop.f32.mrb[0].mxu0
  %v7711 = vadd.f32 %v7614, %v7710
  %v7712 = vpop.f32.mrb[0].mxu0
  %v7713 = vpop.f32.mrb[0].mxu0
  %v7714 = vadd.f32 %v7617, %v7713
  %v7715 = vpop.f32.mrb[0].mxu0
  %7716 = vmatprep.mubr.bf16.mxu0 %v2582
  %7717 = vmatmul.mubr.bf16.gmra.mrb[0].mxu0 %v2581
  %v7718 = vpop.f32.mrb[0].mxu0
  %v7719 = vadd.f32 %v7622, %v7718
  %v7720 = vpop.f32.mrb[0].mxu0
  %v7721 = vpop.f32.mrb[0].mxu0
  %v7722 = vadd.f32 %v7625, %v7721
  %v7723 = vpop.f32.mrb[0].mxu0
  %7724 = vmatprep.mubr.bf16.mxu0 %v2631
  %7725 = vmatmul.mubr.bf16.gmra.mrb[0].mxu0 %v2630
  %v7726 = vpop.f32.mrb[0].mxu0
  %v7727 = vadd.f32 %v7630, %v7726
  %v7728 = vpop.f32.mrb[0].mxu0
  %v7729 = vpop.f32.mrb[0].mxu0
  %v7730 = vadd.f32 %v7633, %v7729
  %v7731 = vpop.f32.mrb[0].mxu0
  %7732 = vmatprep.mubr.bf16.mxu0 %v2680
  %7733 = vmatmul.mubr.bf16.gmra.mrb[0].mxu0 %v2679
  %v7734 = vpop.f32.mrb[0].mxu0
  %v7735 = vadd.f32 %v7638, %v7734
  %v7736 = vpop.f32.mrb[0].mxu0
  %v7737 = vpop.f32.mrb[0].mxu0
  %v7738 = vadd.f32 %v7641, %v7737
  %v7739 = vpop.f32.mrb[0].mxu0
  %7740 = vmatprep.mubr.bf16.mxu0 %v2729
  %7741 = vmatmul.mubr.bf16.gmra.mrb[0].mxu0 %v2728
  %v7742 = vpop.f32.mrb[0].mxu0
  %v7743 = vadd.f32 %v7646, %v7742
  %v7744 = vpop.f32.mrb[0].mxu0
  %v7745 = vpop.f32.mrb[0].mxu0
  %v7746 = vadd.f32 %v7649, %v7745
  %v7747 = vpop.f32.mrb[0].mxu0
  %7748 = vmatprep.mubr.bf16.mxu0 %v2778
  %7749 = vmatmul.mubr.bf16.gmra.mrb[0].mxu0 %v2777
  %v7750 = vpop.f32.mrb[0].mxu0
  %v7751 = vadd.f32 %v7654, %v7750
  %v7752 = vpop.f32.mrb[0].mxu0
  %v7753 = vpop.f32.mrb[0].mxu0
  %v7754 = vadd.f32 %v7657, %v7753
  %v7755 = vpop.f32.mrb[0].mxu0
  %7756 = vdwg.mxu0
  %7757 = vmatprep.subr.bf16.mxu0 0
  %7758 = vmatpush1.bf16.msra.mxu0 %v5110
  %7759 = vmatprep.subr.bf16.mxu0 0
  %7760 = vmatpush1.bf16.msra.mxu0 %v5111
  %7761 = vmatprep.subr.bf16.mxu0 0
  %7762 = vmatpush1.bf16.msra.mxu0 %v5112
  %7763 = vmatprep.subr.bf16.mxu0 0
  %7764 = vmatpush1.bf16.msra.mxu0 %v5113
  %7765 = vmatprep.subr.bf16.mxu0 0
  %7766 = vmatpush1.bf16.msra.mxu0 %v5114
  %7767 = vmatprep.subr.bf16.mxu0 0
  %7768 = vmatpush1.bf16.msra.mxu0 %v5115
  %7769 = vmatprep.subr.bf16.mxu0 0
  %7770 = vmatpush1.bf16.msra.mxu0 %v5116
  %7771 = vmatprep.subr.bf16.mxu0 0
  %7772 = vmatpush1.bf16.msra.mxu0 %v5117
  %7773 = vmatprep.subr.bf16.mxu0 0
  %7774 = vmatpush1.bf16.msra.mxu0 %v5118
  %7775 = vmatprep.subr.bf16.mxu0 0
  %7776 = vmatpush1.bf16.msra.mxu0 %v5119
  %7777 = vmatprep.subr.bf16.mxu0 0
  %7778 = vmatpush1.bf16.msra.mxu0 %v5120
  %7779 = vmatprep.subr.bf16.mxu0 0
  %7780 = vmatpush1.bf16.msra.mxu0 %v5121
  %7781 = vmatprep.subr.bf16.mxu0 0
  %7782 = vmatpush1.bf16.msra.mxu0 %v5122
  %7783 = vmatprep.subr.bf16.mxu0 0
  %7784 = vmatpush1.bf16.msra.mxu0 %v5123
  %7785 = vmatprep.subr.bf16.mxu0 0
  %7786 = vmatpush1.bf16.msra.mxu0 %v5124
  %7787 = vmatprep.subr.bf16.mxu0 0
  %7788 = vmatpush1.bf16.msra.mxu0 %v5125
  %7789 = vmatprep.mubr.bf16.mxu0 %v2437
  %7790 = vmatmul.mubr.bf16.gmra.mrb[0].mxu0 %v2436
  %v7791 = vpop.f32.mrb[0].mxu0
  %v7792 = vadd.f32 %v7695, %v7791
  %v7793 = vpop.f32.mrb[0].mxu0
  %v7794 = vpop.f32.mrb[0].mxu0
  %v7795 = vadd.f32 %v7698, %v7794
  %v7796 = vpop.f32.mrb[0].mxu0
  %7797 = vmatprep.mubr.bf16.mxu0 %v2486
  %7798 = vmatmul.mubr.bf16.gmra.mrb[0].mxu0 %v2485
  %v7799 = vpop.f32.mrb[0].mxu0
  %v7800 = vadd.f32 %v7703, %v7799
  %v7801 = vpop.f32.mrb[0].mxu0
  %v7802 = vpop.f32.mrb[0].mxu0
  %v7803 = vadd.f32 %v7706, %v7802
  %v7804 = vpop.f32.mrb[0].mxu0
  %7805 = vmatprep.mubr.bf16.mxu0 %v2535
  %7806 = vmatmul.mubr.bf16.gmra.mrb[0].mxu0 %v2534
  %v7807 = vpop.f32.mrb[0].mxu0
  %v7808 = vadd.f32 %v7711, %v7807
  %v7809 = vpop.f32.mrb[0].mxu0
  %v7810 = vpop.f32.mrb[0].mxu0
  %v7811 = vadd.f32 %v7714, %v7810
  %v7812 = vpop.f32.mrb[0].mxu0
  %7813 = vmatprep.mubr.bf16.mxu0 %v2584
  %7814 = vmatmul.mubr.bf16.gmra.mrb[0].mxu0 %v2583
  %v7815 = vpop.f32.mrb[0].mxu0
  %v7816 = vadd.f32 %v7719, %v7815
  %v7817 = vpop.f32.mrb[0].mxu0
  %v7818 = vpop.f32.mrb[0].mxu0
  %v7819 = vadd.f32 %v7722, %v7818
  %v7820 = vpop.f32.mrb[0].mxu0
  %7821 = vmatprep.mubr.bf16.mxu0 %v2633
  %7822 = vmatmul.mubr.bf16.gmra.mrb[0].mxu0 %v2632
  %v7823 = vpop.f32.mrb[0].mxu0
  %v7824 = vadd.f32 %v7727, %v7823
  %v7825 = vpop.f32.mrb[0].mxu0
  %v7826 = vpop.f32.mrb[0].mxu0
  %v7827 = vadd.f32 %v7730, %v7826
  %v7828 = vpop.f32.mrb[0].mxu0
  %7829 = vmatprep.mubr.bf16.mxu0 %v2682
  %7830 = vmatmul.mubr.bf16.gmra.mrb[0].mxu0 %v2681
  %v7831 = vpop.f32.mrb[0].mxu0
  %v7832 = vadd.f32 %v7735, %v7831
  %v7833 = vpop.f32.mrb[0].mxu0
  %v7834 = vpop.f32.mrb[0].mxu0
  %v7835 = vadd.f32 %v7738, %v7834
  %v7836 = vpop.f32.mrb[0].mxu0
  %7837 = vmatprep.mubr.bf16.mxu0 %v2731
  %7838 = vmatmul.mubr.bf16.gmra.mrb[0].mxu0 %v2730
  %v7839 = vpop.f32.mrb[0].mxu0
  %v7840 = vadd.f32 %v7743, %v7839
  %v7841 = vpop.f32.mrb[0].mxu0
  %v7842 = vpop.f32.mrb[0].mxu0
  %v7843 = vadd.f32 %v7746, %v7842
  %v7844 = vpop.f32.mrb[0].mxu0
  %7845 = vmatprep.mubr.bf16.mxu0 %v2780
  %7846 = vmatmul.mubr.bf16.gmra.mrb[0].mxu0 %v2779
  %v7847 = vpop.f32.mrb[0].mxu0
  %v7848 = vadd.f32 %v7751, %v7847
  %v7849 = vpop.f32.mrb[0].mxu0
  %v7850 = vpop.f32.mrb[0].mxu0
  %v7851 = vadd.f32 %v7754, %v7850
  %v7852 = vpop.f32.mrb[0].mxu0
  %7853 = vdwg.mxu0
  %7854 = vmatprep.subr.bf16.mxu0 0
  %7855 = vmatpush1.bf16.msra.mxu0 %v5126
  %7856 = vmatprep.subr.bf16.mxu0 0
  %7857 = vmatpush1.bf16.msra.mxu0 %v5127
  %7858 = vmatprep.subr.bf16.mxu0 0
  %7859 = vmatpush1.bf16.msra.mxu0 %v5128
  %7860 = vmatprep.subr.bf16.mxu0 0
  %7861 = vmatpush1.bf16.msra.mxu0 %v5129
  %7862 = vmatprep.subr.bf16.mxu0 0
  %7863 = vmatpush1.bf16.msra.mxu0 %v5130
  %7864 = vmatprep.subr.bf16.mxu0 0
  %7865 = vmatpush1.bf16.msra.mxu0 %v5131
  %7866 = vmatprep.subr.bf16.mxu0 0
  %7867 = vmatpush1.bf16.msra.mxu0 %v5132
  %7868 = vmatprep.subr.bf16.mxu0 0
  %7869 = vmatpush1.bf16.msra.mxu0 %v5133
  %7870 = vmatprep.subr.bf16.mxu0 0
  %7871 = vmatpush1.bf16.msra.mxu0 0
  %7872 = vmatprep.subr.bf16.mxu0 0
  %7873 = vmatpush1.bf16.msra.mxu0 0
  %7874 = vmatprep.subr.bf16.mxu0 0
  %7875 = vmatpush1.bf16.msra.mxu0 0
  %7876 = vmatprep.subr.bf16.mxu0 0
  %7877 = vmatpush1.bf16.msra.mxu0 0
  %7878 = vmatprep.subr.bf16.mxu0 0
  %7879 = vmatpush1.bf16.msra.mxu0 0
  %7880 = vmatprep.subr.bf16.mxu0 0
  %7881 = vmatpush1.bf16.msra.mxu0 0
  %7882 = vmatprep.subr.bf16.mxu0 0
  %7883 = vmatpush1.bf16.msra.mxu0 0
  %7884 = vmatprep.subr.bf16.mxu0 0
  %7885 = vmatpush1.bf16.msra.mxu0 0
  %7886 = vmatprep.mubr.bf16.mxu0 0
  %7887 = vmatmul.mubr.bf16.gmra.mrb[0].mxu0 %v2438
  %v7888 = vpop.f32.mrb[0].mxu0
  %v7889 = vadd.f32 %v7792, %v7888
  %v7890 = vpop.f32.mrb[0].mxu0
  %v7891 = vpop.f32.mrb[0].mxu0
  %v7892 = vadd.f32 %v7795, %v7891
  %v7893 = vpop.f32.mrb[0].mxu0
  %7894 = vmatprep.mubr.bf16.mxu0 0
  %7895 = vmatmul.mubr.bf16.gmra.mrb[0].mxu0 %v2487
  %v7896 = vpop.f32.mrb[0].mxu0
  %v7897 = vadd.f32 %v7800, %v7896
  %v7898 = vpop.f32.mrb[0].mxu0
  %v7899 = vpop.f32.mrb[0].mxu0
  %v7900 = vadd.f32 %v7803, %v7899
  %v7901 = vpop.f32.mrb[0].mxu0
  %7902 = vmatprep.mubr.bf16.mxu0 0
  %7903 = vmatmul.mubr.bf16.gmra.mrb[0].mxu0 %v2536
  %v7904 = vpop.f32.mrb[0].mxu0
  %v7905 = vadd.f32 %v7808, %v7904
  %v7906 = vpop.f32.mrb[0].mxu0
  %v7907 = vpop.f32.mrb[0].mxu0
  %v7908 = vadd.f32 %v7811, %v7907
  %v7909 = vpop.f32.mrb[0].mxu0
  %7910 = vmatprep.mubr.bf16.mxu0 0
  %7911 = vmatmul.mubr.bf16.gmra.mrb[0].mxu0 %v2585
  %v7912 = vpop.f32.mrb[0].mxu0
  %v7913 = vadd.f32 %v7816, %v7912
  %v7914 = vpop.f32.mrb[0].mxu0
  %v7915 = vpop.f32.mrb[0].mxu0
  %v7916 = vadd.f32 %v7819, %v7915
  %v7917 = vpop.f32.mrb[0].mxu0
  %7918 = vmatprep.mubr.bf16.mxu0 0
  %7919 = vmatmul.mubr.bf16.gmra.mrb[0].mxu0 %v2634
  %v7920 = vpop.f32.mrb[0].mxu0
  %v7921 = vadd.f32 %v7824, %v7920
  %v7922 = vpop.f32.mrb[0].mxu0
  %v7923 = vpop.f32.mrb[0].mxu0
  %v7924 = vadd.f32 %v7827, %v7923
  %v7925 = vpop.f32.mrb[0].mxu0
  %7926 = vmatprep.mubr.bf16.mxu0 0
  %7927 = vmatmul.mubr.bf16.gmra.mrb[0].mxu0 %v2683
  %v7928 = vpop.f32.mrb[0].mxu0
  %v7929 = vadd.f32 %v7832, %v7928
  %v7930 = vpop.f32.mrb[0].mxu0
  %v7931 = vpop.f32.mrb[0].mxu0
  %v7932 = vadd.f32 %v7835, %v7931
  %v7933 = vpop.f32.mrb[0].mxu0
  %7934 = vmatprep.mubr.bf16.mxu0 0
  %7935 = vmatmul.mubr.bf16.gmra.mrb[0].mxu0 %v2732
  %v7936 = vpop.f32.mrb[0].mxu0
  %v7937 = vadd.f32 %v7840, %v7936
  %v7938 = vpop.f32.mrb[0].mxu0
  %v7939 = vpop.f32.mrb[0].mxu0
  %v7940 = vadd.f32 %v7843, %v7939
  %v7941 = vpop.f32.mrb[0].mxu0
  %7942 = vmatprep.mubr.bf16.mxu0 0
  %7943 = vmatmul.mubr.bf16.gmra.mrb[0].mxu0 %v2781
  %v7944 = vpop.f32.mrb[0].mxu0
  %v7945 = vadd.f32 %v7848, %v7944
  %v7946 = vpop.f32.mrb[0].mxu0
  %v7947 = vpop.f32.mrb[0].mxu0
  %v7948 = vadd.f32 %v7851, %v7947
  %v7949 = vpop.f32.mrb[0].mxu0
  %7950 = vdwg.mxu0
  %v7951 = vmax.f32 %v7889, 0.0
  %v7952 = vmax.f32 %v7892, 0.0
  %v7953 = vmax.f32 %v7897, 0.0
  %v7954 = vmax.f32 %v7900, 0.0
  %v7955 = vmax.f32 %v7905, 0.0
  %v7956 = vmax.f32 %v7908, 0.0
  %v7957 = vmax.f32 %v7913, 0.0
  %v7958 = vmax.f32 %v7916, 0.0
  %v7959 = vmax.f32 %v7921, 0.0
  %v7960 = vmax.f32 %v7924, 0.0
  %v7961 = vmax.f32 %v7929, 0.0
  %v7962 = vmax.f32 %v7932, 0.0
  %v7963 = vmax.f32 %v7937, 0.0
  %v7964 = vmax.f32 %v7940, 0.0
  %v7965 = vmax.f32 %v7945, 0.0
  %v7966 = vmax.f32 %v7948, 0.0
  %7967 = vst [vmem:[%s3] sm:$0xff] %v7951
  %7968 = vst [vmem:[%s3 + $0x8] sm:$0xff] %v7952
  %7969 = vst [vmem:[%s3 + $0x10] sm:$0xff] %v7953
  %7970 = vst [vmem:[%s3 + $0x18] sm:$0xff] %v7954
  %7971 = vst [vmem:[%s3 + $0x20] sm:$0xff] %v7955
  %7972 = vst [vmem:[%s3 + $0x28] sm:$0xff] %v7956
  %7973 = vst [vmem:[%s3 + $0x30] sm:$0xff] %v7957
  %7974 = vst [vmem:[%s3 + $0x38] sm:$0xff] %v7958
  %7975 = vst [vmem:[%s3 + $0x40] sm:$0xff] %v7959
  %7976 = vst [vmem:[%s3 + $0x48] sm:$0xff] %v7960
  %7977 = vst [vmem:[%s3 + $0x50] sm:$0xff] %v7961
  %7978 = vst [vmem:[%s3 + $0x58] sm:$0xff] %v7962
  %7979 = vst [vmem:[%s3 + $0x60] sm:$0xff] %v7963
  %7980 = vst [vmem:[%s3 + $0x68] sm:$0xff] %v7964
  %7981 = vst [vmem:[%s3 + $0x70] sm:$0xff] %v7965
  %7982 = vst [vmem:[%s3 + $0x78] sm:$0xff] %v7966
  // Predicated region
  $region14: #{_lambda_.18} parent=0 // pred_check
    _
  $region15: #{_lambda_.18} parent=0 // pred_check_branch
    %7984 = sbr.rel (0) target = $region17
  $region16: #{_lambda_.18} parent=0 // pred_region
    _
  $region17: #{_lambda_.18} parent=0 // pred_fallthru
    _
  // Predicated region
  $region18: #{_lambda_.18} parent=0 // pred_check
    _
  $region19: #{_lambda_.18} parent=0 // pred_check_branch
    %7986 = sbr.rel (0) target = $region21
  $region20: #{_lambda_.18} parent=0 // pred_region
    _
  $region21: #{_lambda_.18} parent=0 // pred_fallthru
    _

</llo_original>
